<compile_context>
chip_gen: v6e
topology: v6e:2x2x1
jax: 0.10.0
libtpu: 0.0.40
codegen_flags: <defaults>
</compile_context>

<pallas_src>
import functools

import jax
import jax.numpy as jnp
from jax.experimental import pallas as pl
from jax.experimental.pallas import tpu as pltpu

LANES = 128


# ----------------------------------------------------------------------------
# Fused forward kernel: one grid step == one batch element, all in VMEM.
# ----------------------------------------------------------------------------
def _fused_forward_kernel(ph_ref, stem_w_ref, stem_b_ref, mid_w_ref, mid_b_ref,
                          s2_w_ref, s2_b_ref, head_w_ref, head_b_ref, o_ref,
                          *, h4, w4):
    """Whole Model.forward for one image.

    ph_ref holds the 16 stride-4 phase planes of the zero-padded image: plane
    (r, s) = padded_image[r::4, s::4], each (h4+1, w4+1, 3), stacked along
    rows, so plane p lives at ph_ref[0, p*(h4+1):(p+1)*(h4+1)].
    """
    pph = h4 + 1
    m = h4 * w4
    parities = ((0, 0), (0, 1), (1, 0), (1, 1))

    def flat(tap):                                   # (h, w, c) -> (h*w, c)
        return tap.reshape(tap.shape[0] * tap.shape[1], tap.shape[2])

    # ---- 16 input phase planes, bf16, (h4+1, w4+1, 3) -----------------------
    planes = [ph_ref[0, p * pph:(p + 1) * pph] for p in range(16)]

    # ---- fused stem (pose 3->16 | hand 3->8), 3x3 stride 2 ------------------
    # Output parity plane S_pq[u, v] = S[2u+p, 2v+q]:
    #   S_pq[u, v] = relu(b + sum_{di,dj} W[di,dj] . P[4u + 2p+di, 4v + 2q+dj])
    # with P the pad-1 image, i.e. phase plane ((2p+di)%4, (2q+dj)%4) at
    # contiguous offset ((2p+di)//4, (2q+dj)//4).
    groups = []
    for (p, q) in parities:
        taps = []
        for di in range(3):
            r, ro = (2 * p + di) % 4, (2 * p + di) // 4
            for dj in range(3):
                s, co = (2 * q + dj) % 4, (2 * q + dj) // 4
                taps.append(flat(planes[r * 4 + s][ro:ro + h4, co:co + w4, :]))
        groups.append(jnp.concatenate(taps, axis=1))           # (m, 27) bf16
    stem_patches = jnp.concatenate(groups, axis=0)             # (4m, 27) bf16
    stem = jnp.dot(stem_patches, stem_w_ref[...],
                   preferred_element_type=jnp.float32)
    stem = jnp.maximum(stem + stem_b_ref[...], 0.0)            # (4m, 128) f32

    # Zero-padded parity planes Q_pq[i, j] = S_pq[i-1, j-1]
    # (channels 0:16 pose stem, 16:24 hand conv1, 24:32 exact zeros).
    q_planes = {}
    for idx, (p, q) in enumerate(parities):
        sp = stem[idx * m:(idx + 1) * m, :32].reshape(h4, w4, 32)
        sp = jnp.concatenate([jnp.zeros((h4, 1, 32), jnp.float32), sp], axis=1)
        sp = jnp.concatenate([jnp.zeros((1, w4 + 1, 32), jnp.float32), sp],
                             axis=0)
        q_planes[(p, q)] = sp                                  # (h4+1, w4+1, 32)

    # ---- fused mid layer: pose stage1 (16->32) | hand conv2 (8->16), s2 -----
    # Tap e of a stride-2 conv over S maps to (parity, offset):
    #   e=0 -> (odd, 0), e=1 -> (even, 1), e=2 -> (odd, 1).
    def s2_tap(e):
        return ((1, 0), (0, 1), (1, 1))[e]

    taps = []
    for ei in range(3):
        p, ro = s2_tap(ei)
        for ej in range(3):
            q, co = s2_tap(ej)
            taps.append(flat(q_planes[(p, q)][ro:ro + h4, co:co + w4, :]))
    mid_patches = jnp.concatenate(taps, axis=1).astype(jnp.bfloat16)  # (m, 288)
    mid = jnp.dot(mid_patches, mid_w_ref[...],
                  preferred_element_type=jnp.float32)
    mid = jnp.maximum(mid + mid_b_ref[...], 0.0)               # (m, 128) f32

    # hand branch finishes here: global average pool of its 16 channels
    hand_pool = jnp.sum(mid[:, 32:48], axis=0, keepdims=True) * (1.0 / m)

    # ---- pose stage2 (32->32, 3x3 s1) + GAP, chunked over output rows -------
    t_feat = mid[:, :32].reshape(h4, w4, 32)
    zc = jnp.zeros((h4, 1, 32), jnp.float32)
    tp = jnp.concatenate([zc, t_feat, zc], axis=1)             # (h4, w4+2, 32)
    zr = jnp.zeros((1, w4 + 2, 32), jnp.float32)
    tp = jnp.concatenate([zr, tp, zr], axis=0)                 # (h4+2, w4+2, 32)

    rc = 8 if h4 % 8 == 0 else h4                              # rows per chunk
    pose_sum = jnp.zeros((1, LANES), jnp.float32)
    for r0 in range(0, h4, rc):
        ctaps = []
        for fi in range(3):
            for fj in range(3):
                ctaps.append(flat(tp[r0 + fi:r0 + fi + rc, fj:fj + w4, :]))
        patches = jnp.concatenate(ctaps, axis=1).astype(jnp.bfloat16)
        acc = jnp.dot(patches, s2_w_ref[...],
                      preferred_element_type=jnp.float32)
        acc = jnp.maximum(acc + s2_b_ref[...], 0.0)            # (rc*w4, 128)
        pose_sum = pose_sum + jnp.sum(acc, axis=0, keepdims=True)
    pose_pool = pose_sum * (1.0 / m)                           # (1, 128)

    # ---- fused heads in f32: [mu | sigmoid(sigma) | class logits] -----------
    feat = jnp.concatenate([pose_pool[:, :32], hand_pool], axis=1)   # (1, 48)
    out = jnp.dot(feat, head_w_ref[...],
                  preferred_element_type=jnp.float32) + head_b_ref[...]
    col = jax.lax.broadcasted_iota(jnp.int32, out.shape, 1)
    out = jnp.where((col >= 42) & (col < 84), jax.nn.sigmoid(out), out)
    o_ref[...] = out.reshape(1, 1, LANES)


def _pallas_forward(params, phases, batch, h4, w4):
    pph, ppw = h4 + 1, w4 + 1
    kernel = functools.partial(_fused_forward_kernel, h4=h4, w4=w4)

    def full(shape):
        return pl.BlockSpec(shape, lambda b: (0,) * len(shape))

    out = pl.pallas_call(
        kernel,
        out_shape=jax.ShapeDtypeStruct((batch, 1, LANES), jnp.float32),
        grid=(batch,),
        in_specs=[
            pl.BlockSpec((1, 16 * pph, ppw, 3), lambda b: (b, 0, 0, 0)),
            full((27, LANES)), full((1, LANES)),       # fused stem
            full((288, LANES)), full((1, LANES)),      # fused pose-s1 | hand-c2
            full((288, LANES)), full((1, LANES)),      # pose-s2 (+GAP)
            full((48, LANES)), full((1, LANES)),       # fused heads (f32)
        ],
        out_specs=pl.BlockSpec((1, 1, LANES), lambda b: (b, 0, 0)),
        compiler_params=pltpu.CompilerParams(
            dimension_semantics=("parallel",),          # batch -> v7x megacore
            vmem_limit_bytes=32 * 1024 * 1024,          # well inside v7x 64MiB
        ),
    )(phases,
      params["stem_w"], params["stem_b"],
      params["mid_w"], params["mid_b"],
      params["s2_w"], params["s2_b"],
      params["head_w"], params["head_b"])
    return out[:, 0, :]                                 # (B, 128) f32


# ----------------------------------------------------------------------------
# Forward pass (mirrors Model.forward: y = pose head, y1 = hand-cls logits)
# ----------------------------------------------------------------------------
def model_forward(params, x_nchw):
    b, c, h, w = x_nchw.shape
    assert c == 3 and h % 4 == 0 and w % 4 == 0, x_nchw.shape
    x = jnp.transpose(x_nchw, (0, 2, 3, 1))            # NCHW -> NHWC
    # pad-1 for the stride-2 stem conv plus 2 trailing zero rows/cols so the
    # extent is a multiple of 4 for the phase split (the extra rows are never
    # read by any tap).
    xp = jnp.pad(x, ((0, 0), (1, 3), (1, 3), (0, 0))).astype(jnp.bfloat16)
    h4, w4 = h // 4, w // 4
    pph, ppw = h4 + 1, w4 + 1
    # 16 stride-4 phase planes: a pure relayout with the same byte count as the
    # padded image (no 9x im2col expansion).  Inside the kernel every conv tap
    # then becomes a contiguous VMEM slice.
    # TODO(synk): at very large resolutions this relayout could itself move
    # in-kernel via strided DMA; kept as cheap XLA glue here.
    planes = [xp[:, r::4, s::4, :] for r in range(4) for s in range(4)]
    phases = jnp.stack(planes, axis=1).reshape(b, 16 * pph, ppw, 3)

    out = _pallas_forward(params, phases, b, h4, w4)   # (B, 128) f32
    mu = out[:, 0:42].reshape(b, 21, 2)
    sigma = out[:, 42:84].reshape(b, 21, 2)
    y = (mu, sigma)                     # pose_estimator.head output (RLE style)
    y1 = out[:, 84:89]                  # hand_cls logits (5 classes)
    return y, y1


# ----------------------------------------------------------------------------
# Deterministic parameter construction (packed / fused at build time)
# ----------------------------------------------------------------------------
def _init_linear(key, k_in, k_out):
    kw_, kb_ = jax.random.split(key)
    scale = (2.0 / float(k_in)) ** 0.5
    w = jax.random.normal(kw_, (k_in, k_out), dtype=jnp.float32) * scale
    b = jax.random.normal(kb_, (k_out,), dtype=jnp.float32) * 0.01
    return w, b


def build_params(seed=0):
    # TODO(synk): real HGNetv2-b0 / RLE-head / HandClass('s0') weights come
    # from an on-disk mmpose config + .pth checkpoints; deterministic synthetic
    # weights of the same structure are used instead.  Flattened-K ordering of
    # every conv weight is (kh-major, kw, Cin).
    key = jax.random.PRNGKey(seed)
    keys = jax.random.split(key, 8)
    raw = dict(
        stem=_init_linear(keys[0], 27, 16),   # pose stem   3->16, s2
        s1=_init_linear(keys[1], 144, 32),    # pose stage 16->32, s2
        s2=_init_linear(keys[2], 288, 32),    # pose stage 32->32, s1
        mu=_init_linear(keys[3], 32, 42),     # RLE head: 21 kpts x (x, y)
        sg=_init_linear(keys[4], 32, 42),     # RLE head: per-coord sigma
        c1=_init_linear(keys[5], 27, 8),      # hand-cls conv  3->8,  s2
        c2=_init_linear(keys[6], 72, 16),     # hand-cls conv 8->16, s2
        fc=_init_linear(keys[7], 16, 5),      # hand-cls fc -> 5 logits
    )

    def bias128(placements):
        bvec = jnp.zeros((1, LANES), jnp.float32)
        for c0, v in placements:
            bvec = bvec.at[0, c0:c0 + v.shape[0]].set(v)
        return bvec

    p = {"raw": raw}
    # Fused stem: cols 0:16 pose stem, 16:24 hand conv1 (shared input patches).
    stem_w = jnp.zeros((27, LANES), jnp.float32)
    stem_w = stem_w.at[:, 0:16].set(raw["stem"][0]).at[:, 16:24].set(raw["c1"][0])
    p["stem_w"] = stem_w.astype(jnp.bfloat16)
    p["stem_b"] = bias128([(0, raw["stem"][1]), (16, raw["c1"][1])])

    # Fused mid layer over the 32-channel stem tile (per tap, input channels
    # 0:16 = pose stem, 16:24 = hand conv1, 24:32 = exact zeros):
    #   cols 0:32 = pose stage1, cols 32:48 = hand conv2.
    mid = jnp.zeros((9, 32, LANES), jnp.float32)
    mid = mid.at[:, 0:16, 0:32].set(raw["s1"][0].reshape(9, 16, 32))
    mid = mid.at[:, 16:24, 32:48].set(raw["c2"][0].reshape(9, 8, 16))
    p["mid_w"] = mid.reshape(288, LANES).astype(jnp.bfloat16)
    p["mid_b"] = bias128([(0, raw["s1"][1]), (32, raw["c2"][1])])

    # Pose stage2 (32 -> 32), consumed right before the fused GAP.
    p["s2_w"] = jnp.zeros((288, LANES), jnp.float32).at[:, 0:32].set(
        raw["s2"][0]).astype(jnp.bfloat16)
    p["s2_b"] = bias128([(0, raw["s2"][1])])

    # Fused heads (block diagonal, kept in f32): rows 0:32 pose feature,
    # rows 32:48 hand feature; cols 0:42 mu, 42:84 sigma, 84:89 class logits.
    head = jnp.zeros((48, LANES), jnp.float32)
    head = head.at[0:32, 0:42].set(raw["mu"][0])
    head = head.at[0:32, 42:84].set(raw["sg"][0])
    head = head.at[32:48, 84:89].set(raw["fc"][0])
    p["head_w"] = head
    p["head_b"] = bias128([(0, raw["mu"][1]), (42, raw["sg"][1]),
                           (84, raw["fc"][1])])
    return p


# ----------------------------------------------------------------------------
# Pure-JAX reference (same bf16-matmul / f32-accumulate arithmetic)
# ----------------------------------------------------------------------------
def _im2col(x_nhwc, kh, kw, stride, pad):
    x = jnp.pad(x_nhwc, ((0, 0), (pad, pad), (pad, pad), (0, 0)))
    _, hh, ww, _ = x.shape
    ho = (hh - kh) // stride + 1
    wo = (ww - kw) // stride + 1
    cols = []
    for i in range(kh):
        for j in range(kw):
            cols.append(x[:, i:i + stride * ho:stride,
                          j:j + stride * wo:stride, :])
    return jnp.concatenate(cols, axis=-1), ho, wo


def reference_forward(raw, x_nchw):
    def conv(x, w, b, stride):
        patches, ho, wo = _im2col(x, 3, 3, stride, 1)
        bb = x.shape[0]
        y = jnp.dot(patches.reshape(bb * ho * wo, -1).astype(jnp.bfloat16),
                    w.astype(jnp.bfloat16), preferred_element_type=jnp.float32)
        return jnp.maximum(y + b, 0.0).reshape(bb, ho, wo, -1)

    x = jnp.transpose(x_nchw, (0, 2, 3, 1))
    bb = x.shape[0]
    pose = conv(x, raw["stem"][0], raw["stem"][1], 2)
    hand = conv(x, raw["c1"][0], raw["c1"][1], 2)
    pose = conv(pose, raw["s1"][0], raw["s1"][1], 2)
    pose = conv(pose, raw["s2"][0], raw["s2"][1], 1)
    pose_feat = jnp.mean(pose, axis=(1, 2))
    hand = conv(hand, raw["c2"][0], raw["c2"][1], 2)
    hand_feat = jnp.mean(hand, axis=(1, 2))
    mu = pose_feat @ raw["mu"][0] + raw["mu"][1]
    sg = jax.nn.sigmoid(pose_feat @ raw["sg"][0] + raw["sg"][1])
    y1 = hand_feat @ raw["fc"][0] + raw["fc"][1]
    return mu.reshape(bb, 21, 2), sg.reshape(bb, 21, 2), y1


if __name__ == "__main__":
    params = build_params(seed=0)
    key = jax.random.PRNGKey(0)
    # Small shape consistent with the module's (B, 3, H, W) image input.
    x = jax.random.uniform(key, (2, 3, 64, 64), dtype=jnp.float32)

    fwd = jax.jit(model_forward)
    (mu, sigma), y1 = fwd(params, x)
    jax.block_until_ready((mu, sigma, y1))

    assert mu.shape == (2, 21, 2) and sigma.shape == (2, 21, 2)
    assert y1.shape == (2, 5)
    assert bool(jnp.all(jnp.isfinite(mu))) and bool(jnp.all(jnp.isfinite(y1)))
    assert bool(jnp.all((sigma >= 0.0) & (sigma <= 1.0)))

    # Numerical check against a pure-JAX reference of the same synthetic net.
    mu_r, sg_r, y1_r = jax.jit(reference_forward)(params["raw"], x)
    assert bool(jnp.allclose(mu, mu_r, atol=2e-2, rtol=2e-2)), \
        float(jnp.max(jnp.abs(mu - mu_r)))
    assert bool(jnp.allclose(sigma, sg_r, atol=2e-2, rtol=2e-2)), \
        float(jnp.max(jnp.abs(sigma - sg_r)))
    assert bool(jnp.allclose(y1, y1_r, atol=2e-2, rtol=2e-2)), \
        float(jnp.max(jnp.abs(y1 - y1_r)))
    print("KERNEL_OK")
</pallas_src>

<mosaic_0001>
module attributes {stable_mosaic.version = 11 : i64} {
  func.func @_fused_forward_kernel(%arg0: i32, %arg1: memref<1x272x17x3xbf16, #tpu.memory_space<vmem>>, %arg2: memref<27x128xbf16, #tpu.memory_space<vmem>>, %arg3: memref<1x128xf32, #tpu.memory_space<vmem>>, %arg4: memref<288x128xbf16, #tpu.memory_space<vmem>>, %arg5: memref<1x128xf32, #tpu.memory_space<vmem>>, %arg6: memref<288x128xbf16, #tpu.memory_space<vmem>>, %arg7: memref<1x128xf32, #tpu.memory_space<vmem>>, %arg8: memref<48x128xf32, #tpu.memory_space<vmem>>, %arg9: memref<1x128xf32, #tpu.memory_space<vmem>>, %arg10: memref<1x1x128xf32, #tpu.memory_space<vmem>>) attributes {dimension_semantics = [#tpu.dimension_semantics<parallel>], iteration_bounds = array<i64: 2>, scalar_prefetch = 0 : i64, scratch_operands = 0 : i64, tpu.core_type = #tpu.core_type<tc>, window_params = [{transform_indices = @transform_0, window_bounds = array<i64: 1, 272, 17, 3>}, {pipeline_mode = #tpu.pipeline_mode<synchronous>, transform_indices = @transform_1, window_bounds = array<i64: 27, 128>}, {pipeline_mode = #tpu.pipeline_mode<synchronous>, transform_indices = @transform_2, window_bounds = array<i64: 1, 128>}, {pipeline_mode = #tpu.pipeline_mode<synchronous>, transform_indices = @transform_3, window_bounds = array<i64: 288, 128>}, {pipeline_mode = #tpu.pipeline_mode<synchronous>, transform_indices = @transform_4, window_bounds = array<i64: 1, 128>}, {pipeline_mode = #tpu.pipeline_mode<synchronous>, transform_indices = @transform_5, window_bounds = array<i64: 288, 128>}, {pipeline_mode = #tpu.pipeline_mode<synchronous>, transform_indices = @transform_6, window_bounds = array<i64: 1, 128>}, {pipeline_mode = #tpu.pipeline_mode<synchronous>, transform_indices = @transform_7, window_bounds = array<i64: 48, 128>}, {pipeline_mode = #tpu.pipeline_mode<synchronous>, transform_indices = @transform_8, window_bounds = array<i64: 1, 128>}, {transform_indices = @transform_9, window_bounds = array<i64: 1, 1, 128>}]} {
    %c0 = arith.constant 0 : index
    %c0_0 = arith.constant 0 : index
    %c0_1 = arith.constant 0 : index
    %c0_2 = arith.constant 0 : index
    %0 = vector.load %arg1[%c0, %c0_0, %c0_1, %c0_2] : memref<1x272x17x3xbf16, #tpu.memory_space<vmem>>, vector<1x17x17x3xbf16>
    %1 = vector.shape_cast %0 : vector<1x17x17x3xbf16> to vector<17x17x3xbf16>
    %c0_3 = arith.constant 0 : index
    %c17 = arith.constant 17 : index
    %c0_4 = arith.constant 0 : index
    %c0_5 = arith.constant 0 : index
    %2 = vector.load %arg1[%c0_3, %c17, %c0_4, %c0_5] : memref<1x272x17x3xbf16, #tpu.memory_space<vmem>>, vector<1x17x17x3xbf16>
    %3 = vector.shape_cast %2 : vector<1x17x17x3xbf16> to vector<17x17x3xbf16>
    %c0_6 = arith.constant 0 : index
    %c34 = arith.constant 34 : index
    %c0_7 = arith.constant 0 : index
    %c0_8 = arith.constant 0 : index
    %4 = vector.load %arg1[%c0_6, %c34, %c0_7, %c0_8] : memref<1x272x17x3xbf16, #tpu.memory_space<vmem>>, vector<1x17x17x3xbf16>
    %5 = vector.shape_cast %4 : vector<1x17x17x3xbf16> to vector<17x17x3xbf16>
    %c0_9 = arith.constant 0 : index
    %c51 = arith.constant 51 : index
    %c0_10 = arith.constant 0 : index
    %c0_11 = arith.constant 0 : index
    %6 = vector.load %arg1[%c0_9, %c51, %c0_10, %c0_11] : memref<1x272x17x3xbf16, #tpu.memory_space<vmem>>, vector<1x17x17x3xbf16>
    %7 = vector.shape_cast %6 : vector<1x17x17x3xbf16> to vector<17x17x3xbf16>
    %c0_12 = arith.constant 0 : index
    %c68 = arith.constant 68 : index
    %c0_13 = arith.constant 0 : index
    %c0_14 = arith.constant 0 : index
    %8 = vector.load %arg1[%c0_12, %c68, %c0_13, %c0_14] : memref<1x272x17x3xbf16, #tpu.memory_space<vmem>>, vector<1x17x17x3xbf16>
    %9 = vector.shape_cast %8 : vector<1x17x17x3xbf16> to vector<17x17x3xbf16>
    %c0_15 = arith.constant 0 : index
    %c85 = arith.constant 85 : index
    %c0_16 = arith.constant 0 : index
    %c0_17 = arith.constant 0 : index
    %10 = vector.load %arg1[%c0_15, %c85, %c0_16, %c0_17] : memref<1x272x17x3xbf16, #tpu.memory_space<vmem>>, vector<1x17x17x3xbf16>
    %11 = vector.shape_cast %10 : vector<1x17x17x3xbf16> to vector<17x17x3xbf16>
    %c0_18 = arith.constant 0 : index
    %c102 = arith.constant 102 : index
    %c0_19 = arith.constant 0 : index
    %c0_20 = arith.constant 0 : index
    %12 = vector.load %arg1[%c0_18, %c102, %c0_19, %c0_20] : memref<1x272x17x3xbf16, #tpu.memory_space<vmem>>, vector<1x17x17x3xbf16>
    %13 = vector.shape_cast %12 : vector<1x17x17x3xbf16> to vector<17x17x3xbf16>
    %c0_21 = arith.constant 0 : index
    %c119 = arith.constant 119 : index
    %c0_22 = arith.constant 0 : index
    %c0_23 = arith.constant 0 : index
    %14 = vector.load %arg1[%c0_21, %c119, %c0_22, %c0_23] : memref<1x272x17x3xbf16, #tpu.memory_space<vmem>>, vector<1x17x17x3xbf16>
    %15 = vector.shape_cast %14 : vector<1x17x17x3xbf16> to vector<17x17x3xbf16>
    %c0_24 = arith.constant 0 : index
    %c136 = arith.constant 136 : index
    %c0_25 = arith.constant 0 : index
    %c0_26 = arith.constant 0 : index
    %16 = vector.load %arg1[%c0_24, %c136, %c0_25, %c0_26] : memref<1x272x17x3xbf16, #tpu.memory_space<vmem>>, vector<1x17x17x3xbf16>
    %17 = vector.shape_cast %16 : vector<1x17x17x3xbf16> to vector<17x17x3xbf16>
    %c0_27 = arith.constant 0 : index
    %c153 = arith.constant 153 : index
    %c0_28 = arith.constant 0 : index
    %c0_29 = arith.constant 0 : index
    %18 = vector.load %arg1[%c0_27, %c153, %c0_28, %c0_29] : memref<1x272x17x3xbf16, #tpu.memory_space<vmem>>, vector<1x17x17x3xbf16>
    %19 = vector.shape_cast %18 : vector<1x17x17x3xbf16> to vector<17x17x3xbf16>
    %c0_30 = arith.constant 0 : index
    %c170 = arith.constant 170 : index
    %c0_31 = arith.constant 0 : index
    %c0_32 = arith.constant 0 : index
    %20 = vector.load %arg1[%c0_30, %c170, %c0_31, %c0_32] : memref<1x272x17x3xbf16, #tpu.memory_space<vmem>>, vector<1x17x17x3xbf16>
    %21 = vector.shape_cast %20 : vector<1x17x17x3xbf16> to vector<17x17x3xbf16>
    %c0_33 = arith.constant 0 : index
    %c187 = arith.constant 187 : index
    %c0_34 = arith.constant 0 : index
    %c0_35 = arith.constant 0 : index
    %22 = vector.load %arg1[%c0_33, %c187, %c0_34, %c0_35] : memref<1x272x17x3xbf16, #tpu.memory_space<vmem>>, vector<1x17x17x3xbf16>
    %23 = vector.shape_cast %22 : vector<1x17x17x3xbf16> to vector<17x17x3xbf16>
    %c0_36 = arith.constant 0 : index
    %c204 = arith.constant 204 : index
    %c0_37 = arith.constant 0 : index
    %c0_38 = arith.constant 0 : index
    %24 = vector.load %arg1[%c0_36, %c204, %c0_37, %c0_38] : memref<1x272x17x3xbf16, #tpu.memory_space<vmem>>, vector<1x17x17x3xbf16>
    %25 = vector.shape_cast %24 : vector<1x17x17x3xbf16> to vector<17x17x3xbf16>
    %c0_39 = arith.constant 0 : index
    %c221 = arith.constant 221 : index
    %c0_40 = arith.constant 0 : index
    %c0_41 = arith.constant 0 : index
    %26 = vector.load %arg1[%c0_39, %c221, %c0_40, %c0_41] : memref<1x272x17x3xbf16, #tpu.memory_space<vmem>>, vector<1x17x17x3xbf16>
    %27 = vector.shape_cast %26 : vector<1x17x17x3xbf16> to vector<17x17x3xbf16>
    %c0_42 = arith.constant 0 : index
    %c238 = arith.constant 238 : index
    %c0_43 = arith.constant 0 : index
    %c0_44 = arith.constant 0 : index
    %28 = vector.load %arg1[%c0_42, %c238, %c0_43, %c0_44] : memref<1x272x17x3xbf16, #tpu.memory_space<vmem>>, vector<1x17x17x3xbf16>
    %29 = vector.shape_cast %28 : vector<1x17x17x3xbf16> to vector<17x17x3xbf16>
    %c0_45 = arith.constant 0 : index
    %c255 = arith.constant 255 : index
    %c0_46 = arith.constant 0 : index
    %c0_47 = arith.constant 0 : index
    %30 = vector.load %arg1[%c0_45, %c255, %c0_46, %c0_47] : memref<1x272x17x3xbf16, #tpu.memory_space<vmem>>, vector<1x17x17x3xbf16>
    %31 = vector.shape_cast %30 : vector<1x17x17x3xbf16> to vector<17x17x3xbf16>
    %32 = vector.extract_strided_slice %1 {offsets = [0, 0, 0], sizes = [16, 16, 3], strides = [1, 1, 1]} : vector<17x17x3xbf16> to vector<16x16x3xbf16>
    %33 = vector.shape_cast %32 : vector<16x16x3xbf16> to vector<256x3xbf16>
    %34 = vector.extract_strided_slice %3 {offsets = [0, 0, 0], sizes = [16, 16, 3], strides = [1, 1, 1]} : vector<17x17x3xbf16> to vector<16x16x3xbf16>
    %35 = vector.shape_cast %34 : vector<16x16x3xbf16> to vector<256x3xbf16>
    %36 = vector.extract_strided_slice %5 {offsets = [0, 0, 0], sizes = [16, 16, 3], strides = [1, 1, 1]} : vector<17x17x3xbf16> to vector<16x16x3xbf16>
    %37 = vector.shape_cast %36 : vector<16x16x3xbf16> to vector<256x3xbf16>
    %38 = vector.extract_strided_slice %9 {offsets = [0, 0, 0], sizes = [16, 16, 3], strides = [1, 1, 1]} : vector<17x17x3xbf16> to vector<16x16x3xbf16>
    %39 = vector.shape_cast %38 : vector<16x16x3xbf16> to vector<256x3xbf16>
    %40 = vector.extract_strided_slice %11 {offsets = [0, 0, 0], sizes = [16, 16, 3], strides = [1, 1, 1]} : vector<17x17x3xbf16> to vector<16x16x3xbf16>
    %41 = vector.shape_cast %40 : vector<16x16x3xbf16> to vector<256x3xbf16>
    %42 = vector.extract_strided_slice %13 {offsets = [0, 0, 0], sizes = [16, 16, 3], strides = [1, 1, 1]} : vector<17x17x3xbf16> to vector<16x16x3xbf16>
    %43 = vector.shape_cast %42 : vector<16x16x3xbf16> to vector<256x3xbf16>
    %44 = vector.extract_strided_slice %17 {offsets = [0, 0, 0], sizes = [16, 16, 3], strides = [1, 1, 1]} : vector<17x17x3xbf16> to vector<16x16x3xbf16>
    %45 = vector.shape_cast %44 : vector<16x16x3xbf16> to vector<256x3xbf16>
    %46 = vector.extract_strided_slice %19 {offsets = [0, 0, 0], sizes = [16, 16, 3], strides = [1, 1, 1]} : vector<17x17x3xbf16> to vector<16x16x3xbf16>
    %47 = vector.shape_cast %46 : vector<16x16x3xbf16> to vector<256x3xbf16>
    %48 = vector.extract_strided_slice %21 {offsets = [0, 0, 0], sizes = [16, 16, 3], strides = [1, 1, 1]} : vector<17x17x3xbf16> to vector<16x16x3xbf16>
    %49 = vector.shape_cast %48 : vector<16x16x3xbf16> to vector<256x3xbf16>
    %50 = tpu.concatenate %33, %35, %37, %39, %41, %43, %45, %47, %49 in 1 : vector<256x3xbf16>, vector<256x3xbf16>, vector<256x3xbf16>, vector<256x3xbf16>, vector<256x3xbf16>, vector<256x3xbf16>, vector<256x3xbf16>, vector<256x3xbf16>, vector<256x3xbf16> -> vector<256x27xbf16>
    %51 = vector.extract_strided_slice %5 {offsets = [0, 0, 0], sizes = [16, 16, 3], strides = [1, 1, 1]} : vector<17x17x3xbf16> to vector<16x16x3xbf16>
    %52 = vector.shape_cast %51 : vector<16x16x3xbf16> to vector<256x3xbf16>
    %53 = vector.extract_strided_slice %7 {offsets = [0, 0, 0], sizes = [16, 16, 3], strides = [1, 1, 1]} : vector<17x17x3xbf16> to vector<16x16x3xbf16>
    %54 = vector.shape_cast %53 : vector<16x16x3xbf16> to vector<256x3xbf16>
    %55 = vector.extract_strided_slice %1 {offsets = [0, 1, 0], sizes = [16, 16, 3], strides = [1, 1, 1]} : vector<17x17x3xbf16> to vector<16x16x3xbf16>
    %56 = vector.shape_cast %55 : vector<16x16x3xbf16> to vector<256x3xbf16>
    %57 = vector.extract_strided_slice %13 {offsets = [0, 0, 0], sizes = [16, 16, 3], strides = [1, 1, 1]} : vector<17x17x3xbf16> to vector<16x16x3xbf16>
    %58 = vector.shape_cast %57 : vector<16x16x3xbf16> to vector<256x3xbf16>
    %59 = vector.extract_strided_slice %15 {offsets = [0, 0, 0], sizes = [16, 16, 3], strides = [1, 1, 1]} : vector<17x17x3xbf16> to vector<16x16x3xbf16>
    %60 = vector.shape_cast %59 : vector<16x16x3xbf16> to vector<256x3xbf16>
    %61 = vector.extract_strided_slice %9 {offsets = [0, 1, 0], sizes = [16, 16, 3], strides = [1, 1, 1]} : vector<17x17x3xbf16> to vector<16x16x3xbf16>
    %62 = vector.shape_cast %61 : vector<16x16x3xbf16> to vector<256x3xbf16>
    %63 = vector.extract_strided_slice %21 {offsets = [0, 0, 0], sizes = [16, 16, 3], strides = [1, 1, 1]} : vector<17x17x3xbf16> to vector<16x16x3xbf16>
    %64 = vector.shape_cast %63 : vector<16x16x3xbf16> to vector<256x3xbf16>
    %65 = vector.extract_strided_slice %23 {offsets = [0, 0, 0], sizes = [16, 16, 3], strides = [1, 1, 1]} : vector<17x17x3xbf16> to vector<16x16x3xbf16>
    %66 = vector.shape_cast %65 : vector<16x16x3xbf16> to vector<256x3xbf16>
    %67 = vector.extract_strided_slice %17 {offsets = [0, 1, 0], sizes = [16, 16, 3], strides = [1, 1, 1]} : vector<17x17x3xbf16> to vector<16x16x3xbf16>
    %68 = vector.shape_cast %67 : vector<16x16x3xbf16> to vector<256x3xbf16>
    %69 = tpu.concatenate %52, %54, %56, %58, %60, %62, %64, %66, %68 in 1 : vector<256x3xbf16>, vector<256x3xbf16>, vector<256x3xbf16>, vector<256x3xbf16>, vector<256x3xbf16>, vector<256x3xbf16>, vector<256x3xbf16>, vector<256x3xbf16>, vector<256x3xbf16> -> vector<256x27xbf16>
    %70 = vector.extract_strided_slice %17 {offsets = [0, 0, 0], sizes = [16, 16, 3], strides = [1, 1, 1]} : vector<17x17x3xbf16> to vector<16x16x3xbf16>
    %71 = vector.shape_cast %70 : vector<16x16x3xbf16> to vector<256x3xbf16>
    %72 = vector.extract_strided_slice %19 {offsets = [0, 0, 0], sizes = [16, 16, 3], strides = [1, 1, 1]} : vector<17x17x3xbf16> to vector<16x16x3xbf16>
    %73 = vector.shape_cast %72 : vector<16x16x3xbf16> to vector<256x3xbf16>
    %74 = vector.extract_strided_slice %21 {offsets = [0, 0, 0], sizes = [16, 16, 3], strides = [1, 1, 1]} : vector<17x17x3xbf16> to vector<16x16x3xbf16>
    %75 = vector.shape_cast %74 : vector<16x16x3xbf16> to vector<256x3xbf16>
    %76 = vector.extract_strided_slice %25 {offsets = [0, 0, 0], sizes = [16, 16, 3], strides = [1, 1, 1]} : vector<17x17x3xbf16> to vector<16x16x3xbf16>
    %77 = vector.shape_cast %76 : vector<16x16x3xbf16> to vector<256x3xbf16>
    %78 = vector.extract_strided_slice %27 {offsets = [0, 0, 0], sizes = [16, 16, 3], strides = [1, 1, 1]} : vector<17x17x3xbf16> to vector<16x16x3xbf16>
    %79 = vector.shape_cast %78 : vector<16x16x3xbf16> to vector<256x3xbf16>
    %80 = vector.extract_strided_slice %29 {offsets = [0, 0, 0], sizes = [16, 16, 3], strides = [1, 1, 1]} : vector<17x17x3xbf16> to vector<16x16x3xbf16>
    %81 = vector.shape_cast %80 : vector<16x16x3xbf16> to vector<256x3xbf16>
    %82 = vector.extract_strided_slice %1 {offsets = [1, 0, 0], sizes = [16, 16, 3], strides = [1, 1, 1]} : vector<17x17x3xbf16> to vector<16x16x3xbf16>
    %83 = vector.shape_cast %82 : vector<16x16x3xbf16> to vector<256x3xbf16>
    %84 = vector.extract_strided_slice %3 {offsets = [1, 0, 0], sizes = [16, 16, 3], strides = [1, 1, 1]} : vector<17x17x3xbf16> to vector<16x16x3xbf16>
    %85 = vector.shape_cast %84 : vector<16x16x3xbf16> to vector<256x3xbf16>
    %86 = vector.extract_strided_slice %5 {offsets = [1, 0, 0], sizes = [16, 16, 3], strides = [1, 1, 1]} : vector<17x17x3xbf16> to vector<16x16x3xbf16>
    %87 = vector.shape_cast %86 : vector<16x16x3xbf16> to vector<256x3xbf16>
    %88 = tpu.concatenate %71, %73, %75, %77, %79, %81, %83, %85, %87 in 1 : vector<256x3xbf16>, vector<256x3xbf16>, vector<256x3xbf16>, vector<256x3xbf16>, vector<256x3xbf16>, vector<256x3xbf16>, vector<256x3xbf16>, vector<256x3xbf16>, vector<256x3xbf16> -> vector<256x27xbf16>
    %89 = vector.extract_strided_slice %21 {offsets = [0, 0, 0], sizes = [16, 16, 3], strides = [1, 1, 1]} : vector<17x17x3xbf16> to vector<16x16x3xbf16>
    %90 = vector.shape_cast %89 : vector<16x16x3xbf16> to vector<256x3xbf16>
    %91 = vector.extract_strided_slice %23 {offsets = [0, 0, 0], sizes = [16, 16, 3], strides = [1, 1, 1]} : vector<17x17x3xbf16> to vector<16x16x3xbf16>
    %92 = vector.shape_cast %91 : vector<16x16x3xbf16> to vector<256x3xbf16>
    %93 = vector.extract_strided_slice %17 {offsets = [0, 1, 0], sizes = [16, 16, 3], strides = [1, 1, 1]} : vector<17x17x3xbf16> to vector<16x16x3xbf16>
    %94 = vector.shape_cast %93 : vector<16x16x3xbf16> to vector<256x3xbf16>
    %95 = vector.extract_strided_slice %29 {offsets = [0, 0, 0], sizes = [16, 16, 3], strides = [1, 1, 1]} : vector<17x17x3xbf16> to vector<16x16x3xbf16>
    %96 = vector.shape_cast %95 : vector<16x16x3xbf16> to vector<256x3xbf16>
    %97 = vector.extract_strided_slice %31 {offsets = [0, 0, 0], sizes = [16, 16, 3], strides = [1, 1, 1]} : vector<17x17x3xbf16> to vector<16x16x3xbf16>
    %98 = vector.shape_cast %97 : vector<16x16x3xbf16> to vector<256x3xbf16>
    %99 = vector.extract_strided_slice %25 {offsets = [0, 1, 0], sizes = [16, 16, 3], strides = [1, 1, 1]} : vector<17x17x3xbf16> to vector<16x16x3xbf16>
    %100 = vector.shape_cast %99 : vector<16x16x3xbf16> to vector<256x3xbf16>
    %101 = vector.extract_strided_slice %5 {offsets = [1, 0, 0], sizes = [16, 16, 3], strides = [1, 1, 1]} : vector<17x17x3xbf16> to vector<16x16x3xbf16>
    %102 = vector.shape_cast %101 : vector<16x16x3xbf16> to vector<256x3xbf16>
    %103 = vector.extract_strided_slice %7 {offsets = [1, 0, 0], sizes = [16, 16, 3], strides = [1, 1, 1]} : vector<17x17x3xbf16> to vector<16x16x3xbf16>
    %104 = vector.shape_cast %103 : vector<16x16x3xbf16> to vector<256x3xbf16>
    %105 = vector.extract_strided_slice %1 {offsets = [1, 1, 0], sizes = [16, 16, 3], strides = [1, 1, 1]} : vector<17x17x3xbf16> to vector<16x16x3xbf16>
    %106 = vector.shape_cast %105 : vector<16x16x3xbf16> to vector<256x3xbf16>
    %107 = tpu.concatenate %90, %92, %94, %96, %98, %100, %102, %104, %106 in 1 : vector<256x3xbf16>, vector<256x3xbf16>, vector<256x3xbf16>, vector<256x3xbf16>, vector<256x3xbf16>, vector<256x3xbf16>, vector<256x3xbf16>, vector<256x3xbf16>, vector<256x3xbf16> -> vector<256x27xbf16>
    %108 = tpu.concatenate %50, %69, %88, %107 in 0 : vector<256x27xbf16>, vector<256x27xbf16>, vector<256x27xbf16>, vector<256x27xbf16> -> vector<1024x27xbf16>
    %c0_48 = arith.constant 0 : index
    %c0_49 = arith.constant 0 : index
    %109 = vector.load %arg2[%c0_48, %c0_49] : memref<27x128xbf16, #tpu.memory_space<vmem>>, vector<27x128xbf16>
    %cst = arith.constant dense<0.000000e+00> : vector<1024x128xf32>
    %110 = tpu.matmul %108, %109, %cst {dimension_numbers = #tpu.dot_dimension_numbers<[1], [0], [0], [1], [0, 0, 1, 1], [], []>} : vector<1024x27xbf16>, vector<27x128xbf16>, vector<1024x128xf32> -> vector<1024x128xf32>
    %c0_50 = arith.constant 0 : index
    %c0_51 = arith.constant 0 : index
    %111 = vector.load %arg3[%c0_50, %c0_51] : memref<1x128xf32, #tpu.memory_space<vmem>>, vector<1x128xf32>
    %112 = vector.broadcast %111 : vector<1x128xf32> to vector<1024x128xf32>
    %113 = arith.addf %110, %112 : vector<1024x128xf32>
    %cst_52 = arith.constant 0.000000e+00 : f32
    %114 = vector.broadcast %cst_52 : f32 to vector<1024x128xf32>
    %115 = arith.maximumf %113, %114 : vector<1024x128xf32>
    %116 = vector.extract_strided_slice %115 {offsets = [0, 0], sizes = [256, 32], strides = [1, 1]} : vector<1024x128xf32> to vector<256x32xf32>
    %117 = vector.shape_cast %116 : vector<256x32xf32> to vector<16x16x32xf32>
    %cst_53 = arith.constant 0.000000e+00 : f32
    %118 = vector.broadcast %cst_53 : f32 to vector<16x1x32xf32>
    %119 = tpu.concatenate %118, %117 in 1 : vector<16x1x32xf32>, vector<16x16x32xf32> -> vector<16x17x32xf32>
    %cst_54 = arith.constant 0.000000e+00 : f32
    %120 = vector.broadcast %cst_54 : f32 to vector<1x17x32xf32>
    %121 = tpu.concatenate %120, %119 in 0 : vector<1x17x32xf32>, vector<16x17x32xf32> -> vector<17x17x32xf32>
    %122 = vector.extract_strided_slice %115 {offsets = [256, 0], sizes = [256, 32], strides = [1, 1]} : vector<1024x128xf32> to vector<256x32xf32>
    %123 = vector.shape_cast %122 : vector<256x32xf32> to vector<16x16x32xf32>
    %cst_55 = arith.constant 0.000000e+00 : f32
    %124 = vector.broadcast %cst_55 : f32 to vector<16x1x32xf32>
    %125 = tpu.concatenate %124, %123 in 1 : vector<16x1x32xf32>, vector<16x16x32xf32> -> vector<16x17x32xf32>
    %cst_56 = arith.constant 0.000000e+00 : f32
    %126 = vector.broadcast %cst_56 : f32 to vector<1x17x32xf32>
    %127 = tpu.concatenate %126, %125 in 0 : vector<1x17x32xf32>, vector<16x17x32xf32> -> vector<17x17x32xf32>
    %128 = vector.extract_strided_slice %115 {offsets = [512, 0], sizes = [256, 32], strides = [1, 1]} : vector<1024x128xf32> to vector<256x32xf32>
    %129 = vector.shape_cast %128 : vector<256x32xf32> to vector<16x16x32xf32>
    %cst_57 = arith.constant 0.000000e+00 : f32
    %130 = vector.broadcast %cst_57 : f32 to vector<16x1x32xf32>
    %131 = tpu.concatenate %130, %129 in 1 : vector<16x1x32xf32>, vector<16x16x32xf32> -> vector<16x17x32xf32>
    %cst_58 = arith.constant 0.000000e+00 : f32
    %132 = vector.broadcast %cst_58 : f32 to vector<1x17x32xf32>
    %133 = tpu.concatenate %132, %131 in 0 : vector<1x17x32xf32>, vector<16x17x32xf32> -> vector<17x17x32xf32>
    %134 = vector.extract_strided_slice %115 {offsets = [768, 0], sizes = [256, 32], strides = [1, 1]} : vector<1024x128xf32> to vector<256x32xf32>
    %135 = vector.shape_cast %134 : vector<256x32xf32> to vector<16x16x32xf32>
    %cst_59 = arith.constant 0.000000e+00 : f32
    %136 = vector.broadcast %cst_59 : f32 to vector<16x1x32xf32>
    %137 = tpu.concatenate %136, %135 in 1 : vector<16x1x32xf32>, vector<16x16x32xf32> -> vector<16x17x32xf32>
    %cst_60 = arith.constant 0.000000e+00 : f32
    %138 = vector.broadcast %cst_60 : f32 to vector<1x17x32xf32>
    %139 = tpu.concatenate %138, %137 in 0 : vector<1x17x32xf32>, vector<16x17x32xf32> -> vector<17x17x32xf32>
    %140 = vector.extract_strided_slice %139 {offsets = [0, 0, 0], sizes = [16, 16, 32], strides = [1, 1, 1]} : vector<17x17x32xf32> to vector<16x16x32xf32>
    %141 = vector.shape_cast %140 : vector<16x16x32xf32> to vector<256x32xf32>
    %142 = vector.extract_strided_slice %133 {offsets = [0, 1, 0], sizes = [16, 16, 32], strides = [1, 1, 1]} : vector<17x17x32xf32> to vector<16x16x32xf32>
    %143 = vector.shape_cast %142 : vector<16x16x32xf32> to vector<256x32xf32>
    %144 = vector.extract_strided_slice %139 {offsets = [0, 1, 0], sizes = [16, 16, 32], strides = [1, 1, 1]} : vector<17x17x32xf32> to vector<16x16x32xf32>
    %145 = vector.shape_cast %144 : vector<16x16x32xf32> to vector<256x32xf32>
    %146 = vector.extract_strided_slice %127 {offsets = [1, 0, 0], sizes = [16, 16, 32], strides = [1, 1, 1]} : vector<17x17x32xf32> to vector<16x16x32xf32>
    %147 = vector.shape_cast %146 : vector<16x16x32xf32> to vector<256x32xf32>
    %148 = vector.extract_strided_slice %121 {offsets = [1, 1, 0], sizes = [16, 16, 32], strides = [1, 1, 1]} : vector<17x17x32xf32> to vector<16x16x32xf32>
    %149 = vector.shape_cast %148 : vector<16x16x32xf32> to vector<256x32xf32>
    %150 = vector.extract_strided_slice %127 {offsets = [1, 1, 0], sizes = [16, 16, 32], strides = [1, 1, 1]} : vector<17x17x32xf32> to vector<16x16x32xf32>
    %151 = vector.shape_cast %150 : vector<16x16x32xf32> to vector<256x32xf32>
    %152 = vector.extract_strided_slice %139 {offsets = [1, 0, 0], sizes = [16, 16, 32], strides = [1, 1, 1]} : vector<17x17x32xf32> to vector<16x16x32xf32>
    %153 = vector.shape_cast %152 : vector<16x16x32xf32> to vector<256x32xf32>
    %154 = vector.extract_strided_slice %133 {offsets = [1, 1, 0], sizes = [16, 16, 32], strides = [1, 1, 1]} : vector<17x17x32xf32> to vector<16x16x32xf32>
    %155 = vector.shape_cast %154 : vector<16x16x32xf32> to vector<256x32xf32>
    %156 = vector.extract_strided_slice %139 {offsets = [1, 1, 0], sizes = [16, 16, 32], strides = [1, 1, 1]} : vector<17x17x32xf32> to vector<16x16x32xf32>
    %157 = vector.shape_cast %156 : vector<16x16x32xf32> to vector<256x32xf32>
    %158 = tpu.concatenate %141, %143, %145, %147, %149, %151, %153, %155, %157 in 1 : vector<256x32xf32>, vector<256x32xf32>, vector<256x32xf32>, vector<256x32xf32>, vector<256x32xf32>, vector<256x32xf32>, vector<256x32xf32>, vector<256x32xf32>, vector<256x32xf32> -> vector<256x288xf32>
    %159 = arith.truncf %158 : vector<256x288xf32> to vector<256x288xbf16>
    %c0_61 = arith.constant 0 : index
    %c0_62 = arith.constant 0 : index
    %160 = vector.load %arg4[%c0_61, %c0_62] : memref<288x128xbf16, #tpu.memory_space<vmem>>, vector<288x128xbf16>
    %cst_63 = arith.constant dense<0.000000e+00> : vector<256x128xf32>
    %161 = tpu.matmul %159, %160, %cst_63 {dimension_numbers = #tpu.dot_dimension_numbers<[1], [0], [0], [1], [0, 0, 1, 1], [], []>} : vector<256x288xbf16>, vector<288x128xbf16>, vector<256x128xf32> -> vector<256x128xf32>
    %c0_64 = arith.constant 0 : index
    %c0_65 = arith.constant 0 : index
    %162 = vector.load %arg5[%c0_64, %c0_65] : memref<1x128xf32, #tpu.memory_space<vmem>>, vector<1x128xf32>
    %163 = vector.broadcast %162 : vector<1x128xf32> to vector<256x128xf32>
    %164 = arith.addf %161, %163 : vector<256x128xf32>
    %cst_66 = arith.constant 0.000000e+00 : f32
    %165 = vector.broadcast %cst_66 : f32 to vector<256x128xf32>
    %166 = arith.maximumf %164, %165 : vector<256x128xf32>
    %167 = vector.extract_strided_slice %166 {offsets = [0, 32], sizes = [256, 16], strides = [1, 1]} : vector<256x128xf32> to vector<256x16xf32>
    %cst_67 = arith.constant dense<0.000000e+00> : vector<16xf32>
    %168 = vector.multi_reduction <add>, %167, %cst_67 [0] : vector<256x16xf32> to vector<16xf32>
    %169 = vector.shape_cast %168 : vector<16xf32> to vector<1x16xf32>
    %cst_68 = arith.constant 3.906250e-03 : f32
    %170 = vector.broadcast %cst_68 : f32 to vector<1x16xf32>
    %171 = arith.mulf %169, %170 : vector<1x16xf32>
    %172 = vector.extract_strided_slice %166 {offsets = [0, 0], sizes = [256, 32], strides = [1, 1]} : vector<256x128xf32> to vector<256x32xf32>
    %173 = vector.shape_cast %172 : vector<256x32xf32> to vector<16x16x32xf32>
    %cst_69 = arith.constant 0.000000e+00 : f32
    %174 = vector.broadcast %cst_69 : f32 to vector<16x1x32xf32>
    %175 = tpu.concatenate %174, %173, %174 in 1 : vector<16x1x32xf32>, vector<16x16x32xf32>, vector<16x1x32xf32> -> vector<16x18x32xf32>
    %cst_70 = arith.constant 0.000000e+00 : f32
    %176 = vector.broadcast %cst_70 : f32 to vector<1x18x32xf32>
    %177 = tpu.concatenate %176, %175, %176 in 0 : vector<1x18x32xf32>, vector<16x18x32xf32>, vector<1x18x32xf32> -> vector<18x18x32xf32>
    %cst_71 = arith.constant 0.000000e+00 : f32
    %178 = vector.broadcast %cst_71 : f32 to vector<1x128xf32>
    %179 = vector.extract_strided_slice %177 {offsets = [0, 0, 0], sizes = [8, 16, 32], strides = [1, 1, 1]} : vector<18x18x32xf32> to vector<8x16x32xf32>
    %180 = vector.shape_cast %179 : vector<8x16x32xf32> to vector<128x32xf32>
    %181 = vector.extract_strided_slice %177 {offsets = [0, 1, 0], sizes = [8, 16, 32], strides = [1, 1, 1]} : vector<18x18x32xf32> to vector<8x16x32xf32>
    %182 = vector.shape_cast %181 : vector<8x16x32xf32> to vector<128x32xf32>
    %183 = vector.extract_strided_slice %177 {offsets = [0, 2, 0], sizes = [8, 16, 32], strides = [1, 1, 1]} : vector<18x18x32xf32> to vector<8x16x32xf32>
    %184 = vector.shape_cast %183 : vector<8x16x32xf32> to vector<128x32xf32>
    %185 = vector.extract_strided_slice %177 {offsets = [1, 0, 0], sizes = [8, 16, 32], strides = [1, 1, 1]} : vector<18x18x32xf32> to vector<8x16x32xf32>
    %186 = vector.shape_cast %185 : vector<8x16x32xf32> to vector<128x32xf32>
    %187 = vector.extract_strided_slice %177 {offsets = [1, 1, 0], sizes = [8, 16, 32], strides = [1, 1, 1]} : vector<18x18x32xf32> to vector<8x16x32xf32>
    %188 = vector.shape_cast %187 : vector<8x16x32xf32> to vector<128x32xf32>
    %189 = vector.extract_strided_slice %177 {offsets = [1, 2, 0], sizes = [8, 16, 32], strides = [1, 1, 1]} : vector<18x18x32xf32> to vector<8x16x32xf32>
    %190 = vector.shape_cast %189 : vector<8x16x32xf32> to vector<128x32xf32>
    %191 = vector.extract_strided_slice %177 {offsets = [2, 0, 0], sizes = [8, 16, 32], strides = [1, 1, 1]} : vector<18x18x32xf32> to vector<8x16x32xf32>
    %192 = vector.shape_cast %191 : vector<8x16x32xf32> to vector<128x32xf32>
    %193 = vector.extract_strided_slice %177 {offsets = [2, 1, 0], sizes = [8, 16, 32], strides = [1, 1, 1]} : vector<18x18x32xf32> to vector<8x16x32xf32>
    %194 = vector.shape_cast %193 : vector<8x16x32xf32> to vector<128x32xf32>
    %195 = vector.extract_strided_slice %177 {offsets = [2, 2, 0], sizes = [8, 16, 32], strides = [1, 1, 1]} : vector<18x18x32xf32> to vector<8x16x32xf32>
    %196 = vector.shape_cast %195 : vector<8x16x32xf32> to vector<128x32xf32>
    %197 = tpu.concatenate %180, %182, %184, %186, %188, %190, %192, %194, %196 in 1 : vector<128x32xf32>, vector<128x32xf32>, vector<128x32xf32>, vector<128x32xf32>, vector<128x32xf32>, vector<128x32xf32>, vector<128x32xf32>, vector<128x32xf32>, vector<128x32xf32> -> vector<128x288xf32>
    %198 = arith.truncf %197 : vector<128x288xf32> to vector<128x288xbf16>
    %c0_72 = arith.constant 0 : index
    %c0_73 = arith.constant 0 : index
    %199 = vector.load %arg6[%c0_72, %c0_73] : memref<288x128xbf16, #tpu.memory_space<vmem>>, vector<288x128xbf16>
    %cst_74 = arith.constant dense<0.000000e+00> : vector<128x128xf32>
    %200 = tpu.matmul %198, %199, %cst_74 {dimension_numbers = #tpu.dot_dimension_numbers<[1], [0], [0], [1], [0, 0, 1, 1], [], []>} : vector<128x288xbf16>, vector<288x128xbf16>, vector<128x128xf32> -> vector<128x128xf32>
    %c0_75 = arith.constant 0 : index
    %c0_76 = arith.constant 0 : index
    %201 = vector.load %arg7[%c0_75, %c0_76] : memref<1x128xf32, #tpu.memory_space<vmem>>, vector<1x128xf32>
    %202 = vector.broadcast %201 : vector<1x128xf32> to vector<128x128xf32>
    %203 = arith.addf %200, %202 : vector<128x128xf32>
    %cst_77 = arith.constant 0.000000e+00 : f32
    %204 = vector.broadcast %cst_77 : f32 to vector<128x128xf32>
    %205 = arith.maximumf %203, %204 : vector<128x128xf32>
    %cst_78 = arith.constant dense<0.000000e+00> : vector<128xf32>
    %206 = vector.multi_reduction <add>, %205, %cst_78 [0] : vector<128x128xf32> to vector<128xf32>
    %207 = vector.shape_cast %206 : vector<128xf32> to vector<1x128xf32>
    %208 = arith.addf %178, %207 : vector<1x128xf32>
    %209 = vector.extract_strided_slice %177 {offsets = [8, 0, 0], sizes = [8, 16, 32], strides = [1, 1, 1]} : vector<18x18x32xf32> to vector<8x16x32xf32>
    %210 = vector.shape_cast %209 : vector<8x16x32xf32> to vector<128x32xf32>
    %211 = vector.extract_strided_slice %177 {offsets = [8, 1, 0], sizes = [8, 16, 32], strides = [1, 1, 1]} : vector<18x18x32xf32> to vector<8x16x32xf32>
    %212 = vector.shape_cast %211 : vector<8x16x32xf32> to vector<128x32xf32>
    %213 = vector.extract_strided_slice %177 {offsets = [8, 2, 0], sizes = [8, 16, 32], strides = [1, 1, 1]} : vector<18x18x32xf32> to vector<8x16x32xf32>
    %214 = vector.shape_cast %213 : vector<8x16x32xf32> to vector<128x32xf32>
    %215 = vector.extract_strided_slice %177 {offsets = [9, 0, 0], sizes = [8, 16, 32], strides = [1, 1, 1]} : vector<18x18x32xf32> to vector<8x16x32xf32>
    %216 = vector.shape_cast %215 : vector<8x16x32xf32> to vector<128x32xf32>
    %217 = vector.extract_strided_slice %177 {offsets = [9, 1, 0], sizes = [8, 16, 32], strides = [1, 1, 1]} : vector<18x18x32xf32> to vector<8x16x32xf32>
    %218 = vector.shape_cast %217 : vector<8x16x32xf32> to vector<128x32xf32>
    %219 = vector.extract_strided_slice %177 {offsets = [9, 2, 0], sizes = [8, 16, 32], strides = [1, 1, 1]} : vector<18x18x32xf32> to vector<8x16x32xf32>
    %220 = vector.shape_cast %219 : vector<8x16x32xf32> to vector<128x32xf32>
    %221 = vector.extract_strided_slice %177 {offsets = [10, 0, 0], sizes = [8, 16, 32], strides = [1, 1, 1]} : vector<18x18x32xf32> to vector<8x16x32xf32>
    %222 = vector.shape_cast %221 : vector<8x16x32xf32> to vector<128x32xf32>
    %223 = vector.extract_strided_slice %177 {offsets = [10, 1, 0], sizes = [8, 16, 32], strides = [1, 1, 1]} : vector<18x18x32xf32> to vector<8x16x32xf32>
    %224 = vector.shape_cast %223 : vector<8x16x32xf32> to vector<128x32xf32>
    %225 = vector.extract_strided_slice %177 {offsets = [10, 2, 0], sizes = [8, 16, 32], strides = [1, 1, 1]} : vector<18x18x32xf32> to vector<8x16x32xf32>
    %226 = vector.shape_cast %225 : vector<8x16x32xf32> to vector<128x32xf32>
    %227 = tpu.concatenate %210, %212, %214, %216, %218, %220, %222, %224, %226 in 1 : vector<128x32xf32>, vector<128x32xf32>, vector<128x32xf32>, vector<128x32xf32>, vector<128x32xf32>, vector<128x32xf32>, vector<128x32xf32>, vector<128x32xf32>, vector<128x32xf32> -> vector<128x288xf32>
    %228 = arith.truncf %227 : vector<128x288xf32> to vector<128x288xbf16>
    %c0_79 = arith.constant 0 : index
    %c0_80 = arith.constant 0 : index
    %229 = vector.load %arg6[%c0_79, %c0_80] : memref<288x128xbf16, #tpu.memory_space<vmem>>, vector<288x128xbf16>
    %cst_81 = arith.constant dense<0.000000e+00> : vector<128x128xf32>
    %230 = tpu.matmul %228, %229, %cst_81 {dimension_numbers = #tpu.dot_dimension_numbers<[1], [0], [0], [1], [0, 0, 1, 1], [], []>} : vector<128x288xbf16>, vector<288x128xbf16>, vector<128x128xf32> -> vector<128x128xf32>
    %c0_82 = arith.constant 0 : index
    %c0_83 = arith.constant 0 : index
    %231 = vector.load %arg7[%c0_82, %c0_83] : memref<1x128xf32, #tpu.memory_space<vmem>>, vector<1x128xf32>
    %232 = vector.broadcast %231 : vector<1x128xf32> to vector<128x128xf32>
    %233 = arith.addf %230, %232 : vector<128x128xf32>
    %cst_84 = arith.constant 0.000000e+00 : f32
    %234 = vector.broadcast %cst_84 : f32 to vector<128x128xf32>
    %235 = arith.maximumf %233, %234 : vector<128x128xf32>
    %cst_85 = arith.constant dense<0.000000e+00> : vector<128xf32>
    %236 = vector.multi_reduction <add>, %235, %cst_85 [0] : vector<128x128xf32> to vector<128xf32>
    %237 = vector.shape_cast %236 : vector<128xf32> to vector<1x128xf32>
    %238 = arith.addf %208, %237 : vector<1x128xf32>
    %cst_86 = arith.constant 3.906250e-03 : f32
    %239 = vector.broadcast %cst_86 : f32 to vector<1x128xf32>
    %240 = arith.mulf %238, %239 : vector<1x128xf32>
    %241 = vector.extract_strided_slice %240 {offsets = [0, 0], sizes = [1, 32], strides = [1, 1]} : vector<1x128xf32> to vector<1x32xf32>
    %242 = tpu.concatenate %241, %171 in 1 : vector<1x32xf32>, vector<1x16xf32> -> vector<1x48xf32>
    %c0_87 = arith.constant 0 : index
    %c0_88 = arith.constant 0 : index
    %243 = vector.load %arg8[%c0_87, %c0_88] : memref<48x128xf32, #tpu.memory_space<vmem>>, vector<48x128xf32>
    %cst_89 = arith.constant dense<0.000000e+00> : vector<1x128xf32>
    %244 = tpu.matmul %242, %243, %cst_89 {dimension_numbers = #tpu.dot_dimension_numbers<[1], [0], [0], [1], [0, 0, 1, 1], [], []>} : vector<1x48xf32>, vector<48x128xf32>, vector<1x128xf32> -> vector<1x128xf32>
    %c0_90 = arith.constant 0 : index
    %c0_91 = arith.constant 0 : index
    %245 = vector.load %arg9[%c0_90, %c0_91] : memref<1x128xf32, #tpu.memory_space<vmem>>, vector<1x128xf32>
    %246 = arith.addf %244, %245 : vector<1x128xf32>
    %247 = tpu.iota {dimensions = array<i32: 1>} : vector<1x128xi32>
    %c42_i32 = arith.constant 42 : i32
    %248 = vector.broadcast %c42_i32 : i32 to vector<1x128xi32>
    %249 = arith.cmpi sge, %247, %248 : vector<1x128xi32>
    %c84_i32 = arith.constant 84 : i32
    %250 = vector.broadcast %c84_i32 : i32 to vector<1x128xi32>
    %251 = arith.cmpi slt, %247, %250 : vector<1x128xi32>
    %252 = arith.andi %249, %251 : vector<1x128xi1>
    %253 = arith.negf %246 : vector<1x128xf32>
    %254 = math.exp %253 : vector<1x128xf32>
    %cst_92 = arith.constant 1.000000e+00 : f32
    %255 = vector.broadcast %cst_92 : f32 to vector<1x128xf32>
    %256 = arith.addf %255, %254 : vector<1x128xf32>
    %257 = arith.divf %255, %256 : vector<1x128xf32>
    %258 = arith.select %252, %257, %246 : vector<1x128xi1>, vector<1x128xf32>
    %259 = vector.shape_cast %258 : vector<1x128xf32> to vector<1x1x128xf32>
    %c0_93 = arith.constant 0 : index
    %c0_94 = arith.constant 0 : index
    %c0_95 = arith.constant 0 : index
    %260 = vector.load %arg10[%c0_93, %c0_94, %c0_95] : memref<1x1x128xf32, #tpu.memory_space<vmem>>, vector<1x1x128xf32>
    tpu.vector_store %arg10[%c0_93, %c0_94, %c0_95], %259 {strides = array<i32>} : memref<1x1x128xf32, #tpu.memory_space<vmem>>, vector<1x1x128xf32>,
    return
  }
  func.func @transform_0(%arg0: i32) -> (i32, i32, i32, i32) {
    %c0_i32 = arith.constant 0 : i32
    %c0_i32_0 = arith.constant 0 : i32
    %c0_i32_1 = arith.constant 0 : i32
    %c0_i32_2 = arith.constant 0 : i32
    return %arg0, %c0_i32, %c0_i32_0, %c0_i32_1 : i32, i32, i32, i32
  }
  func.func @transform_1(%arg0: i32) -> (i32, i32) {
    %c0_i32 = arith.constant 0 : i32
    %c0_i32_0 = arith.constant 0 : i32
    %c0_i32_1 = arith.constant 0 : i32
    return %c0_i32, %c0_i32_0 : i32, i32
  }
  func.func @transform_2(%arg0: i32) -> (i32, i32) {
    %c0_i32 = arith.constant 0 : i32
    %c0_i32_0 = arith.constant 0 : i32
    %c0_i32_1 = arith.constant 0 : i32
    return %c0_i32, %c0_i32_0 : i32, i32
  }
  func.func @transform_3(%arg0: i32) -> (i32, i32) {
    %c0_i32 = arith.constant 0 : i32
    %c0_i32_0 = arith.constant 0 : i32
    %c0_i32_1 = arith.constant 0 : i32
    return %c0_i32, %c0_i32_0 : i32, i32
  }
  func.func @transform_4(%arg0: i32) -> (i32, i32) {
    %c0_i32 = arith.constant 0 : i32
    %c0_i32_0 = arith.constant 0 : i32
    %c0_i32_1 = arith.constant 0 : i32
    return %c0_i32, %c0_i32_0 : i32, i32
  }
  func.func @transform_5(%arg0: i32) -> (i32, i32) {
    %c0_i32 = arith.constant 0 : i32
    %c0_i32_0 = arith.constant 0 : i32
    %c0_i32_1 = arith.constant 0 : i32
    return %c0_i32, %c0_i32_0 : i32, i32
  }
  func.func @transform_6(%arg0: i32) -> (i32, i32) {
    %c0_i32 = arith.constant 0 : i32
    %c0_i32_0 = arith.constant 0 : i32
    %c0_i32_1 = arith.constant 0 : i32
    return %c0_i32, %c0_i32_0 : i32, i32
  }
  func.func @transform_7(%arg0: i32) -> (i32, i32) {
    %c0_i32 = arith.constant 0 : i32
    %c0_i32_0 = arith.constant 0 : i32
    %c0_i32_1 = arith.constant 0 : i32
    return %c0_i32, %c0_i32_0 : i32, i32
  }
  func.func @transform_8(%arg0: i32) -> (i32, i32) {
    %c0_i32 = arith.constant 0 : i32
    %c0_i32_0 = arith.constant 0 : i32
    %c0_i32_1 = arith.constant 0 : i32
    return %c0_i32, %c0_i32_0 : i32, i32
  }
  func.func @transform_9(%arg0: i32) -> (i32, i32, i32) {
    %c0_i32 = arith.constant 0 : i32
    %c0_i32_0 = arith.constant 0 : i32
    %c0_i32_1 = arith.constant 0 : i32
    return %arg0, %c0_i32, %c0_i32_0 : i32, i32, i32
  }
}

</mosaic_0001>

<llo_original>
// kernel: model_forward.1
$region0: #{model_forward.1}
  #allocation0 [shape = 'u32[]', space=smem, size = 0x4, offset = 0x4, fixed_abs, tag = 'smem constant byte address 0x4 - core index']
  #allocation1 [shape = 'u32[144,128]{1,0:T(1,128)}', space=vmem, size = 0x12000, scoped, tag = 'internal scratch']
  %s0 = inlined_call_operand.vmem [shape: bf16[2,272,17,3], index: 0, kind: input, shape index: {}]
  %s1 = inlined_call_operand.vmem [shape: bf16[27,128], index: 1, kind: input, shape index: {}]
  %s2 = inlined_call_operand.vmem [shape: f32[1,128], index: 2, kind: input, shape index: {}]
  %s3 = inlined_call_operand.vmem [shape: bf16[288,128], index: 3, kind: input, shape index: {}]
  %s4 = inlined_call_operand.vmem [shape: f32[1,128], index: 4, kind: input, shape index: {}]
  %s5 = inlined_call_operand.vmem [shape: bf16[288,128], index: 5, kind: input, shape index: {}]
  %s6 = inlined_call_operand.vmem [shape: f32[1,128], index: 6, kind: input, shape index: {}]
  %s7 = inlined_call_operand.vmem [shape: f32[48,128], index: 7, kind: input, shape index: {}]
  %s8 = inlined_call_operand.vmem [shape: f32[1,128], index: 8, kind: input, shape index: {}]
  %s9 = inlined_call_operand.vmem [shape: f32[2,1,128], index: 9, kind: output, shape index: {}]
  %s10 = sld [smem:[#allocation0]]
  $region69: #{model_forward.1} parent=0
    _
  %s12 = ssub.s32 1, %s10
  %s13 = scalar_select 0, %s12, %s10
  loop: start=0, step=1, limit=4
  $region2: #{model_forward.1} parent=0 // loop_pre_header
    _
  $region3: #{model_forward.1} parent=0 // loop_header
    %s15 = sphi 0, %s19
    %p16 = scmp.ge.s32.totalorder %s15, 4
    %s25 = sphi 0, %s27
    %s28 = sphi 0, %s25
    %s29 = sphi 0, %s28
    %s45 = sphi 0, %s29
    %s49 = sphi 0, %s49
    %s51 = sphi 0, %s49
    %s52 = sphi 0, %s51
    %s66 = sphi 0, %s52
    %s70 = sphi 0, %s70
    %s72 = sphi 0, %s70
    %s73 = sphi 0, %s72
    %s87 = sphi 0, %s73
    %s91 = sphi 0, %s91
    %s93 = sphi 0, %s91
    %s94 = sphi 0, %s93
    %s108 = sphi 0, %s94
    %s112 = sphi 0, %s112
    %s114 = sphi 0, %s112
    %s115 = sphi 0, %s114
    %s129 = sphi 0, %s115
    %s133 = sphi 0, %s133
    %s135 = sphi 0, %s133
    %s136 = sphi 0, %s135
    %s150 = sphi 0, %s136
    %s154 = sphi 0, %s154
    %s156 = sphi 0, %s154
    %s157 = sphi 0, %s156
    %s171 = sphi 0, %s157
    %s175 = sphi 0, %s175
    %s177 = sphi 0, %s175
    %s178 = sphi 0, %s177
    %s192 = sphi 0, %s178
    %s196 = sphi 0, %s196
    %s198 = sphi 0, %s196
    %s199 = sphi 0, %s198
    %s213 = sphi 0, %s199
    %s219 = sphi 0, %s221
    %s222 = sphi 0, %s219
    %s223 = sphi 0, %s222
    %s239 = sphi 0, %s223
  $region4: #{model_forward.1} parent=0 // loop_header_branch
    %18 = sbr.rel (%p16) target = $region8
  $region5: #{model_forward.1} parent=0 // loop_body
    %s20 = ssub.s32 %s15, 1
    %s21 = ssub.s32 %s15, 2
    %s22 = sadd.s32 %s15, 1
    %s23 = ssub.s32 %s15, %s22
    %p24 = scmp.eq.s32.totalorder %s23, 0
    %s26 = sadd.s32 %s25, 1
    %s27 = scalar_select %p24, %s25, %s26
    %p30 = pneg %p24
    %p31 = scmp.eq.s32.totalorder %s15, 1
    %p32 = por %p30, %p31
    %p33 = scmp.ne.s32.totalorder %s25, %s28
    %p34 = scmp.eq.s32.totalorder %s15, 0
    %p35 = por %p33, %p34
    %p36 = scmp.ne.s32.totalorder %s25, %s28
    %p37 = scmp.eq.s32.totalorder %s20, 1
    %p38 = por %p36, %p37
    %p39 = scmp.ne.s32.totalorder %s28, %s29
    %p40 = scmp.eq.s32.totalorder %s20, 0
    %p41 = por %p39, %p40
    %p42 = scmp.ne.s32.totalorder %s28, %s29
    %p43 = scmp.eq.s32.totalorder %s21, 1
    %p44 = por %p42, %p43
    %p46 = scmp.ne.s32.totalorder %s29, %s45
    %p47 = scmp.eq.s32.totalorder %s21, 0
    %p48 = por %p46, %p47
    %s50 = sadd.s32 %s49, 1
    %p53 = scmp.eq.s32.totalorder %s15, 1
    %p54 = scmp.ne.s32.totalorder %s49, %s51
    %p55 = scmp.eq.s32.totalorder %s15, 0
    %p56 = por %p54, %p55
    %p57 = scmp.ne.s32.totalorder %s49, %s51
    %p58 = scmp.eq.s32.totalorder %s20, 1
    %p59 = por %p57, %p58
    %p60 = scmp.ne.s32.totalorder %s51, %s52
    %p61 = scmp.eq.s32.totalorder %s20, 0
    %p62 = por %p60, %p61
    %p63 = scmp.ne.s32.totalorder %s51, %s52
    %p64 = scmp.eq.s32.totalorder %s21, 1
    %p65 = por %p63, %p64
    %p67 = scmp.ne.s32.totalorder %s52, %s66
    %p68 = scmp.eq.s32.totalorder %s21, 0
    %p69 = por %p67, %p68
    %s71 = sadd.s32 %s70, 1
    %p74 = scmp.eq.s32.totalorder %s15, 1
    %p75 = scmp.ne.s32.totalorder %s70, %s72
    %p76 = scmp.eq.s32.totalorder %s15, 0
    %p77 = por %p75, %p76
    %p78 = scmp.ne.s32.totalorder %s70, %s72
    %p79 = scmp.eq.s32.totalorder %s20, 1
    %p80 = por %p78, %p79
    %p81 = scmp.ne.s32.totalorder %s72, %s73
    %p82 = scmp.eq.s32.totalorder %s20, 0
    %p83 = por %p81, %p82
    %p84 = scmp.ne.s32.totalorder %s72, %s73
    %p85 = scmp.eq.s32.totalorder %s21, 1
    %p86 = por %p84, %p85
    %p88 = scmp.ne.s32.totalorder %s73, %s87
    %p89 = scmp.eq.s32.totalorder %s21, 0
    %p90 = por %p88, %p89
    %s92 = sadd.s32 %s91, 1
    %p95 = scmp.eq.s32.totalorder %s15, 1
    %p96 = scmp.ne.s32.totalorder %s91, %s93
    %p97 = scmp.eq.s32.totalorder %s15, 0
    %p98 = por %p96, %p97
    %p99 = scmp.ne.s32.totalorder %s91, %s93
    %p100 = scmp.eq.s32.totalorder %s20, 1
    %p101 = por %p99, %p100
    %p102 = scmp.ne.s32.totalorder %s93, %s94
    %p103 = scmp.eq.s32.totalorder %s20, 0
    %p104 = por %p102, %p103
    %p105 = scmp.ne.s32.totalorder %s93, %s94
    %p106 = scmp.eq.s32.totalorder %s21, 1
    %p107 = por %p105, %p106
    %p109 = scmp.ne.s32.totalorder %s94, %s108
    %p110 = scmp.eq.s32.totalorder %s21, 0
    %p111 = por %p109, %p110
    %s113 = sadd.s32 %s112, 1
    %p116 = scmp.eq.s32.totalorder %s15, 1
    %p117 = scmp.ne.s32.totalorder %s112, %s114
    %p118 = scmp.eq.s32.totalorder %s15, 0
    %p119 = por %p117, %p118
    %p120 = scmp.ne.s32.totalorder %s112, %s114
    %p121 = scmp.eq.s32.totalorder %s20, 1
    %p122 = por %p120, %p121
    %p123 = scmp.ne.s32.totalorder %s114, %s115
    %p124 = scmp.eq.s32.totalorder %s20, 0
    %p125 = por %p123, %p124
    %p126 = scmp.ne.s32.totalorder %s114, %s115
    %p127 = scmp.eq.s32.totalorder %s21, 1
    %p128 = por %p126, %p127
    %p130 = scmp.ne.s32.totalorder %s115, %s129
    %p131 = scmp.eq.s32.totalorder %s21, 0
    %p132 = por %p130, %p131
    %s134 = sadd.s32 %s133, 1
    %p137 = scmp.eq.s32.totalorder %s15, 1
    %p138 = scmp.ne.s32.totalorder %s133, %s135
    %p139 = scmp.eq.s32.totalorder %s15, 0
    %p140 = por %p138, %p139
    %p141 = scmp.ne.s32.totalorder %s133, %s135
    %p142 = scmp.eq.s32.totalorder %s20, 1
    %p143 = por %p141, %p142
    %p144 = scmp.ne.s32.totalorder %s135, %s136
    %p145 = scmp.eq.s32.totalorder %s20, 0
    %p146 = por %p144, %p145
    %p147 = scmp.ne.s32.totalorder %s135, %s136
    %p148 = scmp.eq.s32.totalorder %s21, 1
    %p149 = por %p147, %p148
    %p151 = scmp.ne.s32.totalorder %s136, %s150
    %p152 = scmp.eq.s32.totalorder %s21, 0
    %p153 = por %p151, %p152
    %s155 = sadd.s32 %s154, 1
    %p158 = scmp.eq.s32.totalorder %s15, 1
    %p159 = scmp.ne.s32.totalorder %s154, %s156
    %p160 = scmp.eq.s32.totalorder %s15, 0
    %p161 = por %p159, %p160
    %p162 = scmp.ne.s32.totalorder %s154, %s156
    %p163 = scmp.eq.s32.totalorder %s20, 1
    %p164 = por %p162, %p163
    %p165 = scmp.ne.s32.totalorder %s156, %s157
    %p166 = scmp.eq.s32.totalorder %s20, 0
    %p167 = por %p165, %p166
    %p168 = scmp.ne.s32.totalorder %s156, %s157
    %p169 = scmp.eq.s32.totalorder %s21, 1
    %p170 = por %p168, %p169
    %p172 = scmp.ne.s32.totalorder %s157, %s171
    %p173 = scmp.eq.s32.totalorder %s21, 0
    %p174 = por %p172, %p173
    %s176 = sadd.s32 %s175, 1
    %p179 = scmp.eq.s32.totalorder %s15, 1
    %p180 = scmp.ne.s32.totalorder %s175, %s177
    %p181 = scmp.eq.s32.totalorder %s15, 0
    %p182 = por %p180, %p181
    %p183 = scmp.ne.s32.totalorder %s175, %s177
    %p184 = scmp.eq.s32.totalorder %s20, 1
    %p185 = por %p183, %p184
    %p186 = scmp.ne.s32.totalorder %s177, %s178
    %p187 = scmp.eq.s32.totalorder %s20, 0
    %p188 = por %p186, %p187
    %p189 = scmp.ne.s32.totalorder %s177, %s178
    %p190 = scmp.eq.s32.totalorder %s21, 1
    %p191 = por %p189, %p190
    %p193 = scmp.ne.s32.totalorder %s178, %s192
    %p194 = scmp.eq.s32.totalorder %s21, 0
    %p195 = por %p193, %p194
    %s197 = sadd.s32 %s196, 1
    %p200 = scmp.eq.s32.totalorder %s15, 1
    %p201 = scmp.ne.s32.totalorder %s196, %s198
    %p202 = scmp.eq.s32.totalorder %s15, 0
    %p203 = por %p201, %p202
    %p204 = scmp.ne.s32.totalorder %s196, %s198
    %p205 = scmp.eq.s32.totalorder %s20, 1
    %p206 = por %p204, %p205
    %p207 = scmp.ne.s32.totalorder %s198, %s199
    %p208 = scmp.eq.s32.totalorder %s20, 0
    %p209 = por %p207, %p208
    %p210 = scmp.ne.s32.totalorder %s198, %s199
    %p211 = scmp.eq.s32.totalorder %s21, 1
    %p212 = por %p210, %p211
    %p214 = scmp.ne.s32.totalorder %s199, %s213
    %p215 = scmp.eq.s32.totalorder %s21, 0
    %p216 = por %p214, %p215
    %s217 = ssub.s32 %s15, %s22
    %p218 = scmp.eq.s32.totalorder %s217, 0
    %s220 = sadd.s32 %s219, 1
    %s221 = scalar_select %p218, %s219, %s220
    %p224 = pneg %p218
    %p225 = scmp.eq.s32.totalorder %s15, 1
    %p226 = por %p224, %p225
    %p227 = scmp.ne.s32.totalorder %s219, %s222
    %p228 = scmp.eq.s32.totalorder %s15, 0
    %p229 = por %p227, %p228
    %p230 = scmp.ne.s32.totalorder %s219, %s222
    %p231 = scmp.eq.s32.totalorder %s20, 1
    %p232 = por %p230, %p231
    %p233 = scmp.ne.s32.totalorder %s222, %s223
    %p234 = scmp.eq.s32.totalorder %s20, 0
    %p235 = por %p233, %p234
    %p236 = scmp.ne.s32.totalorder %s222, %s223
    %p237 = scmp.eq.s32.totalorder %s21, 1
    %p238 = por %p236, %p237
    %p240 = scmp.ne.s32.totalorder %s223, %s239
    %p241 = scmp.eq.s32.totalorder %s21, 0
    %p242 = por %p240, %p241
    %p243 = scmp.le.s32.totalorder 1, %s15
    %p244 = scmp.lt.s32.totalorder %s15, 3
    %p245 = pnand %p243, %p244
    %p246 = pneg %p245
    // Predicated region
    $region9: #{model_forward.1} parent=5 // pred_check
      _
    $region10: #{model_forward.1} parent=5 // pred_check_branch
      %248 = sbr.rel (%p245) target = $region12
    $region11: #{model_forward.1} parent=5 // pred_region
      %s249 = ssub.s32 %s15, 1
      // Predicated region
      $region13: #{model_forward.1} parent=11 // pred_check
        %p250 = pneg %p62
      $region14: #{model_forward.1} parent=11 // pred_check_branch
        %252 = sbr.rel (%p250) target = $region16
      $region15: #{model_forward.1} parent=11 // pred_region
        _
      $region16: #{model_forward.1} parent=11 // pred_fallthru
        _
      // Predicated region
      $region17: #{model_forward.1} parent=11 // pred_check
        %p253 = pneg %p83
      $region18: #{model_forward.1} parent=11 // pred_check_branch
        %255 = sbr.rel (%p253) target = $region20
      $region19: #{model_forward.1} parent=11 // pred_region
        _
      $region20: #{model_forward.1} parent=11 // pred_fallthru
        _
      // Predicated region
      $region21: #{model_forward.1} parent=11 // pred_check
        %p256 = pneg %p104
      $region22: #{model_forward.1} parent=11 // pred_check_branch
        %258 = sbr.rel (%p256) target = $region24
      $region23: #{model_forward.1} parent=11 // pred_region
        _
      $region24: #{model_forward.1} parent=11 // pred_fallthru
        _
      // Predicated region
      $region25: #{model_forward.1} parent=11 // pred_check
        %p259 = pneg %p125
      $region26: #{model_forward.1} parent=11 // pred_check_branch
        %261 = sbr.rel (%p259) target = $region28
      $region27: #{model_forward.1} parent=11 // pred_region
        _
      $region28: #{model_forward.1} parent=11 // pred_fallthru
        _
      // Predicated region
      $region29: #{model_forward.1} parent=11 // pred_check
        %p262 = pneg %p146
      $region30: #{model_forward.1} parent=11 // pred_check_branch
        %264 = sbr.rel (%p262) target = $region32
      $region31: #{model_forward.1} parent=11 // pred_region
        _
      $region32: #{model_forward.1} parent=11 // pred_fallthru
        _
      // Predicated region
      $region33: #{model_forward.1} parent=11 // pred_check
        %p265 = pneg %p167
      $region34: #{model_forward.1} parent=11 // pred_check_branch
        %267 = sbr.rel (%p265) target = $region36
      $region35: #{model_forward.1} parent=11 // pred_region
        _
      $region36: #{model_forward.1} parent=11 // pred_fallthru
        _
      // Predicated region
      $region37: #{model_forward.1} parent=11 // pred_check
        %p268 = pneg %p188
      $region38: #{model_forward.1} parent=11 // pred_check_branch
        %270 = sbr.rel (%p268) target = $region40
      $region39: #{model_forward.1} parent=11 // pred_region
        _
      $region40: #{model_forward.1} parent=11 // pred_fallthru
        _
      // Predicated region
      $region41: #{model_forward.1} parent=11 // pred_check
        %p271 = pneg %p209
      $region42: #{model_forward.1} parent=11 // pred_check_branch
        %273 = sbr.rel (%p271) target = $region44
      $region43: #{model_forward.1} parent=11 // pred_region
        _
      $region44: #{model_forward.1} parent=11 // pred_fallthru
        _
    $region12: #{model_forward.1} parent=5 // pred_fallthru
      _
    %p274 = scmp.lt.s32.totalorder %s15, 2
    // Predicated region
    $region45: #{model_forward.1} parent=5 // pred_check
      %p275 = pneg %p274
    $region46: #{model_forward.1} parent=5 // pred_check_branch
      %277 = sbr.rel (%p275) target = $region48
    $region47: #{model_forward.1} parent=5 // pred_region
      // Predicated region
      $region49: #{model_forward.1} parent=47 // pred_check
        %p278 = pneg %p35
      $region50: #{model_forward.1} parent=47 // pred_check_branch
        %280 = sbr.rel (%p278) target = $region52
      $region51: #{model_forward.1} parent=47 // pred_region
        %p281 = scmp.lt.s32.totalorder %s15, 1
        %s282 = scalar_select %p281, %s15, 1
        %s283 = smul.addr %s282, 816
        %s284 = smul.addr %s283, 4
        %s285 = scalar_lea.vmem %s0, %s284
      $region52: #{model_forward.1} parent=47 // pred_fallthru
        _
    $region48: #{model_forward.1} parent=5 // pred_fallthru
      _
    %p286 = scmp.le.s32.totalorder 1, %s15
    %p287 = scmp.lt.s32.totalorder %s15, 3
    %p288 = pnand %p286, %p287
    %p289 = pneg %p288
    // Predicated region
    $region53: #{model_forward.1} parent=5 // pred_check
      _
    $region54: #{model_forward.1} parent=5 // pred_check_branch
      %291 = sbr.rel (%p288) target = $region56
    $region55: #{model_forward.1} parent=5 // pred_region
      %s292 = ssub.s32 %s15, 1
      %p293 = scmp.lt.s32.totalorder %s20, 1
      %s294 = scalar_select %p293, %s20, 1
      %s295 = smul.addr %s294, 816
      %s296 = smul.addr %s295, 4
      %s297 = scalar_lea.vmem %s0, %s296
      %p298 = pneg %p41
      %p299 = pneg %p38
      %p300 = pneg %p62
      %p301 = pneg %p59
      %p302 = pneg %p83
      %p303 = pneg %p80
      %p304 = pneg %p104
      %p305 = pneg %p101
      %p306 = pneg %p125
      %p307 = pneg %p122
      %p308 = pneg %p146
      %p309 = pneg %p143
      %p310 = pneg %p167
      %p311 = pneg %p164
      %p312 = pneg %p188
      %p313 = pneg %p185
      %p314 = pneg %p209
      %p315 = pneg %p206
      %p316 = pneg %p235
      %p317 = pneg %p232
      %p318 = scmp.lt.s32.totalorder %s20, 1
      %s319 = scalar_select %p318, %s20, 1
      %s320 = scalar_lea.vmem %s9, %s319
      %p321 = scmp.lt.s32.totalorder %s20, 1
      %s322 = scalar_select %p321, %s20, 1
      %s323 = smul.addr %s322, 816
      %s324 = smul.addr %s323, 4
      %s325 = scalar_lea.vmem %s0, %s324
      %p326 = scmp.lt.s32.totalorder %s20, 1
      %s327 = scalar_select %p326, %s20, 1
      %s328 = scalar_lea.vmem %s9, %s327
      %v330 = vld [vmem:[%s325] sm:$0xf]
      %v331 = vld [vmem:[%s325 + $0x4] sm:$0xf]
      %v332 = vld [vmem:[%s325 + $0x8] sm:$0x1]
      %v333 = vld [vmem:[%s325 + $0xc] sm:$0xf]
      %v334 = vld [vmem:[%s325 + $0x10] sm:$0xf]
      %v335 = vld [vmem:[%s325 + $0x14] sm:$0x1]
      %v336 = vld [vmem:[%s325 + $0x18] sm:$0xf]
      %v337 = vld [vmem:[%s325 + $0x1c] sm:$0xf]
      %v338 = vld [vmem:[%s325 + $0x20] sm:$0x1]
      %v339 = vld [vmem:[%s325 + $0x24] sm:$0xf]
      %v340 = vld [vmem:[%s325 + $0x28] sm:$0xf]
      %v341 = vld [vmem:[%s325 + $0x2c] sm:$0x1]
      %v342 = vld [vmem:[%s325 + $0x30] sm:$0xf]
      %v343 = vld [vmem:[%s325 + $0x34] sm:$0xf]
      %v344 = vld [vmem:[%s325 + $0x38] sm:$0x1]
      %v345 = vld [vmem:[%s325 + $0x3c] sm:$0xf]
      %v346 = vld [vmem:[%s325 + $0x40] sm:$0xf]
      %v347 = vld [vmem:[%s325 + $0x44] sm:$0x1]
      %v348 = vld [vmem:[%s325 + $0x48] sm:$0xf]
      %v349 = vld [vmem:[%s325 + $0x4c] sm:$0xf]
      %v350 = vld [vmem:[%s325 + $0x50] sm:$0x1]
      %v351 = vld [vmem:[%s325 + $0x54] sm:$0xf]
      %v352 = vld [vmem:[%s325 + $0x58] sm:$0xf]
      %v353 = vld [vmem:[%s325 + $0x5c] sm:$0x1]
      %v354 = vld [vmem:[%s325 + $0x60] sm:$0xf]
      %v355 = vld [vmem:[%s325 + $0x64] sm:$0xf]
      %v356 = vld [vmem:[%s325 + $0x68] sm:$0x1]
      %v357 = vld [vmem:[%s325 + $0x6c] sm:$0xf]
      %v358 = vld [vmem:[%s325 + $0x70] sm:$0xf]
      %v359 = vld [vmem:[%s325 + $0x74] sm:$0x1]
      %v360 = vld [vmem:[%s325 + $0x78] sm:$0xf]
      %v361 = vld [vmem:[%s325 + $0x7c] sm:$0xf]
      %v362 = vld [vmem:[%s325 + $0x80] sm:$0x1]
      %v363 = vld [vmem:[%s325 + $0x84] sm:$0xf]
      %v364 = vld [vmem:[%s325 + $0x88] sm:$0xf]
      %v365 = vld [vmem:[%s325 + $0x8c] sm:$0x1]
      %v366 = vld [vmem:[%s325 + $0x90] sm:$0xf]
      %v367 = vld [vmem:[%s325 + $0x94] sm:$0xf]
      %v368 = vld [vmem:[%s325 + $0x98] sm:$0x1]
      %v369 = vld [vmem:[%s325 + $0x9c] sm:$0xf]
      %v370 = vld [vmem:[%s325 + $0xa0] sm:$0xf]
      %v371 = vld [vmem:[%s325 + $0xa4] sm:$0x1]
      %v372 = vld [vmem:[%s325 + $0xa8] sm:$0xf]
      %v373 = vld [vmem:[%s325 + $0xac] sm:$0xf]
      %v374 = vld [vmem:[%s325 + $0xb0] sm:$0x1]
      %v375 = vld [vmem:[%s325 + $0xb4] sm:$0xf]
      %v376 = vld [vmem:[%s325 + $0xb8] sm:$0xf]
      %v377 = vld [vmem:[%s325 + $0xbc] sm:$0x1]
      %v378 = vld [vmem:[%s325 + $0xc0] sm:$0xf]
      %v379 = vld [vmem:[%s325 + $0xc4] sm:$0xf]
      %v380 = vld [vmem:[%s325 + $0xc8] sm:$0x1]
      %s381 = scalar_lea.vmem %s325, 204
      %v382 = vld [vmem:[%s381] sm:$0xf]
      %v383 = vld [vmem:[%s381 + $0x4] sm:$0xf]
      %v384 = vld [vmem:[%s381 + $0xc] sm:$0xf]
      %v385 = vld [vmem:[%s381 + $0x10] sm:$0xf]
      %v386 = vld [vmem:[%s381 + $0x18] sm:$0xf]
      %v387 = vld [vmem:[%s381 + $0x1c] sm:$0xf]
      %v388 = vld [vmem:[%s381 + $0x24] sm:$0xf]
      %v389 = vld [vmem:[%s381 + $0x28] sm:$0xf]
      %v390 = vld [vmem:[%s381 + $0x30] sm:$0xf]
      %v391 = vld [vmem:[%s381 + $0x34] sm:$0xf]
      %v392 = vld [vmem:[%s381 + $0x3c] sm:$0xf]
      %v393 = vld [vmem:[%s381 + $0x40] sm:$0xf]
      %v394 = vld [vmem:[%s381 + $0x48] sm:$0xf]
      %v395 = vld [vmem:[%s381 + $0x4c] sm:$0xf]
      %v396 = vld [vmem:[%s381 + $0x54] sm:$0xf]
      %v397 = vld [vmem:[%s381 + $0x58] sm:$0xf]
      %v398 = vld [vmem:[%s381 + $0x60] sm:$0xf]
      %v399 = vld [vmem:[%s381 + $0x64] sm:$0xf]
      %v400 = vld [vmem:[%s381 + $0x6c] sm:$0xf]
      %v401 = vld [vmem:[%s381 + $0x70] sm:$0xf]
      %v402 = vld [vmem:[%s381 + $0x78] sm:$0xf]
      %v403 = vld [vmem:[%s381 + $0x7c] sm:$0xf]
      %v404 = vld [vmem:[%s381 + $0x84] sm:$0xf]
      %v405 = vld [vmem:[%s381 + $0x88] sm:$0xf]
      %v406 = vld [vmem:[%s381 + $0x90] sm:$0xf]
      %v407 = vld [vmem:[%s381 + $0x94] sm:$0xf]
      %v408 = vld [vmem:[%s381 + $0x9c] sm:$0xf]
      %v409 = vld [vmem:[%s381 + $0xa0] sm:$0xf]
      %v410 = vld [vmem:[%s381 + $0xa8] sm:$0xf]
      %v411 = vld [vmem:[%s381 + $0xac] sm:$0xf]
      %v412 = vld [vmem:[%s381 + $0xb4] sm:$0xf]
      %v413 = vld [vmem:[%s381 + $0xb8] sm:$0xf]
      %v414 = vld [vmem:[%s381 + $0xc0] sm:$0xf]
      %v415 = vld [vmem:[%s381 + $0xc4] sm:$0xf]
      %s416 = scalar_lea.vmem %s325, 408
      %v417 = vld [vmem:[%s416] sm:$0xf]
      %v418 = vld [vmem:[%s416 + $0x4] sm:$0xf]
      %v419 = vld [vmem:[%s416 + $0xc] sm:$0xf]
      %v420 = vld [vmem:[%s416 + $0x10] sm:$0xf]
      %v421 = vld [vmem:[%s416 + $0x18] sm:$0xf]
      %v422 = vld [vmem:[%s416 + $0x1c] sm:$0xf]
      %v423 = vld [vmem:[%s416 + $0x24] sm:$0xf]
      %v424 = vld [vmem:[%s416 + $0x28] sm:$0xf]
      %v425 = vld [vmem:[%s416 + $0x30] sm:$0xf]
      %v426 = vld [vmem:[%s416 + $0x34] sm:$0xf]
      %v427 = vld [vmem:[%s416 + $0x3c] sm:$0xf]
      %v428 = vld [vmem:[%s416 + $0x40] sm:$0xf]
      %v429 = vld [vmem:[%s416 + $0x48] sm:$0xf]
      %v430 = vld [vmem:[%s416 + $0x4c] sm:$0xf]
      %v431 = vld [vmem:[%s416 + $0x54] sm:$0xf]
      %v432 = vld [vmem:[%s416 + $0x58] sm:$0xf]
      %v433 = vld [vmem:[%s416 + $0x60] sm:$0xf]
      %v434 = vld [vmem:[%s416 + $0x64] sm:$0xf]
      %v435 = vld [vmem:[%s416 + $0x6c] sm:$0xf]
      %v436 = vld [vmem:[%s416 + $0x70] sm:$0xf]
      %v437 = vld [vmem:[%s416 + $0x78] sm:$0xf]
      %v438 = vld [vmem:[%s416 + $0x7c] sm:$0xf]
      %v439 = vld [vmem:[%s416 + $0x84] sm:$0xf]
      %v440 = vld [vmem:[%s416 + $0x88] sm:$0xf]
      %v441 = vld [vmem:[%s416 + $0x90] sm:$0xf]
      %v442 = vld [vmem:[%s416 + $0x94] sm:$0xf]
      %v443 = vld [vmem:[%s416 + $0x9c] sm:$0xf]
      %v444 = vld [vmem:[%s416 + $0xa0] sm:$0xf]
      %v445 = vld [vmem:[%s416 + $0xa8] sm:$0xf]
      %v446 = vld [vmem:[%s416 + $0xac] sm:$0xf]
      %v447 = vld [vmem:[%s416 + $0xb4] sm:$0xf]
      %v448 = vld [vmem:[%s416 + $0xb8] sm:$0xf]
      %v449 = vld [vmem:[%s416 + $0xc0] sm:$0xf]
      %v450 = vld [vmem:[%s416 + $0xc4] sm:$0xf]
      %s451 = scalar_lea.vmem %s325, 612
      %v452 = vld [vmem:[%s451] sm:$0xf]
      %v453 = vld [vmem:[%s451 + $0x4] sm:$0xf]
      %v454 = vld [vmem:[%s451 + $0xc] sm:$0xf]
      %v455 = vld [vmem:[%s451 + $0x10] sm:$0xf]
      %v456 = vld [vmem:[%s451 + $0x18] sm:$0xf]
      %v457 = vld [vmem:[%s451 + $0x1c] sm:$0xf]
      %v458 = vld [vmem:[%s451 + $0x24] sm:$0xf]
      %v459 = vld [vmem:[%s451 + $0x28] sm:$0xf]
      %v460 = vld [vmem:[%s451 + $0x30] sm:$0xf]
      %v461 = vld [vmem:[%s451 + $0x34] sm:$0xf]
      %v462 = vld [vmem:[%s451 + $0x3c] sm:$0xf]
      %v463 = vld [vmem:[%s451 + $0x40] sm:$0xf]
      %v464 = vld [vmem:[%s451 + $0x48] sm:$0xf]
      %v465 = vld [vmem:[%s451 + $0x4c] sm:$0xf]
      %v466 = vld [vmem:[%s451 + $0x54] sm:$0xf]
      %v467 = vld [vmem:[%s451 + $0x58] sm:$0xf]
      %v468 = vld [vmem:[%s451 + $0x60] sm:$0xf]
      %v469 = vld [vmem:[%s451 + $0x64] sm:$0xf]
      %v470 = vld [vmem:[%s451 + $0x6c] sm:$0xf]
      %v471 = vld [vmem:[%s451 + $0x70] sm:$0xf]
      %v472 = vld [vmem:[%s451 + $0x78] sm:$0xf]
      %v473 = vld [vmem:[%s451 + $0x7c] sm:$0xf]
      %v474 = vld [vmem:[%s451 + $0x84] sm:$0xf]
      %v475 = vld [vmem:[%s451 + $0x88] sm:$0xf]
      %v476 = vld [vmem:[%s451 + $0x90] sm:$0xf]
      %v477 = vld [vmem:[%s451 + $0x94] sm:$0xf]
      %v478 = vld [vmem:[%s451 + $0x9c] sm:$0xf]
      %v479 = vld [vmem:[%s451 + $0xa0] sm:$0xf]
      %v480 = vld [vmem:[%s451 + $0xa8] sm:$0xf]
      %v481 = vld [vmem:[%s451 + $0xac] sm:$0xf]
      %v482 = vld [vmem:[%s451 + $0xb4] sm:$0xf]
      %v483 = vld [vmem:[%s451 + $0xb8] sm:$0xf]
      %v484 = vld [vmem:[%s451 + $0xc0] sm:$0xf]
      %v485 = vld [vmem:[%s451 + $0xc4] sm:$0xf]
      %s486 = scalar_lea.vmem %s325, 816
      %v487 = vld [vmem:[%s486] sm:$0xf]
      %v488 = vld [vmem:[%s486 + $0x4] sm:$0xf]
      %v489 = vld [vmem:[%s486 + $0x8] sm:$0x1]
      %v490 = vld [vmem:[%s486 + $0xc] sm:$0xf]
      %v491 = vld [vmem:[%s486 + $0x10] sm:$0xf]
      %v492 = vld [vmem:[%s486 + $0x14] sm:$0x1]
      %v493 = vld [vmem:[%s486 + $0x18] sm:$0xf]
      %v494 = vld [vmem:[%s486 + $0x1c] sm:$0xf]
      %v495 = vld [vmem:[%s486 + $0x20] sm:$0x1]
      %v496 = vld [vmem:[%s486 + $0x24] sm:$0xf]
      %v497 = vld [vmem:[%s486 + $0x28] sm:$0xf]
      %v498 = vld [vmem:[%s486 + $0x2c] sm:$0x1]
      %v499 = vld [vmem:[%s486 + $0x30] sm:$0xf]
      %v500 = vld [vmem:[%s486 + $0x34] sm:$0xf]
      %v501 = vld [vmem:[%s486 + $0x38] sm:$0x1]
      %v502 = vld [vmem:[%s486 + $0x3c] sm:$0xf]
      %v503 = vld [vmem:[%s486 + $0x40] sm:$0xf]
      %v504 = vld [vmem:[%s486 + $0x44] sm:$0x1]
      %v505 = vld [vmem:[%s486 + $0x48] sm:$0xf]
      %v506 = vld [vmem:[%s486 + $0x4c] sm:$0xf]
      %v507 = vld [vmem:[%s486 + $0x50] sm:$0x1]
      %v508 = vld [vmem:[%s486 + $0x54] sm:$0xf]
      %v509 = vld [vmem:[%s486 + $0x58] sm:$0xf]
      %v510 = vld [vmem:[%s486 + $0x5c] sm:$0x1]
      %v511 = vld [vmem:[%s486 + $0x60] sm:$0xf]
      %v512 = vld [vmem:[%s486 + $0x64] sm:$0xf]
      %v513 = vld [vmem:[%s486 + $0x68] sm:$0x1]
      %v514 = vld [vmem:[%s486 + $0x6c] sm:$0xf]
      %v515 = vld [vmem:[%s486 + $0x70] sm:$0xf]
      %v516 = vld [vmem:[%s486 + $0x74] sm:$0x1]
      %v517 = vld [vmem:[%s486 + $0x78] sm:$0xf]
      %v518 = vld [vmem:[%s486 + $0x7c] sm:$0xf]
      %v519 = vld [vmem:[%s486 + $0x80] sm:$0x1]
      %v520 = vld [vmem:[%s486 + $0x84] sm:$0xf]
      %v521 = vld [vmem:[%s486 + $0x88] sm:$0xf]
      %v522 = vld [vmem:[%s486 + $0x8c] sm:$0x1]
      %v523 = vld [vmem:[%s486 + $0x90] sm:$0xf]
      %v524 = vld [vmem:[%s486 + $0x94] sm:$0xf]
      %v525 = vld [vmem:[%s486 + $0x98] sm:$0x1]
      %v526 = vld [vmem:[%s486 + $0x9c] sm:$0xf]
      %v527 = vld [vmem:[%s486 + $0xa0] sm:$0xf]
      %v528 = vld [vmem:[%s486 + $0xa4] sm:$0x1]
      %v529 = vld [vmem:[%s486 + $0xa8] sm:$0xf]
      %v530 = vld [vmem:[%s486 + $0xac] sm:$0xf]
      %v531 = vld [vmem:[%s486 + $0xb0] sm:$0x1]
      %v532 = vld [vmem:[%s486 + $0xb4] sm:$0xf]
      %v533 = vld [vmem:[%s486 + $0xb8] sm:$0xf]
      %v534 = vld [vmem:[%s486 + $0xbc] sm:$0x1]
      %s535 = scalar_lea.vmem %s325, 1020
      %v536 = vld [vmem:[%s535] sm:$0xf]
      %v537 = vld [vmem:[%s535 + $0x4] sm:$0xf]
      %v538 = vld [vmem:[%s535 + $0xc] sm:$0xf]
      %v539 = vld [vmem:[%s535 + $0x10] sm:$0xf]
      %v540 = vld [vmem:[%s535 + $0x18] sm:$0xf]
      %v541 = vld [vmem:[%s535 + $0x1c] sm:$0xf]
      %v542 = vld [vmem:[%s535 + $0x24] sm:$0xf]
      %v543 = vld [vmem:[%s535 + $0x28] sm:$0xf]
      %v544 = vld [vmem:[%s535 + $0x30] sm:$0xf]
      %v545 = vld [vmem:[%s535 + $0x34] sm:$0xf]
      %v546 = vld [vmem:[%s535 + $0x3c] sm:$0xf]
      %v547 = vld [vmem:[%s535 + $0x40] sm:$0xf]
      %v548 = vld [vmem:[%s535 + $0x48] sm:$0xf]
      %v549 = vld [vmem:[%s535 + $0x4c] sm:$0xf]
      %v550 = vld [vmem:[%s535 + $0x54] sm:$0xf]
      %v551 = vld [vmem:[%s535 + $0x58] sm:$0xf]
      %v552 = vld [vmem:[%s535 + $0x60] sm:$0xf]
      %v553 = vld [vmem:[%s535 + $0x64] sm:$0xf]
      %v554 = vld [vmem:[%s535 + $0x6c] sm:$0xf]
      %v555 = vld [vmem:[%s535 + $0x70] sm:$0xf]
      %v556 = vld [vmem:[%s535 + $0x78] sm:$0xf]
      %v557 = vld [vmem:[%s535 + $0x7c] sm:$0xf]
      %v558 = vld [vmem:[%s535 + $0x84] sm:$0xf]
      %v559 = vld [vmem:[%s535 + $0x88] sm:$0xf]
      %v560 = vld [vmem:[%s535 + $0x90] sm:$0xf]
      %v561 = vld [vmem:[%s535 + $0x94] sm:$0xf]
      %v562 = vld [vmem:[%s535 + $0x9c] sm:$0xf]
      %v563 = vld [vmem:[%s535 + $0xa0] sm:$0xf]
      %v564 = vld [vmem:[%s535 + $0xa8] sm:$0xf]
      %v565 = vld [vmem:[%s535 + $0xac] sm:$0xf]
      %v566 = vld [vmem:[%s535 + $0xb4] sm:$0xf]
      %v567 = vld [vmem:[%s535 + $0xb8] sm:$0xf]
      %s568 = scalar_lea.vmem %s325, 1224
      %v569 = vld [vmem:[%s568] sm:$0xf]
      %v570 = vld [vmem:[%s568 + $0x4] sm:$0xf]
      %v571 = vld [vmem:[%s568 + $0xc] sm:$0xf]
      %v572 = vld [vmem:[%s568 + $0x10] sm:$0xf]
      %v573 = vld [vmem:[%s568 + $0x18] sm:$0xf]
      %v574 = vld [vmem:[%s568 + $0x1c] sm:$0xf]
      %v575 = vld [vmem:[%s568 + $0x24] sm:$0xf]
      %v576 = vld [vmem:[%s568 + $0x28] sm:$0xf]
      %v577 = vld [vmem:[%s568 + $0x30] sm:$0xf]
      %v578 = vld [vmem:[%s568 + $0x34] sm:$0xf]
      %v579 = vld [vmem:[%s568 + $0x3c] sm:$0xf]
      %v580 = vld [vmem:[%s568 + $0x40] sm:$0xf]
      %v581 = vld [vmem:[%s568 + $0x48] sm:$0xf]
      %v582 = vld [vmem:[%s568 + $0x4c] sm:$0xf]
      %v583 = vld [vmem:[%s568 + $0x54] sm:$0xf]
      %v584 = vld [vmem:[%s568 + $0x58] sm:$0xf]
      %v585 = vld [vmem:[%s568 + $0x60] sm:$0xf]
      %v586 = vld [vmem:[%s568 + $0x64] sm:$0xf]
      %v587 = vld [vmem:[%s568 + $0x6c] sm:$0xf]
      %v588 = vld [vmem:[%s568 + $0x70] sm:$0xf]
      %v589 = vld [vmem:[%s568 + $0x78] sm:$0xf]
      %v590 = vld [vmem:[%s568 + $0x7c] sm:$0xf]
      %v591 = vld [vmem:[%s568 + $0x84] sm:$0xf]
      %v592 = vld [vmem:[%s568 + $0x88] sm:$0xf]
      %v593 = vld [vmem:[%s568 + $0x90] sm:$0xf]
      %v594 = vld [vmem:[%s568 + $0x94] sm:$0xf]
      %v595 = vld [vmem:[%s568 + $0x9c] sm:$0xf]
      %v596 = vld [vmem:[%s568 + $0xa0] sm:$0xf]
      %v597 = vld [vmem:[%s568 + $0xa8] sm:$0xf]
      %v598 = vld [vmem:[%s568 + $0xac] sm:$0xf]
      %v599 = vld [vmem:[%s568 + $0xb4] sm:$0xf]
      %v600 = vld [vmem:[%s568 + $0xb8] sm:$0xf]
      %s601 = scalar_lea.vmem %s325, 1428
      %v602 = vld [vmem:[%s601] sm:$0xf]
      %v603 = vld [vmem:[%s601 + $0x4] sm:$0xf]
      %v604 = vld [vmem:[%s601 + $0xc] sm:$0xf]
      %v605 = vld [vmem:[%s601 + $0x10] sm:$0xf]
      %v606 = vld [vmem:[%s601 + $0x18] sm:$0xf]
      %v607 = vld [vmem:[%s601 + $0x1c] sm:$0xf]
      %v608 = vld [vmem:[%s601 + $0x24] sm:$0xf]
      %v609 = vld [vmem:[%s601 + $0x28] sm:$0xf]
      %v610 = vld [vmem:[%s601 + $0x30] sm:$0xf]
      %v611 = vld [vmem:[%s601 + $0x34] sm:$0xf]
      %v612 = vld [vmem:[%s601 + $0x3c] sm:$0xf]
      %v613 = vld [vmem:[%s601 + $0x40] sm:$0xf]
      %v614 = vld [vmem:[%s601 + $0x48] sm:$0xf]
      %v615 = vld [vmem:[%s601 + $0x4c] sm:$0xf]
      %v616 = vld [vmem:[%s601 + $0x54] sm:$0xf]
      %v617 = vld [vmem:[%s601 + $0x58] sm:$0xf]
      %v618 = vld [vmem:[%s601 + $0x60] sm:$0xf]
      %v619 = vld [vmem:[%s601 + $0x64] sm:$0xf]
      %v620 = vld [vmem:[%s601 + $0x6c] sm:$0xf]
      %v621 = vld [vmem:[%s601 + $0x70] sm:$0xf]
      %v622 = vld [vmem:[%s601 + $0x78] sm:$0xf]
      %v623 = vld [vmem:[%s601 + $0x7c] sm:$0xf]
      %v624 = vld [vmem:[%s601 + $0x84] sm:$0xf]
      %v625 = vld [vmem:[%s601 + $0x88] sm:$0xf]
      %v626 = vld [vmem:[%s601 + $0x90] sm:$0xf]
      %v627 = vld [vmem:[%s601 + $0x94] sm:$0xf]
      %v628 = vld [vmem:[%s601 + $0x9c] sm:$0xf]
      %v629 = vld [vmem:[%s601 + $0xa0] sm:$0xf]
      %v630 = vld [vmem:[%s601 + $0xa8] sm:$0xf]
      %v631 = vld [vmem:[%s601 + $0xac] sm:$0xf]
      %v632 = vld [vmem:[%s601 + $0xb4] sm:$0xf]
      %v633 = vld [vmem:[%s601 + $0xb8] sm:$0xf]
      %s634 = scalar_lea.vmem %s325, 1632
      %v635 = vld [vmem:[%s634] sm:$0xf]
      %v636 = vld [vmem:[%s634 + $0x4] sm:$0xf]
      %v637 = vld [vmem:[%s634 + $0x8] sm:$0x1]
      %v638 = vld [vmem:[%s634 + $0xc] sm:$0xf]
      %v639 = vld [vmem:[%s634 + $0x10] sm:$0xf]
      %v640 = vld [vmem:[%s634 + $0x14] sm:$0x1]
      %v641 = vld [vmem:[%s634 + $0x18] sm:$0xf]
      %v642 = vld [vmem:[%s634 + $0x1c] sm:$0xf]
      %v643 = vld [vmem:[%s634 + $0x20] sm:$0x1]
      %v644 = vld [vmem:[%s634 + $0x24] sm:$0xf]
      %v645 = vld [vmem:[%s634 + $0x28] sm:$0xf]
      %v646 = vld [vmem:[%s634 + $0x2c] sm:$0x1]
      %v647 = vld [vmem:[%s634 + $0x30] sm:$0xf]
      %v648 = vld [vmem:[%s634 + $0x34] sm:$0xf]
      %v649 = vld [vmem:[%s634 + $0x38] sm:$0x1]
      %v650 = vld [vmem:[%s634 + $0x3c] sm:$0xf]
      %v651 = vld [vmem:[%s634 + $0x40] sm:$0xf]
      %v652 = vld [vmem:[%s634 + $0x44] sm:$0x1]
      %v653 = vld [vmem:[%s634 + $0x48] sm:$0xf]
      %v654 = vld [vmem:[%s634 + $0x4c] sm:$0xf]
      %v655 = vld [vmem:[%s634 + $0x50] sm:$0x1]
      %v656 = vld [vmem:[%s634 + $0x54] sm:$0xf]
      %v657 = vld [vmem:[%s634 + $0x58] sm:$0xf]
      %v658 = vld [vmem:[%s634 + $0x5c] sm:$0x1]
      %v659 = vld [vmem:[%s634 + $0x60] sm:$0xf]
      %v660 = vld [vmem:[%s634 + $0x64] sm:$0xf]
      %v661 = vld [vmem:[%s634 + $0x68] sm:$0x1]
      %v662 = vld [vmem:[%s634 + $0x6c] sm:$0xf]
      %v663 = vld [vmem:[%s634 + $0x70] sm:$0xf]
      %v664 = vld [vmem:[%s634 + $0x74] sm:$0x1]
      %v665 = vld [vmem:[%s634 + $0x78] sm:$0xf]
      %v666 = vld [vmem:[%s634 + $0x7c] sm:$0xf]
      %v667 = vld [vmem:[%s634 + $0x80] sm:$0x1]
      %v668 = vld [vmem:[%s634 + $0x84] sm:$0xf]
      %v669 = vld [vmem:[%s634 + $0x88] sm:$0xf]
      %v670 = vld [vmem:[%s634 + $0x8c] sm:$0x1]
      %v671 = vld [vmem:[%s634 + $0x90] sm:$0xf]
      %v672 = vld [vmem:[%s634 + $0x94] sm:$0xf]
      %v673 = vld [vmem:[%s634 + $0x98] sm:$0x1]
      %v674 = vld [vmem:[%s634 + $0x9c] sm:$0xf]
      %v675 = vld [vmem:[%s634 + $0xa0] sm:$0xf]
      %v676 = vld [vmem:[%s634 + $0xa4] sm:$0x1]
      %v677 = vld [vmem:[%s634 + $0xa8] sm:$0xf]
      %v678 = vld [vmem:[%s634 + $0xac] sm:$0xf]
      %v679 = vld [vmem:[%s634 + $0xb0] sm:$0x1]
      %v680 = vld [vmem:[%s634 + $0xb4] sm:$0xf]
      %v681 = vld [vmem:[%s634 + $0xb8] sm:$0xf]
      %v682 = vld [vmem:[%s634 + $0xbc] sm:$0x1]
      %s683 = scalar_lea.vmem %s325, 1836
      %v684 = vld [vmem:[%s683] sm:$0xf]
      %v685 = vld [vmem:[%s683 + $0x4] sm:$0xf]
      %v686 = vld [vmem:[%s683 + $0xc] sm:$0xf]
      %v687 = vld [vmem:[%s683 + $0x10] sm:$0xf]
      %v688 = vld [vmem:[%s683 + $0x18] sm:$0xf]
      %v689 = vld [vmem:[%s683 + $0x1c] sm:$0xf]
      %v690 = vld [vmem:[%s683 + $0x24] sm:$0xf]
      %v691 = vld [vmem:[%s683 + $0x28] sm:$0xf]
      %v692 = vld [vmem:[%s683 + $0x30] sm:$0xf]
      %v693 = vld [vmem:[%s683 + $0x34] sm:$0xf]
      %v694 = vld [vmem:[%s683 + $0x3c] sm:$0xf]
      %v695 = vld [vmem:[%s683 + $0x40] sm:$0xf]
      %v696 = vld [vmem:[%s683 + $0x48] sm:$0xf]
      %v697 = vld [vmem:[%s683 + $0x4c] sm:$0xf]
      %v698 = vld [vmem:[%s683 + $0x54] sm:$0xf]
      %v699 = vld [vmem:[%s683 + $0x58] sm:$0xf]
      %v700 = vld [vmem:[%s683 + $0x60] sm:$0xf]
      %v701 = vld [vmem:[%s683 + $0x64] sm:$0xf]
      %v702 = vld [vmem:[%s683 + $0x6c] sm:$0xf]
      %v703 = vld [vmem:[%s683 + $0x70] sm:$0xf]
      %v704 = vld [vmem:[%s683 + $0x78] sm:$0xf]
      %v705 = vld [vmem:[%s683 + $0x7c] sm:$0xf]
      %v706 = vld [vmem:[%s683 + $0x84] sm:$0xf]
      %v707 = vld [vmem:[%s683 + $0x88] sm:$0xf]
      %v708 = vld [vmem:[%s683 + $0x90] sm:$0xf]
      %v709 = vld [vmem:[%s683 + $0x94] sm:$0xf]
      %v710 = vld [vmem:[%s683 + $0x9c] sm:$0xf]
      %v711 = vld [vmem:[%s683 + $0xa0] sm:$0xf]
      %v712 = vld [vmem:[%s683 + $0xa8] sm:$0xf]
      %v713 = vld [vmem:[%s683 + $0xac] sm:$0xf]
      %v714 = vld [vmem:[%s683 + $0xb4] sm:$0xf]
      %v715 = vld [vmem:[%s683 + $0xb8] sm:$0xf]
      %s716 = scalar_lea.vmem %s325, 2040
      %v717 = vld [vmem:[%s716] sm:$0xf]
      %v718 = vld [vmem:[%s716 + $0x4] sm:$0xf]
      %v719 = vld [vmem:[%s716 + $0xc] sm:$0xf]
      %v720 = vld [vmem:[%s716 + $0x10] sm:$0xf]
      %v721 = vld [vmem:[%s716 + $0x18] sm:$0xf]
      %v722 = vld [vmem:[%s716 + $0x1c] sm:$0xf]
      %v723 = vld [vmem:[%s716 + $0x24] sm:$0xf]
      %v724 = vld [vmem:[%s716 + $0x28] sm:$0xf]
      %v725 = vld [vmem:[%s716 + $0x30] sm:$0xf]
      %v726 = vld [vmem:[%s716 + $0x34] sm:$0xf]
      %v727 = vld [vmem:[%s716 + $0x3c] sm:$0xf]
      %v728 = vld [vmem:[%s716 + $0x40] sm:$0xf]
      %v729 = vld [vmem:[%s716 + $0x48] sm:$0xf]
      %v730 = vld [vmem:[%s716 + $0x4c] sm:$0xf]
      %v731 = vld [vmem:[%s716 + $0x54] sm:$0xf]
      %v732 = vld [vmem:[%s716 + $0x58] sm:$0xf]
      %v733 = vld [vmem:[%s716 + $0x60] sm:$0xf]
      %v734 = vld [vmem:[%s716 + $0x64] sm:$0xf]
      %v735 = vld [vmem:[%s716 + $0x6c] sm:$0xf]
      %v736 = vld [vmem:[%s716 + $0x70] sm:$0xf]
      %v737 = vld [vmem:[%s716 + $0x78] sm:$0xf]
      %v738 = vld [vmem:[%s716 + $0x7c] sm:$0xf]
      %v739 = vld [vmem:[%s716 + $0x84] sm:$0xf]
      %v740 = vld [vmem:[%s716 + $0x88] sm:$0xf]
      %v741 = vld [vmem:[%s716 + $0x90] sm:$0xf]
      %v742 = vld [vmem:[%s716 + $0x94] sm:$0xf]
      %v743 = vld [vmem:[%s716 + $0x9c] sm:$0xf]
      %v744 = vld [vmem:[%s716 + $0xa0] sm:$0xf]
      %v745 = vld [vmem:[%s716 + $0xa8] sm:$0xf]
      %v746 = vld [vmem:[%s716 + $0xac] sm:$0xf]
      %v747 = vld [vmem:[%s716 + $0xb4] sm:$0xf]
      %v748 = vld [vmem:[%s716 + $0xb8] sm:$0xf]
      %s749 = scalar_lea.vmem %s325, 2244
      %v750 = vld [vmem:[%s749] sm:$0xf]
      %v751 = vld [vmem:[%s749 + $0x4] sm:$0xf]
      %v752 = vld [vmem:[%s749 + $0xc] sm:$0xf]
      %v753 = vld [vmem:[%s749 + $0x10] sm:$0xf]
      %v754 = vld [vmem:[%s749 + $0x18] sm:$0xf]
      %v755 = vld [vmem:[%s749 + $0x1c] sm:$0xf]
      %v756 = vld [vmem:[%s749 + $0x24] sm:$0xf]
      %v757 = vld [vmem:[%s749 + $0x28] sm:$0xf]
      %v758 = vld [vmem:[%s749 + $0x30] sm:$0xf]
      %v759 = vld [vmem:[%s749 + $0x34] sm:$0xf]
      %v760 = vld [vmem:[%s749 + $0x3c] sm:$0xf]
      %v761 = vld [vmem:[%s749 + $0x40] sm:$0xf]
      %v762 = vld [vmem:[%s749 + $0x48] sm:$0xf]
      %v763 = vld [vmem:[%s749 + $0x4c] sm:$0xf]
      %v764 = vld [vmem:[%s749 + $0x54] sm:$0xf]
      %v765 = vld [vmem:[%s749 + $0x58] sm:$0xf]
      %v766 = vld [vmem:[%s749 + $0x60] sm:$0xf]
      %v767 = vld [vmem:[%s749 + $0x64] sm:$0xf]
      %v768 = vld [vmem:[%s749 + $0x6c] sm:$0xf]
      %v769 = vld [vmem:[%s749 + $0x70] sm:$0xf]
      %v770 = vld [vmem:[%s749 + $0x78] sm:$0xf]
      %v771 = vld [vmem:[%s749 + $0x7c] sm:$0xf]
      %v772 = vld [vmem:[%s749 + $0x84] sm:$0xf]
      %v773 = vld [vmem:[%s749 + $0x88] sm:$0xf]
      %v774 = vld [vmem:[%s749 + $0x90] sm:$0xf]
      %v775 = vld [vmem:[%s749 + $0x94] sm:$0xf]
      %v776 = vld [vmem:[%s749 + $0x9c] sm:$0xf]
      %v777 = vld [vmem:[%s749 + $0xa0] sm:$0xf]
      %v778 = vld [vmem:[%s749 + $0xa8] sm:$0xf]
      %v779 = vld [vmem:[%s749 + $0xac] sm:$0xf]
      %v780 = vld [vmem:[%s749 + $0xb4] sm:$0xf]
      %v781 = vld [vmem:[%s749 + $0xb8] sm:$0xf]
      %s782 = scalar_lea.vmem %s325, 2448
      %v783 = vld [vmem:[%s782] sm:$0xf]
      %v784 = vld [vmem:[%s782 + $0x4] sm:$0xf]
      %v785 = vld [vmem:[%s782 + $0x8] sm:$0x1]
      %v786 = vld [vmem:[%s782 + $0xc] sm:$0xf]
      %v787 = vld [vmem:[%s782 + $0x10] sm:$0xf]
      %v788 = vld [vmem:[%s782 + $0x14] sm:$0x1]
      %v789 = vld [vmem:[%s782 + $0x18] sm:$0xf]
      %v790 = vld [vmem:[%s782 + $0x1c] sm:$0xf]
      %v791 = vld [vmem:[%s782 + $0x20] sm:$0x1]
      %v792 = vld [vmem:[%s782 + $0x24] sm:$0xf]
      %v793 = vld [vmem:[%s782 + $0x28] sm:$0xf]
      %v794 = vld [vmem:[%s782 + $0x2c] sm:$0x1]
      %v795 = vld [vmem:[%s782 + $0x30] sm:$0xf]
      %v796 = vld [vmem:[%s782 + $0x34] sm:$0xf]
      %v797 = vld [vmem:[%s782 + $0x38] sm:$0x1]
      %v798 = vld [vmem:[%s782 + $0x3c] sm:$0xf]
      %v799 = vld [vmem:[%s782 + $0x40] sm:$0xf]
      %v800 = vld [vmem:[%s782 + $0x44] sm:$0x1]
      %v801 = vld [vmem:[%s782 + $0x48] sm:$0xf]
      %v802 = vld [vmem:[%s782 + $0x4c] sm:$0xf]
      %v803 = vld [vmem:[%s782 + $0x50] sm:$0x1]
      %v804 = vld [vmem:[%s782 + $0x54] sm:$0xf]
      %v805 = vld [vmem:[%s782 + $0x58] sm:$0xf]
      %v806 = vld [vmem:[%s782 + $0x5c] sm:$0x1]
      %v807 = vld [vmem:[%s782 + $0x60] sm:$0xf]
      %v808 = vld [vmem:[%s782 + $0x64] sm:$0xf]
      %v809 = vld [vmem:[%s782 + $0x68] sm:$0x1]
      %v810 = vld [vmem:[%s782 + $0x6c] sm:$0xf]
      %v811 = vld [vmem:[%s782 + $0x70] sm:$0xf]
      %v812 = vld [vmem:[%s782 + $0x74] sm:$0x1]
      %v813 = vld [vmem:[%s782 + $0x78] sm:$0xf]
      %v814 = vld [vmem:[%s782 + $0x7c] sm:$0xf]
      %v815 = vld [vmem:[%s782 + $0x80] sm:$0x1]
      %v816 = vld [vmem:[%s782 + $0x84] sm:$0xf]
      %v817 = vld [vmem:[%s782 + $0x88] sm:$0xf]
      %v818 = vld [vmem:[%s782 + $0x8c] sm:$0x1]
      %v819 = vld [vmem:[%s782 + $0x90] sm:$0xf]
      %v820 = vld [vmem:[%s782 + $0x94] sm:$0xf]
      %v821 = vld [vmem:[%s782 + $0x98] sm:$0x1]
      %v822 = vld [vmem:[%s782 + $0x9c] sm:$0xf]
      %v823 = vld [vmem:[%s782 + $0xa0] sm:$0xf]
      %v824 = vld [vmem:[%s782 + $0xa4] sm:$0x1]
      %v825 = vld [vmem:[%s782 + $0xa8] sm:$0xf]
      %v826 = vld [vmem:[%s782 + $0xac] sm:$0xf]
      %v827 = vld [vmem:[%s782 + $0xb0] sm:$0x1]
      %v828 = vld [vmem:[%s782 + $0xb4] sm:$0xf]
      %v829 = vld [vmem:[%s782 + $0xb8] sm:$0xf]
      %v830 = vld [vmem:[%s782 + $0xbc] sm:$0x1]
      %s831 = scalar_lea.vmem %s325, 2652
      %v832 = vld [vmem:[%s831] sm:$0xf]
      %v833 = vld [vmem:[%s831 + $0x4] sm:$0xf]
      %v834 = vld [vmem:[%s831 + $0xc] sm:$0xf]
      %v835 = vld [vmem:[%s831 + $0x10] sm:$0xf]
      %v836 = vld [vmem:[%s831 + $0x18] sm:$0xf]
      %v837 = vld [vmem:[%s831 + $0x1c] sm:$0xf]
      %v838 = vld [vmem:[%s831 + $0x24] sm:$0xf]
      %v839 = vld [vmem:[%s831 + $0x28] sm:$0xf]
      %v840 = vld [vmem:[%s831 + $0x30] sm:$0xf]
      %v841 = vld [vmem:[%s831 + $0x34] sm:$0xf]
      %v842 = vld [vmem:[%s831 + $0x3c] sm:$0xf]
      %v843 = vld [vmem:[%s831 + $0x40] sm:$0xf]
      %v844 = vld [vmem:[%s831 + $0x48] sm:$0xf]
      %v845 = vld [vmem:[%s831 + $0x4c] sm:$0xf]
      %v846 = vld [vmem:[%s831 + $0x54] sm:$0xf]
      %v847 = vld [vmem:[%s831 + $0x58] sm:$0xf]
      %v848 = vld [vmem:[%s831 + $0x60] sm:$0xf]
      %v849 = vld [vmem:[%s831 + $0x64] sm:$0xf]
      %v850 = vld [vmem:[%s831 + $0x6c] sm:$0xf]
      %v851 = vld [vmem:[%s831 + $0x70] sm:$0xf]
      %v852 = vld [vmem:[%s831 + $0x78] sm:$0xf]
      %v853 = vld [vmem:[%s831 + $0x7c] sm:$0xf]
      %v854 = vld [vmem:[%s831 + $0x84] sm:$0xf]
      %v855 = vld [vmem:[%s831 + $0x88] sm:$0xf]
      %v856 = vld [vmem:[%s831 + $0x90] sm:$0xf]
      %v857 = vld [vmem:[%s831 + $0x94] sm:$0xf]
      %v858 = vld [vmem:[%s831 + $0x9c] sm:$0xf]
      %v859 = vld [vmem:[%s831 + $0xa0] sm:$0xf]
      %v860 = vld [vmem:[%s831 + $0xa8] sm:$0xf]
      %v861 = vld [vmem:[%s831 + $0xac] sm:$0xf]
      %v862 = vld [vmem:[%s831 + $0xb4] sm:$0xf]
      %v863 = vld [vmem:[%s831 + $0xb8] sm:$0xf]
      %s864 = scalar_lea.vmem %s325, 2856
      %v865 = vld [vmem:[%s864] sm:$0xf]
      %v866 = vld [vmem:[%s864 + $0x4] sm:$0xf]
      %v867 = vld [vmem:[%s864 + $0xc] sm:$0xf]
      %v868 = vld [vmem:[%s864 + $0x10] sm:$0xf]
      %v869 = vld [vmem:[%s864 + $0x18] sm:$0xf]
      %v870 = vld [vmem:[%s864 + $0x1c] sm:$0xf]
      %v871 = vld [vmem:[%s864 + $0x24] sm:$0xf]
      %v872 = vld [vmem:[%s864 + $0x28] sm:$0xf]
      %v873 = vld [vmem:[%s864 + $0x30] sm:$0xf]
      %v874 = vld [vmem:[%s864 + $0x34] sm:$0xf]
      %v875 = vld [vmem:[%s864 + $0x3c] sm:$0xf]
      %v876 = vld [vmem:[%s864 + $0x40] sm:$0xf]
      %v877 = vld [vmem:[%s864 + $0x48] sm:$0xf]
      %v878 = vld [vmem:[%s864 + $0x4c] sm:$0xf]
      %v879 = vld [vmem:[%s864 + $0x54] sm:$0xf]
      %v880 = vld [vmem:[%s864 + $0x58] sm:$0xf]
      %v881 = vld [vmem:[%s864 + $0x60] sm:$0xf]
      %v882 = vld [vmem:[%s864 + $0x64] sm:$0xf]
      %v883 = vld [vmem:[%s864 + $0x6c] sm:$0xf]
      %v884 = vld [vmem:[%s864 + $0x70] sm:$0xf]
      %v885 = vld [vmem:[%s864 + $0x78] sm:$0xf]
      %v886 = vld [vmem:[%s864 + $0x7c] sm:$0xf]
      %v887 = vld [vmem:[%s864 + $0x84] sm:$0xf]
      %v888 = vld [vmem:[%s864 + $0x88] sm:$0xf]
      %v889 = vld [vmem:[%s864 + $0x90] sm:$0xf]
      %v890 = vld [vmem:[%s864 + $0x94] sm:$0xf]
      %v891 = vld [vmem:[%s864 + $0x9c] sm:$0xf]
      %v892 = vld [vmem:[%s864 + $0xa0] sm:$0xf]
      %v893 = vld [vmem:[%s864 + $0xa8] sm:$0xf]
      %v894 = vld [vmem:[%s864 + $0xac] sm:$0xf]
      %v895 = vld [vmem:[%s864 + $0xb4] sm:$0xf]
      %v896 = vld [vmem:[%s864 + $0xb8] sm:$0xf]
      %s897 = scalar_lea.vmem %s325, 3060
      %v898 = vld [vmem:[%s897] sm:$0xf]
      %v899 = vld [vmem:[%s897 + $0x4] sm:$0xf]
      %v900 = vld [vmem:[%s897 + $0xc] sm:$0xf]
      %v901 = vld [vmem:[%s897 + $0x10] sm:$0xf]
      %v902 = vld [vmem:[%s897 + $0x18] sm:$0xf]
      %v903 = vld [vmem:[%s897 + $0x1c] sm:$0xf]
      %v904 = vld [vmem:[%s897 + $0x24] sm:$0xf]
      %v905 = vld [vmem:[%s897 + $0x28] sm:$0xf]
      %v906 = vld [vmem:[%s897 + $0x30] sm:$0xf]
      %v907 = vld [vmem:[%s897 + $0x34] sm:$0xf]
      %v908 = vld [vmem:[%s897 + $0x3c] sm:$0xf]
      %v909 = vld [vmem:[%s897 + $0x40] sm:$0xf]
      %v910 = vld [vmem:[%s897 + $0x48] sm:$0xf]
      %v911 = vld [vmem:[%s897 + $0x4c] sm:$0xf]
      %v912 = vld [vmem:[%s897 + $0x54] sm:$0xf]
      %v913 = vld [vmem:[%s897 + $0x58] sm:$0xf]
      %v914 = vld [vmem:[%s897 + $0x60] sm:$0xf]
      %v915 = vld [vmem:[%s897 + $0x64] sm:$0xf]
      %v916 = vld [vmem:[%s897 + $0x6c] sm:$0xf]
      %v917 = vld [vmem:[%s897 + $0x70] sm:$0xf]
      %v918 = vld [vmem:[%s897 + $0x78] sm:$0xf]
      %v919 = vld [vmem:[%s897 + $0x7c] sm:$0xf]
      %v920 = vld [vmem:[%s897 + $0x84] sm:$0xf]
      %v921 = vld [vmem:[%s897 + $0x88] sm:$0xf]
      %v922 = vld [vmem:[%s897 + $0x90] sm:$0xf]
      %v923 = vld [vmem:[%s897 + $0x94] sm:$0xf]
      %v924 = vld [vmem:[%s897 + $0x9c] sm:$0xf]
      %v925 = vld [vmem:[%s897 + $0xa0] sm:$0xf]
      %v926 = vld [vmem:[%s897 + $0xa8] sm:$0xf]
      %v927 = vld [vmem:[%s897 + $0xac] sm:$0xf]
      %v928 = vld [vmem:[%s897 + $0xb4] sm:$0xf]
      %v929 = vld [vmem:[%s897 + $0xb8] sm:$0xf]
      %v962 = vunpack.c.l.b16 %v330
      %v963 = vunpack.c.l.b16 %v331
      %v964 = vunpack.c.l.b16 %v333
      %v965 = vunpack.c.l.b16 %v334
      %v966 = vunpack.c.l.b16 %v336
      %v967 = vunpack.c.l.b16 %v337
      %v968 = vunpack.c.l.b16 %v339
      %v969 = vunpack.c.l.b16 %v340
      %v970 = vunpack.c.l.b16 %v342
      %v971 = vunpack.c.l.b16 %v343
      %v972 = vunpack.c.l.b16 %v345
      %v973 = vunpack.c.l.b16 %v346
      %v974 = vunpack.c.l.b16 %v348
      %v975 = vunpack.c.l.b16 %v349
      %v976 = vunpack.c.l.b16 %v351
      %v977 = vunpack.c.l.b16 %v352
      %v978 = vunpack.c.l.b16 %v354
      %v979 = vunpack.c.l.b16 %v355
      %v980 = vunpack.c.l.b16 %v357
      %v981 = vunpack.c.l.b16 %v358
      %v982 = vunpack.c.l.b16 %v360
      %v983 = vunpack.c.l.b16 %v361
      %v984 = vunpack.c.l.b16 %v363
      %v985 = vunpack.c.l.b16 %v364
      %v986 = vunpack.c.l.b16 %v366
      %v987 = vunpack.c.l.b16 %v367
      %v988 = vunpack.c.l.b16 %v369
      %v989 = vunpack.c.l.b16 %v370
      %v990 = vunpack.c.l.b16 %v372
      %v991 = vunpack.c.l.b16 %v373
      %v992 = vunpack.c.l.b16 %v375
      %v993 = vunpack.c.l.b16 %v376
      %v994 = vpack.c.b16 %v963, %v962
      %v995 = vpack.c.b16 %v965, %v964
      %v996 = vpack.c.b16 %v967, %v966
      %v997 = vpack.c.b16 %v969, %v968
      %v998 = vpack.c.b16 %v971, %v970
      %v999 = vpack.c.b16 %v973, %v972
      %v1000 = vpack.c.b16 %v975, %v974
      %v1001 = vpack.c.b16 %v977, %v976
      %v1002 = vpack.c.b16 %v979, %v978
      %v1003 = vpack.c.b16 %v981, %v980
      %v1004 = vpack.c.b16 %v983, %v982
      %v1005 = vpack.c.b16 %v985, %v984
      %v1006 = vpack.c.b16 %v987, %v986
      %v1007 = vpack.c.b16 %v989, %v988
      %v1008 = vpack.c.b16 %v991, %v990
      %v1009 = vpack.c.b16 %v993, %v992
      %v1042 = vunpack.c.l.b16 %v382
      %v1043 = vunpack.c.l.b16 %v383
      %v1044 = vunpack.c.l.b16 %v384
      %v1045 = vunpack.c.l.b16 %v385
      %v1046 = vunpack.c.l.b16 %v386
      %v1047 = vunpack.c.l.b16 %v387
      %v1048 = vunpack.c.l.b16 %v388
      %v1049 = vunpack.c.l.b16 %v389
      %v1050 = vunpack.c.l.b16 %v390
      %v1051 = vunpack.c.l.b16 %v391
      %v1052 = vunpack.c.l.b16 %v392
      %v1053 = vunpack.c.l.b16 %v393
      %v1054 = vunpack.c.l.b16 %v394
      %v1055 = vunpack.c.l.b16 %v395
      %v1056 = vunpack.c.l.b16 %v396
      %v1057 = vunpack.c.l.b16 %v397
      %v1058 = vunpack.c.l.b16 %v398
      %v1059 = vunpack.c.l.b16 %v399
      %v1060 = vunpack.c.l.b16 %v400
      %v1061 = vunpack.c.l.b16 %v401
      %v1062 = vunpack.c.l.b16 %v402
      %v1063 = vunpack.c.l.b16 %v403
      %v1064 = vunpack.c.l.b16 %v404
      %v1065 = vunpack.c.l.b16 %v405
      %v1066 = vunpack.c.l.b16 %v406
      %v1067 = vunpack.c.l.b16 %v407
      %v1068 = vunpack.c.l.b16 %v408
      %v1069 = vunpack.c.l.b16 %v409
      %v1070 = vunpack.c.l.b16 %v410
      %v1071 = vunpack.c.l.b16 %v411
      %v1072 = vunpack.c.l.b16 %v412
      %v1073 = vunpack.c.l.b16 %v413
      %v1074 = vpack.c.b16 %v1043, %v1042
      %v1075 = vpack.c.b16 %v1045, %v1044
      %v1076 = vpack.c.b16 %v1047, %v1046
      %v1077 = vpack.c.b16 %v1049, %v1048
      %v1078 = vpack.c.b16 %v1051, %v1050
      %v1079 = vpack.c.b16 %v1053, %v1052
      %v1080 = vpack.c.b16 %v1055, %v1054
      %v1081 = vpack.c.b16 %v1057, %v1056
      %v1082 = vpack.c.b16 %v1059, %v1058
      %v1083 = vpack.c.b16 %v1061, %v1060
      %v1084 = vpack.c.b16 %v1063, %v1062
      %v1085 = vpack.c.b16 %v1065, %v1064
      %v1086 = vpack.c.b16 %v1067, %v1066
      %v1087 = vpack.c.b16 %v1069, %v1068
      %v1088 = vpack.c.b16 %v1071, %v1070
      %v1089 = vpack.c.b16 %v1073, %v1072
      %1090 = vrot.lane.b32.xlu0 %v1074, 3
      %v1091 = vpop.permute.xlu0 %1090
      %1092 = vrot.lane.b32.xlu0 %v1075, 3
      %v1093 = vpop.permute.xlu0 %1092
      %1094 = vrot.lane.b32.xlu0 %v1076, 3
      %v1095 = vpop.permute.xlu0 %1094
      %1096 = vrot.lane.b32.xlu0 %v1077, 3
      %v1097 = vpop.permute.xlu0 %1096
      %1098 = vrot.lane.b32.xlu0 %v1078, 3
      %v1099 = vpop.permute.xlu0 %1098
      %1100 = vrot.lane.b32.xlu0 %v1079, 3
      %v1101 = vpop.permute.xlu0 %1100
      %1102 = vrot.lane.b32.xlu0 %v1080, 3
      %v1103 = vpop.permute.xlu0 %1102
      %1104 = vrot.lane.b32.xlu0 %v1081, 3
      %v1105 = vpop.permute.xlu0 %1104
      %1106 = vrot.lane.b32.xlu0 %v1082, 3
      %v1107 = vpop.permute.xlu0 %1106
      %1108 = vrot.lane.b32.xlu0 %v1083, 3
      %v1109 = vpop.permute.xlu0 %1108
      %1110 = vrot.lane.b32.xlu0 %v1084, 3
      %v1111 = vpop.permute.xlu0 %1110
      %1112 = vrot.lane.b32.xlu0 %v1085, 3
      %v1113 = vpop.permute.xlu0 %1112
      %1114 = vrot.lane.b32.xlu0 %v1086, 3
      %v1115 = vpop.permute.xlu0 %1114
      %1116 = vrot.lane.b32.xlu0 %v1087, 3
      %v1117 = vpop.permute.xlu0 %1116
      %1118 = vrot.lane.b32.xlu0 %v1088, 3
      %v1119 = vpop.permute.xlu0 %1118
      %1120 = vrot.lane.b32.xlu0 %v1089, 3
      %v1121 = vpop.permute.xlu0 %1120
      %v1154 = vunpack.c.l.b16 %v417
      %v1155 = vunpack.c.l.b16 %v418
      %v1156 = vunpack.c.l.b16 %v419
      %v1157 = vunpack.c.l.b16 %v420
      %v1158 = vunpack.c.l.b16 %v421
      %v1159 = vunpack.c.l.b16 %v422
      %v1160 = vunpack.c.l.b16 %v423
      %v1161 = vunpack.c.l.b16 %v424
      %v1162 = vunpack.c.l.b16 %v425
      %v1163 = vunpack.c.l.b16 %v426
      %v1164 = vunpack.c.l.b16 %v427
      %v1165 = vunpack.c.l.b16 %v428
      %v1166 = vunpack.c.l.b16 %v429
      %v1167 = vunpack.c.l.b16 %v430
      %v1168 = vunpack.c.l.b16 %v431
      %v1169 = vunpack.c.l.b16 %v432
      %v1170 = vunpack.c.l.b16 %v433
      %v1171 = vunpack.c.l.b16 %v434
      %v1172 = vunpack.c.l.b16 %v435
      %v1173 = vunpack.c.l.b16 %v436
      %v1174 = vunpack.c.l.b16 %v437
      %v1175 = vunpack.c.l.b16 %v438
      %v1176 = vunpack.c.l.b16 %v439
      %v1177 = vunpack.c.l.b16 %v440
      %v1178 = vunpack.c.l.b16 %v441
      %v1179 = vunpack.c.l.b16 %v442
      %v1180 = vunpack.c.l.b16 %v443
      %v1181 = vunpack.c.l.b16 %v444
      %v1182 = vunpack.c.l.b16 %v445
      %v1183 = vunpack.c.l.b16 %v446
      %v1184 = vunpack.c.l.b16 %v447
      %v1185 = vunpack.c.l.b16 %v448
      %v1186 = vpack.c.b16 %v1155, %v1154
      %v1187 = vpack.c.b16 %v1157, %v1156
      %v1188 = vpack.c.b16 %v1159, %v1158
      %v1189 = vpack.c.b16 %v1161, %v1160
      %v1190 = vpack.c.b16 %v1163, %v1162
      %v1191 = vpack.c.b16 %v1165, %v1164
      %v1192 = vpack.c.b16 %v1167, %v1166
      %v1193 = vpack.c.b16 %v1169, %v1168
      %v1194 = vpack.c.b16 %v1171, %v1170
      %v1195 = vpack.c.b16 %v1173, %v1172
      %v1196 = vpack.c.b16 %v1175, %v1174
      %v1197 = vpack.c.b16 %v1177, %v1176
      %v1198 = vpack.c.b16 %v1179, %v1178
      %v1199 = vpack.c.b16 %v1181, %v1180
      %v1200 = vpack.c.b16 %v1183, %v1182
      %v1201 = vpack.c.b16 %v1185, %v1184
      %1202 = vrot.lane.b32.xlu0 %v1186, 6
      %v1203 = vpop.permute.xlu0 %1202
      %1204 = vrot.lane.b32.xlu0 %v1187, 6
      %v1205 = vpop.permute.xlu0 %1204
      %1206 = vrot.lane.b32.xlu0 %v1188, 6
      %v1207 = vpop.permute.xlu0 %1206
      %1208 = vrot.lane.b32.xlu0 %v1189, 6
      %v1209 = vpop.permute.xlu0 %1208
      %1210 = vrot.lane.b32.xlu0 %v1190, 6
      %v1211 = vpop.permute.xlu0 %1210
      %1212 = vrot.lane.b32.xlu0 %v1191, 6
      %v1213 = vpop.permute.xlu0 %1212
      %1214 = vrot.lane.b32.xlu0 %v1192, 6
      %v1215 = vpop.permute.xlu0 %1214
      %1216 = vrot.lane.b32.xlu0 %v1193, 6
      %v1217 = vpop.permute.xlu0 %1216
      %1218 = vrot.lane.b32.xlu0 %v1194, 6
      %v1219 = vpop.permute.xlu0 %1218
      %1220 = vrot.lane.b32.xlu0 %v1195, 6
      %v1221 = vpop.permute.xlu0 %1220
      %1222 = vrot.lane.b32.xlu0 %v1196, 6
      %v1223 = vpop.permute.xlu0 %1222
      %1224 = vrot.lane.b32.xlu0 %v1197, 6
      %v1225 = vpop.permute.xlu0 %1224
      %1226 = vrot.lane.b32.xlu0 %v1198, 6
      %v1227 = vpop.permute.xlu0 %1226
      %1228 = vrot.lane.b32.xlu0 %v1199, 6
      %v1229 = vpop.permute.xlu0 %1228
      %1230 = vrot.lane.b32.xlu0 %v1200, 6
      %v1231 = vpop.permute.xlu0 %1230
      %1232 = vrot.lane.b32.xlu0 %v1201, 6
      %v1233 = vpop.permute.xlu0 %1232
      %v1266 = vunpack.c.l.b16 %v487
      %v1267 = vunpack.c.l.b16 %v488
      %v1268 = vunpack.c.l.b16 %v490
      %v1269 = vunpack.c.l.b16 %v491
      %v1270 = vunpack.c.l.b16 %v493
      %v1271 = vunpack.c.l.b16 %v494
      %v1272 = vunpack.c.l.b16 %v496
      %v1273 = vunpack.c.l.b16 %v497
      %v1274 = vunpack.c.l.b16 %v499
      %v1275 = vunpack.c.l.b16 %v500
      %v1276 = vunpack.c.l.b16 %v502
      %v1277 = vunpack.c.l.b16 %v503
      %v1278 = vunpack.c.l.b16 %v505
      %v1279 = vunpack.c.l.b16 %v506
      %v1280 = vunpack.c.l.b16 %v508
      %v1281 = vunpack.c.l.b16 %v509
      %v1282 = vunpack.c.l.b16 %v511
      %v1283 = vunpack.c.l.b16 %v512
      %v1284 = vunpack.c.l.b16 %v514
      %v1285 = vunpack.c.l.b16 %v515
      %v1286 = vunpack.c.l.b16 %v517
      %v1287 = vunpack.c.l.b16 %v518
      %v1288 = vunpack.c.l.b16 %v520
      %v1289 = vunpack.c.l.b16 %v521
      %v1290 = vunpack.c.l.b16 %v523
      %v1291 = vunpack.c.l.b16 %v524
      %v1292 = vunpack.c.l.b16 %v526
      %v1293 = vunpack.c.l.b16 %v527
      %v1294 = vunpack.c.l.b16 %v529
      %v1295 = vunpack.c.l.b16 %v530
      %v1296 = vunpack.c.l.b16 %v532
      %v1297 = vunpack.c.l.b16 %v533
      %v1298 = vpack.c.b16 %v1267, %v1266
      %v1299 = vpack.c.b16 %v1269, %v1268
      %v1300 = vpack.c.b16 %v1271, %v1270
      %v1301 = vpack.c.b16 %v1273, %v1272
      %v1302 = vpack.c.b16 %v1275, %v1274
      %v1303 = vpack.c.b16 %v1277, %v1276
      %v1304 = vpack.c.b16 %v1279, %v1278
      %v1305 = vpack.c.b16 %v1281, %v1280
      %v1306 = vpack.c.b16 %v1283, %v1282
      %v1307 = vpack.c.b16 %v1285, %v1284
      %v1308 = vpack.c.b16 %v1287, %v1286
      %v1309 = vpack.c.b16 %v1289, %v1288
      %v1310 = vpack.c.b16 %v1291, %v1290
      %v1311 = vpack.c.b16 %v1293, %v1292
      %v1312 = vpack.c.b16 %v1295, %v1294
      %v1313 = vpack.c.b16 %v1297, %v1296
      %1314 = vrot.lane.b32.xlu0 %v1298, 9
      %v1315 = vpop.permute.xlu0 %1314
      %1316 = vrot.lane.b32.xlu0 %v1299, 9
      %v1317 = vpop.permute.xlu0 %1316
      %1318 = vrot.lane.b32.xlu0 %v1300, 9
      %v1319 = vpop.permute.xlu0 %1318
      %1320 = vrot.lane.b32.xlu0 %v1301, 9
      %v1321 = vpop.permute.xlu0 %1320
      %1322 = vrot.lane.b32.xlu0 %v1302, 9
      %v1323 = vpop.permute.xlu0 %1322
      %1324 = vrot.lane.b32.xlu0 %v1303, 9
      %v1325 = vpop.permute.xlu0 %1324
      %1326 = vrot.lane.b32.xlu0 %v1304, 9
      %v1327 = vpop.permute.xlu0 %1326
      %1328 = vrot.lane.b32.xlu0 %v1305, 9
      %v1329 = vpop.permute.xlu0 %1328
      %1330 = vrot.lane.b32.xlu0 %v1306, 9
      %v1331 = vpop.permute.xlu0 %1330
      %1332 = vrot.lane.b32.xlu0 %v1307, 9
      %v1333 = vpop.permute.xlu0 %1332
      %1334 = vrot.lane.b32.xlu0 %v1308, 9
      %v1335 = vpop.permute.xlu0 %1334
      %1336 = vrot.lane.b32.xlu0 %v1309, 9
      %v1337 = vpop.permute.xlu0 %1336
      %1338 = vrot.lane.b32.xlu0 %v1310, 9
      %v1339 = vpop.permute.xlu0 %1338
      %1340 = vrot.lane.b32.xlu0 %v1311, 9
      %v1341 = vpop.permute.xlu0 %1340
      %1342 = vrot.lane.b32.xlu0 %v1312, 9
      %v1343 = vpop.permute.xlu0 %1342
      %1344 = vrot.lane.b32.xlu0 %v1313, 9
      %v1345 = vpop.permute.xlu0 %1344
      %v1378 = vunpack.c.l.b16 %v536
      %v1379 = vunpack.c.l.b16 %v537
      %v1380 = vunpack.c.l.b16 %v538
      %v1381 = vunpack.c.l.b16 %v539
      %v1382 = vunpack.c.l.b16 %v540
      %v1383 = vunpack.c.l.b16 %v541
      %v1384 = vunpack.c.l.b16 %v542
      %v1385 = vunpack.c.l.b16 %v543
      %v1386 = vunpack.c.l.b16 %v544
      %v1387 = vunpack.c.l.b16 %v545
      %v1388 = vunpack.c.l.b16 %v546
      %v1389 = vunpack.c.l.b16 %v547
      %v1390 = vunpack.c.l.b16 %v548
      %v1391 = vunpack.c.l.b16 %v549
      %v1392 = vunpack.c.l.b16 %v550
      %v1393 = vunpack.c.l.b16 %v551
      %v1394 = vunpack.c.l.b16 %v552
      %v1395 = vunpack.c.l.b16 %v553
      %v1396 = vunpack.c.l.b16 %v554
      %v1397 = vunpack.c.l.b16 %v555
      %v1398 = vunpack.c.l.b16 %v556
      %v1399 = vunpack.c.l.b16 %v557
      %v1400 = vunpack.c.l.b16 %v558
      %v1401 = vunpack.c.l.b16 %v559
      %v1402 = vunpack.c.l.b16 %v560
      %v1403 = vunpack.c.l.b16 %v561
      %v1404 = vunpack.c.l.b16 %v562
      %v1405 = vunpack.c.l.b16 %v563
      %v1406 = vunpack.c.l.b16 %v564
      %v1407 = vunpack.c.l.b16 %v565
      %v1408 = vunpack.c.l.b16 %v566
      %v1409 = vunpack.c.l.b16 %v567
      %v1410 = vpack.c.b16 %v1379, %v1378
      %v1411 = vpack.c.b16 %v1381, %v1380
      %v1412 = vpack.c.b16 %v1383, %v1382
      %v1413 = vpack.c.b16 %v1385, %v1384
      %v1414 = vpack.c.b16 %v1387, %v1386
      %v1415 = vpack.c.b16 %v1389, %v1388
      %v1416 = vpack.c.b16 %v1391, %v1390
      %v1417 = vpack.c.b16 %v1393, %v1392
      %v1418 = vpack.c.b16 %v1395, %v1394
      %v1419 = vpack.c.b16 %v1397, %v1396
      %v1420 = vpack.c.b16 %v1399, %v1398
      %v1421 = vpack.c.b16 %v1401, %v1400
      %v1422 = vpack.c.b16 %v1403, %v1402
      %v1423 = vpack.c.b16 %v1405, %v1404
      %v1424 = vpack.c.b16 %v1407, %v1406
      %v1425 = vpack.c.b16 %v1409, %v1408
      %1426 = vrot.lane.b32.xlu0 %v1410, 12
      %v1427 = vpop.permute.xlu0 %1426
      %1428 = vrot.lane.b32.xlu0 %v1411, 12
      %v1429 = vpop.permute.xlu0 %1428
      %1430 = vrot.lane.b32.xlu0 %v1412, 12
      %v1431 = vpop.permute.xlu0 %1430
      %1432 = vrot.lane.b32.xlu0 %v1413, 12
      %v1433 = vpop.permute.xlu0 %1432
      %1434 = vrot.lane.b32.xlu0 %v1414, 12
      %v1435 = vpop.permute.xlu0 %1434
      %1436 = vrot.lane.b32.xlu0 %v1415, 12
      %v1437 = vpop.permute.xlu0 %1436
      %1438 = vrot.lane.b32.xlu0 %v1416, 12
      %v1439 = vpop.permute.xlu0 %1438
      %1440 = vrot.lane.b32.xlu0 %v1417, 12
      %v1441 = vpop.permute.xlu0 %1440
      %1442 = vrot.lane.b32.xlu0 %v1418, 12
      %v1443 = vpop.permute.xlu0 %1442
      %1444 = vrot.lane.b32.xlu0 %v1419, 12
      %v1445 = vpop.permute.xlu0 %1444
      %1446 = vrot.lane.b32.xlu0 %v1420, 12
      %v1447 = vpop.permute.xlu0 %1446
      %1448 = vrot.lane.b32.xlu0 %v1421, 12
      %v1449 = vpop.permute.xlu0 %1448
      %1450 = vrot.lane.b32.xlu0 %v1422, 12
      %v1451 = vpop.permute.xlu0 %1450
      %1452 = vrot.lane.b32.xlu0 %v1423, 12
      %v1453 = vpop.permute.xlu0 %1452
      %1454 = vrot.lane.b32.xlu0 %v1424, 12
      %v1455 = vpop.permute.xlu0 %1454
      %1456 = vrot.lane.b32.xlu0 %v1425, 12
      %v1457 = vpop.permute.xlu0 %1456
      %v1490 = vunpack.c.l.b16 %v569
      %v1491 = vunpack.c.l.b16 %v570
      %v1492 = vunpack.c.l.b16 %v571
      %v1493 = vunpack.c.l.b16 %v572
      %v1494 = vunpack.c.l.b16 %v573
      %v1495 = vunpack.c.l.b16 %v574
      %v1496 = vunpack.c.l.b16 %v575
      %v1497 = vunpack.c.l.b16 %v576
      %v1498 = vunpack.c.l.b16 %v577
      %v1499 = vunpack.c.l.b16 %v578
      %v1500 = vunpack.c.l.b16 %v579
      %v1501 = vunpack.c.l.b16 %v580
      %v1502 = vunpack.c.l.b16 %v581
      %v1503 = vunpack.c.l.b16 %v582
      %v1504 = vunpack.c.l.b16 %v583
      %v1505 = vunpack.c.l.b16 %v584
      %v1506 = vunpack.c.l.b16 %v585
      %v1507 = vunpack.c.l.b16 %v586
      %v1508 = vunpack.c.l.b16 %v587
      %v1509 = vunpack.c.l.b16 %v588
      %v1510 = vunpack.c.l.b16 %v589
      %v1511 = vunpack.c.l.b16 %v590
      %v1512 = vunpack.c.l.b16 %v591
      %v1513 = vunpack.c.l.b16 %v592
      %v1514 = vunpack.c.l.b16 %v593
      %v1515 = vunpack.c.l.b16 %v594
      %v1516 = vunpack.c.l.b16 %v595
      %v1517 = vunpack.c.l.b16 %v596
      %v1518 = vunpack.c.l.b16 %v597
      %v1519 = vunpack.c.l.b16 %v598
      %v1520 = vunpack.c.l.b16 %v599
      %v1521 = vunpack.c.l.b16 %v600
      %v1522 = vpack.c.b16 %v1491, %v1490
      %v1523 = vpack.c.b16 %v1493, %v1492
      %v1524 = vpack.c.b16 %v1495, %v1494
      %v1525 = vpack.c.b16 %v1497, %v1496
      %v1526 = vpack.c.b16 %v1499, %v1498
      %v1527 = vpack.c.b16 %v1501, %v1500
      %v1528 = vpack.c.b16 %v1503, %v1502
      %v1529 = vpack.c.b16 %v1505, %v1504
      %v1530 = vpack.c.b16 %v1507, %v1506
      %v1531 = vpack.c.b16 %v1509, %v1508
      %v1532 = vpack.c.b16 %v1511, %v1510
      %v1533 = vpack.c.b16 %v1513, %v1512
      %v1534 = vpack.c.b16 %v1515, %v1514
      %v1535 = vpack.c.b16 %v1517, %v1516
      %v1536 = vpack.c.b16 %v1519, %v1518
      %v1537 = vpack.c.b16 %v1521, %v1520
      %1538 = vrot.lane.b32.xlu0 %v1522, 15
      %v1539 = vpop.permute.xlu0 %1538
      %1540 = vrot.lane.b32.xlu0 %v1523, 15
      %v1541 = vpop.permute.xlu0 %1540
      %1542 = vrot.lane.b32.xlu0 %v1524, 15
      %v1543 = vpop.permute.xlu0 %1542
      %1544 = vrot.lane.b32.xlu0 %v1525, 15
      %v1545 = vpop.permute.xlu0 %1544
      %1546 = vrot.lane.b32.xlu0 %v1526, 15
      %v1547 = vpop.permute.xlu0 %1546
      %1548 = vrot.lane.b32.xlu0 %v1527, 15
      %v1549 = vpop.permute.xlu0 %1548
      %1550 = vrot.lane.b32.xlu0 %v1528, 15
      %v1551 = vpop.permute.xlu0 %1550
      %1552 = vrot.lane.b32.xlu0 %v1529, 15
      %v1553 = vpop.permute.xlu0 %1552
      %1554 = vrot.lane.b32.xlu0 %v1530, 15
      %v1555 = vpop.permute.xlu0 %1554
      %1556 = vrot.lane.b32.xlu0 %v1531, 15
      %v1557 = vpop.permute.xlu0 %1556
      %1558 = vrot.lane.b32.xlu0 %v1532, 15
      %v1559 = vpop.permute.xlu0 %1558
      %1560 = vrot.lane.b32.xlu0 %v1533, 15
      %v1561 = vpop.permute.xlu0 %1560
      %1562 = vrot.lane.b32.xlu0 %v1534, 15
      %v1563 = vpop.permute.xlu0 %1562
      %1564 = vrot.lane.b32.xlu0 %v1535, 15
      %v1565 = vpop.permute.xlu0 %1564
      %1566 = vrot.lane.b32.xlu0 %v1536, 15
      %v1567 = vpop.permute.xlu0 %1566
      %1568 = vrot.lane.b32.xlu0 %v1537, 15
      %v1569 = vpop.permute.xlu0 %1568
      %v1602 = vunpack.c.l.b16 %v635
      %v1603 = vunpack.c.l.b16 %v636
      %v1604 = vunpack.c.l.b16 %v638
      %v1605 = vunpack.c.l.b16 %v639
      %v1606 = vunpack.c.l.b16 %v641
      %v1607 = vunpack.c.l.b16 %v642
      %v1608 = vunpack.c.l.b16 %v644
      %v1609 = vunpack.c.l.b16 %v645
      %v1610 = vunpack.c.l.b16 %v647
      %v1611 = vunpack.c.l.b16 %v648
      %v1612 = vunpack.c.l.b16 %v650
      %v1613 = vunpack.c.l.b16 %v651
      %v1614 = vunpack.c.l.b16 %v653
      %v1615 = vunpack.c.l.b16 %v654
      %v1616 = vunpack.c.l.b16 %v656
      %v1617 = vunpack.c.l.b16 %v657
      %v1618 = vunpack.c.l.b16 %v659
      %v1619 = vunpack.c.l.b16 %v660
      %v1620 = vunpack.c.l.b16 %v662
      %v1621 = vunpack.c.l.b16 %v663
      %v1622 = vunpack.c.l.b16 %v665
      %v1623 = vunpack.c.l.b16 %v666
      %v1624 = vunpack.c.l.b16 %v668
      %v1625 = vunpack.c.l.b16 %v669
      %v1626 = vunpack.c.l.b16 %v671
      %v1627 = vunpack.c.l.b16 %v672
      %v1628 = vunpack.c.l.b16 %v674
      %v1629 = vunpack.c.l.b16 %v675
      %v1630 = vunpack.c.l.b16 %v677
      %v1631 = vunpack.c.l.b16 %v678
      %v1632 = vunpack.c.l.b16 %v680
      %v1633 = vunpack.c.l.b16 %v681
      %v1634 = vpack.c.b16 %v1603, %v1602
      %v1635 = vpack.c.b16 %v1605, %v1604
      %v1636 = vpack.c.b16 %v1607, %v1606
      %v1637 = vpack.c.b16 %v1609, %v1608
      %v1638 = vpack.c.b16 %v1611, %v1610
      %v1639 = vpack.c.b16 %v1613, %v1612
      %v1640 = vpack.c.b16 %v1615, %v1614
      %v1641 = vpack.c.b16 %v1617, %v1616
      %v1642 = vpack.c.b16 %v1619, %v1618
      %v1643 = vpack.c.b16 %v1621, %v1620
      %v1644 = vpack.c.b16 %v1623, %v1622
      %v1645 = vpack.c.b16 %v1625, %v1624
      %v1646 = vpack.c.b16 %v1627, %v1626
      %v1647 = vpack.c.b16 %v1629, %v1628
      %v1648 = vpack.c.b16 %v1631, %v1630
      %v1649 = vpack.c.b16 %v1633, %v1632
      %1650 = vrot.lane.b32.xlu0 %v1634, 18
      %v1651 = vpop.permute.xlu0 %1650
      %1652 = vrot.lane.b32.xlu0 %v1635, 18
      %v1653 = vpop.permute.xlu0 %1652
      %1654 = vrot.lane.b32.xlu0 %v1636, 18
      %v1655 = vpop.permute.xlu0 %1654
      %1656 = vrot.lane.b32.xlu0 %v1637, 18
      %v1657 = vpop.permute.xlu0 %1656
      %1658 = vrot.lane.b32.xlu0 %v1638, 18
      %v1659 = vpop.permute.xlu0 %1658
      %1660 = vrot.lane.b32.xlu0 %v1639, 18
      %v1661 = vpop.permute.xlu0 %1660
      %1662 = vrot.lane.b32.xlu0 %v1640, 18
      %v1663 = vpop.permute.xlu0 %1662
      %1664 = vrot.lane.b32.xlu0 %v1641, 18
      %v1665 = vpop.permute.xlu0 %1664
      %1666 = vrot.lane.b32.xlu0 %v1642, 18
      %v1667 = vpop.permute.xlu0 %1666
      %1668 = vrot.lane.b32.xlu0 %v1643, 18
      %v1669 = vpop.permute.xlu0 %1668
      %1670 = vrot.lane.b32.xlu0 %v1644, 18
      %v1671 = vpop.permute.xlu0 %1670
      %1672 = vrot.lane.b32.xlu0 %v1645, 18
      %v1673 = vpop.permute.xlu0 %1672
      %1674 = vrot.lane.b32.xlu0 %v1646, 18
      %v1675 = vpop.permute.xlu0 %1674
      %1676 = vrot.lane.b32.xlu0 %v1647, 18
      %v1677 = vpop.permute.xlu0 %1676
      %1678 = vrot.lane.b32.xlu0 %v1648, 18
      %v1679 = vpop.permute.xlu0 %1678
      %1680 = vrot.lane.b32.xlu0 %v1649, 18
      %v1681 = vpop.permute.xlu0 %1680
      %v1714 = vunpack.c.l.b16 %v684
      %v1715 = vunpack.c.l.b16 %v685
      %v1716 = vunpack.c.l.b16 %v686
      %v1717 = vunpack.c.l.b16 %v687
      %v1718 = vunpack.c.l.b16 %v688
      %v1719 = vunpack.c.l.b16 %v689
      %v1720 = vunpack.c.l.b16 %v690
      %v1721 = vunpack.c.l.b16 %v691
      %v1722 = vunpack.c.l.b16 %v692
      %v1723 = vunpack.c.l.b16 %v693
      %v1724 = vunpack.c.l.b16 %v694
      %v1725 = vunpack.c.l.b16 %v695
      %v1726 = vunpack.c.l.b16 %v696
      %v1727 = vunpack.c.l.b16 %v697
      %v1728 = vunpack.c.l.b16 %v698
      %v1729 = vunpack.c.l.b16 %v699
      %v1730 = vunpack.c.l.b16 %v700
      %v1731 = vunpack.c.l.b16 %v701
      %v1732 = vunpack.c.l.b16 %v702
      %v1733 = vunpack.c.l.b16 %v703
      %v1734 = vunpack.c.l.b16 %v704
      %v1735 = vunpack.c.l.b16 %v705
      %v1736 = vunpack.c.l.b16 %v706
      %v1737 = vunpack.c.l.b16 %v707
      %v1738 = vunpack.c.l.b16 %v708
      %v1739 = vunpack.c.l.b16 %v709
      %v1740 = vunpack.c.l.b16 %v710
      %v1741 = vunpack.c.l.b16 %v711
      %v1742 = vunpack.c.l.b16 %v712
      %v1743 = vunpack.c.l.b16 %v713
      %v1744 = vunpack.c.l.b16 %v714
      %v1745 = vunpack.c.l.b16 %v715
      %v1746 = vpack.c.b16 %v1715, %v1714
      %v1747 = vpack.c.b16 %v1717, %v1716
      %v1748 = vpack.c.b16 %v1719, %v1718
      %v1749 = vpack.c.b16 %v1721, %v1720
      %v1750 = vpack.c.b16 %v1723, %v1722
      %v1751 = vpack.c.b16 %v1725, %v1724
      %v1752 = vpack.c.b16 %v1727, %v1726
      %v1753 = vpack.c.b16 %v1729, %v1728
      %v1754 = vpack.c.b16 %v1731, %v1730
      %v1755 = vpack.c.b16 %v1733, %v1732
      %v1756 = vpack.c.b16 %v1735, %v1734
      %v1757 = vpack.c.b16 %v1737, %v1736
      %v1758 = vpack.c.b16 %v1739, %v1738
      %v1759 = vpack.c.b16 %v1741, %v1740
      %v1760 = vpack.c.b16 %v1743, %v1742
      %v1761 = vpack.c.b16 %v1745, %v1744
      %1762 = vrot.lane.b32.xlu0 %v1746, 21
      %v1763 = vpop.permute.xlu0 %1762
      %1764 = vrot.lane.b32.xlu0 %v1747, 21
      %v1765 = vpop.permute.xlu0 %1764
      %1766 = vrot.lane.b32.xlu0 %v1748, 21
      %v1767 = vpop.permute.xlu0 %1766
      %1768 = vrot.lane.b32.xlu0 %v1749, 21
      %v1769 = vpop.permute.xlu0 %1768
      %1770 = vrot.lane.b32.xlu0 %v1750, 21
      %v1771 = vpop.permute.xlu0 %1770
      %1772 = vrot.lane.b32.xlu0 %v1751, 21
      %v1773 = vpop.permute.xlu0 %1772
      %1774 = vrot.lane.b32.xlu0 %v1752, 21
      %v1775 = vpop.permute.xlu0 %1774
      %1776 = vrot.lane.b32.xlu0 %v1753, 21
      %v1777 = vpop.permute.xlu0 %1776
      %1778 = vrot.lane.b32.xlu0 %v1754, 21
      %v1779 = vpop.permute.xlu0 %1778
      %1780 = vrot.lane.b32.xlu0 %v1755, 21
      %v1781 = vpop.permute.xlu0 %1780
      %1782 = vrot.lane.b32.xlu0 %v1756, 21
      %v1783 = vpop.permute.xlu0 %1782
      %1784 = vrot.lane.b32.xlu0 %v1757, 21
      %v1785 = vpop.permute.xlu0 %1784
      %1786 = vrot.lane.b32.xlu0 %v1758, 21
      %v1787 = vpop.permute.xlu0 %1786
      %1788 = vrot.lane.b32.xlu0 %v1759, 21
      %v1789 = vpop.permute.xlu0 %1788
      %1790 = vrot.lane.b32.xlu0 %v1760, 21
      %v1791 = vpop.permute.xlu0 %1790
      %1792 = vrot.lane.b32.xlu0 %v1761, 21
      %v1793 = vpop.permute.xlu0 %1792
      %v1826 = vunpack.c.l.b16 %v717
      %v1827 = vunpack.c.l.b16 %v718
      %v1828 = vunpack.c.l.b16 %v719
      %v1829 = vunpack.c.l.b16 %v720
      %v1830 = vunpack.c.l.b16 %v721
      %v1831 = vunpack.c.l.b16 %v722
      %v1832 = vunpack.c.l.b16 %v723
      %v1833 = vunpack.c.l.b16 %v724
      %v1834 = vunpack.c.l.b16 %v725
      %v1835 = vunpack.c.l.b16 %v726
      %v1836 = vunpack.c.l.b16 %v727
      %v1837 = vunpack.c.l.b16 %v728
      %v1838 = vunpack.c.l.b16 %v729
      %v1839 = vunpack.c.l.b16 %v730
      %v1840 = vunpack.c.l.b16 %v731
      %v1841 = vunpack.c.l.b16 %v732
      %v1842 = vunpack.c.l.b16 %v733
      %v1843 = vunpack.c.l.b16 %v734
      %v1844 = vunpack.c.l.b16 %v735
      %v1845 = vunpack.c.l.b16 %v736
      %v1846 = vunpack.c.l.b16 %v737
      %v1847 = vunpack.c.l.b16 %v738
      %v1848 = vunpack.c.l.b16 %v739
      %v1849 = vunpack.c.l.b16 %v740
      %v1850 = vunpack.c.l.b16 %v741
      %v1851 = vunpack.c.l.b16 %v742
      %v1852 = vunpack.c.l.b16 %v743
      %v1853 = vunpack.c.l.b16 %v744
      %v1854 = vunpack.c.l.b16 %v745
      %v1855 = vunpack.c.l.b16 %v746
      %v1856 = vunpack.c.l.b16 %v747
      %v1857 = vunpack.c.l.b16 %v748
      %v1858 = vpack.c.b16 %v1827, %v1826
      %v1859 = vpack.c.b16 %v1829, %v1828
      %v1860 = vpack.c.b16 %v1831, %v1830
      %v1861 = vpack.c.b16 %v1833, %v1832
      %v1862 = vpack.c.b16 %v1835, %v1834
      %v1863 = vpack.c.b16 %v1837, %v1836
      %v1864 = vpack.c.b16 %v1839, %v1838
      %v1865 = vpack.c.b16 %v1841, %v1840
      %v1866 = vpack.c.b16 %v1843, %v1842
      %v1867 = vpack.c.b16 %v1845, %v1844
      %v1868 = vpack.c.b16 %v1847, %v1846
      %v1869 = vpack.c.b16 %v1849, %v1848
      %v1870 = vpack.c.b16 %v1851, %v1850
      %v1871 = vpack.c.b16 %v1853, %v1852
      %v1872 = vpack.c.b16 %v1855, %v1854
      %v1873 = vpack.c.b16 %v1857, %v1856
      %1874 = vrot.lane.b32.xlu0 %v1858, 24
      %v1875 = vpop.permute.xlu0 %1874
      %1876 = vrot.lane.b32.xlu0 %v1859, 24
      %v1877 = vpop.permute.xlu0 %1876
      %1878 = vrot.lane.b32.xlu0 %v1860, 24
      %v1879 = vpop.permute.xlu0 %1878
      %1880 = vrot.lane.b32.xlu0 %v1861, 24
      %v1881 = vpop.permute.xlu0 %1880
      %1882 = vrot.lane.b32.xlu0 %v1862, 24
      %v1883 = vpop.permute.xlu0 %1882
      %1884 = vrot.lane.b32.xlu0 %v1863, 24
      %v1885 = vpop.permute.xlu0 %1884
      %1886 = vrot.lane.b32.xlu0 %v1864, 24
      %v1887 = vpop.permute.xlu0 %1886
      %1888 = vrot.lane.b32.xlu0 %v1865, 24
      %v1889 = vpop.permute.xlu0 %1888
      %1890 = vrot.lane.b32.xlu0 %v1866, 24
      %v1891 = vpop.permute.xlu0 %1890
      %1892 = vrot.lane.b32.xlu0 %v1867, 24
      %v1893 = vpop.permute.xlu0 %1892
      %1894 = vrot.lane.b32.xlu0 %v1868, 24
      %v1895 = vpop.permute.xlu0 %1894
      %1896 = vrot.lane.b32.xlu0 %v1869, 24
      %v1897 = vpop.permute.xlu0 %1896
      %1898 = vrot.lane.b32.xlu0 %v1870, 24
      %v1899 = vpop.permute.xlu0 %1898
      %1900 = vrot.lane.b32.xlu0 %v1871, 24
      %v1901 = vpop.permute.xlu0 %1900
      %1902 = vrot.lane.b32.xlu0 %v1872, 24
      %v1903 = vpop.permute.xlu0 %1902
      %1904 = vrot.lane.b32.xlu0 %v1873, 24
      %v1905 = vpop.permute.xlu0 %1904
      %vm1906 = vcmask 23552
      %v1909 = vsel %vm1906, %v994, %v1091
      %v1912 = vsel %vm1906, %v995, %v1093
      %v1915 = vsel %vm1906, %v996, %v1095
      %v1918 = vsel %vm1906, %v997, %v1097
      %v1921 = vsel %vm1906, %v998, %v1099
      %v1924 = vsel %vm1906, %v999, %v1101
      %v1927 = vsel %vm1906, %v1000, %v1103
      %v1930 = vsel %vm1906, %v1001, %v1105
      %v1933 = vsel %vm1906, %v1002, %v1107
      %v1936 = vsel %vm1906, %v1003, %v1109
      %v1939 = vsel %vm1906, %v1004, %v1111
      %v1942 = vsel %vm1906, %v1005, %v1113
      %v1945 = vsel %vm1906, %v1006, %v1115
      %v1948 = vsel %vm1906, %v1007, %v1117
      %v1951 = vsel %vm1906, %v1008, %v1119
      %v1954 = vsel %vm1906, %v1009, %v1121
      %vm1955 = vcmask 48128
      %v1957 = vsel %vm1955, %v1909, %v1203
      %v1959 = vsel %vm1955, %v1912, %v1205
      %v1961 = vsel %vm1955, %v1915, %v1207
      %v1963 = vsel %vm1955, %v1918, %v1209
      %v1965 = vsel %vm1955, %v1921, %v1211
      %v1967 = vsel %vm1955, %v1924, %v1213
      %v1969 = vsel %vm1955, %v1927, %v1215
      %v1971 = vsel %vm1955, %v1930, %v1217
      %v1973 = vsel %vm1955, %v1933, %v1219
      %v1975 = vsel %vm1955, %v1936, %v1221
      %v1977 = vsel %vm1955, %v1939, %v1223
      %v1979 = vsel %vm1955, %v1942, %v1225
      %v1981 = vsel %vm1955, %v1945, %v1227
      %v1983 = vsel %vm1955, %v1948, %v1229
      %v1985 = vsel %vm1955, %v1951, %v1231
      %v1987 = vsel %vm1955, %v1954, %v1233
      %vm1988 = vcmask 72704
      %v1990 = vsel %vm1988, %v1957, %v1315
      %v1992 = vsel %vm1988, %v1959, %v1317
      %v1994 = vsel %vm1988, %v1961, %v1319
      %v1996 = vsel %vm1988, %v1963, %v1321
      %v1998 = vsel %vm1988, %v1965, %v1323
      %v2000 = vsel %vm1988, %v1967, %v1325
      %v2002 = vsel %vm1988, %v1969, %v1327
      %v2004 = vsel %vm1988, %v1971, %v1329
      %v2006 = vsel %vm1988, %v1973, %v1331
      %v2008 = vsel %vm1988, %v1975, %v1333
      %v2010 = vsel %vm1988, %v1977, %v1335
      %v2012 = vsel %vm1988, %v1979, %v1337
      %v2014 = vsel %vm1988, %v1981, %v1339
      %v2016 = vsel %vm1988, %v1983, %v1341
      %v2018 = vsel %vm1988, %v1985, %v1343
      %v2020 = vsel %vm1988, %v1987, %v1345
      %vm2021 = vcmask 97280
      %v2023 = vsel %vm2021, %v1990, %v1427
      %v2025 = vsel %vm2021, %v1992, %v1429
      %v2027 = vsel %vm2021, %v1994, %v1431
      %v2029 = vsel %vm2021, %v1996, %v1433
      %v2031 = vsel %vm2021, %v1998, %v1435
      %v2033 = vsel %vm2021, %v2000, %v1437
      %v2035 = vsel %vm2021, %v2002, %v1439
      %v2037 = vsel %vm2021, %v2004, %v1441
      %v2039 = vsel %vm2021, %v2006, %v1443
      %v2041 = vsel %vm2021, %v2008, %v1445
      %v2043 = vsel %vm2021, %v2010, %v1447
      %v2045 = vsel %vm2021, %v2012, %v1449
      %v2047 = vsel %vm2021, %v2014, %v1451
      %v2049 = vsel %vm2021, %v2016, %v1453
      %v2051 = vsel %vm2021, %v2018, %v1455
      %v2053 = vsel %vm2021, %v2020, %v1457
      %vm2054 = vcmask 121856
      %v2056 = vsel %vm2054, %v2023, %v1539
      %v2058 = vsel %vm2054, %v2025, %v1541
      %v2060 = vsel %vm2054, %v2027, %v1543
      %v2062 = vsel %vm2054, %v2029, %v1545
      %v2064 = vsel %vm2054, %v2031, %v1547
      %v2066 = vsel %vm2054, %v2033, %v1549
      %v2068 = vsel %vm2054, %v2035, %v1551
      %v2070 = vsel %vm2054, %v2037, %v1553
      %v2072 = vsel %vm2054, %v2039, %v1555
      %v2074 = vsel %vm2054, %v2041, %v1557
      %v2076 = vsel %vm2054, %v2043, %v1559
      %v2078 = vsel %vm2054, %v2045, %v1561
      %v2080 = vsel %vm2054, %v2047, %v1563
      %v2082 = vsel %vm2054, %v2049, %v1565
      %v2084 = vsel %vm2054, %v2051, %v1567
      %v2086 = vsel %vm2054, %v2053, %v1569
      %vm2087 = vcmask 146432
      %v2089 = vsel %vm2087, %v2056, %v1651
      %v2091 = vsel %vm2087, %v2058, %v1653
      %v2093 = vsel %vm2087, %v2060, %v1655
      %v2095 = vsel %vm2087, %v2062, %v1657
      %v2097 = vsel %vm2087, %v2064, %v1659
      %v2099 = vsel %vm2087, %v2066, %v1661
      %v2101 = vsel %vm2087, %v2068, %v1663
      %v2103 = vsel %vm2087, %v2070, %v1665
      %v2105 = vsel %vm2087, %v2072, %v1667
      %v2107 = vsel %vm2087, %v2074, %v1669
      %v2109 = vsel %vm2087, %v2076, %v1671
      %v2111 = vsel %vm2087, %v2078, %v1673
      %v2113 = vsel %vm2087, %v2080, %v1675
      %v2115 = vsel %vm2087, %v2082, %v1677
      %v2117 = vsel %vm2087, %v2084, %v1679
      %v2119 = vsel %vm2087, %v2086, %v1681
      %vm2120 = vcmask 171008
      %v2122 = vsel %vm2120, %v2089, %v1763
      %v2124 = vsel %vm2120, %v2091, %v1765
      %v2126 = vsel %vm2120, %v2093, %v1767
      %v2128 = vsel %vm2120, %v2095, %v1769
      %v2130 = vsel %vm2120, %v2097, %v1771
      %v2132 = vsel %vm2120, %v2099, %v1773
      %v2134 = vsel %vm2120, %v2101, %v1775
      %v2136 = vsel %vm2120, %v2103, %v1777
      %v2138 = vsel %vm2120, %v2105, %v1779
      %v2140 = vsel %vm2120, %v2107, %v1781
      %v2142 = vsel %vm2120, %v2109, %v1783
      %v2144 = vsel %vm2120, %v2111, %v1785
      %v2146 = vsel %vm2120, %v2113, %v1787
      %v2148 = vsel %vm2120, %v2115, %v1789
      %v2150 = vsel %vm2120, %v2117, %v1791
      %v2152 = vsel %vm2120, %v2119, %v1793
      %vm2153 = vcmask 195584
      %v2155 = vsel %vm2153, %v2122, %v1875
      %v2157 = vsel %vm2153, %v2124, %v1877
      %v2159 = vsel %vm2153, %v2126, %v1879
      %v2161 = vsel %vm2153, %v2128, %v1881
      %v2163 = vsel %vm2153, %v2130, %v1883
      %v2165 = vsel %vm2153, %v2132, %v1885
      %v2167 = vsel %vm2153, %v2134, %v1887
      %v2169 = vsel %vm2153, %v2136, %v1889
      %v2171 = vsel %vm2153, %v2138, %v1891
      %v2173 = vsel %vm2153, %v2140, %v1893
      %v2175 = vsel %vm2153, %v2142, %v1895
      %v2177 = vsel %vm2153, %v2144, %v1897
      %v2179 = vsel %vm2153, %v2146, %v1899
      %v2181 = vsel %vm2153, %v2148, %v1901
      %v2183 = vsel %vm2153, %v2150, %v1903
      %v2185 = vsel %vm2153, %v2152, %v1905
      %vm2186 = vsmask.f32 3328
      %vm2187 = vsmask.f32 7440
      %vm2188 = vmor %vm2186, %vm2187
      %v2190 = vshrl.u32 %v330, 16
      %v2192 = vrot.slane %v2190, 4
      %v2193 = vshll.u32 %v330, 16
      %v2195 = vrot.slane %v2193, 5
      %v2196 = vor.u32 %v2192, %v2195
      %v2197 = vrot.slane %v2196, 4
      %v2199 = vshll.u32 %v331, 16
      %v2201 = vrot.slane %v2199, 5
      %v2202 = vsel %vm2188, %v2197, %v2201
      %v2203 = vshrl.u32 %v331, 16
      %v2205 = vrot.slane %v2203, 4
      %v2206 = vor.u32 %v2205, %v2201
      %v2207 = vrot.slane %v2206, 4
      %v2209 = vshll.u32 %v332, 16
      %v2211 = vrot.slane %v2209, 5
      %v2212 = vsel %vm2188, %v2207, %v2211
      %v2214 = vshrl.u32 %v333, 16
      %v2216 = vrot.slane %v2214, 4
      %v2217 = vshll.u32 %v333, 16
      %v2219 = vrot.slane %v2217, 5
      %v2220 = vor.u32 %v2216, %v2219
      %v2221 = vrot.slane %v2220, 4
      %v2223 = vshll.u32 %v334, 16
      %v2225 = vrot.slane %v2223, 5
      %v2226 = vsel %vm2188, %v2221, %v2225
      %v2227 = vshrl.u32 %v334, 16
      %v2229 = vrot.slane %v2227, 4
      %v2230 = vor.u32 %v2229, %v2225
      %v2231 = vrot.slane %v2230, 4
      %v2233 = vshll.u32 %v335, 16
      %v2235 = vrot.slane %v2233, 5
      %v2236 = vsel %vm2188, %v2231, %v2235
      %v2238 = vshrl.u32 %v336, 16
      %v2240 = vrot.slane %v2238, 4
      %v2241 = vshll.u32 %v336, 16
      %v2243 = vrot.slane %v2241, 5
      %v2244 = vor.u32 %v2240, %v2243
      %v2245 = vrot.slane %v2244, 4
      %v2247 = vshll.u32 %v337, 16
      %v2249 = vrot.slane %v2247, 5
      %v2250 = vsel %vm2188, %v2245, %v2249
      %v2251 = vshrl.u32 %v337, 16
      %v2253 = vrot.slane %v2251, 4
      %v2254 = vor.u32 %v2253, %v2249
      %v2255 = vrot.slane %v2254, 4
      %v2257 = vshll.u32 %v338, 16
      %v2259 = vrot.slane %v2257, 5
      %v2260 = vsel %vm2188, %v2255, %v2259
      %v2262 = vshrl.u32 %v339, 16
      %v2264 = vrot.slane %v2262, 4
      %v2265 = vshll.u32 %v339, 16
      %v2267 = vrot.slane %v2265, 5
      %v2268 = vor.u32 %v2264, %v2267
      %v2269 = vrot.slane %v2268, 4
      %v2271 = vshll.u32 %v340, 16
      %v2273 = vrot.slane %v2271, 5
      %v2274 = vsel %vm2188, %v2269, %v2273
      %v2275 = vshrl.u32 %v340, 16
      %v2277 = vrot.slane %v2275, 4
      %v2278 = vor.u32 %v2277, %v2273
      %v2279 = vrot.slane %v2278, 4
      %v2281 = vshll.u32 %v341, 16
      %v2283 = vrot.slane %v2281, 5
      %v2284 = vsel %vm2188, %v2279, %v2283
      %v2286 = vshrl.u32 %v342, 16
      %v2288 = vrot.slane %v2286, 4
      %v2289 = vshll.u32 %v342, 16
      %v2291 = vrot.slane %v2289, 5
      %v2292 = vor.u32 %v2288, %v2291
      %v2293 = vrot.slane %v2292, 4
      %v2295 = vshll.u32 %v343, 16
      %v2297 = vrot.slane %v2295, 5
      %v2298 = vsel %vm2188, %v2293, %v2297
      %v2299 = vshrl.u32 %v343, 16
      %v2301 = vrot.slane %v2299, 4
      %v2302 = vor.u32 %v2301, %v2297
      %v2303 = vrot.slane %v2302, 4
      %v2305 = vshll.u32 %v344, 16
      %v2307 = vrot.slane %v2305, 5
      %v2308 = vsel %vm2188, %v2303, %v2307
      %v2310 = vshrl.u32 %v345, 16
      %v2312 = vrot.slane %v2310, 4
      %v2313 = vshll.u32 %v345, 16
      %v2315 = vrot.slane %v2313, 5
      %v2316 = vor.u32 %v2312, %v2315
      %v2317 = vrot.slane %v2316, 4
      %v2319 = vshll.u32 %v346, 16
      %v2321 = vrot.slane %v2319, 5
      %v2322 = vsel %vm2188, %v2317, %v2321
      %v2323 = vshrl.u32 %v346, 16
      %v2325 = vrot.slane %v2323, 4
      %v2326 = vor.u32 %v2325, %v2321
      %v2327 = vrot.slane %v2326, 4
      %v2329 = vshll.u32 %v347, 16
      %v2331 = vrot.slane %v2329, 5
      %v2332 = vsel %vm2188, %v2327, %v2331
      %v2334 = vshrl.u32 %v348, 16
      %v2336 = vrot.slane %v2334, 4
      %v2337 = vshll.u32 %v348, 16
      %v2339 = vrot.slane %v2337, 5
      %v2340 = vor.u32 %v2336, %v2339
      %v2341 = vrot.slane %v2340, 4
      %v2343 = vshll.u32 %v349, 16
      %v2345 = vrot.slane %v2343, 5
      %v2346 = vsel %vm2188, %v2341, %v2345
      %v2347 = vshrl.u32 %v349, 16
      %v2349 = vrot.slane %v2347, 4
      %v2350 = vor.u32 %v2349, %v2345
      %v2351 = vrot.slane %v2350, 4
      %v2353 = vshll.u32 %v350, 16
      %v2355 = vrot.slane %v2353, 5
      %v2356 = vsel %vm2188, %v2351, %v2355
      %v2358 = vshrl.u32 %v351, 16
      %v2360 = vrot.slane %v2358, 4
      %v2361 = vshll.u32 %v351, 16
      %v2363 = vrot.slane %v2361, 5
      %v2364 = vor.u32 %v2360, %v2363
      %v2365 = vrot.slane %v2364, 4
      %v2367 = vshll.u32 %v352, 16
      %v2369 = vrot.slane %v2367, 5
      %v2370 = vsel %vm2188, %v2365, %v2369
      %v2371 = vshrl.u32 %v352, 16
      %v2373 = vrot.slane %v2371, 4
      %v2374 = vor.u32 %v2373, %v2369
      %v2375 = vrot.slane %v2374, 4
      %v2377 = vshll.u32 %v353, 16
      %v2379 = vrot.slane %v2377, 5
      %v2380 = vsel %vm2188, %v2375, %v2379
      %v2382 = vshrl.u32 %v354, 16
      %v2384 = vrot.slane %v2382, 4
      %v2385 = vshll.u32 %v354, 16
      %v2387 = vrot.slane %v2385, 5
      %v2388 = vor.u32 %v2384, %v2387
      %v2389 = vrot.slane %v2388, 4
      %v2391 = vshll.u32 %v355, 16
      %v2393 = vrot.slane %v2391, 5
      %v2394 = vsel %vm2188, %v2389, %v2393
      %v2395 = vshrl.u32 %v355, 16
      %v2397 = vrot.slane %v2395, 4
      %v2398 = vor.u32 %v2397, %v2393
      %v2399 = vrot.slane %v2398, 4
      %v2401 = vshll.u32 %v356, 16
      %v2403 = vrot.slane %v2401, 5
      %v2404 = vsel %vm2188, %v2399, %v2403
      %v2406 = vshrl.u32 %v357, 16
      %v2408 = vrot.slane %v2406, 4
      %v2409 = vshll.u32 %v357, 16
      %v2411 = vrot.slane %v2409, 5
      %v2412 = vor.u32 %v2408, %v2411
      %v2413 = vrot.slane %v2412, 4
      %v2415 = vshll.u32 %v358, 16
      %v2417 = vrot.slane %v2415, 5
      %v2418 = vsel %vm2188, %v2413, %v2417
      %v2419 = vshrl.u32 %v358, 16
      %v2421 = vrot.slane %v2419, 4
      %v2422 = vor.u32 %v2421, %v2417
      %v2423 = vrot.slane %v2422, 4
      %v2425 = vshll.u32 %v359, 16
      %v2427 = vrot.slane %v2425, 5
      %v2428 = vsel %vm2188, %v2423, %v2427
      %v2430 = vshrl.u32 %v360, 16
      %v2432 = vrot.slane %v2430, 4
      %v2433 = vshll.u32 %v360, 16
      %v2435 = vrot.slane %v2433, 5
      %v2436 = vor.u32 %v2432, %v2435
      %v2437 = vrot.slane %v2436, 4
      %v2439 = vshll.u32 %v361, 16
      %v2441 = vrot.slane %v2439, 5
      %v2442 = vsel %vm2188, %v2437, %v2441
      %v2443 = vshrl.u32 %v361, 16
      %v2445 = vrot.slane %v2443, 4
      %v2446 = vor.u32 %v2445, %v2441
      %v2447 = vrot.slane %v2446, 4
      %v2449 = vshll.u32 %v362, 16
      %v2451 = vrot.slane %v2449, 5
      %v2452 = vsel %vm2188, %v2447, %v2451
      %v2454 = vshrl.u32 %v363, 16
      %v2456 = vrot.slane %v2454, 4
      %v2457 = vshll.u32 %v363, 16
      %v2459 = vrot.slane %v2457, 5
      %v2460 = vor.u32 %v2456, %v2459
      %v2461 = vrot.slane %v2460, 4
      %v2463 = vshll.u32 %v364, 16
      %v2465 = vrot.slane %v2463, 5
      %v2466 = vsel %vm2188, %v2461, %v2465
      %v2467 = vshrl.u32 %v364, 16
      %v2469 = vrot.slane %v2467, 4
      %v2470 = vor.u32 %v2469, %v2465
      %v2471 = vrot.slane %v2470, 4
      %v2473 = vshll.u32 %v365, 16
      %v2475 = vrot.slane %v2473, 5
      %v2476 = vsel %vm2188, %v2471, %v2475
      %v2478 = vshrl.u32 %v366, 16
      %v2480 = vrot.slane %v2478, 4
      %v2481 = vshll.u32 %v366, 16
      %v2483 = vrot.slane %v2481, 5
      %v2484 = vor.u32 %v2480, %v2483
      %v2485 = vrot.slane %v2484, 4
      %v2487 = vshll.u32 %v367, 16
      %v2489 = vrot.slane %v2487, 5
      %v2490 = vsel %vm2188, %v2485, %v2489
      %v2491 = vshrl.u32 %v367, 16
      %v2493 = vrot.slane %v2491, 4
      %v2494 = vor.u32 %v2493, %v2489
      %v2495 = vrot.slane %v2494, 4
      %v2497 = vshll.u32 %v368, 16
      %v2499 = vrot.slane %v2497, 5
      %v2500 = vsel %vm2188, %v2495, %v2499
      %v2502 = vshrl.u32 %v369, 16
      %v2504 = vrot.slane %v2502, 4
      %v2505 = vshll.u32 %v369, 16
      %v2507 = vrot.slane %v2505, 5
      %v2508 = vor.u32 %v2504, %v2507
      %v2509 = vrot.slane %v2508, 4
      %v2511 = vshll.u32 %v370, 16
      %v2513 = vrot.slane %v2511, 5
      %v2514 = vsel %vm2188, %v2509, %v2513
      %v2515 = vshrl.u32 %v370, 16
      %v2517 = vrot.slane %v2515, 4
      %v2518 = vor.u32 %v2517, %v2513
      %v2519 = vrot.slane %v2518, 4
      %v2521 = vshll.u32 %v371, 16
      %v2523 = vrot.slane %v2521, 5
      %v2524 = vsel %vm2188, %v2519, %v2523
      %v2526 = vshrl.u32 %v372, 16
      %v2528 = vrot.slane %v2526, 4
      %v2529 = vshll.u32 %v372, 16
      %v2531 = vrot.slane %v2529, 5
      %v2532 = vor.u32 %v2528, %v2531
      %v2533 = vrot.slane %v2532, 4
      %v2535 = vshll.u32 %v373, 16
      %v2537 = vrot.slane %v2535, 5
      %v2538 = vsel %vm2188, %v2533, %v2537
      %v2539 = vshrl.u32 %v373, 16
      %v2541 = vrot.slane %v2539, 4
      %v2542 = vor.u32 %v2541, %v2537
      %v2543 = vrot.slane %v2542, 4
      %v2545 = vshll.u32 %v374, 16
      %v2547 = vrot.slane %v2545, 5
      %v2548 = vsel %vm2188, %v2543, %v2547
      %v2550 = vshrl.u32 %v375, 16
      %v2552 = vrot.slane %v2550, 4
      %v2553 = vshll.u32 %v375, 16
      %v2555 = vrot.slane %v2553, 5
      %v2556 = vor.u32 %v2552, %v2555
      %v2557 = vrot.slane %v2556, 4
      %v2559 = vshll.u32 %v376, 16
      %v2561 = vrot.slane %v2559, 5
      %v2562 = vsel %vm2188, %v2557, %v2561
      %v2563 = vshrl.u32 %v376, 16
      %v2565 = vrot.slane %v2563, 4
      %v2566 = vor.u32 %v2565, %v2561
      %v2567 = vrot.slane %v2566, 4
      %v2569 = vshll.u32 %v377, 16
      %v2571 = vrot.slane %v2569, 5
      %v2572 = vsel %vm2188, %v2567, %v2571
      %v2574 = vshrl.u32 %v487, 16
      %v2576 = vrot.slane %v2574, 4
      %v2577 = vshll.u32 %v487, 16
      %v2579 = vrot.slane %v2577, 5
      %v2580 = vor.u32 %v2576, %v2579
      %v2581 = vrot.slane %v2580, 4
      %v2583 = vshll.u32 %v488, 16
      %v2585 = vrot.slane %v2583, 5
      %v2586 = vsel %vm2188, %v2581, %v2585
      %v2587 = vshrl.u32 %v488, 16
      %v2589 = vrot.slane %v2587, 4
      %v2590 = vor.u32 %v2589, %v2585
      %v2591 = vrot.slane %v2590, 4
      %v2593 = vshll.u32 %v489, 16
      %v2595 = vrot.slane %v2593, 5
      %v2596 = vsel %vm2188, %v2591, %v2595
      %v2598 = vshrl.u32 %v490, 16
      %v2600 = vrot.slane %v2598, 4
      %v2601 = vshll.u32 %v490, 16
      %v2603 = vrot.slane %v2601, 5
      %v2604 = vor.u32 %v2600, %v2603
      %v2605 = vrot.slane %v2604, 4
      %v2607 = vshll.u32 %v491, 16
      %v2609 = vrot.slane %v2607, 5
      %v2610 = vsel %vm2188, %v2605, %v2609
      %v2611 = vshrl.u32 %v491, 16
      %v2613 = vrot.slane %v2611, 4
      %v2614 = vor.u32 %v2613, %v2609
      %v2615 = vrot.slane %v2614, 4
      %v2617 = vshll.u32 %v492, 16
      %v2619 = vrot.slane %v2617, 5
      %v2620 = vsel %vm2188, %v2615, %v2619
      %v2622 = vshrl.u32 %v493, 16
      %v2624 = vrot.slane %v2622, 4
      %v2625 = vshll.u32 %v493, 16
      %v2627 = vrot.slane %v2625, 5
      %v2628 = vor.u32 %v2624, %v2627
      %v2629 = vrot.slane %v2628, 4
      %v2631 = vshll.u32 %v494, 16
      %v2633 = vrot.slane %v2631, 5
      %v2634 = vsel %vm2188, %v2629, %v2633
      %v2635 = vshrl.u32 %v494, 16
      %v2637 = vrot.slane %v2635, 4
      %v2638 = vor.u32 %v2637, %v2633
      %v2639 = vrot.slane %v2638, 4
      %v2641 = vshll.u32 %v495, 16
      %v2643 = vrot.slane %v2641, 5
      %v2644 = vsel %vm2188, %v2639, %v2643
      %v2646 = vshrl.u32 %v496, 16
      %v2648 = vrot.slane %v2646, 4
      %v2649 = vshll.u32 %v496, 16
      %v2651 = vrot.slane %v2649, 5
      %v2652 = vor.u32 %v2648, %v2651
      %v2653 = vrot.slane %v2652, 4
      %v2655 = vshll.u32 %v497, 16
      %v2657 = vrot.slane %v2655, 5
      %v2658 = vsel %vm2188, %v2653, %v2657
      %v2659 = vshrl.u32 %v497, 16
      %v2661 = vrot.slane %v2659, 4
      %v2662 = vor.u32 %v2661, %v2657
      %v2663 = vrot.slane %v2662, 4
      %v2665 = vshll.u32 %v498, 16
      %v2667 = vrot.slane %v2665, 5
      %v2668 = vsel %vm2188, %v2663, %v2667
      %v2670 = vshrl.u32 %v499, 16
      %v2672 = vrot.slane %v2670, 4
      %v2673 = vshll.u32 %v499, 16
      %v2675 = vrot.slane %v2673, 5
      %v2676 = vor.u32 %v2672, %v2675
      %v2677 = vrot.slane %v2676, 4
      %v2679 = vshll.u32 %v500, 16
      %v2681 = vrot.slane %v2679, 5
      %v2682 = vsel %vm2188, %v2677, %v2681
      %v2683 = vshrl.u32 %v500, 16
      %v2685 = vrot.slane %v2683, 4
      %v2686 = vor.u32 %v2685, %v2681
      %v2687 = vrot.slane %v2686, 4
      %v2689 = vshll.u32 %v501, 16
      %v2691 = vrot.slane %v2689, 5
      %v2692 = vsel %vm2188, %v2687, %v2691
      %v2694 = vshrl.u32 %v502, 16
      %v2696 = vrot.slane %v2694, 4
      %v2697 = vshll.u32 %v502, 16
      %v2699 = vrot.slane %v2697, 5
      %v2700 = vor.u32 %v2696, %v2699
      %v2701 = vrot.slane %v2700, 4
      %v2703 = vshll.u32 %v503, 16
      %v2705 = vrot.slane %v2703, 5
      %v2706 = vsel %vm2188, %v2701, %v2705
      %v2707 = vshrl.u32 %v503, 16
      %v2709 = vrot.slane %v2707, 4
      %v2710 = vor.u32 %v2709, %v2705
      %v2711 = vrot.slane %v2710, 4
      %v2713 = vshll.u32 %v504, 16
      %v2715 = vrot.slane %v2713, 5
      %v2716 = vsel %vm2188, %v2711, %v2715
      %v2718 = vshrl.u32 %v505, 16
      %v2720 = vrot.slane %v2718, 4
      %v2721 = vshll.u32 %v505, 16
      %v2723 = vrot.slane %v2721, 5
      %v2724 = vor.u32 %v2720, %v2723
      %v2725 = vrot.slane %v2724, 4
      %v2727 = vshll.u32 %v506, 16
      %v2729 = vrot.slane %v2727, 5
      %v2730 = vsel %vm2188, %v2725, %v2729
      %v2731 = vshrl.u32 %v506, 16
      %v2733 = vrot.slane %v2731, 4
      %v2734 = vor.u32 %v2733, %v2729
      %v2735 = vrot.slane %v2734, 4
      %v2737 = vshll.u32 %v507, 16
      %v2739 = vrot.slane %v2737, 5
      %v2740 = vsel %vm2188, %v2735, %v2739
      %v2742 = vshrl.u32 %v508, 16
      %v2744 = vrot.slane %v2742, 4
      %v2745 = vshll.u32 %v508, 16
      %v2747 = vrot.slane %v2745, 5
      %v2748 = vor.u32 %v2744, %v2747
      %v2749 = vrot.slane %v2748, 4
      %v2751 = vshll.u32 %v509, 16
      %v2753 = vrot.slane %v2751, 5
      %v2754 = vsel %vm2188, %v2749, %v2753
      %v2755 = vshrl.u32 %v509, 16
      %v2757 = vrot.slane %v2755, 4
      %v2758 = vor.u32 %v2757, %v2753
      %v2759 = vrot.slane %v2758, 4
      %v2761 = vshll.u32 %v510, 16
      %v2763 = vrot.slane %v2761, 5
      %v2764 = vsel %vm2188, %v2759, %v2763
      %v2766 = vshrl.u32 %v511, 16
      %v2768 = vrot.slane %v2766, 4
      %v2769 = vshll.u32 %v511, 16
      %v2771 = vrot.slane %v2769, 5
      %v2772 = vor.u32 %v2768, %v2771
      %v2773 = vrot.slane %v2772, 4
      %v2775 = vshll.u32 %v512, 16
      %v2777 = vrot.slane %v2775, 5
      %v2778 = vsel %vm2188, %v2773, %v2777
      %v2779 = vshrl.u32 %v512, 16
      %v2781 = vrot.slane %v2779, 4
      %v2782 = vor.u32 %v2781, %v2777
      %v2783 = vrot.slane %v2782, 4
      %v2785 = vshll.u32 %v513, 16
      %v2787 = vrot.slane %v2785, 5
      %v2788 = vsel %vm2188, %v2783, %v2787
      %v2790 = vshrl.u32 %v514, 16
      %v2792 = vrot.slane %v2790, 4
      %v2793 = vshll.u32 %v514, 16
      %v2795 = vrot.slane %v2793, 5
      %v2796 = vor.u32 %v2792, %v2795
      %v2797 = vrot.slane %v2796, 4
      %v2799 = vshll.u32 %v515, 16
      %v2801 = vrot.slane %v2799, 5
      %v2802 = vsel %vm2188, %v2797, %v2801
      %v2803 = vshrl.u32 %v515, 16
      %v2805 = vrot.slane %v2803, 4
      %v2806 = vor.u32 %v2805, %v2801
      %v2807 = vrot.slane %v2806, 4
      %v2809 = vshll.u32 %v516, 16
      %v2811 = vrot.slane %v2809, 5
      %v2812 = vsel %vm2188, %v2807, %v2811
      %v2814 = vshrl.u32 %v517, 16
      %v2816 = vrot.slane %v2814, 4
      %v2817 = vshll.u32 %v517, 16
      %v2819 = vrot.slane %v2817, 5
      %v2820 = vor.u32 %v2816, %v2819
      %v2821 = vrot.slane %v2820, 4
      %v2823 = vshll.u32 %v518, 16
      %v2825 = vrot.slane %v2823, 5
      %v2826 = vsel %vm2188, %v2821, %v2825
      %v2827 = vshrl.u32 %v518, 16
      %v2829 = vrot.slane %v2827, 4
      %v2830 = vor.u32 %v2829, %v2825
      %v2831 = vrot.slane %v2830, 4
      %v2833 = vshll.u32 %v519, 16
      %v2835 = vrot.slane %v2833, 5
      %v2836 = vsel %vm2188, %v2831, %v2835
      %v2838 = vshrl.u32 %v520, 16
      %v2840 = vrot.slane %v2838, 4
      %v2841 = vshll.u32 %v520, 16
      %v2843 = vrot.slane %v2841, 5
      %v2844 = vor.u32 %v2840, %v2843
      %v2845 = vrot.slane %v2844, 4
      %v2847 = vshll.u32 %v521, 16
      %v2849 = vrot.slane %v2847, 5
      %v2850 = vsel %vm2188, %v2845, %v2849
      %v2851 = vshrl.u32 %v521, 16
      %v2853 = vrot.slane %v2851, 4
      %v2854 = vor.u32 %v2853, %v2849
      %v2855 = vrot.slane %v2854, 4
      %v2857 = vshll.u32 %v522, 16
      %v2859 = vrot.slane %v2857, 5
      %v2860 = vsel %vm2188, %v2855, %v2859
      %v2862 = vshrl.u32 %v523, 16
      %v2864 = vrot.slane %v2862, 4
      %v2865 = vshll.u32 %v523, 16
      %v2867 = vrot.slane %v2865, 5
      %v2868 = vor.u32 %v2864, %v2867
      %v2869 = vrot.slane %v2868, 4
      %v2871 = vshll.u32 %v524, 16
      %v2873 = vrot.slane %v2871, 5
      %v2874 = vsel %vm2188, %v2869, %v2873
      %v2875 = vshrl.u32 %v524, 16
      %v2877 = vrot.slane %v2875, 4
      %v2878 = vor.u32 %v2877, %v2873
      %v2879 = vrot.slane %v2878, 4
      %v2881 = vshll.u32 %v525, 16
      %v2883 = vrot.slane %v2881, 5
      %v2884 = vsel %vm2188, %v2879, %v2883
      %v2886 = vshrl.u32 %v526, 16
      %v2888 = vrot.slane %v2886, 4
      %v2889 = vshll.u32 %v526, 16
      %v2891 = vrot.slane %v2889, 5
      %v2892 = vor.u32 %v2888, %v2891
      %v2893 = vrot.slane %v2892, 4
      %v2895 = vshll.u32 %v527, 16
      %v2897 = vrot.slane %v2895, 5
      %v2898 = vsel %vm2188, %v2893, %v2897
      %v2899 = vshrl.u32 %v527, 16
      %v2901 = vrot.slane %v2899, 4
      %v2902 = vor.u32 %v2901, %v2897
      %v2903 = vrot.slane %v2902, 4
      %v2905 = vshll.u32 %v528, 16
      %v2907 = vrot.slane %v2905, 5
      %v2908 = vsel %vm2188, %v2903, %v2907
      %v2910 = vshrl.u32 %v529, 16
      %v2912 = vrot.slane %v2910, 4
      %v2913 = vshll.u32 %v529, 16
      %v2915 = vrot.slane %v2913, 5
      %v2916 = vor.u32 %v2912, %v2915
      %v2917 = vrot.slane %v2916, 4
      %v2919 = vshll.u32 %v530, 16
      %v2921 = vrot.slane %v2919, 5
      %v2922 = vsel %vm2188, %v2917, %v2921
      %v2923 = vshrl.u32 %v530, 16
      %v2925 = vrot.slane %v2923, 4
      %v2926 = vor.u32 %v2925, %v2921
      %v2927 = vrot.slane %v2926, 4
      %v2929 = vshll.u32 %v531, 16
      %v2931 = vrot.slane %v2929, 5
      %v2932 = vsel %vm2188, %v2927, %v2931
      %v2934 = vshrl.u32 %v532, 16
      %v2936 = vrot.slane %v2934, 4
      %v2937 = vshll.u32 %v532, 16
      %v2939 = vrot.slane %v2937, 5
      %v2940 = vor.u32 %v2936, %v2939
      %v2941 = vrot.slane %v2940, 4
      %v2943 = vshll.u32 %v533, 16
      %v2945 = vrot.slane %v2943, 5
      %v2946 = vsel %vm2188, %v2941, %v2945
      %v2947 = vshrl.u32 %v533, 16
      %v2949 = vrot.slane %v2947, 4
      %v2950 = vor.u32 %v2949, %v2945
      %v2951 = vrot.slane %v2950, 4
      %v2953 = vshll.u32 %v534, 16
      %v2955 = vrot.slane %v2953, 5
      %v2956 = vsel %vm2188, %v2951, %v2955
      %v2958 = vshrl.u32 %v635, 16
      %v2960 = vrot.slane %v2958, 4
      %v2961 = vshll.u32 %v635, 16
      %v2963 = vrot.slane %v2961, 5
      %v2964 = vor.u32 %v2960, %v2963
      %v2965 = vrot.slane %v2964, 4
      %v2967 = vshll.u32 %v636, 16
      %v2969 = vrot.slane %v2967, 5
      %v2970 = vsel %vm2188, %v2965, %v2969
      %v2971 = vshrl.u32 %v636, 16
      %v2973 = vrot.slane %v2971, 4
      %v2974 = vor.u32 %v2973, %v2969
      %v2975 = vrot.slane %v2974, 4
      %v2977 = vshll.u32 %v637, 16
      %v2979 = vrot.slane %v2977, 5
      %v2980 = vsel %vm2188, %v2975, %v2979
      %v2982 = vshrl.u32 %v638, 16
      %v2984 = vrot.slane %v2982, 4
      %v2985 = vshll.u32 %v638, 16
      %v2987 = vrot.slane %v2985, 5
      %v2988 = vor.u32 %v2984, %v2987
      %v2989 = vrot.slane %v2988, 4
      %v2991 = vshll.u32 %v639, 16
      %v2993 = vrot.slane %v2991, 5
      %v2994 = vsel %vm2188, %v2989, %v2993
      %v2995 = vshrl.u32 %v639, 16
      %v2997 = vrot.slane %v2995, 4
      %v2998 = vor.u32 %v2997, %v2993
      %v2999 = vrot.slane %v2998, 4
      %v3001 = vshll.u32 %v640, 16
      %v3003 = vrot.slane %v3001, 5
      %v3004 = vsel %vm2188, %v2999, %v3003
      %v3006 = vshrl.u32 %v641, 16
      %v3008 = vrot.slane %v3006, 4
      %v3009 = vshll.u32 %v641, 16
      %v3011 = vrot.slane %v3009, 5
      %v3012 = vor.u32 %v3008, %v3011
      %v3013 = vrot.slane %v3012, 4
      %v3015 = vshll.u32 %v642, 16
      %v3017 = vrot.slane %v3015, 5
      %v3018 = vsel %vm2188, %v3013, %v3017
      %v3019 = vshrl.u32 %v642, 16
      %v3021 = vrot.slane %v3019, 4
      %v3022 = vor.u32 %v3021, %v3017
      %v3023 = vrot.slane %v3022, 4
      %v3025 = vshll.u32 %v643, 16
      %v3027 = vrot.slane %v3025, 5
      %v3028 = vsel %vm2188, %v3023, %v3027
      %v3030 = vshrl.u32 %v644, 16
      %v3032 = vrot.slane %v3030, 4
      %v3033 = vshll.u32 %v644, 16
      %v3035 = vrot.slane %v3033, 5
      %v3036 = vor.u32 %v3032, %v3035
      %v3037 = vrot.slane %v3036, 4
      %v3039 = vshll.u32 %v645, 16
      %v3041 = vrot.slane %v3039, 5
      %v3042 = vsel %vm2188, %v3037, %v3041
      %v3043 = vshrl.u32 %v645, 16
      %v3045 = vrot.slane %v3043, 4
      %v3046 = vor.u32 %v3045, %v3041
      %v3047 = vrot.slane %v3046, 4
      %v3049 = vshll.u32 %v646, 16
      %v3051 = vrot.slane %v3049, 5
      %v3052 = vsel %vm2188, %v3047, %v3051
      %v3054 = vshrl.u32 %v647, 16
      %v3056 = vrot.slane %v3054, 4
      %v3057 = vshll.u32 %v647, 16
      %v3059 = vrot.slane %v3057, 5
      %v3060 = vor.u32 %v3056, %v3059
      %v3061 = vrot.slane %v3060, 4
      %v3063 = vshll.u32 %v648, 16
      %v3065 = vrot.slane %v3063, 5
      %v3066 = vsel %vm2188, %v3061, %v3065
      %v3067 = vshrl.u32 %v648, 16
      %v3069 = vrot.slane %v3067, 4
      %v3070 = vor.u32 %v3069, %v3065
      %v3071 = vrot.slane %v3070, 4
      %v3073 = vshll.u32 %v649, 16
      %v3075 = vrot.slane %v3073, 5
      %v3076 = vsel %vm2188, %v3071, %v3075
      %v3078 = vshrl.u32 %v650, 16
      %v3080 = vrot.slane %v3078, 4
      %v3081 = vshll.u32 %v650, 16
      %v3083 = vrot.slane %v3081, 5
      %v3084 = vor.u32 %v3080, %v3083
      %v3085 = vrot.slane %v3084, 4
      %v3087 = vshll.u32 %v651, 16
      %v3089 = vrot.slane %v3087, 5
      %v3090 = vsel %vm2188, %v3085, %v3089
      %v3091 = vshrl.u32 %v651, 16
      %v3093 = vrot.slane %v3091, 4
      %v3094 = vor.u32 %v3093, %v3089
      %v3095 = vrot.slane %v3094, 4
      %v3097 = vshll.u32 %v652, 16
      %v3099 = vrot.slane %v3097, 5
      %v3100 = vsel %vm2188, %v3095, %v3099
      %v3102 = vshrl.u32 %v653, 16
      %v3104 = vrot.slane %v3102, 4
      %v3105 = vshll.u32 %v653, 16
      %v3107 = vrot.slane %v3105, 5
      %v3108 = vor.u32 %v3104, %v3107
      %v3109 = vrot.slane %v3108, 4
      %v3111 = vshll.u32 %v654, 16
      %v3113 = vrot.slane %v3111, 5
      %v3114 = vsel %vm2188, %v3109, %v3113
      %v3115 = vshrl.u32 %v654, 16
      %v3117 = vrot.slane %v3115, 4
      %v3118 = vor.u32 %v3117, %v3113
      %v3119 = vrot.slane %v3118, 4
      %v3121 = vshll.u32 %v655, 16
      %v3123 = vrot.slane %v3121, 5
      %v3124 = vsel %vm2188, %v3119, %v3123
      %v3126 = vshrl.u32 %v656, 16
      %v3128 = vrot.slane %v3126, 4
      %v3129 = vshll.u32 %v656, 16
      %v3131 = vrot.slane %v3129, 5
      %v3132 = vor.u32 %v3128, %v3131
      %v3133 = vrot.slane %v3132, 4
      %v3135 = vshll.u32 %v657, 16
      %v3137 = vrot.slane %v3135, 5
      %v3138 = vsel %vm2188, %v3133, %v3137
      %v3139 = vshrl.u32 %v657, 16
      %v3141 = vrot.slane %v3139, 4
      %v3142 = vor.u32 %v3141, %v3137
      %v3143 = vrot.slane %v3142, 4
      %v3145 = vshll.u32 %v658, 16
      %v3147 = vrot.slane %v3145, 5
      %v3148 = vsel %vm2188, %v3143, %v3147
      %v3150 = vshrl.u32 %v659, 16
      %v3152 = vrot.slane %v3150, 4
      %v3153 = vshll.u32 %v659, 16
      %v3155 = vrot.slane %v3153, 5
      %v3156 = vor.u32 %v3152, %v3155
      %v3157 = vrot.slane %v3156, 4
      %v3159 = vshll.u32 %v660, 16
      %v3161 = vrot.slane %v3159, 5
      %v3162 = vsel %vm2188, %v3157, %v3161
      %v3163 = vshrl.u32 %v660, 16
      %v3165 = vrot.slane %v3163, 4
      %v3166 = vor.u32 %v3165, %v3161
      %v3167 = vrot.slane %v3166, 4
      %v3169 = vshll.u32 %v661, 16
      %v3171 = vrot.slane %v3169, 5
      %v3172 = vsel %vm2188, %v3167, %v3171
      %v3174 = vshrl.u32 %v662, 16
      %v3176 = vrot.slane %v3174, 4
      %v3177 = vshll.u32 %v662, 16
      %v3179 = vrot.slane %v3177, 5
      %v3180 = vor.u32 %v3176, %v3179
      %v3181 = vrot.slane %v3180, 4
      %v3183 = vshll.u32 %v663, 16
      %v3185 = vrot.slane %v3183, 5
      %v3186 = vsel %vm2188, %v3181, %v3185
      %v3187 = vshrl.u32 %v663, 16
      %v3189 = vrot.slane %v3187, 4
      %v3190 = vor.u32 %v3189, %v3185
      %v3191 = vrot.slane %v3190, 4
      %v3193 = vshll.u32 %v664, 16
      %v3195 = vrot.slane %v3193, 5
      %v3196 = vsel %vm2188, %v3191, %v3195
      %v3198 = vshrl.u32 %v665, 16
      %v3200 = vrot.slane %v3198, 4
      %v3201 = vshll.u32 %v665, 16
      %v3203 = vrot.slane %v3201, 5
      %v3204 = vor.u32 %v3200, %v3203
      %v3205 = vrot.slane %v3204, 4
      %v3207 = vshll.u32 %v666, 16
      %v3209 = vrot.slane %v3207, 5
      %v3210 = vsel %vm2188, %v3205, %v3209
      %v3211 = vshrl.u32 %v666, 16
      %v3213 = vrot.slane %v3211, 4
      %v3214 = vor.u32 %v3213, %v3209
      %v3215 = vrot.slane %v3214, 4
      %v3217 = vshll.u32 %v667, 16
      %v3219 = vrot.slane %v3217, 5
      %v3220 = vsel %vm2188, %v3215, %v3219
      %v3222 = vshrl.u32 %v668, 16
      %v3224 = vrot.slane %v3222, 4
      %v3225 = vshll.u32 %v668, 16
      %v3227 = vrot.slane %v3225, 5
      %v3228 = vor.u32 %v3224, %v3227
      %v3229 = vrot.slane %v3228, 4
      %v3231 = vshll.u32 %v669, 16
      %v3233 = vrot.slane %v3231, 5
      %v3234 = vsel %vm2188, %v3229, %v3233
      %v3235 = vshrl.u32 %v669, 16
      %v3237 = vrot.slane %v3235, 4
      %v3238 = vor.u32 %v3237, %v3233
      %v3239 = vrot.slane %v3238, 4
      %v3241 = vshll.u32 %v670, 16
      %v3243 = vrot.slane %v3241, 5
      %v3244 = vsel %vm2188, %v3239, %v3243
      %v3246 = vshrl.u32 %v671, 16
      %v3248 = vrot.slane %v3246, 4
      %v3249 = vshll.u32 %v671, 16
      %v3251 = vrot.slane %v3249, 5
      %v3252 = vor.u32 %v3248, %v3251
      %v3253 = vrot.slane %v3252, 4
      %v3255 = vshll.u32 %v672, 16
      %v3257 = vrot.slane %v3255, 5
      %v3258 = vsel %vm2188, %v3253, %v3257
      %v3259 = vshrl.u32 %v672, 16
      %v3261 = vrot.slane %v3259, 4
      %v3262 = vor.u32 %v3261, %v3257
      %v3263 = vrot.slane %v3262, 4
      %v3265 = vshll.u32 %v673, 16
      %v3267 = vrot.slane %v3265, 5
      %v3268 = vsel %vm2188, %v3263, %v3267
      %v3270 = vshrl.u32 %v674, 16
      %v3272 = vrot.slane %v3270, 4
      %v3273 = vshll.u32 %v674, 16
      %v3275 = vrot.slane %v3273, 5
      %v3276 = vor.u32 %v3272, %v3275
      %v3277 = vrot.slane %v3276, 4
      %v3279 = vshll.u32 %v675, 16
      %v3281 = vrot.slane %v3279, 5
      %v3282 = vsel %vm2188, %v3277, %v3281
      %v3283 = vshrl.u32 %v675, 16
      %v3285 = vrot.slane %v3283, 4
      %v3286 = vor.u32 %v3285, %v3281
      %v3287 = vrot.slane %v3286, 4
      %v3289 = vshll.u32 %v676, 16
      %v3291 = vrot.slane %v3289, 5
      %v3292 = vsel %vm2188, %v3287, %v3291
      %v3294 = vshrl.u32 %v677, 16
      %v3296 = vrot.slane %v3294, 4
      %v3297 = vshll.u32 %v677, 16
      %v3299 = vrot.slane %v3297, 5
      %v3300 = vor.u32 %v3296, %v3299
      %v3301 = vrot.slane %v3300, 4
      %v3303 = vshll.u32 %v678, 16
      %v3305 = vrot.slane %v3303, 5
      %v3306 = vsel %vm2188, %v3301, %v3305
      %v3307 = vshrl.u32 %v678, 16
      %v3309 = vrot.slane %v3307, 4
      %v3310 = vor.u32 %v3309, %v3305
      %v3311 = vrot.slane %v3310, 4
      %v3313 = vshll.u32 %v679, 16
      %v3315 = vrot.slane %v3313, 5
      %v3316 = vsel %vm2188, %v3311, %v3315
      %v3318 = vshrl.u32 %v680, 16
      %v3320 = vrot.slane %v3318, 4
      %v3321 = vshll.u32 %v680, 16
      %v3323 = vrot.slane %v3321, 5
      %v3324 = vor.u32 %v3320, %v3323
      %v3325 = vrot.slane %v3324, 4
      %v3327 = vshll.u32 %v681, 16
      %v3329 = vrot.slane %v3327, 5
      %v3330 = vsel %vm2188, %v3325, %v3329
      %v3331 = vshrl.u32 %v681, 16
      %v3333 = vrot.slane %v3331, 4
      %v3334 = vor.u32 %v3333, %v3329
      %v3335 = vrot.slane %v3334, 4
      %v3337 = vshll.u32 %v682, 16
      %v3339 = vrot.slane %v3337, 5
      %v3340 = vsel %vm2188, %v3335, %v3339
      %v3373 = vunpack.c.l.b16 %v452
      %v3374 = vunpack.c.l.b16 %v453
      %v3375 = vunpack.c.l.b16 %v454
      %v3376 = vunpack.c.l.b16 %v455
      %v3377 = vunpack.c.l.b16 %v456
      %v3378 = vunpack.c.l.b16 %v457
      %v3379 = vunpack.c.l.b16 %v458
      %v3380 = vunpack.c.l.b16 %v459
      %v3381 = vunpack.c.l.b16 %v460
      %v3382 = vunpack.c.l.b16 %v461
      %v3383 = vunpack.c.l.b16 %v462
      %v3384 = vunpack.c.l.b16 %v463
      %v3385 = vunpack.c.l.b16 %v464
      %v3386 = vunpack.c.l.b16 %v465
      %v3387 = vunpack.c.l.b16 %v466
      %v3388 = vunpack.c.l.b16 %v467
      %v3389 = vunpack.c.l.b16 %v468
      %v3390 = vunpack.c.l.b16 %v469
      %v3391 = vunpack.c.l.b16 %v470
      %v3392 = vunpack.c.l.b16 %v471
      %v3393 = vunpack.c.l.b16 %v472
      %v3394 = vunpack.c.l.b16 %v473
      %v3395 = vunpack.c.l.b16 %v474
      %v3396 = vunpack.c.l.b16 %v475
      %v3397 = vunpack.c.l.b16 %v476
      %v3398 = vunpack.c.l.b16 %v477
      %v3399 = vunpack.c.l.b16 %v478
      %v3400 = vunpack.c.l.b16 %v479
      %v3401 = vunpack.c.l.b16 %v480
      %v3402 = vunpack.c.l.b16 %v481
      %v3403 = vunpack.c.l.b16 %v482
      %v3404 = vunpack.c.l.b16 %v483
      %v3405 = vpack.c.b16 %v3374, %v3373
      %v3406 = vpack.c.b16 %v3376, %v3375
      %v3407 = vpack.c.b16 %v3378, %v3377
      %v3408 = vpack.c.b16 %v3380, %v3379
      %v3409 = vpack.c.b16 %v3382, %v3381
      %v3410 = vpack.c.b16 %v3384, %v3383
      %v3411 = vpack.c.b16 %v3386, %v3385
      %v3412 = vpack.c.b16 %v3388, %v3387
      %v3413 = vpack.c.b16 %v3390, %v3389
      %v3414 = vpack.c.b16 %v3392, %v3391
      %v3415 = vpack.c.b16 %v3394, %v3393
      %v3416 = vpack.c.b16 %v3396, %v3395
      %v3417 = vpack.c.b16 %v3398, %v3397
      %v3418 = vpack.c.b16 %v3400, %v3399
      %v3419 = vpack.c.b16 %v3402, %v3401
      %v3420 = vpack.c.b16 %v3404, %v3403
      %3421 = vrot.lane.b32.xlu0 %v3405, 3
      %v3422 = vpop.permute.xlu0 %3421
      %3423 = vrot.lane.b32.xlu0 %v3406, 3
      %v3424 = vpop.permute.xlu0 %3423
      %3425 = vrot.lane.b32.xlu0 %v3407, 3
      %v3426 = vpop.permute.xlu0 %3425
      %3427 = vrot.lane.b32.xlu0 %v3408, 3
      %v3428 = vpop.permute.xlu0 %3427
      %3429 = vrot.lane.b32.xlu0 %v3409, 3
      %v3430 = vpop.permute.xlu0 %3429
      %3431 = vrot.lane.b32.xlu0 %v3410, 3
      %v3432 = vpop.permute.xlu0 %3431
      %3433 = vrot.lane.b32.xlu0 %v3411, 3
      %v3434 = vpop.permute.xlu0 %3433
      %3435 = vrot.lane.b32.xlu0 %v3412, 3
      %v3436 = vpop.permute.xlu0 %3435
      %3437 = vrot.lane.b32.xlu0 %v3413, 3
      %v3438 = vpop.permute.xlu0 %3437
      %3439 = vrot.lane.b32.xlu0 %v3414, 3
      %v3440 = vpop.permute.xlu0 %3439
      %3441 = vrot.lane.b32.xlu0 %v3415, 3
      %v3442 = vpop.permute.xlu0 %3441
      %3443 = vrot.lane.b32.xlu0 %v3416, 3
      %v3444 = vpop.permute.xlu0 %3443
      %3445 = vrot.lane.b32.xlu0 %v3417, 3
      %v3446 = vpop.permute.xlu0 %3445
      %3447 = vrot.lane.b32.xlu0 %v3418, 3
      %v3448 = vpop.permute.xlu0 %3447
      %3449 = vrot.lane.b32.xlu0 %v3419, 3
      %v3450 = vpop.permute.xlu0 %3449
      %3451 = vrot.lane.b32.xlu0 %v3420, 3
      %v3452 = vpop.permute.xlu0 %3451
      %v3453 = vunpack.c.l.b16 %v2202
      %v3454 = vunpack.c.l.b16 %v2212
      %v3455 = vunpack.c.l.b16 %v2226
      %v3456 = vunpack.c.l.b16 %v2236
      %v3457 = vunpack.c.l.b16 %v2250
      %v3458 = vunpack.c.l.b16 %v2260
      %v3459 = vunpack.c.l.b16 %v2274
      %v3460 = vunpack.c.l.b16 %v2284
      %v3461 = vunpack.c.l.b16 %v2298
      %v3462 = vunpack.c.l.b16 %v2308
      %v3463 = vunpack.c.l.b16 %v2322
      %v3464 = vunpack.c.l.b16 %v2332
      %v3465 = vunpack.c.l.b16 %v2346
      %v3466 = vunpack.c.l.b16 %v2356
      %v3467 = vunpack.c.l.b16 %v2370
      %v3468 = vunpack.c.l.b16 %v2380
      %v3469 = vunpack.c.l.b16 %v2394
      %v3470 = vunpack.c.l.b16 %v2404
      %v3471 = vunpack.c.l.b16 %v2418
      %v3472 = vunpack.c.l.b16 %v2428
      %v3473 = vunpack.c.l.b16 %v2442
      %v3474 = vunpack.c.l.b16 %v2452
      %v3475 = vunpack.c.l.b16 %v2466
      %v3476 = vunpack.c.l.b16 %v2476
      %v3477 = vunpack.c.l.b16 %v2490
      %v3478 = vunpack.c.l.b16 %v2500
      %v3479 = vunpack.c.l.b16 %v2514
      %v3480 = vunpack.c.l.b16 %v2524
      %v3481 = vunpack.c.l.b16 %v2538
      %v3482 = vunpack.c.l.b16 %v2548
      %v3483 = vunpack.c.l.b16 %v2562
      %v3484 = vunpack.c.l.b16 %v2572
      %v3485 = vpack.c.b16 %v3454, %v3453
      %v3486 = vpack.c.b16 %v3456, %v3455
      %v3487 = vpack.c.b16 %v3458, %v3457
      %v3488 = vpack.c.b16 %v3460, %v3459
      %v3489 = vpack.c.b16 %v3462, %v3461
      %v3490 = vpack.c.b16 %v3464, %v3463
      %v3491 = vpack.c.b16 %v3466, %v3465
      %v3492 = vpack.c.b16 %v3468, %v3467
      %v3493 = vpack.c.b16 %v3470, %v3469
      %v3494 = vpack.c.b16 %v3472, %v3471
      %v3495 = vpack.c.b16 %v3474, %v3473
      %v3496 = vpack.c.b16 %v3476, %v3475
      %v3497 = vpack.c.b16 %v3478, %v3477
      %v3498 = vpack.c.b16 %v3480, %v3479
      %v3499 = vpack.c.b16 %v3482, %v3481
      %v3500 = vpack.c.b16 %v3484, %v3483
      %3501 = vrot.lane.b32.xlu0 %v3485, 6
      %v3502 = vpop.permute.xlu0 %3501
      %3503 = vrot.lane.b32.xlu0 %v3486, 6
      %v3504 = vpop.permute.xlu0 %3503
      %3505 = vrot.lane.b32.xlu0 %v3487, 6
      %v3506 = vpop.permute.xlu0 %3505
      %3507 = vrot.lane.b32.xlu0 %v3488, 6
      %v3508 = vpop.permute.xlu0 %3507
      %3509 = vrot.lane.b32.xlu0 %v3489, 6
      %v3510 = vpop.permute.xlu0 %3509
      %3511 = vrot.lane.b32.xlu0 %v3490, 6
      %v3512 = vpop.permute.xlu0 %3511
      %3513 = vrot.lane.b32.xlu0 %v3491, 6
      %v3514 = vpop.permute.xlu0 %3513
      %3515 = vrot.lane.b32.xlu0 %v3492, 6
      %v3516 = vpop.permute.xlu0 %3515
      %3517 = vrot.lane.b32.xlu0 %v3493, 6
      %v3518 = vpop.permute.xlu0 %3517
      %3519 = vrot.lane.b32.xlu0 %v3494, 6
      %v3520 = vpop.permute.xlu0 %3519
      %3521 = vrot.lane.b32.xlu0 %v3495, 6
      %v3522 = vpop.permute.xlu0 %3521
      %3523 = vrot.lane.b32.xlu0 %v3496, 6
      %v3524 = vpop.permute.xlu0 %3523
      %3525 = vrot.lane.b32.xlu0 %v3497, 6
      %v3526 = vpop.permute.xlu0 %3525
      %3527 = vrot.lane.b32.xlu0 %v3498, 6
      %v3528 = vpop.permute.xlu0 %3527
      %3529 = vrot.lane.b32.xlu0 %v3499, 6
      %v3530 = vpop.permute.xlu0 %3529
      %3531 = vrot.lane.b32.xlu0 %v3500, 6
      %v3532 = vpop.permute.xlu0 %3531
      %3533 = vrot.lane.b32.xlu0 %v1522, 9
      %v3534 = vpop.permute.xlu0 %3533
      %3535 = vrot.lane.b32.xlu0 %v1523, 9
      %v3536 = vpop.permute.xlu0 %3535
      %3537 = vrot.lane.b32.xlu0 %v1524, 9
      %v3538 = vpop.permute.xlu0 %3537
      %3539 = vrot.lane.b32.xlu0 %v1525, 9
      %v3540 = vpop.permute.xlu0 %3539
      %3541 = vrot.lane.b32.xlu0 %v1526, 9
      %v3542 = vpop.permute.xlu0 %3541
      %3543 = vrot.lane.b32.xlu0 %v1527, 9
      %v3544 = vpop.permute.xlu0 %3543
      %3545 = vrot.lane.b32.xlu0 %v1528, 9
      %v3546 = vpop.permute.xlu0 %3545
      %3547 = vrot.lane.b32.xlu0 %v1529, 9
      %v3548 = vpop.permute.xlu0 %3547
      %3549 = vrot.lane.b32.xlu0 %v1530, 9
      %v3550 = vpop.permute.xlu0 %3549
      %3551 = vrot.lane.b32.xlu0 %v1531, 9
      %v3552 = vpop.permute.xlu0 %3551
      %3553 = vrot.lane.b32.xlu0 %v1532, 9
      %v3554 = vpop.permute.xlu0 %3553
      %3555 = vrot.lane.b32.xlu0 %v1533, 9
      %v3556 = vpop.permute.xlu0 %3555
      %3557 = vrot.lane.b32.xlu0 %v1534, 9
      %v3558 = vpop.permute.xlu0 %3557
      %3559 = vrot.lane.b32.xlu0 %v1535, 9
      %v3560 = vpop.permute.xlu0 %3559
      %3561 = vrot.lane.b32.xlu0 %v1536, 9
      %v3562 = vpop.permute.xlu0 %3561
      %3563 = vrot.lane.b32.xlu0 %v1537, 9
      %v3564 = vpop.permute.xlu0 %3563
      %v3597 = vunpack.c.l.b16 %v602
      %v3598 = vunpack.c.l.b16 %v603
      %v3599 = vunpack.c.l.b16 %v604
      %v3600 = vunpack.c.l.b16 %v605
      %v3601 = vunpack.c.l.b16 %v606
      %v3602 = vunpack.c.l.b16 %v607
      %v3603 = vunpack.c.l.b16 %v608
      %v3604 = vunpack.c.l.b16 %v609
      %v3605 = vunpack.c.l.b16 %v610
      %v3606 = vunpack.c.l.b16 %v611
      %v3607 = vunpack.c.l.b16 %v612
      %v3608 = vunpack.c.l.b16 %v613
      %v3609 = vunpack.c.l.b16 %v614
      %v3610 = vunpack.c.l.b16 %v615
      %v3611 = vunpack.c.l.b16 %v616
      %v3612 = vunpack.c.l.b16 %v617
      %v3613 = vunpack.c.l.b16 %v618
      %v3614 = vunpack.c.l.b16 %v619
      %v3615 = vunpack.c.l.b16 %v620
      %v3616 = vunpack.c.l.b16 %v621
      %v3617 = vunpack.c.l.b16 %v622
      %v3618 = vunpack.c.l.b16 %v623
      %v3619 = vunpack.c.l.b16 %v624
      %v3620 = vunpack.c.l.b16 %v625
      %v3621 = vunpack.c.l.b16 %v626
      %v3622 = vunpack.c.l.b16 %v627
      %v3623 = vunpack.c.l.b16 %v628
      %v3624 = vunpack.c.l.b16 %v629
      %v3625 = vunpack.c.l.b16 %v630
      %v3626 = vunpack.c.l.b16 %v631
      %v3627 = vunpack.c.l.b16 %v632
      %v3628 = vunpack.c.l.b16 %v633
      %v3629 = vpack.c.b16 %v3598, %v3597
      %v3630 = vpack.c.b16 %v3600, %v3599
      %v3631 = vpack.c.b16 %v3602, %v3601
      %v3632 = vpack.c.b16 %v3604, %v3603
      %v3633 = vpack.c.b16 %v3606, %v3605
      %v3634 = vpack.c.b16 %v3608, %v3607
      %v3635 = vpack.c.b16 %v3610, %v3609
      %v3636 = vpack.c.b16 %v3612, %v3611
      %v3637 = vpack.c.b16 %v3614, %v3613
      %v3638 = vpack.c.b16 %v3616, %v3615
      %v3639 = vpack.c.b16 %v3618, %v3617
      %v3640 = vpack.c.b16 %v3620, %v3619
      %v3641 = vpack.c.b16 %v3622, %v3621
      %v3642 = vpack.c.b16 %v3624, %v3623
      %v3643 = vpack.c.b16 %v3626, %v3625
      %v3644 = vpack.c.b16 %v3628, %v3627
      %3645 = vrot.lane.b32.xlu0 %v3629, 12
      %v3646 = vpop.permute.xlu0 %3645
      %3647 = vrot.lane.b32.xlu0 %v3630, 12
      %v3648 = vpop.permute.xlu0 %3647
      %3649 = vrot.lane.b32.xlu0 %v3631, 12
      %v3650 = vpop.permute.xlu0 %3649
      %3651 = vrot.lane.b32.xlu0 %v3632, 12
      %v3652 = vpop.permute.xlu0 %3651
      %3653 = vrot.lane.b32.xlu0 %v3633, 12
      %v3654 = vpop.permute.xlu0 %3653
      %3655 = vrot.lane.b32.xlu0 %v3634, 12
      %v3656 = vpop.permute.xlu0 %3655
      %3657 = vrot.lane.b32.xlu0 %v3635, 12
      %v3658 = vpop.permute.xlu0 %3657
      %3659 = vrot.lane.b32.xlu0 %v3636, 12
      %v3660 = vpop.permute.xlu0 %3659
      %3661 = vrot.lane.b32.xlu0 %v3637, 12
      %v3662 = vpop.permute.xlu0 %3661
      %3663 = vrot.lane.b32.xlu0 %v3638, 12
      %v3664 = vpop.permute.xlu0 %3663
      %3665 = vrot.lane.b32.xlu0 %v3639, 12
      %v3666 = vpop.permute.xlu0 %3665
      %3667 = vrot.lane.b32.xlu0 %v3640, 12
      %v3668 = vpop.permute.xlu0 %3667
      %3669 = vrot.lane.b32.xlu0 %v3641, 12
      %v3670 = vpop.permute.xlu0 %3669
      %3671 = vrot.lane.b32.xlu0 %v3642, 12
      %v3672 = vpop.permute.xlu0 %3671
      %3673 = vrot.lane.b32.xlu0 %v3643, 12
      %v3674 = vpop.permute.xlu0 %3673
      %3675 = vrot.lane.b32.xlu0 %v3644, 12
      %v3676 = vpop.permute.xlu0 %3675
      %v3677 = vunpack.c.l.b16 %v2586
      %v3678 = vunpack.c.l.b16 %v2596
      %v3679 = vunpack.c.l.b16 %v2610
      %v3680 = vunpack.c.l.b16 %v2620
      %v3681 = vunpack.c.l.b16 %v2634
      %v3682 = vunpack.c.l.b16 %v2644
      %v3683 = vunpack.c.l.b16 %v2658
      %v3684 = vunpack.c.l.b16 %v2668
      %v3685 = vunpack.c.l.b16 %v2682
      %v3686 = vunpack.c.l.b16 %v2692
      %v3687 = vunpack.c.l.b16 %v2706
      %v3688 = vunpack.c.l.b16 %v2716
      %v3689 = vunpack.c.l.b16 %v2730
      %v3690 = vunpack.c.l.b16 %v2740
      %v3691 = vunpack.c.l.b16 %v2754
      %v3692 = vunpack.c.l.b16 %v2764
      %v3693 = vunpack.c.l.b16 %v2778
      %v3694 = vunpack.c.l.b16 %v2788
      %v3695 = vunpack.c.l.b16 %v2802
      %v3696 = vunpack.c.l.b16 %v2812
      %v3697 = vunpack.c.l.b16 %v2826
      %v3698 = vunpack.c.l.b16 %v2836
      %v3699 = vunpack.c.l.b16 %v2850
      %v3700 = vunpack.c.l.b16 %v2860
      %v3701 = vunpack.c.l.b16 %v2874
      %v3702 = vunpack.c.l.b16 %v2884
      %v3703 = vunpack.c.l.b16 %v2898
      %v3704 = vunpack.c.l.b16 %v2908
      %v3705 = vunpack.c.l.b16 %v2922
      %v3706 = vunpack.c.l.b16 %v2932
      %v3707 = vunpack.c.l.b16 %v2946
      %v3708 = vunpack.c.l.b16 %v2956
      %v3709 = vpack.c.b16 %v3678, %v3677
      %v3710 = vpack.c.b16 %v3680, %v3679
      %v3711 = vpack.c.b16 %v3682, %v3681
      %v3712 = vpack.c.b16 %v3684, %v3683
      %v3713 = vpack.c.b16 %v3686, %v3685
      %v3714 = vpack.c.b16 %v3688, %v3687
      %v3715 = vpack.c.b16 %v3690, %v3689
      %v3716 = vpack.c.b16 %v3692, %v3691
      %v3717 = vpack.c.b16 %v3694, %v3693
      %v3718 = vpack.c.b16 %v3696, %v3695
      %v3719 = vpack.c.b16 %v3698, %v3697
      %v3720 = vpack.c.b16 %v3700, %v3699
      %v3721 = vpack.c.b16 %v3702, %v3701
      %v3722 = vpack.c.b16 %v3704, %v3703
      %v3723 = vpack.c.b16 %v3706, %v3705
      %v3724 = vpack.c.b16 %v3708, %v3707
      %3725 = vrot.lane.b32.xlu0 %v3709, 15
      %v3726 = vpop.permute.xlu0 %3725
      %3727 = vrot.lane.b32.xlu0 %v3710, 15
      %v3728 = vpop.permute.xlu0 %3727
      %3729 = vrot.lane.b32.xlu0 %v3711, 15
      %v3730 = vpop.permute.xlu0 %3729
      %3731 = vrot.lane.b32.xlu0 %v3712, 15
      %v3732 = vpop.permute.xlu0 %3731
      %3733 = vrot.lane.b32.xlu0 %v3713, 15
      %v3734 = vpop.permute.xlu0 %3733
      %3735 = vrot.lane.b32.xlu0 %v3714, 15
      %v3736 = vpop.permute.xlu0 %3735
      %3737 = vrot.lane.b32.xlu0 %v3715, 15
      %v3738 = vpop.permute.xlu0 %3737
      %3739 = vrot.lane.b32.xlu0 %v3716, 15
      %v3740 = vpop.permute.xlu0 %3739
      %3741 = vrot.lane.b32.xlu0 %v3717, 15
      %v3742 = vpop.permute.xlu0 %3741
      %3743 = vrot.lane.b32.xlu0 %v3718, 15
      %v3744 = vpop.permute.xlu0 %3743
      %3745 = vrot.lane.b32.xlu0 %v3719, 15
      %v3746 = vpop.permute.xlu0 %3745
      %3747 = vrot.lane.b32.xlu0 %v3720, 15
      %v3748 = vpop.permute.xlu0 %3747
      %3749 = vrot.lane.b32.xlu0 %v3721, 15
      %v3750 = vpop.permute.xlu0 %3749
      %3751 = vrot.lane.b32.xlu0 %v3722, 15
      %v3752 = vpop.permute.xlu0 %3751
      %3753 = vrot.lane.b32.xlu0 %v3723, 15
      %v3754 = vpop.permute.xlu0 %3753
      %3755 = vrot.lane.b32.xlu0 %v3724, 15
      %v3756 = vpop.permute.xlu0 %3755
      %3757 = vrot.lane.b32.xlu0 %v1858, 18
      %v3758 = vpop.permute.xlu0 %3757
      %3759 = vrot.lane.b32.xlu0 %v1859, 18
      %v3760 = vpop.permute.xlu0 %3759
      %3761 = vrot.lane.b32.xlu0 %v1860, 18
      %v3762 = vpop.permute.xlu0 %3761
      %3763 = vrot.lane.b32.xlu0 %v1861, 18
      %v3764 = vpop.permute.xlu0 %3763
      %3765 = vrot.lane.b32.xlu0 %v1862, 18
      %v3766 = vpop.permute.xlu0 %3765
      %3767 = vrot.lane.b32.xlu0 %v1863, 18
      %v3768 = vpop.permute.xlu0 %3767
      %3769 = vrot.lane.b32.xlu0 %v1864, 18
      %v3770 = vpop.permute.xlu0 %3769
      %3771 = vrot.lane.b32.xlu0 %v1865, 18
      %v3772 = vpop.permute.xlu0 %3771
      %3773 = vrot.lane.b32.xlu0 %v1866, 18
      %v3774 = vpop.permute.xlu0 %3773
      %3775 = vrot.lane.b32.xlu0 %v1867, 18
      %v3776 = vpop.permute.xlu0 %3775
      %3777 = vrot.lane.b32.xlu0 %v1868, 18
      %v3778 = vpop.permute.xlu0 %3777
      %3779 = vrot.lane.b32.xlu0 %v1869, 18
      %v3780 = vpop.permute.xlu0 %3779
      %3781 = vrot.lane.b32.xlu0 %v1870, 18
      %v3782 = vpop.permute.xlu0 %3781
      %3783 = vrot.lane.b32.xlu0 %v1871, 18
      %v3784 = vpop.permute.xlu0 %3783
      %3785 = vrot.lane.b32.xlu0 %v1872, 18
      %v3786 = vpop.permute.xlu0 %3785
      %3787 = vrot.lane.b32.xlu0 %v1873, 18
      %v3788 = vpop.permute.xlu0 %3787
      %v3821 = vunpack.c.l.b16 %v750
      %v3822 = vunpack.c.l.b16 %v751
      %v3823 = vunpack.c.l.b16 %v752
      %v3824 = vunpack.c.l.b16 %v753
      %v3825 = vunpack.c.l.b16 %v754
      %v3826 = vunpack.c.l.b16 %v755
      %v3827 = vunpack.c.l.b16 %v756
      %v3828 = vunpack.c.l.b16 %v757
      %v3829 = vunpack.c.l.b16 %v758
      %v3830 = vunpack.c.l.b16 %v759
      %v3831 = vunpack.c.l.b16 %v760
      %v3832 = vunpack.c.l.b16 %v761
      %v3833 = vunpack.c.l.b16 %v762
      %v3834 = vunpack.c.l.b16 %v763
      %v3835 = vunpack.c.l.b16 %v764
      %v3836 = vunpack.c.l.b16 %v765
      %v3837 = vunpack.c.l.b16 %v766
      %v3838 = vunpack.c.l.b16 %v767
      %v3839 = vunpack.c.l.b16 %v768
      %v3840 = vunpack.c.l.b16 %v769
      %v3841 = vunpack.c.l.b16 %v770
      %v3842 = vunpack.c.l.b16 %v771
      %v3843 = vunpack.c.l.b16 %v772
      %v3844 = vunpack.c.l.b16 %v773
      %v3845 = vunpack.c.l.b16 %v774
      %v3846 = vunpack.c.l.b16 %v775
      %v3847 = vunpack.c.l.b16 %v776
      %v3848 = vunpack.c.l.b16 %v777
      %v3849 = vunpack.c.l.b16 %v778
      %v3850 = vunpack.c.l.b16 %v779
      %v3851 = vunpack.c.l.b16 %v780
      %v3852 = vunpack.c.l.b16 %v781
      %v3853 = vpack.c.b16 %v3822, %v3821
      %v3854 = vpack.c.b16 %v3824, %v3823
      %v3855 = vpack.c.b16 %v3826, %v3825
      %v3856 = vpack.c.b16 %v3828, %v3827
      %v3857 = vpack.c.b16 %v3830, %v3829
      %v3858 = vpack.c.b16 %v3832, %v3831
      %v3859 = vpack.c.b16 %v3834, %v3833
      %v3860 = vpack.c.b16 %v3836, %v3835
      %v3861 = vpack.c.b16 %v3838, %v3837
      %v3862 = vpack.c.b16 %v3840, %v3839
      %v3863 = vpack.c.b16 %v3842, %v3841
      %v3864 = vpack.c.b16 %v3844, %v3843
      %v3865 = vpack.c.b16 %v3846, %v3845
      %v3866 = vpack.c.b16 %v3848, %v3847
      %v3867 = vpack.c.b16 %v3850, %v3849
      %v3868 = vpack.c.b16 %v3852, %v3851
      %3869 = vrot.lane.b32.xlu0 %v3853, 21
      %v3870 = vpop.permute.xlu0 %3869
      %3871 = vrot.lane.b32.xlu0 %v3854, 21
      %v3872 = vpop.permute.xlu0 %3871
      %3873 = vrot.lane.b32.xlu0 %v3855, 21
      %v3874 = vpop.permute.xlu0 %3873
      %3875 = vrot.lane.b32.xlu0 %v3856, 21
      %v3876 = vpop.permute.xlu0 %3875
      %3877 = vrot.lane.b32.xlu0 %v3857, 21
      %v3878 = vpop.permute.xlu0 %3877
      %3879 = vrot.lane.b32.xlu0 %v3858, 21
      %v3880 = vpop.permute.xlu0 %3879
      %3881 = vrot.lane.b32.xlu0 %v3859, 21
      %v3882 = vpop.permute.xlu0 %3881
      %3883 = vrot.lane.b32.xlu0 %v3860, 21
      %v3884 = vpop.permute.xlu0 %3883
      %3885 = vrot.lane.b32.xlu0 %v3861, 21
      %v3886 = vpop.permute.xlu0 %3885
      %3887 = vrot.lane.b32.xlu0 %v3862, 21
      %v3888 = vpop.permute.xlu0 %3887
      %3889 = vrot.lane.b32.xlu0 %v3863, 21
      %v3890 = vpop.permute.xlu0 %3889
      %3891 = vrot.lane.b32.xlu0 %v3864, 21
      %v3892 = vpop.permute.xlu0 %3891
      %3893 = vrot.lane.b32.xlu0 %v3865, 21
      %v3894 = vpop.permute.xlu0 %3893
      %3895 = vrot.lane.b32.xlu0 %v3866, 21
      %v3896 = vpop.permute.xlu0 %3895
      %3897 = vrot.lane.b32.xlu0 %v3867, 21
      %v3898 = vpop.permute.xlu0 %3897
      %3899 = vrot.lane.b32.xlu0 %v3868, 21
      %v3900 = vpop.permute.xlu0 %3899
      %v3901 = vunpack.c.l.b16 %v2970
      %v3902 = vunpack.c.l.b16 %v2980
      %v3903 = vunpack.c.l.b16 %v2994
      %v3904 = vunpack.c.l.b16 %v3004
      %v3905 = vunpack.c.l.b16 %v3018
      %v3906 = vunpack.c.l.b16 %v3028
      %v3907 = vunpack.c.l.b16 %v3042
      %v3908 = vunpack.c.l.b16 %v3052
      %v3909 = vunpack.c.l.b16 %v3066
      %v3910 = vunpack.c.l.b16 %v3076
      %v3911 = vunpack.c.l.b16 %v3090
      %v3912 = vunpack.c.l.b16 %v3100
      %v3913 = vunpack.c.l.b16 %v3114
      %v3914 = vunpack.c.l.b16 %v3124
      %v3915 = vunpack.c.l.b16 %v3138
      %v3916 = vunpack.c.l.b16 %v3148
      %v3917 = vunpack.c.l.b16 %v3162
      %v3918 = vunpack.c.l.b16 %v3172
      %v3919 = vunpack.c.l.b16 %v3186
      %v3920 = vunpack.c.l.b16 %v3196
      %v3921 = vunpack.c.l.b16 %v3210
      %v3922 = vunpack.c.l.b16 %v3220
      %v3923 = vunpack.c.l.b16 %v3234
      %v3924 = vunpack.c.l.b16 %v3244
      %v3925 = vunpack.c.l.b16 %v3258
      %v3926 = vunpack.c.l.b16 %v3268
      %v3927 = vunpack.c.l.b16 %v3282
      %v3928 = vunpack.c.l.b16 %v3292
      %v3929 = vunpack.c.l.b16 %v3306
      %v3930 = vunpack.c.l.b16 %v3316
      %v3931 = vunpack.c.l.b16 %v3330
      %v3932 = vunpack.c.l.b16 %v3340
      %v3933 = vpack.c.b16 %v3902, %v3901
      %v3934 = vpack.c.b16 %v3904, %v3903
      %v3935 = vpack.c.b16 %v3906, %v3905
      %v3936 = vpack.c.b16 %v3908, %v3907
      %v3937 = vpack.c.b16 %v3910, %v3909
      %v3938 = vpack.c.b16 %v3912, %v3911
      %v3939 = vpack.c.b16 %v3914, %v3913
      %v3940 = vpack.c.b16 %v3916, %v3915
      %v3941 = vpack.c.b16 %v3918, %v3917
      %v3942 = vpack.c.b16 %v3920, %v3919
      %v3943 = vpack.c.b16 %v3922, %v3921
      %v3944 = vpack.c.b16 %v3924, %v3923
      %v3945 = vpack.c.b16 %v3926, %v3925
      %v3946 = vpack.c.b16 %v3928, %v3927
      %v3947 = vpack.c.b16 %v3930, %v3929
      %v3948 = vpack.c.b16 %v3932, %v3931
      %3949 = vrot.lane.b32.xlu0 %v3933, 24
      %v3950 = vpop.permute.xlu0 %3949
      %3951 = vrot.lane.b32.xlu0 %v3934, 24
      %v3952 = vpop.permute.xlu0 %3951
      %3953 = vrot.lane.b32.xlu0 %v3935, 24
      %v3954 = vpop.permute.xlu0 %3953
      %3955 = vrot.lane.b32.xlu0 %v3936, 24
      %v3956 = vpop.permute.xlu0 %3955
      %3957 = vrot.lane.b32.xlu0 %v3937, 24
      %v3958 = vpop.permute.xlu0 %3957
      %3959 = vrot.lane.b32.xlu0 %v3938, 24
      %v3960 = vpop.permute.xlu0 %3959
      %3961 = vrot.lane.b32.xlu0 %v3939, 24
      %v3962 = vpop.permute.xlu0 %3961
      %3963 = vrot.lane.b32.xlu0 %v3940, 24
      %v3964 = vpop.permute.xlu0 %3963
      %3965 = vrot.lane.b32.xlu0 %v3941, 24
      %v3966 = vpop.permute.xlu0 %3965
      %3967 = vrot.lane.b32.xlu0 %v3942, 24
      %v3968 = vpop.permute.xlu0 %3967
      %3969 = vrot.lane.b32.xlu0 %v3943, 24
      %v3970 = vpop.permute.xlu0 %3969
      %3971 = vrot.lane.b32.xlu0 %v3944, 24
      %v3972 = vpop.permute.xlu0 %3971
      %3973 = vrot.lane.b32.xlu0 %v3945, 24
      %v3974 = vpop.permute.xlu0 %3973
      %3975 = vrot.lane.b32.xlu0 %v3946, 24
      %v3976 = vpop.permute.xlu0 %3975
      %3977 = vrot.lane.b32.xlu0 %v3947, 24
      %v3978 = vpop.permute.xlu0 %3977
      %3979 = vrot.lane.b32.xlu0 %v3948, 24
      %v3980 = vpop.permute.xlu0 %3979
      %v3983 = vsel %vm1906, %v1186, %v3422
      %v3986 = vsel %vm1906, %v1187, %v3424
      %v3989 = vsel %vm1906, %v1188, %v3426
      %v3992 = vsel %vm1906, %v1189, %v3428
      %v3995 = vsel %vm1906, %v1190, %v3430
      %v3998 = vsel %vm1906, %v1191, %v3432
      %v4001 = vsel %vm1906, %v1192, %v3434
      %v4004 = vsel %vm1906, %v1193, %v3436
      %v4007 = vsel %vm1906, %v1194, %v3438
      %v4010 = vsel %vm1906, %v1195, %v3440
      %v4013 = vsel %vm1906, %v1196, %v3442
      %v4016 = vsel %vm1906, %v1197, %v3444
      %v4019 = vsel %vm1906, %v1198, %v3446
      %v4022 = vsel %vm1906, %v1199, %v3448
      %v4025 = vsel %vm1906, %v1200, %v3450
      %v4028 = vsel %vm1906, %v1201, %v3452
      %v4030 = vsel %vm1955, %v3983, %v3502
      %v4032 = vsel %vm1955, %v3986, %v3504
      %v4034 = vsel %vm1955, %v3989, %v3506
      %v4036 = vsel %vm1955, %v3992, %v3508
      %v4038 = vsel %vm1955, %v3995, %v3510
      %v4040 = vsel %vm1955, %v3998, %v3512
      %v4042 = vsel %vm1955, %v4001, %v3514
      %v4044 = vsel %vm1955, %v4004, %v3516
      %v4046 = vsel %vm1955, %v4007, %v3518
      %v4048 = vsel %vm1955, %v4010, %v3520
      %v4050 = vsel %vm1955, %v4013, %v3522
      %v4052 = vsel %vm1955, %v4016, %v3524
      %v4054 = vsel %vm1955, %v4019, %v3526
      %v4056 = vsel %vm1955, %v4022, %v3528
      %v4058 = vsel %vm1955, %v4025, %v3530
      %v4060 = vsel %vm1955, %v4028, %v3532
      %v4062 = vsel %vm1988, %v4030, %v3534
      %v4064 = vsel %vm1988, %v4032, %v3536
      %v4066 = vsel %vm1988, %v4034, %v3538
      %v4068 = vsel %vm1988, %v4036, %v3540
      %v4070 = vsel %vm1988, %v4038, %v3542
      %v4072 = vsel %vm1988, %v4040, %v3544
      %v4074 = vsel %vm1988, %v4042, %v3546
      %v4076 = vsel %vm1988, %v4044, %v3548
      %v4078 = vsel %vm1988, %v4046, %v3550
      %v4080 = vsel %vm1988, %v4048, %v3552
      %v4082 = vsel %vm1988, %v4050, %v3554
      %v4084 = vsel %vm1988, %v4052, %v3556
      %v4086 = vsel %vm1988, %v4054, %v3558
      %v4088 = vsel %vm1988, %v4056, %v3560
      %v4090 = vsel %vm1988, %v4058, %v3562
      %v4092 = vsel %vm1988, %v4060, %v3564
      %v4094 = vsel %vm2021, %v4062, %v3646
      %v4096 = vsel %vm2021, %v4064, %v3648
      %v4098 = vsel %vm2021, %v4066, %v3650
      %v4100 = vsel %vm2021, %v4068, %v3652
      %v4102 = vsel %vm2021, %v4070, %v3654
      %v4104 = vsel %vm2021, %v4072, %v3656
      %v4106 = vsel %vm2021, %v4074, %v3658
      %v4108 = vsel %vm2021, %v4076, %v3660
      %v4110 = vsel %vm2021, %v4078, %v3662
      %v4112 = vsel %vm2021, %v4080, %v3664
      %v4114 = vsel %vm2021, %v4082, %v3666
      %v4116 = vsel %vm2021, %v4084, %v3668
      %v4118 = vsel %vm2021, %v4086, %v3670
      %v4120 = vsel %vm2021, %v4088, %v3672
      %v4122 = vsel %vm2021, %v4090, %v3674
      %v4124 = vsel %vm2021, %v4092, %v3676
      %v4126 = vsel %vm2054, %v4094, %v3726
      %v4128 = vsel %vm2054, %v4096, %v3728
      %v4130 = vsel %vm2054, %v4098, %v3730
      %v4132 = vsel %vm2054, %v4100, %v3732
      %v4134 = vsel %vm2054, %v4102, %v3734
      %v4136 = vsel %vm2054, %v4104, %v3736
      %v4138 = vsel %vm2054, %v4106, %v3738
      %v4140 = vsel %vm2054, %v4108, %v3740
      %v4142 = vsel %vm2054, %v4110, %v3742
      %v4144 = vsel %vm2054, %v4112, %v3744
      %v4146 = vsel %vm2054, %v4114, %v3746
      %v4148 = vsel %vm2054, %v4116, %v3748
      %v4150 = vsel %vm2054, %v4118, %v3750
      %v4152 = vsel %vm2054, %v4120, %v3752
      %v4154 = vsel %vm2054, %v4122, %v3754
      %v4156 = vsel %vm2054, %v4124, %v3756
      %v4158 = vsel %vm2087, %v4126, %v3758
      %v4160 = vsel %vm2087, %v4128, %v3760
      %v4162 = vsel %vm2087, %v4130, %v3762
      %v4164 = vsel %vm2087, %v4132, %v3764
      %v4166 = vsel %vm2087, %v4134, %v3766
      %v4168 = vsel %vm2087, %v4136, %v3768
      %v4170 = vsel %vm2087, %v4138, %v3770
      %v4172 = vsel %vm2087, %v4140, %v3772
      %v4174 = vsel %vm2087, %v4142, %v3774
      %v4176 = vsel %vm2087, %v4144, %v3776
      %v4178 = vsel %vm2087, %v4146, %v3778
      %v4180 = vsel %vm2087, %v4148, %v3780
      %v4182 = vsel %vm2087, %v4150, %v3782
      %v4184 = vsel %vm2087, %v4152, %v3784
      %v4186 = vsel %vm2087, %v4154, %v3786
      %v4188 = vsel %vm2087, %v4156, %v3788
      %v4190 = vsel %vm2120, %v4158, %v3870
      %v4192 = vsel %vm2120, %v4160, %v3872
      %v4194 = vsel %vm2120, %v4162, %v3874
      %v4196 = vsel %vm2120, %v4164, %v3876
      %v4198 = vsel %vm2120, %v4166, %v3878
      %v4200 = vsel %vm2120, %v4168, %v3880
      %v4202 = vsel %vm2120, %v4170, %v3882
      %v4204 = vsel %vm2120, %v4172, %v3884
      %v4206 = vsel %vm2120, %v4174, %v3886
      %v4208 = vsel %vm2120, %v4176, %v3888
      %v4210 = vsel %vm2120, %v4178, %v3890
      %v4212 = vsel %vm2120, %v4180, %v3892
      %v4214 = vsel %vm2120, %v4182, %v3894
      %v4216 = vsel %vm2120, %v4184, %v3896
      %v4218 = vsel %vm2120, %v4186, %v3898
      %v4220 = vsel %vm2120, %v4188, %v3900
      %v4222 = vsel %vm2153, %v4190, %v3950
      %v4224 = vsel %vm2153, %v4192, %v3952
      %v4226 = vsel %vm2153, %v4194, %v3954
      %v4228 = vsel %vm2153, %v4196, %v3956
      %v4230 = vsel %vm2153, %v4198, %v3958
      %v4232 = vsel %vm2153, %v4200, %v3960
      %v4234 = vsel %vm2153, %v4202, %v3962
      %v4236 = vsel %vm2153, %v4204, %v3964
      %v4238 = vsel %vm2153, %v4206, %v3966
      %v4240 = vsel %vm2153, %v4208, %v3968
      %v4242 = vsel %vm2153, %v4210, %v3970
      %v4244 = vsel %vm2153, %v4212, %v3972
      %v4246 = vsel %vm2153, %v4214, %v3974
      %v4248 = vsel %vm2153, %v4216, %v3976
      %v4250 = vsel %vm2153, %v4218, %v3978
      %v4252 = vsel %vm2153, %v4220, %v3980
      %4253 = vrot.lane.b32.xlu0 %v1746, 3
      %v4254 = vpop.permute.xlu0 %4253
      %4255 = vrot.lane.b32.xlu0 %v1747, 3
      %v4256 = vpop.permute.xlu0 %4255
      %4257 = vrot.lane.b32.xlu0 %v1748, 3
      %v4258 = vpop.permute.xlu0 %4257
      %4259 = vrot.lane.b32.xlu0 %v1749, 3
      %v4260 = vpop.permute.xlu0 %4259
      %4261 = vrot.lane.b32.xlu0 %v1750, 3
      %v4262 = vpop.permute.xlu0 %4261
      %4263 = vrot.lane.b32.xlu0 %v1751, 3
      %v4264 = vpop.permute.xlu0 %4263
      %4265 = vrot.lane.b32.xlu0 %v1752, 3
      %v4266 = vpop.permute.xlu0 %4265
      %4267 = vrot.lane.b32.xlu0 %v1753, 3
      %v4268 = vpop.permute.xlu0 %4267
      %4269 = vrot.lane.b32.xlu0 %v1754, 3
      %v4270 = vpop.permute.xlu0 %4269
      %4271 = vrot.lane.b32.xlu0 %v1755, 3
      %v4272 = vpop.permute.xlu0 %4271
      %4273 = vrot.lane.b32.xlu0 %v1756, 3
      %v4274 = vpop.permute.xlu0 %4273
      %4275 = vrot.lane.b32.xlu0 %v1757, 3
      %v4276 = vpop.permute.xlu0 %4275
      %4277 = vrot.lane.b32.xlu0 %v1758, 3
      %v4278 = vpop.permute.xlu0 %4277
      %4279 = vrot.lane.b32.xlu0 %v1759, 3
      %v4280 = vpop.permute.xlu0 %4279
      %4281 = vrot.lane.b32.xlu0 %v1760, 3
      %v4282 = vpop.permute.xlu0 %4281
      %4283 = vrot.lane.b32.xlu0 %v1761, 3
      %v4284 = vpop.permute.xlu0 %4283
      %4285 = vrot.lane.b32.xlu0 %v1858, 6
      %v4286 = vpop.permute.xlu0 %4285
      %4287 = vrot.lane.b32.xlu0 %v1859, 6
      %v4288 = vpop.permute.xlu0 %4287
      %4289 = vrot.lane.b32.xlu0 %v1860, 6
      %v4290 = vpop.permute.xlu0 %4289
      %4291 = vrot.lane.b32.xlu0 %v1861, 6
      %v4292 = vpop.permute.xlu0 %4291
      %4293 = vrot.lane.b32.xlu0 %v1862, 6
      %v4294 = vpop.permute.xlu0 %4293
      %4295 = vrot.lane.b32.xlu0 %v1863, 6
      %v4296 = vpop.permute.xlu0 %4295
      %4297 = vrot.lane.b32.xlu0 %v1864, 6
      %v4298 = vpop.permute.xlu0 %4297
      %4299 = vrot.lane.b32.xlu0 %v1865, 6
      %v4300 = vpop.permute.xlu0 %4299
      %4301 = vrot.lane.b32.xlu0 %v1866, 6
      %v4302 = vpop.permute.xlu0 %4301
      %4303 = vrot.lane.b32.xlu0 %v1867, 6
      %v4304 = vpop.permute.xlu0 %4303
      %4305 = vrot.lane.b32.xlu0 %v1868, 6
      %v4306 = vpop.permute.xlu0 %4305
      %4307 = vrot.lane.b32.xlu0 %v1869, 6
      %v4308 = vpop.permute.xlu0 %4307
      %4309 = vrot.lane.b32.xlu0 %v1870, 6
      %v4310 = vpop.permute.xlu0 %4309
      %4311 = vrot.lane.b32.xlu0 %v1871, 6
      %v4312 = vpop.permute.xlu0 %4311
      %4313 = vrot.lane.b32.xlu0 %v1872, 6
      %v4314 = vpop.permute.xlu0 %4313
      %4315 = vrot.lane.b32.xlu0 %v1873, 6
      %v4316 = vpop.permute.xlu0 %4315
      %v4349 = vunpack.c.l.b16 %v783
      %v4350 = vunpack.c.l.b16 %v784
      %v4351 = vunpack.c.l.b16 %v786
      %v4352 = vunpack.c.l.b16 %v787
      %v4353 = vunpack.c.l.b16 %v789
      %v4354 = vunpack.c.l.b16 %v790
      %v4355 = vunpack.c.l.b16 %v792
      %v4356 = vunpack.c.l.b16 %v793
      %v4357 = vunpack.c.l.b16 %v795
      %v4358 = vunpack.c.l.b16 %v796
      %v4359 = vunpack.c.l.b16 %v798
      %v4360 = vunpack.c.l.b16 %v799
      %v4361 = vunpack.c.l.b16 %v801
      %v4362 = vunpack.c.l.b16 %v802
      %v4363 = vunpack.c.l.b16 %v804
      %v4364 = vunpack.c.l.b16 %v805
      %v4365 = vunpack.c.l.b16 %v807
      %v4366 = vunpack.c.l.b16 %v808
      %v4367 = vunpack.c.l.b16 %v810
      %v4368 = vunpack.c.l.b16 %v811
      %v4369 = vunpack.c.l.b16 %v813
      %v4370 = vunpack.c.l.b16 %v814
      %v4371 = vunpack.c.l.b16 %v816
      %v4372 = vunpack.c.l.b16 %v817
      %v4373 = vunpack.c.l.b16 %v819
      %v4374 = vunpack.c.l.b16 %v820
      %v4375 = vunpack.c.l.b16 %v822
      %v4376 = vunpack.c.l.b16 %v823
      %v4377 = vunpack.c.l.b16 %v825
      %v4378 = vunpack.c.l.b16 %v826
      %v4379 = vunpack.c.l.b16 %v828
      %v4380 = vunpack.c.l.b16 %v829
      %v4381 = vpack.c.b16 %v4350, %v4349
      %v4382 = vpack.c.b16 %v4352, %v4351
      %v4383 = vpack.c.b16 %v4354, %v4353
      %v4384 = vpack.c.b16 %v4356, %v4355
      %v4385 = vpack.c.b16 %v4358, %v4357
      %v4386 = vpack.c.b16 %v4360, %v4359
      %v4387 = vpack.c.b16 %v4362, %v4361
      %v4388 = vpack.c.b16 %v4364, %v4363
      %v4389 = vpack.c.b16 %v4366, %v4365
      %v4390 = vpack.c.b16 %v4368, %v4367
      %v4391 = vpack.c.b16 %v4370, %v4369
      %v4392 = vpack.c.b16 %v4372, %v4371
      %v4393 = vpack.c.b16 %v4374, %v4373
      %v4394 = vpack.c.b16 %v4376, %v4375
      %v4395 = vpack.c.b16 %v4378, %v4377
      %v4396 = vpack.c.b16 %v4380, %v4379
      %4397 = vrot.lane.b32.xlu0 %v4381, 9
      %v4398 = vpop.permute.xlu0 %4397
      %4399 = vrot.lane.b32.xlu0 %v4382, 9
      %v4400 = vpop.permute.xlu0 %4399
      %4401 = vrot.lane.b32.xlu0 %v4383, 9
      %v4402 = vpop.permute.xlu0 %4401
      %4403 = vrot.lane.b32.xlu0 %v4384, 9
      %v4404 = vpop.permute.xlu0 %4403
      %4405 = vrot.lane.b32.xlu0 %v4385, 9
      %v4406 = vpop.permute.xlu0 %4405
      %4407 = vrot.lane.b32.xlu0 %v4386, 9
      %v4408 = vpop.permute.xlu0 %4407
      %4409 = vrot.lane.b32.xlu0 %v4387, 9
      %v4410 = vpop.permute.xlu0 %4409
      %4411 = vrot.lane.b32.xlu0 %v4388, 9
      %v4412 = vpop.permute.xlu0 %4411
      %4413 = vrot.lane.b32.xlu0 %v4389, 9
      %v4414 = vpop.permute.xlu0 %4413
      %4415 = vrot.lane.b32.xlu0 %v4390, 9
      %v4416 = vpop.permute.xlu0 %4415
      %4417 = vrot.lane.b32.xlu0 %v4391, 9
      %v4418 = vpop.permute.xlu0 %4417
      %4419 = vrot.lane.b32.xlu0 %v4392, 9
      %v4420 = vpop.permute.xlu0 %4419
      %4421 = vrot.lane.b32.xlu0 %v4393, 9
      %v4422 = vpop.permute.xlu0 %4421
      %4423 = vrot.lane.b32.xlu0 %v4394, 9
      %v4424 = vpop.permute.xlu0 %4423
      %4425 = vrot.lane.b32.xlu0 %v4395, 9
      %v4426 = vpop.permute.xlu0 %4425
      %4427 = vrot.lane.b32.xlu0 %v4396, 9
      %v4428 = vpop.permute.xlu0 %4427
      %v4461 = vunpack.c.l.b16 %v832
      %v4462 = vunpack.c.l.b16 %v833
      %v4463 = vunpack.c.l.b16 %v834
      %v4464 = vunpack.c.l.b16 %v835
      %v4465 = vunpack.c.l.b16 %v836
      %v4466 = vunpack.c.l.b16 %v837
      %v4467 = vunpack.c.l.b16 %v838
      %v4468 = vunpack.c.l.b16 %v839
      %v4469 = vunpack.c.l.b16 %v840
      %v4470 = vunpack.c.l.b16 %v841
      %v4471 = vunpack.c.l.b16 %v842
      %v4472 = vunpack.c.l.b16 %v843
      %v4473 = vunpack.c.l.b16 %v844
      %v4474 = vunpack.c.l.b16 %v845
      %v4475 = vunpack.c.l.b16 %v846
      %v4476 = vunpack.c.l.b16 %v847
      %v4477 = vunpack.c.l.b16 %v848
      %v4478 = vunpack.c.l.b16 %v849
      %v4479 = vunpack.c.l.b16 %v850
      %v4480 = vunpack.c.l.b16 %v851
      %v4481 = vunpack.c.l.b16 %v852
      %v4482 = vunpack.c.l.b16 %v853
      %v4483 = vunpack.c.l.b16 %v854
      %v4484 = vunpack.c.l.b16 %v855
      %v4485 = vunpack.c.l.b16 %v856
      %v4486 = vunpack.c.l.b16 %v857
      %v4487 = vunpack.c.l.b16 %v858
      %v4488 = vunpack.c.l.b16 %v859
      %v4489 = vunpack.c.l.b16 %v860
      %v4490 = vunpack.c.l.b16 %v861
      %v4491 = vunpack.c.l.b16 %v862
      %v4492 = vunpack.c.l.b16 %v863
      %v4493 = vpack.c.b16 %v4462, %v4461
      %v4494 = vpack.c.b16 %v4464, %v4463
      %v4495 = vpack.c.b16 %v4466, %v4465
      %v4496 = vpack.c.b16 %v4468, %v4467
      %v4497 = vpack.c.b16 %v4470, %v4469
      %v4498 = vpack.c.b16 %v4472, %v4471
      %v4499 = vpack.c.b16 %v4474, %v4473
      %v4500 = vpack.c.b16 %v4476, %v4475
      %v4501 = vpack.c.b16 %v4478, %v4477
      %v4502 = vpack.c.b16 %v4480, %v4479
      %v4503 = vpack.c.b16 %v4482, %v4481
      %v4504 = vpack.c.b16 %v4484, %v4483
      %v4505 = vpack.c.b16 %v4486, %v4485
      %v4506 = vpack.c.b16 %v4488, %v4487
      %v4507 = vpack.c.b16 %v4490, %v4489
      %v4508 = vpack.c.b16 %v4492, %v4491
      %4509 = vrot.lane.b32.xlu0 %v4493, 12
      %v4510 = vpop.permute.xlu0 %4509
      %4511 = vrot.lane.b32.xlu0 %v4494, 12
      %v4512 = vpop.permute.xlu0 %4511
      %4513 = vrot.lane.b32.xlu0 %v4495, 12
      %v4514 = vpop.permute.xlu0 %4513
      %4515 = vrot.lane.b32.xlu0 %v4496, 12
      %v4516 = vpop.permute.xlu0 %4515
      %4517 = vrot.lane.b32.xlu0 %v4497, 12
      %v4518 = vpop.permute.xlu0 %4517
      %4519 = vrot.lane.b32.xlu0 %v4498, 12
      %v4520 = vpop.permute.xlu0 %4519
      %4521 = vrot.lane.b32.xlu0 %v4499, 12
      %v4522 = vpop.permute.xlu0 %4521
      %4523 = vrot.lane.b32.xlu0 %v4500, 12
      %v4524 = vpop.permute.xlu0 %4523
      %4525 = vrot.lane.b32.xlu0 %v4501, 12
      %v4526 = vpop.permute.xlu0 %4525
      %4527 = vrot.lane.b32.xlu0 %v4502, 12
      %v4528 = vpop.permute.xlu0 %4527
      %4529 = vrot.lane.b32.xlu0 %v4503, 12
      %v4530 = vpop.permute.xlu0 %4529
      %4531 = vrot.lane.b32.xlu0 %v4504, 12
      %v4532 = vpop.permute.xlu0 %4531
      %4533 = vrot.lane.b32.xlu0 %v4505, 12
      %v4534 = vpop.permute.xlu0 %4533
      %4535 = vrot.lane.b32.xlu0 %v4506, 12
      %v4536 = vpop.permute.xlu0 %4535
      %4537 = vrot.lane.b32.xlu0 %v4507, 12
      %v4538 = vpop.permute.xlu0 %4537
      %4539 = vrot.lane.b32.xlu0 %v4508, 12
      %v4540 = vpop.permute.xlu0 %4539
      %v4573 = vunpack.c.l.b16 %v865
      %v4574 = vunpack.c.l.b16 %v866
      %v4575 = vunpack.c.l.b16 %v867
      %v4576 = vunpack.c.l.b16 %v868
      %v4577 = vunpack.c.l.b16 %v869
      %v4578 = vunpack.c.l.b16 %v870
      %v4579 = vunpack.c.l.b16 %v871
      %v4580 = vunpack.c.l.b16 %v872
      %v4581 = vunpack.c.l.b16 %v873
      %v4582 = vunpack.c.l.b16 %v874
      %v4583 = vunpack.c.l.b16 %v875
      %v4584 = vunpack.c.l.b16 %v876
      %v4585 = vunpack.c.l.b16 %v877
      %v4586 = vunpack.c.l.b16 %v878
      %v4587 = vunpack.c.l.b16 %v879
      %v4588 = vunpack.c.l.b16 %v880
      %v4589 = vunpack.c.l.b16 %v881
      %v4590 = vunpack.c.l.b16 %v882
      %v4591 = vunpack.c.l.b16 %v883
      %v4592 = vunpack.c.l.b16 %v884
      %v4593 = vunpack.c.l.b16 %v885
      %v4594 = vunpack.c.l.b16 %v886
      %v4595 = vunpack.c.l.b16 %v887
      %v4596 = vunpack.c.l.b16 %v888
      %v4597 = vunpack.c.l.b16 %v889
      %v4598 = vunpack.c.l.b16 %v890
      %v4599 = vunpack.c.l.b16 %v891
      %v4600 = vunpack.c.l.b16 %v892
      %v4601 = vunpack.c.l.b16 %v893
      %v4602 = vunpack.c.l.b16 %v894
      %v4603 = vunpack.c.l.b16 %v895
      %v4604 = vunpack.c.l.b16 %v896
      %v4605 = vpack.c.b16 %v4574, %v4573
      %v4606 = vpack.c.b16 %v4576, %v4575
      %v4607 = vpack.c.b16 %v4578, %v4577
      %v4608 = vpack.c.b16 %v4580, %v4579
      %v4609 = vpack.c.b16 %v4582, %v4581
      %v4610 = vpack.c.b16 %v4584, %v4583
      %v4611 = vpack.c.b16 %v4586, %v4585
      %v4612 = vpack.c.b16 %v4588, %v4587
      %v4613 = vpack.c.b16 %v4590, %v4589
      %v4614 = vpack.c.b16 %v4592, %v4591
      %v4615 = vpack.c.b16 %v4594, %v4593
      %v4616 = vpack.c.b16 %v4596, %v4595
      %v4617 = vpack.c.b16 %v4598, %v4597
      %v4618 = vpack.c.b16 %v4600, %v4599
      %v4619 = vpack.c.b16 %v4602, %v4601
      %v4620 = vpack.c.b16 %v4604, %v4603
      %4621 = vrot.lane.b32.xlu0 %v4605, 15
      %v4622 = vpop.permute.xlu0 %4621
      %4623 = vrot.lane.b32.xlu0 %v4606, 15
      %v4624 = vpop.permute.xlu0 %4623
      %4625 = vrot.lane.b32.xlu0 %v4607, 15
      %v4626 = vpop.permute.xlu0 %4625
      %4627 = vrot.lane.b32.xlu0 %v4608, 15
      %v4628 = vpop.permute.xlu0 %4627
      %4629 = vrot.lane.b32.xlu0 %v4609, 15
      %v4630 = vpop.permute.xlu0 %4629
      %4631 = vrot.lane.b32.xlu0 %v4610, 15
      %v4632 = vpop.permute.xlu0 %4631
      %4633 = vrot.lane.b32.xlu0 %v4611, 15
      %v4634 = vpop.permute.xlu0 %4633
      %4635 = vrot.lane.b32.xlu0 %v4612, 15
      %v4636 = vpop.permute.xlu0 %4635
      %4637 = vrot.lane.b32.xlu0 %v4613, 15
      %v4638 = vpop.permute.xlu0 %4637
      %4639 = vrot.lane.b32.xlu0 %v4614, 15
      %v4640 = vpop.permute.xlu0 %4639
      %4641 = vrot.lane.b32.xlu0 %v4615, 15
      %v4642 = vpop.permute.xlu0 %4641
      %4643 = vrot.lane.b32.xlu0 %v4616, 15
      %v4644 = vpop.permute.xlu0 %4643
      %4645 = vrot.lane.b32.xlu0 %v4617, 15
      %v4646 = vpop.permute.xlu0 %4645
      %4647 = vrot.lane.b32.xlu0 %v4618, 15
      %v4648 = vpop.permute.xlu0 %4647
      %4649 = vrot.lane.b32.xlu0 %v4619, 15
      %v4650 = vpop.permute.xlu0 %4649
      %4651 = vrot.lane.b32.xlu0 %v4620, 15
      %v4652 = vpop.permute.xlu0 %4651
      %v4655 = vunpack.c.l.b16 %v378
      %v4656 = vunpack.c.l.b16 %v379
      %v4657 = vpack.c.b16 %v4656, %v4655
      %4658 = vrot.lane.b32.xlu0 %v995, 18
      %v4659 = vpop.permute.xlu0 %4658
      %4660 = vrot.lane.b32.xlu0 %v996, 18
      %v4661 = vpop.permute.xlu0 %4660
      %4662 = vrot.lane.b32.xlu0 %v997, 18
      %v4663 = vpop.permute.xlu0 %4662
      %4664 = vrot.lane.b32.xlu0 %v998, 18
      %v4665 = vpop.permute.xlu0 %4664
      %4666 = vrot.lane.b32.xlu0 %v999, 18
      %v4667 = vpop.permute.xlu0 %4666
      %4668 = vrot.lane.b32.xlu0 %v1000, 18
      %v4669 = vpop.permute.xlu0 %4668
      %4670 = vrot.lane.b32.xlu0 %v1001, 18
      %v4671 = vpop.permute.xlu0 %4670
      %4672 = vrot.lane.b32.xlu0 %v1002, 18
      %v4673 = vpop.permute.xlu0 %4672
      %4674 = vrot.lane.b32.xlu0 %v1003, 18
      %v4675 = vpop.permute.xlu0 %4674
      %4676 = vrot.lane.b32.xlu0 %v1004, 18
      %v4677 = vpop.permute.xlu0 %4676
      %4678 = vrot.lane.b32.xlu0 %v1005, 18
      %v4679 = vpop.permute.xlu0 %4678
      %4680 = vrot.lane.b32.xlu0 %v1006, 18
      %v4681 = vpop.permute.xlu0 %4680
      %4682 = vrot.lane.b32.xlu0 %v1007, 18
      %v4683 = vpop.permute.xlu0 %4682
      %4684 = vrot.lane.b32.xlu0 %v1008, 18
      %v4685 = vpop.permute.xlu0 %4684
      %4686 = vrot.lane.b32.xlu0 %v1009, 18
      %v4687 = vpop.permute.xlu0 %4686
      %4688 = vrot.lane.b32.xlu0 %v4657, 18
      %v4689 = vpop.permute.xlu0 %4688
      %v4692 = vunpack.c.l.b16 %v414
      %v4693 = vunpack.c.l.b16 %v415
      %v4694 = vpack.c.b16 %v4693, %v4692
      %4695 = vrot.lane.b32.xlu0 %v1075, 21
      %v4696 = vpop.permute.xlu0 %4695
      %4697 = vrot.lane.b32.xlu0 %v1076, 21
      %v4698 = vpop.permute.xlu0 %4697
      %4699 = vrot.lane.b32.xlu0 %v1077, 21
      %v4700 = vpop.permute.xlu0 %4699
      %4701 = vrot.lane.b32.xlu0 %v1078, 21
      %v4702 = vpop.permute.xlu0 %4701
      %4703 = vrot.lane.b32.xlu0 %v1079, 21
      %v4704 = vpop.permute.xlu0 %4703
      %4705 = vrot.lane.b32.xlu0 %v1080, 21
      %v4706 = vpop.permute.xlu0 %4705
      %4707 = vrot.lane.b32.xlu0 %v1081, 21
      %v4708 = vpop.permute.xlu0 %4707
      %4709 = vrot.lane.b32.xlu0 %v1082, 21
      %v4710 = vpop.permute.xlu0 %4709
      %4711 = vrot.lane.b32.xlu0 %v1083, 21
      %v4712 = vpop.permute.xlu0 %4711
      %4713 = vrot.lane.b32.xlu0 %v1084, 21
      %v4714 = vpop.permute.xlu0 %4713
      %4715 = vrot.lane.b32.xlu0 %v1085, 21
      %v4716 = vpop.permute.xlu0 %4715
      %4717 = vrot.lane.b32.xlu0 %v1086, 21
      %v4718 = vpop.permute.xlu0 %4717
      %4719 = vrot.lane.b32.xlu0 %v1087, 21
      %v4720 = vpop.permute.xlu0 %4719
      %4721 = vrot.lane.b32.xlu0 %v1088, 21
      %v4722 = vpop.permute.xlu0 %4721
      %4723 = vrot.lane.b32.xlu0 %v1089, 21
      %v4724 = vpop.permute.xlu0 %4723
      %4725 = vrot.lane.b32.xlu0 %v4694, 21
      %v4726 = vpop.permute.xlu0 %4725
      %v4729 = vunpack.c.l.b16 %v449
      %v4730 = vunpack.c.l.b16 %v450
      %v4731 = vpack.c.b16 %v4730, %v4729
      %4732 = vrot.lane.b32.xlu0 %v1187, 24
      %v4733 = vpop.permute.xlu0 %4732
      %4734 = vrot.lane.b32.xlu0 %v1188, 24
      %v4735 = vpop.permute.xlu0 %4734
      %4736 = vrot.lane.b32.xlu0 %v1189, 24
      %v4737 = vpop.permute.xlu0 %4736
      %4738 = vrot.lane.b32.xlu0 %v1190, 24
      %v4739 = vpop.permute.xlu0 %4738
      %4740 = vrot.lane.b32.xlu0 %v1191, 24
      %v4741 = vpop.permute.xlu0 %4740
      %4742 = vrot.lane.b32.xlu0 %v1192, 24
      %v4743 = vpop.permute.xlu0 %4742
      %4744 = vrot.lane.b32.xlu0 %v1193, 24
      %v4745 = vpop.permute.xlu0 %4744
      %4746 = vrot.lane.b32.xlu0 %v1194, 24
      %v4747 = vpop.permute.xlu0 %4746
      %4748 = vrot.lane.b32.xlu0 %v1195, 24
      %v4749 = vpop.permute.xlu0 %4748
      %4750 = vrot.lane.b32.xlu0 %v1196, 24
      %v4751 = vpop.permute.xlu0 %4750
      %4752 = vrot.lane.b32.xlu0 %v1197, 24
      %v4753 = vpop.permute.xlu0 %4752
      %4754 = vrot.lane.b32.xlu0 %v1198, 24
      %v4755 = vpop.permute.xlu0 %4754
      %4756 = vrot.lane.b32.xlu0 %v1199, 24
      %v4757 = vpop.permute.xlu0 %4756
      %4758 = vrot.lane.b32.xlu0 %v1200, 24
      %v4759 = vpop.permute.xlu0 %4758
      %4760 = vrot.lane.b32.xlu0 %v1201, 24
      %v4761 = vpop.permute.xlu0 %4760
      %4762 = vrot.lane.b32.xlu0 %v4731, 24
      %v4763 = vpop.permute.xlu0 %4762
      %v4766 = vsel %vm1906, %v1634, %v4254
      %v4769 = vsel %vm1906, %v1635, %v4256
      %v4772 = vsel %vm1906, %v1636, %v4258
      %v4775 = vsel %vm1906, %v1637, %v4260
      %v4778 = vsel %vm1906, %v1638, %v4262
      %v4781 = vsel %vm1906, %v1639, %v4264
      %v4784 = vsel %vm1906, %v1640, %v4266
      %v4787 = vsel %vm1906, %v1641, %v4268
      %v4790 = vsel %vm1906, %v1642, %v4270
      %v4793 = vsel %vm1906, %v1643, %v4272
      %v4796 = vsel %vm1906, %v1644, %v4274
      %v4799 = vsel %vm1906, %v1645, %v4276
      %v4802 = vsel %vm1906, %v1646, %v4278
      %v4805 = vsel %vm1906, %v1647, %v4280
      %v4808 = vsel %vm1906, %v1648, %v4282
      %v4811 = vsel %vm1906, %v1649, %v4284
      %v4813 = vsel %vm1955, %v4766, %v4286
      %v4815 = vsel %vm1955, %v4769, %v4288
      %v4817 = vsel %vm1955, %v4772, %v4290
      %v4819 = vsel %vm1955, %v4775, %v4292
      %v4821 = vsel %vm1955, %v4778, %v4294
      %v4823 = vsel %vm1955, %v4781, %v4296
      %v4825 = vsel %vm1955, %v4784, %v4298
      %v4827 = vsel %vm1955, %v4787, %v4300
      %v4829 = vsel %vm1955, %v4790, %v4302
      %v4831 = vsel %vm1955, %v4793, %v4304
      %v4833 = vsel %vm1955, %v4796, %v4306
      %v4835 = vsel %vm1955, %v4799, %v4308
      %v4837 = vsel %vm1955, %v4802, %v4310
      %v4839 = vsel %vm1955, %v4805, %v4312
      %v4841 = vsel %vm1955, %v4808, %v4314
      %v4843 = vsel %vm1955, %v4811, %v4316
      %v4845 = vsel %vm1988, %v4813, %v4398
      %v4847 = vsel %vm1988, %v4815, %v4400
      %v4849 = vsel %vm1988, %v4817, %v4402
      %v4851 = vsel %vm1988, %v4819, %v4404
      %v4853 = vsel %vm1988, %v4821, %v4406
      %v4855 = vsel %vm1988, %v4823, %v4408
      %v4857 = vsel %vm1988, %v4825, %v4410
      %v4859 = vsel %vm1988, %v4827, %v4412
      %v4861 = vsel %vm1988, %v4829, %v4414
      %v4863 = vsel %vm1988, %v4831, %v4416
      %v4865 = vsel %vm1988, %v4833, %v4418
      %v4867 = vsel %vm1988, %v4835, %v4420
      %v4869 = vsel %vm1988, %v4837, %v4422
      %v4871 = vsel %vm1988, %v4839, %v4424
      %v4873 = vsel %vm1988, %v4841, %v4426
      %v4875 = vsel %vm1988, %v4843, %v4428
      %v4877 = vsel %vm2021, %v4845, %v4510
      %v4879 = vsel %vm2021, %v4847, %v4512
      %v4881 = vsel %vm2021, %v4849, %v4514
      %v4883 = vsel %vm2021, %v4851, %v4516
      %v4885 = vsel %vm2021, %v4853, %v4518
      %v4887 = vsel %vm2021, %v4855, %v4520
      %v4889 = vsel %vm2021, %v4857, %v4522
      %v4891 = vsel %vm2021, %v4859, %v4524
      %v4893 = vsel %vm2021, %v4861, %v4526
      %v4895 = vsel %vm2021, %v4863, %v4528
      %v4897 = vsel %vm2021, %v4865, %v4530
      %v4899 = vsel %vm2021, %v4867, %v4532
      %v4901 = vsel %vm2021, %v4869, %v4534
      %v4903 = vsel %vm2021, %v4871, %v4536
      %v4905 = vsel %vm2021, %v4873, %v4538
      %v4907 = vsel %vm2021, %v4875, %v4540
      %v4909 = vsel %vm2054, %v4877, %v4622
      %v4911 = vsel %vm2054, %v4879, %v4624
      %v4913 = vsel %vm2054, %v4881, %v4626
      %v4915 = vsel %vm2054, %v4883, %v4628
      %v4917 = vsel %vm2054, %v4885, %v4630
      %v4919 = vsel %vm2054, %v4887, %v4632
      %v4921 = vsel %vm2054, %v4889, %v4634
      %v4923 = vsel %vm2054, %v4891, %v4636
      %v4925 = vsel %vm2054, %v4893, %v4638
      %v4927 = vsel %vm2054, %v4895, %v4640
      %v4929 = vsel %vm2054, %v4897, %v4642
      %v4931 = vsel %vm2054, %v4899, %v4644
      %v4933 = vsel %vm2054, %v4901, %v4646
      %v4935 = vsel %vm2054, %v4903, %v4648
      %v4937 = vsel %vm2054, %v4905, %v4650
      %v4939 = vsel %vm2054, %v4907, %v4652
      %v4941 = vsel %vm2087, %v4909, %v4659
      %v4943 = vsel %vm2087, %v4911, %v4661
      %v4945 = vsel %vm2087, %v4913, %v4663
      %v4947 = vsel %vm2087, %v4915, %v4665
      %v4949 = vsel %vm2087, %v4917, %v4667
      %v4951 = vsel %vm2087, %v4919, %v4669
      %v4953 = vsel %vm2087, %v4921, %v4671
      %v4955 = vsel %vm2087, %v4923, %v4673
      %v4957 = vsel %vm2087, %v4925, %v4675
      %v4959 = vsel %vm2087, %v4927, %v4677
      %v4961 = vsel %vm2087, %v4929, %v4679
      %v4963 = vsel %vm2087, %v4931, %v4681
      %v4965 = vsel %vm2087, %v4933, %v4683
      %v4967 = vsel %vm2087, %v4935, %v4685
      %v4969 = vsel %vm2087, %v4937, %v4687
      %v4971 = vsel %vm2087, %v4939, %v4689
      %v4973 = vsel %vm2120, %v4941, %v4696
      %v4975 = vsel %vm2120, %v4943, %v4698
      %v4977 = vsel %vm2120, %v4945, %v4700
      %v4979 = vsel %vm2120, %v4947, %v4702
      %v4981 = vsel %vm2120, %v4949, %v4704
      %v4983 = vsel %vm2120, %v4951, %v4706
      %v4985 = vsel %vm2120, %v4953, %v4708
      %v4987 = vsel %vm2120, %v4955, %v4710
      %v4989 = vsel %vm2120, %v4957, %v4712
      %v4991 = vsel %vm2120, %v4959, %v4714
      %v4993 = vsel %vm2120, %v4961, %v4716
      %v4995 = vsel %vm2120, %v4963, %v4718
      %v4997 = vsel %vm2120, %v4965, %v4720
      %v4999 = vsel %vm2120, %v4967, %v4722
      %v5001 = vsel %vm2120, %v4969, %v4724
      %v5003 = vsel %vm2120, %v4971, %v4726
      %v5005 = vsel %vm2153, %v4973, %v4733
      %v5007 = vsel %vm2153, %v4975, %v4735
      %v5009 = vsel %vm2153, %v4977, %v4737
      %v5011 = vsel %vm2153, %v4979, %v4739
      %v5013 = vsel %vm2153, %v4981, %v4741
      %v5015 = vsel %vm2153, %v4983, %v4743
      %v5017 = vsel %vm2153, %v4985, %v4745
      %v5019 = vsel %vm2153, %v4987, %v4747
      %v5021 = vsel %vm2153, %v4989, %v4749
      %v5023 = vsel %vm2153, %v4991, %v4751
      %v5025 = vsel %vm2153, %v4993, %v4753
      %v5027 = vsel %vm2153, %v4995, %v4755
      %v5029 = vsel %vm2153, %v4997, %v4757
      %v5031 = vsel %vm2153, %v4999, %v4759
      %v5033 = vsel %vm2153, %v5001, %v4761
      %v5035 = vsel %vm2153, %v5003, %v4763
      %v5037 = vshrl.u32 %v783, 16
      %v5039 = vrot.slane %v5037, 4
      %v5040 = vshll.u32 %v783, 16
      %v5042 = vrot.slane %v5040, 5
      %v5043 = vor.u32 %v5039, %v5042
      %v5044 = vrot.slane %v5043, 4
      %v5046 = vshll.u32 %v784, 16
      %v5048 = vrot.slane %v5046, 5
      %v5049 = vsel %vm2188, %v5044, %v5048
      %v5050 = vshrl.u32 %v784, 16
      %v5052 = vrot.slane %v5050, 4
      %v5053 = vor.u32 %v5052, %v5048
      %v5054 = vrot.slane %v5053, 4
      %v5056 = vshll.u32 %v785, 16
      %v5058 = vrot.slane %v5056, 5
      %v5059 = vsel %vm2188, %v5054, %v5058
      %v5061 = vshrl.u32 %v786, 16
      %v5063 = vrot.slane %v5061, 4
      %v5064 = vshll.u32 %v786, 16
      %v5066 = vrot.slane %v5064, 5
      %v5067 = vor.u32 %v5063, %v5066
      %v5068 = vrot.slane %v5067, 4
      %v5070 = vshll.u32 %v787, 16
      %v5072 = vrot.slane %v5070, 5
      %v5073 = vsel %vm2188, %v5068, %v5072
      %v5074 = vshrl.u32 %v787, 16
      %v5076 = vrot.slane %v5074, 4
      %v5077 = vor.u32 %v5076, %v5072
      %v5078 = vrot.slane %v5077, 4
      %v5080 = vshll.u32 %v788, 16
      %v5082 = vrot.slane %v5080, 5
      %v5083 = vsel %vm2188, %v5078, %v5082
      %v5085 = vshrl.u32 %v789, 16
      %v5087 = vrot.slane %v5085, 4
      %v5088 = vshll.u32 %v789, 16
      %v5090 = vrot.slane %v5088, 5
      %v5091 = vor.u32 %v5087, %v5090
      %v5092 = vrot.slane %v5091, 4
      %v5094 = vshll.u32 %v790, 16
      %v5096 = vrot.slane %v5094, 5
      %v5097 = vsel %vm2188, %v5092, %v5096
      %v5098 = vshrl.u32 %v790, 16
      %v5100 = vrot.slane %v5098, 4
      %v5101 = vor.u32 %v5100, %v5096
      %v5102 = vrot.slane %v5101, 4
      %v5104 = vshll.u32 %v791, 16
      %v5106 = vrot.slane %v5104, 5
      %v5107 = vsel %vm2188, %v5102, %v5106
      %v5109 = vshrl.u32 %v792, 16
      %v5111 = vrot.slane %v5109, 4
      %v5112 = vshll.u32 %v792, 16
      %v5114 = vrot.slane %v5112, 5
      %v5115 = vor.u32 %v5111, %v5114
      %v5116 = vrot.slane %v5115, 4
      %v5118 = vshll.u32 %v793, 16
      %v5120 = vrot.slane %v5118, 5
      %v5121 = vsel %vm2188, %v5116, %v5120
      %v5122 = vshrl.u32 %v793, 16
      %v5124 = vrot.slane %v5122, 4
      %v5125 = vor.u32 %v5124, %v5120
      %v5126 = vrot.slane %v5125, 4
      %v5128 = vshll.u32 %v794, 16
      %v5130 = vrot.slane %v5128, 5
      %v5131 = vsel %vm2188, %v5126, %v5130
      %v5133 = vshrl.u32 %v795, 16
      %v5135 = vrot.slane %v5133, 4
      %v5136 = vshll.u32 %v795, 16
      %v5138 = vrot.slane %v5136, 5
      %v5139 = vor.u32 %v5135, %v5138
      %v5140 = vrot.slane %v5139, 4
      %v5142 = vshll.u32 %v796, 16
      %v5144 = vrot.slane %v5142, 5
      %v5145 = vsel %vm2188, %v5140, %v5144
      %v5146 = vshrl.u32 %v796, 16
      %v5148 = vrot.slane %v5146, 4
      %v5149 = vor.u32 %v5148, %v5144
      %v5150 = vrot.slane %v5149, 4
      %v5152 = vshll.u32 %v797, 16
      %v5154 = vrot.slane %v5152, 5
      %v5155 = vsel %vm2188, %v5150, %v5154
      %v5157 = vshrl.u32 %v798, 16
      %v5159 = vrot.slane %v5157, 4
      %v5160 = vshll.u32 %v798, 16
      %v5162 = vrot.slane %v5160, 5
      %v5163 = vor.u32 %v5159, %v5162
      %v5164 = vrot.slane %v5163, 4
      %v5166 = vshll.u32 %v799, 16
      %v5168 = vrot.slane %v5166, 5
      %v5169 = vsel %vm2188, %v5164, %v5168
      %v5170 = vshrl.u32 %v799, 16
      %v5172 = vrot.slane %v5170, 4
      %v5173 = vor.u32 %v5172, %v5168
      %v5174 = vrot.slane %v5173, 4
      %v5176 = vshll.u32 %v800, 16
      %v5178 = vrot.slane %v5176, 5
      %v5179 = vsel %vm2188, %v5174, %v5178
      %v5181 = vshrl.u32 %v801, 16
      %v5183 = vrot.slane %v5181, 4
      %v5184 = vshll.u32 %v801, 16
      %v5186 = vrot.slane %v5184, 5
      %v5187 = vor.u32 %v5183, %v5186
      %v5188 = vrot.slane %v5187, 4
      %v5190 = vshll.u32 %v802, 16
      %v5192 = vrot.slane %v5190, 5
      %v5193 = vsel %vm2188, %v5188, %v5192
      %v5194 = vshrl.u32 %v802, 16
      %v5196 = vrot.slane %v5194, 4
      %v5197 = vor.u32 %v5196, %v5192
      %v5198 = vrot.slane %v5197, 4
      %v5200 = vshll.u32 %v803, 16
      %v5202 = vrot.slane %v5200, 5
      %v5203 = vsel %vm2188, %v5198, %v5202
      %v5205 = vshrl.u32 %v804, 16
      %v5207 = vrot.slane %v5205, 4
      %v5208 = vshll.u32 %v804, 16
      %v5210 = vrot.slane %v5208, 5
      %v5211 = vor.u32 %v5207, %v5210
      %v5212 = vrot.slane %v5211, 4
      %v5214 = vshll.u32 %v805, 16
      %v5216 = vrot.slane %v5214, 5
      %v5217 = vsel %vm2188, %v5212, %v5216
      %v5218 = vshrl.u32 %v805, 16
      %v5220 = vrot.slane %v5218, 4
      %v5221 = vor.u32 %v5220, %v5216
      %v5222 = vrot.slane %v5221, 4
      %v5224 = vshll.u32 %v806, 16
      %v5226 = vrot.slane %v5224, 5
      %v5227 = vsel %vm2188, %v5222, %v5226
      %v5229 = vshrl.u32 %v807, 16
      %v5231 = vrot.slane %v5229, 4
      %v5232 = vshll.u32 %v807, 16
      %v5234 = vrot.slane %v5232, 5
      %v5235 = vor.u32 %v5231, %v5234
      %v5236 = vrot.slane %v5235, 4
      %v5238 = vshll.u32 %v808, 16
      %v5240 = vrot.slane %v5238, 5
      %v5241 = vsel %vm2188, %v5236, %v5240
      %v5242 = vshrl.u32 %v808, 16
      %v5244 = vrot.slane %v5242, 4
      %v5245 = vor.u32 %v5244, %v5240
      %v5246 = vrot.slane %v5245, 4
      %v5248 = vshll.u32 %v809, 16
      %v5250 = vrot.slane %v5248, 5
      %v5251 = vsel %vm2188, %v5246, %v5250
      %v5253 = vshrl.u32 %v810, 16
      %v5255 = vrot.slane %v5253, 4
      %v5256 = vshll.u32 %v810, 16
      %v5258 = vrot.slane %v5256, 5
      %v5259 = vor.u32 %v5255, %v5258
      %v5260 = vrot.slane %v5259, 4
      %v5262 = vshll.u32 %v811, 16
      %v5264 = vrot.slane %v5262, 5
      %v5265 = vsel %vm2188, %v5260, %v5264
      %v5266 = vshrl.u32 %v811, 16
      %v5268 = vrot.slane %v5266, 4
      %v5269 = vor.u32 %v5268, %v5264
      %v5270 = vrot.slane %v5269, 4
      %v5272 = vshll.u32 %v812, 16
      %v5274 = vrot.slane %v5272, 5
      %v5275 = vsel %vm2188, %v5270, %v5274
      %v5277 = vshrl.u32 %v813, 16
      %v5279 = vrot.slane %v5277, 4
      %v5280 = vshll.u32 %v813, 16
      %v5282 = vrot.slane %v5280, 5
      %v5283 = vor.u32 %v5279, %v5282
      %v5284 = vrot.slane %v5283, 4
      %v5286 = vshll.u32 %v814, 16
      %v5288 = vrot.slane %v5286, 5
      %v5289 = vsel %vm2188, %v5284, %v5288
      %v5290 = vshrl.u32 %v814, 16
      %v5292 = vrot.slane %v5290, 4
      %v5293 = vor.u32 %v5292, %v5288
      %v5294 = vrot.slane %v5293, 4
      %v5296 = vshll.u32 %v815, 16
      %v5298 = vrot.slane %v5296, 5
      %v5299 = vsel %vm2188, %v5294, %v5298
      %v5301 = vshrl.u32 %v816, 16
      %v5303 = vrot.slane %v5301, 4
      %v5304 = vshll.u32 %v816, 16
      %v5306 = vrot.slane %v5304, 5
      %v5307 = vor.u32 %v5303, %v5306
      %v5308 = vrot.slane %v5307, 4
      %v5310 = vshll.u32 %v817, 16
      %v5312 = vrot.slane %v5310, 5
      %v5313 = vsel %vm2188, %v5308, %v5312
      %v5314 = vshrl.u32 %v817, 16
      %v5316 = vrot.slane %v5314, 4
      %v5317 = vor.u32 %v5316, %v5312
      %v5318 = vrot.slane %v5317, 4
      %v5320 = vshll.u32 %v818, 16
      %v5322 = vrot.slane %v5320, 5
      %v5323 = vsel %vm2188, %v5318, %v5322
      %v5325 = vshrl.u32 %v819, 16
      %v5327 = vrot.slane %v5325, 4
      %v5328 = vshll.u32 %v819, 16
      %v5330 = vrot.slane %v5328, 5
      %v5331 = vor.u32 %v5327, %v5330
      %v5332 = vrot.slane %v5331, 4
      %v5334 = vshll.u32 %v820, 16
      %v5336 = vrot.slane %v5334, 5
      %v5337 = vsel %vm2188, %v5332, %v5336
      %v5338 = vshrl.u32 %v820, 16
      %v5340 = vrot.slane %v5338, 4
      %v5341 = vor.u32 %v5340, %v5336
      %v5342 = vrot.slane %v5341, 4
      %v5344 = vshll.u32 %v821, 16
      %v5346 = vrot.slane %v5344, 5
      %v5347 = vsel %vm2188, %v5342, %v5346
      %v5349 = vshrl.u32 %v822, 16
      %v5351 = vrot.slane %v5349, 4
      %v5352 = vshll.u32 %v822, 16
      %v5354 = vrot.slane %v5352, 5
      %v5355 = vor.u32 %v5351, %v5354
      %v5356 = vrot.slane %v5355, 4
      %v5358 = vshll.u32 %v823, 16
      %v5360 = vrot.slane %v5358, 5
      %v5361 = vsel %vm2188, %v5356, %v5360
      %v5362 = vshrl.u32 %v823, 16
      %v5364 = vrot.slane %v5362, 4
      %v5365 = vor.u32 %v5364, %v5360
      %v5366 = vrot.slane %v5365, 4
      %v5368 = vshll.u32 %v824, 16
      %v5370 = vrot.slane %v5368, 5
      %v5371 = vsel %vm2188, %v5366, %v5370
      %v5373 = vshrl.u32 %v825, 16
      %v5375 = vrot.slane %v5373, 4
      %v5376 = vshll.u32 %v825, 16
      %v5378 = vrot.slane %v5376, 5
      %v5379 = vor.u32 %v5375, %v5378
      %v5380 = vrot.slane %v5379, 4
      %v5382 = vshll.u32 %v826, 16
      %v5384 = vrot.slane %v5382, 5
      %v5385 = vsel %vm2188, %v5380, %v5384
      %v5386 = vshrl.u32 %v826, 16
      %v5388 = vrot.slane %v5386, 4
      %v5389 = vor.u32 %v5388, %v5384
      %v5390 = vrot.slane %v5389, 4
      %v5392 = vshll.u32 %v827, 16
      %v5394 = vrot.slane %v5392, 5
      %v5395 = vsel %vm2188, %v5390, %v5394
      %v5397 = vshrl.u32 %v828, 16
      %v5399 = vrot.slane %v5397, 4
      %v5400 = vshll.u32 %v828, 16
      %v5402 = vrot.slane %v5400, 5
      %v5403 = vor.u32 %v5399, %v5402
      %v5404 = vrot.slane %v5403, 4
      %v5406 = vshll.u32 %v829, 16
      %v5408 = vrot.slane %v5406, 5
      %v5409 = vsel %vm2188, %v5404, %v5408
      %v5410 = vshrl.u32 %v829, 16
      %v5412 = vrot.slane %v5410, 4
      %v5413 = vor.u32 %v5412, %v5408
      %v5414 = vrot.slane %v5413, 4
      %v5416 = vshll.u32 %v830, 16
      %v5418 = vrot.slane %v5416, 5
      %v5419 = vsel %vm2188, %v5414, %v5418
      %v5421 = vshrl.u32 %v378, 16
      %v5423 = vrot.slane %v5421, 4
      %v5424 = vshll.u32 %v378, 16
      %v5426 = vrot.slane %v5424, 5
      %v5427 = vor.u32 %v5423, %v5426
      %v5428 = vrot.slane %v5427, 4
      %v5430 = vshll.u32 %v379, 16
      %v5432 = vrot.slane %v5430, 5
      %v5433 = vsel %vm2188, %v5428, %v5432
      %v5434 = vshrl.u32 %v379, 16
      %v5436 = vrot.slane %v5434, 4
      %v5437 = vor.u32 %v5436, %v5432
      %v5438 = vrot.slane %v5437, 4
      %v5440 = vshll.u32 %v380, 16
      %v5442 = vrot.slane %v5440, 5
      %v5443 = vsel %vm2188, %v5438, %v5442
      %5444 = vrot.lane.b32.xlu0 %v3853, 3
      %v5445 = vpop.permute.xlu0 %5444
      %5446 = vrot.lane.b32.xlu0 %v3854, 3
      %v5447 = vpop.permute.xlu0 %5446
      %5448 = vrot.lane.b32.xlu0 %v3855, 3
      %v5449 = vpop.permute.xlu0 %5448
      %5450 = vrot.lane.b32.xlu0 %v3856, 3
      %v5451 = vpop.permute.xlu0 %5450
      %5452 = vrot.lane.b32.xlu0 %v3857, 3
      %v5453 = vpop.permute.xlu0 %5452
      %5454 = vrot.lane.b32.xlu0 %v3858, 3
      %v5455 = vpop.permute.xlu0 %5454
      %5456 = vrot.lane.b32.xlu0 %v3859, 3
      %v5457 = vpop.permute.xlu0 %5456
      %5458 = vrot.lane.b32.xlu0 %v3860, 3
      %v5459 = vpop.permute.xlu0 %5458
      %5460 = vrot.lane.b32.xlu0 %v3861, 3
      %v5461 = vpop.permute.xlu0 %5460
      %5462 = vrot.lane.b32.xlu0 %v3862, 3
      %v5463 = vpop.permute.xlu0 %5462
      %5464 = vrot.lane.b32.xlu0 %v3863, 3
      %v5465 = vpop.permute.xlu0 %5464
      %5466 = vrot.lane.b32.xlu0 %v3864, 3
      %v5467 = vpop.permute.xlu0 %5466
      %5468 = vrot.lane.b32.xlu0 %v3865, 3
      %v5469 = vpop.permute.xlu0 %5468
      %5470 = vrot.lane.b32.xlu0 %v3866, 3
      %v5471 = vpop.permute.xlu0 %5470
      %5472 = vrot.lane.b32.xlu0 %v3867, 3
      %v5473 = vpop.permute.xlu0 %5472
      %5474 = vrot.lane.b32.xlu0 %v3868, 3
      %v5475 = vpop.permute.xlu0 %5474
      %5476 = vrot.lane.b32.xlu0 %v3933, 6
      %v5477 = vpop.permute.xlu0 %5476
      %5478 = vrot.lane.b32.xlu0 %v3934, 6
      %v5479 = vpop.permute.xlu0 %5478
      %5480 = vrot.lane.b32.xlu0 %v3935, 6
      %v5481 = vpop.permute.xlu0 %5480
      %5482 = vrot.lane.b32.xlu0 %v3936, 6
      %v5483 = vpop.permute.xlu0 %5482
      %5484 = vrot.lane.b32.xlu0 %v3937, 6
      %v5485 = vpop.permute.xlu0 %5484
      %5486 = vrot.lane.b32.xlu0 %v3938, 6
      %v5487 = vpop.permute.xlu0 %5486
      %5488 = vrot.lane.b32.xlu0 %v3939, 6
      %v5489 = vpop.permute.xlu0 %5488
      %5490 = vrot.lane.b32.xlu0 %v3940, 6
      %v5491 = vpop.permute.xlu0 %5490
      %5492 = vrot.lane.b32.xlu0 %v3941, 6
      %v5493 = vpop.permute.xlu0 %5492
      %5494 = vrot.lane.b32.xlu0 %v3942, 6
      %v5495 = vpop.permute.xlu0 %5494
      %5496 = vrot.lane.b32.xlu0 %v3943, 6
      %v5497 = vpop.permute.xlu0 %5496
      %5498 = vrot.lane.b32.xlu0 %v3944, 6
      %v5499 = vpop.permute.xlu0 %5498
      %5500 = vrot.lane.b32.xlu0 %v3945, 6
      %v5501 = vpop.permute.xlu0 %5500
      %5502 = vrot.lane.b32.xlu0 %v3946, 6
      %v5503 = vpop.permute.xlu0 %5502
      %5504 = vrot.lane.b32.xlu0 %v3947, 6
      %v5505 = vpop.permute.xlu0 %5504
      %5506 = vrot.lane.b32.xlu0 %v3948, 6
      %v5507 = vpop.permute.xlu0 %5506
      %5508 = vrot.lane.b32.xlu0 %v4605, 9
      %v5509 = vpop.permute.xlu0 %5508
      %5510 = vrot.lane.b32.xlu0 %v4606, 9
      %v5511 = vpop.permute.xlu0 %5510
      %5512 = vrot.lane.b32.xlu0 %v4607, 9
      %v5513 = vpop.permute.xlu0 %5512
      %5514 = vrot.lane.b32.xlu0 %v4608, 9
      %v5515 = vpop.permute.xlu0 %5514
      %5516 = vrot.lane.b32.xlu0 %v4609, 9
      %v5517 = vpop.permute.xlu0 %5516
      %5518 = vrot.lane.b32.xlu0 %v4610, 9
      %v5519 = vpop.permute.xlu0 %5518
      %5520 = vrot.lane.b32.xlu0 %v4611, 9
      %v5521 = vpop.permute.xlu0 %5520
      %5522 = vrot.lane.b32.xlu0 %v4612, 9
      %v5523 = vpop.permute.xlu0 %5522
      %5524 = vrot.lane.b32.xlu0 %v4613, 9
      %v5525 = vpop.permute.xlu0 %5524
      %5526 = vrot.lane.b32.xlu0 %v4614, 9
      %v5527 = vpop.permute.xlu0 %5526
      %5528 = vrot.lane.b32.xlu0 %v4615, 9
      %v5529 = vpop.permute.xlu0 %5528
      %5530 = vrot.lane.b32.xlu0 %v4616, 9
      %v5531 = vpop.permute.xlu0 %5530
      %5532 = vrot.lane.b32.xlu0 %v4617, 9
      %v5533 = vpop.permute.xlu0 %5532
      %5534 = vrot.lane.b32.xlu0 %v4618, 9
      %v5535 = vpop.permute.xlu0 %5534
      %5536 = vrot.lane.b32.xlu0 %v4619, 9
      %v5537 = vpop.permute.xlu0 %5536
      %5538 = vrot.lane.b32.xlu0 %v4620, 9
      %v5539 = vpop.permute.xlu0 %5538
      %v5572 = vunpack.c.l.b16 %v898
      %v5573 = vunpack.c.l.b16 %v899
      %v5574 = vunpack.c.l.b16 %v900
      %v5575 = vunpack.c.l.b16 %v901
      %v5576 = vunpack.c.l.b16 %v902
      %v5577 = vunpack.c.l.b16 %v903
      %v5578 = vunpack.c.l.b16 %v904
      %v5579 = vunpack.c.l.b16 %v905
      %v5580 = vunpack.c.l.b16 %v906
      %v5581 = vunpack.c.l.b16 %v907
      %v5582 = vunpack.c.l.b16 %v908
      %v5583 = vunpack.c.l.b16 %v909
      %v5584 = vunpack.c.l.b16 %v910
      %v5585 = vunpack.c.l.b16 %v911
      %v5586 = vunpack.c.l.b16 %v912
      %v5587 = vunpack.c.l.b16 %v913
      %v5588 = vunpack.c.l.b16 %v914
      %v5589 = vunpack.c.l.b16 %v915
      %v5590 = vunpack.c.l.b16 %v916
      %v5591 = vunpack.c.l.b16 %v917
      %v5592 = vunpack.c.l.b16 %v918
      %v5593 = vunpack.c.l.b16 %v919
      %v5594 = vunpack.c.l.b16 %v920
      %v5595 = vunpack.c.l.b16 %v921
      %v5596 = vunpack.c.l.b16 %v922
      %v5597 = vunpack.c.l.b16 %v923
      %v5598 = vunpack.c.l.b16 %v924
      %v5599 = vunpack.c.l.b16 %v925
      %v5600 = vunpack.c.l.b16 %v926
      %v5601 = vunpack.c.l.b16 %v927
      %v5602 = vunpack.c.l.b16 %v928
      %v5603 = vunpack.c.l.b16 %v929
      %v5604 = vpack.c.b16 %v5573, %v5572
      %v5605 = vpack.c.b16 %v5575, %v5574
      %v5606 = vpack.c.b16 %v5577, %v5576
      %v5607 = vpack.c.b16 %v5579, %v5578
      %v5608 = vpack.c.b16 %v5581, %v5580
      %v5609 = vpack.c.b16 %v5583, %v5582
      %v5610 = vpack.c.b16 %v5585, %v5584
      %v5611 = vpack.c.b16 %v5587, %v5586
      %v5612 = vpack.c.b16 %v5589, %v5588
      %v5613 = vpack.c.b16 %v5591, %v5590
      %v5614 = vpack.c.b16 %v5593, %v5592
      %v5615 = vpack.c.b16 %v5595, %v5594
      %v5616 = vpack.c.b16 %v5597, %v5596
      %v5617 = vpack.c.b16 %v5599, %v5598
      %v5618 = vpack.c.b16 %v5601, %v5600
      %v5619 = vpack.c.b16 %v5603, %v5602
      %5620 = vrot.lane.b32.xlu0 %v5604, 12
      %v5621 = vpop.permute.xlu0 %5620
      %5622 = vrot.lane.b32.xlu0 %v5605, 12
      %v5623 = vpop.permute.xlu0 %5622
      %5624 = vrot.lane.b32.xlu0 %v5606, 12
      %v5625 = vpop.permute.xlu0 %5624
      %5626 = vrot.lane.b32.xlu0 %v5607, 12
      %v5627 = vpop.permute.xlu0 %5626
      %5628 = vrot.lane.b32.xlu0 %v5608, 12
      %v5629 = vpop.permute.xlu0 %5628
      %5630 = vrot.lane.b32.xlu0 %v5609, 12
      %v5631 = vpop.permute.xlu0 %5630
      %5632 = vrot.lane.b32.xlu0 %v5610, 12
      %v5633 = vpop.permute.xlu0 %5632
      %5634 = vrot.lane.b32.xlu0 %v5611, 12
      %v5635 = vpop.permute.xlu0 %5634
      %5636 = vrot.lane.b32.xlu0 %v5612, 12
      %v5637 = vpop.permute.xlu0 %5636
      %5638 = vrot.lane.b32.xlu0 %v5613, 12
      %v5639 = vpop.permute.xlu0 %5638
      %5640 = vrot.lane.b32.xlu0 %v5614, 12
      %v5641 = vpop.permute.xlu0 %5640
      %5642 = vrot.lane.b32.xlu0 %v5615, 12
      %v5643 = vpop.permute.xlu0 %5642
      %5644 = vrot.lane.b32.xlu0 %v5616, 12
      %v5645 = vpop.permute.xlu0 %5644
      %5646 = vrot.lane.b32.xlu0 %v5617, 12
      %v5647 = vpop.permute.xlu0 %5646
      %5648 = vrot.lane.b32.xlu0 %v5618, 12
      %v5649 = vpop.permute.xlu0 %5648
      %5650 = vrot.lane.b32.xlu0 %v5619, 12
      %v5651 = vpop.permute.xlu0 %5650
      %v5652 = vunpack.c.l.b16 %v5049
      %v5653 = vunpack.c.l.b16 %v5059
      %v5654 = vunpack.c.l.b16 %v5073
      %v5655 = vunpack.c.l.b16 %v5083
      %v5656 = vunpack.c.l.b16 %v5097
      %v5657 = vunpack.c.l.b16 %v5107
      %v5658 = vunpack.c.l.b16 %v5121
      %v5659 = vunpack.c.l.b16 %v5131
      %v5660 = vunpack.c.l.b16 %v5145
      %v5661 = vunpack.c.l.b16 %v5155
      %v5662 = vunpack.c.l.b16 %v5169
      %v5663 = vunpack.c.l.b16 %v5179
      %v5664 = vunpack.c.l.b16 %v5193
      %v5665 = vunpack.c.l.b16 %v5203
      %v5666 = vunpack.c.l.b16 %v5217
      %v5667 = vunpack.c.l.b16 %v5227
      %v5668 = vunpack.c.l.b16 %v5241
      %v5669 = vunpack.c.l.b16 %v5251
      %v5670 = vunpack.c.l.b16 %v5265
      %v5671 = vunpack.c.l.b16 %v5275
      %v5672 = vunpack.c.l.b16 %v5289
      %v5673 = vunpack.c.l.b16 %v5299
      %v5674 = vunpack.c.l.b16 %v5313
      %v5675 = vunpack.c.l.b16 %v5323
      %v5676 = vunpack.c.l.b16 %v5337
      %v5677 = vunpack.c.l.b16 %v5347
      %v5678 = vunpack.c.l.b16 %v5361
      %v5679 = vunpack.c.l.b16 %v5371
      %v5680 = vunpack.c.l.b16 %v5385
      %v5681 = vunpack.c.l.b16 %v5395
      %v5682 = vunpack.c.l.b16 %v5409
      %v5683 = vunpack.c.l.b16 %v5419
      %v5684 = vpack.c.b16 %v5653, %v5652
      %v5685 = vpack.c.b16 %v5655, %v5654
      %v5686 = vpack.c.b16 %v5657, %v5656
      %v5687 = vpack.c.b16 %v5659, %v5658
      %v5688 = vpack.c.b16 %v5661, %v5660
      %v5689 = vpack.c.b16 %v5663, %v5662
      %v5690 = vpack.c.b16 %v5665, %v5664
      %v5691 = vpack.c.b16 %v5667, %v5666
      %v5692 = vpack.c.b16 %v5669, %v5668
      %v5693 = vpack.c.b16 %v5671, %v5670
      %v5694 = vpack.c.b16 %v5673, %v5672
      %v5695 = vpack.c.b16 %v5675, %v5674
      %v5696 = vpack.c.b16 %v5677, %v5676
      %v5697 = vpack.c.b16 %v5679, %v5678
      %v5698 = vpack.c.b16 %v5681, %v5680
      %v5699 = vpack.c.b16 %v5683, %v5682
      %5700 = vrot.lane.b32.xlu0 %v5684, 15
      %v5701 = vpop.permute.xlu0 %5700
      %5702 = vrot.lane.b32.xlu0 %v5685, 15
      %v5703 = vpop.permute.xlu0 %5702
      %5704 = vrot.lane.b32.xlu0 %v5686, 15
      %v5705 = vpop.permute.xlu0 %5704
      %5706 = vrot.lane.b32.xlu0 %v5687, 15
      %v5707 = vpop.permute.xlu0 %5706
      %5708 = vrot.lane.b32.xlu0 %v5688, 15
      %v5709 = vpop.permute.xlu0 %5708
      %5710 = vrot.lane.b32.xlu0 %v5689, 15
      %v5711 = vpop.permute.xlu0 %5710
      %5712 = vrot.lane.b32.xlu0 %v5690, 15
      %v5713 = vpop.permute.xlu0 %5712
      %5714 = vrot.lane.b32.xlu0 %v5691, 15
      %v5715 = vpop.permute.xlu0 %5714
      %5716 = vrot.lane.b32.xlu0 %v5692, 15
      %v5717 = vpop.permute.xlu0 %5716
      %5718 = vrot.lane.b32.xlu0 %v5693, 15
      %v5719 = vpop.permute.xlu0 %5718
      %5720 = vrot.lane.b32.xlu0 %v5694, 15
      %v5721 = vpop.permute.xlu0 %5720
      %5722 = vrot.lane.b32.xlu0 %v5695, 15
      %v5723 = vpop.permute.xlu0 %5722
      %5724 = vrot.lane.b32.xlu0 %v5696, 15
      %v5725 = vpop.permute.xlu0 %5724
      %5726 = vrot.lane.b32.xlu0 %v5697, 15
      %v5727 = vpop.permute.xlu0 %5726
      %5728 = vrot.lane.b32.xlu0 %v5698, 15
      %v5729 = vpop.permute.xlu0 %5728
      %5730 = vrot.lane.b32.xlu0 %v5699, 15
      %v5731 = vpop.permute.xlu0 %5730
      %5732 = vrot.lane.b32.xlu0 %v1187, 18
      %v5733 = vpop.permute.xlu0 %5732
      %5734 = vrot.lane.b32.xlu0 %v1188, 18
      %v5735 = vpop.permute.xlu0 %5734
      %5736 = vrot.lane.b32.xlu0 %v1189, 18
      %v5737 = vpop.permute.xlu0 %5736
      %5738 = vrot.lane.b32.xlu0 %v1190, 18
      %v5739 = vpop.permute.xlu0 %5738
      %5740 = vrot.lane.b32.xlu0 %v1191, 18
      %v5741 = vpop.permute.xlu0 %5740
      %5742 = vrot.lane.b32.xlu0 %v1192, 18
      %v5743 = vpop.permute.xlu0 %5742
      %5744 = vrot.lane.b32.xlu0 %v1193, 18
      %v5745 = vpop.permute.xlu0 %5744
      %5746 = vrot.lane.b32.xlu0 %v1194, 18
      %v5747 = vpop.permute.xlu0 %5746
      %5748 = vrot.lane.b32.xlu0 %v1195, 18
      %v5749 = vpop.permute.xlu0 %5748
      %5750 = vrot.lane.b32.xlu0 %v1196, 18
      %v5751 = vpop.permute.xlu0 %5750
      %5752 = vrot.lane.b32.xlu0 %v1197, 18
      %v5753 = vpop.permute.xlu0 %5752
      %5754 = vrot.lane.b32.xlu0 %v1198, 18
      %v5755 = vpop.permute.xlu0 %5754
      %5756 = vrot.lane.b32.xlu0 %v1199, 18
      %v5757 = vpop.permute.xlu0 %5756
      %5758 = vrot.lane.b32.xlu0 %v1200, 18
      %v5759 = vpop.permute.xlu0 %5758
      %5760 = vrot.lane.b32.xlu0 %v1201, 18
      %v5761 = vpop.permute.xlu0 %5760
      %5762 = vrot.lane.b32.xlu0 %v4731, 18
      %v5763 = vpop.permute.xlu0 %5762
      %v5766 = vunpack.c.l.b16 %v484
      %v5767 = vunpack.c.l.b16 %v485
      %v5768 = vpack.c.b16 %v5767, %v5766
      %5769 = vrot.lane.b32.xlu0 %v3406, 21
      %v5770 = vpop.permute.xlu0 %5769
      %5771 = vrot.lane.b32.xlu0 %v3407, 21
      %v5772 = vpop.permute.xlu0 %5771
      %5773 = vrot.lane.b32.xlu0 %v3408, 21
      %v5774 = vpop.permute.xlu0 %5773
      %5775 = vrot.lane.b32.xlu0 %v3409, 21
      %v5776 = vpop.permute.xlu0 %5775
      %5777 = vrot.lane.b32.xlu0 %v3410, 21
      %v5778 = vpop.permute.xlu0 %5777
      %5779 = vrot.lane.b32.xlu0 %v3411, 21
      %v5780 = vpop.permute.xlu0 %5779
      %5781 = vrot.lane.b32.xlu0 %v3412, 21
      %v5782 = vpop.permute.xlu0 %5781
      %5783 = vrot.lane.b32.xlu0 %v3413, 21
      %v5784 = vpop.permute.xlu0 %5783
      %5785 = vrot.lane.b32.xlu0 %v3414, 21
      %v5786 = vpop.permute.xlu0 %5785
      %5787 = vrot.lane.b32.xlu0 %v3415, 21
      %v5788 = vpop.permute.xlu0 %5787
      %5789 = vrot.lane.b32.xlu0 %v3416, 21
      %v5790 = vpop.permute.xlu0 %5789
      %5791 = vrot.lane.b32.xlu0 %v3417, 21
      %v5792 = vpop.permute.xlu0 %5791
      %5793 = vrot.lane.b32.xlu0 %v3418, 21
      %v5794 = vpop.permute.xlu0 %5793
      %5795 = vrot.lane.b32.xlu0 %v3419, 21
      %v5796 = vpop.permute.xlu0 %5795
      %5797 = vrot.lane.b32.xlu0 %v3420, 21
      %v5798 = vpop.permute.xlu0 %5797
      %5799 = vrot.lane.b32.xlu0 %v5768, 21
      %v5800 = vpop.permute.xlu0 %5799
      %v5801 = vunpack.c.l.b16 %v5433
      %v5802 = vunpack.c.l.b16 %v5443
      %v5803 = vpack.c.b16 %v5802, %v5801
      %5804 = vrot.lane.b32.xlu0 %v3486, 24
      %v5805 = vpop.permute.xlu0 %5804
      %5806 = vrot.lane.b32.xlu0 %v3487, 24
      %v5807 = vpop.permute.xlu0 %5806
      %5808 = vrot.lane.b32.xlu0 %v3488, 24
      %v5809 = vpop.permute.xlu0 %5808
      %5810 = vrot.lane.b32.xlu0 %v3489, 24
      %v5811 = vpop.permute.xlu0 %5810
      %5812 = vrot.lane.b32.xlu0 %v3490, 24
      %v5813 = vpop.permute.xlu0 %5812
      %5814 = vrot.lane.b32.xlu0 %v3491, 24
      %v5815 = vpop.permute.xlu0 %5814
      %5816 = vrot.lane.b32.xlu0 %v3492, 24
      %v5817 = vpop.permute.xlu0 %5816
      %5818 = vrot.lane.b32.xlu0 %v3493, 24
      %v5819 = vpop.permute.xlu0 %5818
      %5820 = vrot.lane.b32.xlu0 %v3494, 24
      %v5821 = vpop.permute.xlu0 %5820
      %5822 = vrot.lane.b32.xlu0 %v3495, 24
      %v5823 = vpop.permute.xlu0 %5822
      %5824 = vrot.lane.b32.xlu0 %v3496, 24
      %v5825 = vpop.permute.xlu0 %5824
      %5826 = vrot.lane.b32.xlu0 %v3497, 24
      %v5827 = vpop.permute.xlu0 %5826
      %5828 = vrot.lane.b32.xlu0 %v3498, 24
      %v5829 = vpop.permute.xlu0 %5828
      %5830 = vrot.lane.b32.xlu0 %v3499, 24
      %v5831 = vpop.permute.xlu0 %5830
      %5832 = vrot.lane.b32.xlu0 %v3500, 24
      %v5833 = vpop.permute.xlu0 %5832
      %5834 = vrot.lane.b32.xlu0 %v5803, 24
      %v5835 = vpop.permute.xlu0 %5834
      %v5838 = vsel %vm1906, %v1858, %v5445
      %v5841 = vsel %vm1906, %v1859, %v5447
      %v5844 = vsel %vm1906, %v1860, %v5449
      %v5847 = vsel %vm1906, %v1861, %v5451
      %v5850 = vsel %vm1906, %v1862, %v5453
      %v5853 = vsel %vm1906, %v1863, %v5455
      %v5856 = vsel %vm1906, %v1864, %v5457
      %v5859 = vsel %vm1906, %v1865, %v5459
      %v5862 = vsel %vm1906, %v1866, %v5461
      %v5865 = vsel %vm1906, %v1867, %v5463
      %v5868 = vsel %vm1906, %v1868, %v5465
      %v5871 = vsel %vm1906, %v1869, %v5467
      %v5874 = vsel %vm1906, %v1870, %v5469
      %v5877 = vsel %vm1906, %v1871, %v5471
      %v5880 = vsel %vm1906, %v1872, %v5473
      %v5883 = vsel %vm1906, %v1873, %v5475
      %v5885 = vsel %vm1955, %v5838, %v5477
      %v5887 = vsel %vm1955, %v5841, %v5479
      %v5889 = vsel %vm1955, %v5844, %v5481
      %v5891 = vsel %vm1955, %v5847, %v5483
      %v5893 = vsel %vm1955, %v5850, %v5485
      %v5895 = vsel %vm1955, %v5853, %v5487
      %v5897 = vsel %vm1955, %v5856, %v5489
      %v5899 = vsel %vm1955, %v5859, %v5491
      %v5901 = vsel %vm1955, %v5862, %v5493
      %v5903 = vsel %vm1955, %v5865, %v5495
      %v5905 = vsel %vm1955, %v5868, %v5497
      %v5907 = vsel %vm1955, %v5871, %v5499
      %v5909 = vsel %vm1955, %v5874, %v5501
      %v5911 = vsel %vm1955, %v5877, %v5503
      %v5913 = vsel %vm1955, %v5880, %v5505
      %v5915 = vsel %vm1955, %v5883, %v5507
      %v5917 = vsel %vm1988, %v5885, %v5509
      %v5919 = vsel %vm1988, %v5887, %v5511
      %v5921 = vsel %vm1988, %v5889, %v5513
      %v5923 = vsel %vm1988, %v5891, %v5515
      %v5925 = vsel %vm1988, %v5893, %v5517
      %v5927 = vsel %vm1988, %v5895, %v5519
      %v5929 = vsel %vm1988, %v5897, %v5521
      %v5931 = vsel %vm1988, %v5899, %v5523
      %v5933 = vsel %vm1988, %v5901, %v5525
      %v5935 = vsel %vm1988, %v5903, %v5527
      %v5937 = vsel %vm1988, %v5905, %v5529
      %v5939 = vsel %vm1988, %v5907, %v5531
      %v5941 = vsel %vm1988, %v5909, %v5533
      %v5943 = vsel %vm1988, %v5911, %v5535
      %v5945 = vsel %vm1988, %v5913, %v5537
      %v5947 = vsel %vm1988, %v5915, %v5539
      %v5949 = vsel %vm2021, %v5917, %v5621
      %v5951 = vsel %vm2021, %v5919, %v5623
      %v5953 = vsel %vm2021, %v5921, %v5625
      %v5955 = vsel %vm2021, %v5923, %v5627
      %v5957 = vsel %vm2021, %v5925, %v5629
      %v5959 = vsel %vm2021, %v5927, %v5631
      %v5961 = vsel %vm2021, %v5929, %v5633
      %v5963 = vsel %vm2021, %v5931, %v5635
      %v5965 = vsel %vm2021, %v5933, %v5637
      %v5967 = vsel %vm2021, %v5935, %v5639
      %v5969 = vsel %vm2021, %v5937, %v5641
      %v5971 = vsel %vm2021, %v5939, %v5643
      %v5973 = vsel %vm2021, %v5941, %v5645
      %v5975 = vsel %vm2021, %v5943, %v5647
      %v5977 = vsel %vm2021, %v5945, %v5649
      %v5979 = vsel %vm2021, %v5947, %v5651
      %v5981 = vsel %vm2054, %v5949, %v5701
      %v5983 = vsel %vm2054, %v5951, %v5703
      %v5985 = vsel %vm2054, %v5953, %v5705
      %v5987 = vsel %vm2054, %v5955, %v5707
      %v5989 = vsel %vm2054, %v5957, %v5709
      %v5991 = vsel %vm2054, %v5959, %v5711
      %v5993 = vsel %vm2054, %v5961, %v5713
      %v5995 = vsel %vm2054, %v5963, %v5715
      %v5997 = vsel %vm2054, %v5965, %v5717
      %v5999 = vsel %vm2054, %v5967, %v5719
      %v6001 = vsel %vm2054, %v5969, %v5721
      %v6003 = vsel %vm2054, %v5971, %v5723
      %v6005 = vsel %vm2054, %v5973, %v5725
      %v6007 = vsel %vm2054, %v5975, %v5727
      %v6009 = vsel %vm2054, %v5977, %v5729
      %v6011 = vsel %vm2054, %v5979, %v5731
      %v6013 = vsel %vm2087, %v5981, %v5733
      %v6015 = vsel %vm2087, %v5983, %v5735
      %v6017 = vsel %vm2087, %v5985, %v5737
      %v6019 = vsel %vm2087, %v5987, %v5739
      %v6021 = vsel %vm2087, %v5989, %v5741
      %v6023 = vsel %vm2087, %v5991, %v5743
      %v6025 = vsel %vm2087, %v5993, %v5745
      %v6027 = vsel %vm2087, %v5995, %v5747
      %v6029 = vsel %vm2087, %v5997, %v5749
      %v6031 = vsel %vm2087, %v5999, %v5751
      %v6033 = vsel %vm2087, %v6001, %v5753
      %v6035 = vsel %vm2087, %v6003, %v5755
      %v6037 = vsel %vm2087, %v6005, %v5757
      %v6039 = vsel %vm2087, %v6007, %v5759
      %v6041 = vsel %vm2087, %v6009, %v5761
      %v6043 = vsel %vm2087, %v6011, %v5763
      %v6045 = vsel %vm2120, %v6013, %v5770
      %v6047 = vsel %vm2120, %v6015, %v5772
      %v6049 = vsel %vm2120, %v6017, %v5774
      %v6051 = vsel %vm2120, %v6019, %v5776
      %v6053 = vsel %vm2120, %v6021, %v5778
      %v6055 = vsel %vm2120, %v6023, %v5780
      %v6057 = vsel %vm2120, %v6025, %v5782
      %v6059 = vsel %vm2120, %v6027, %v5784
      %v6061 = vsel %vm2120, %v6029, %v5786
      %v6063 = vsel %vm2120, %v6031, %v5788
      %v6065 = vsel %vm2120, %v6033, %v5790
      %v6067 = vsel %vm2120, %v6035, %v5792
      %v6069 = vsel %vm2120, %v6037, %v5794
      %v6071 = vsel %vm2120, %v6039, %v5796
      %v6073 = vsel %vm2120, %v6041, %v5798
      %v6075 = vsel %vm2120, %v6043, %v5800
      %v6077 = vsel %vm2153, %v6045, %v5805
      %v6079 = vsel %vm2153, %v6047, %v5807
      %v6081 = vsel %vm2153, %v6049, %v5809
      %v6083 = vsel %vm2153, %v6051, %v5811
      %v6085 = vsel %vm2153, %v6053, %v5813
      %v6087 = vsel %vm2153, %v6055, %v5815
      %v6089 = vsel %vm2153, %v6057, %v5817
      %v6091 = vsel %vm2153, %v6059, %v5819
      %v6093 = vsel %vm2153, %v6061, %v5821
      %v6095 = vsel %vm2153, %v6063, %v5823
      %v6097 = vsel %vm2153, %v6065, %v5825
      %v6099 = vsel %vm2153, %v6067, %v5827
      %v6101 = vsel %vm2153, %v6069, %v5829
      %v6103 = vsel %vm2153, %v6071, %v5831
      %v6105 = vsel %vm2153, %v6073, %v5833
      %v6107 = vsel %vm2153, %v6075, %v5835
      %v6108 = vld [vmem:[%s1] sm:$0xf]
      %v6109 = vld [vmem:[%s1 + $0x4] sm:$0xf]
      %v6110 = vld [vmem:[%s1 + $0x8] sm:$0xf]
      %v6111 = vld [vmem:[%s1 + $0xc] sm:$0x3]
      %v6112 = vld [vmem:[%s2] sm:$0x1]
      %v6114 = vlaneseq
      %v6115 = vshrl.u32 %v6114, 7
      %v6116 = vsub.s32 0, %v6115
      %v6117 = vrot.slane %v6112, %v6116
      %v6123 = vunpack.c.l.b16 %v6108
      %v6124 = vunpack.c.l.b16 %v6109
      %v6125 = vunpack.c.l.b16 %v6110
      %v6126 = vunpack.c.l.b16 %v6111
      %v6127 = vpack.c.b16 %v6124, %v6123
      %v6128 = vpack.c.b16 %v6126, %v6125
      %vm6130 = vcmask 220160
      %v6131 = vsel %vm6130, %v2155, 0
      %v6133 = vsel %vm6130, %v2157, 0
      %v6135 = vsel %vm6130, %v2159, 0
      %v6137 = vsel %vm6130, %v2161, 0
      %v6139 = vsel %vm6130, %v2163, 0
      %v6141 = vsel %vm6130, %v2165, 0
      %v6143 = vsel %vm6130, %v2167, 0
      %v6145 = vsel %vm6130, %v2169, 0
      %v6147 = vsel %vm6130, %v2171, 0
      %v6149 = vsel %vm6130, %v2173, 0
      %v6151 = vsel %vm6130, %v2175, 0
      %v6153 = vsel %vm6130, %v2177, 0
      %v6155 = vsel %vm6130, %v2179, 0
      %v6157 = vsel %vm6130, %v2181, 0
      %v6159 = vsel %vm6130, %v2183, 0
      %v6161 = vsel %vm6130, %v2185, 0
      %v6163 = vsel %vm6130, %v4222, 0
      %v6165 = vsel %vm6130, %v4224, 0
      %v6167 = vsel %vm6130, %v4226, 0
      %v6169 = vsel %vm6130, %v4228, 0
      %v6171 = vsel %vm6130, %v4230, 0
      %v6173 = vsel %vm6130, %v4232, 0
      %v6175 = vsel %vm6130, %v4234, 0
      %v6177 = vsel %vm6130, %v4236, 0
      %v6179 = vsel %vm6130, %v4238, 0
      %v6181 = vsel %vm6130, %v4240, 0
      %v6183 = vsel %vm6130, %v4242, 0
      %v6185 = vsel %vm6130, %v4244, 0
      %v6187 = vsel %vm6130, %v4246, 0
      %v6189 = vsel %vm6130, %v4248, 0
      %v6191 = vsel %vm6130, %v4250, 0
      %v6193 = vsel %vm6130, %v4252, 0
      %v6195 = vsel %vm6130, %v5005, 0
      %v6197 = vsel %vm6130, %v5007, 0
      %v6199 = vsel %vm6130, %v5009, 0
      %v6201 = vsel %vm6130, %v5011, 0
      %v6203 = vsel %vm6130, %v5013, 0
      %v6205 = vsel %vm6130, %v5015, 0
      %v6207 = vsel %vm6130, %v5017, 0
      %v6209 = vsel %vm6130, %v5019, 0
      %v6211 = vsel %vm6130, %v5021, 0
      %v6213 = vsel %vm6130, %v5023, 0
      %v6215 = vsel %vm6130, %v5025, 0
      %v6217 = vsel %vm6130, %v5027, 0
      %v6219 = vsel %vm6130, %v5029, 0
      %v6221 = vsel %vm6130, %v5031, 0
      %v6223 = vsel %vm6130, %v5033, 0
      %v6225 = vsel %vm6130, %v5035, 0
      %v6227 = vsel %vm6130, %v6077, 0
      %v6229 = vsel %vm6130, %v6079, 0
      %v6231 = vsel %vm6130, %v6081, 0
      %v6233 = vsel %vm6130, %v6083, 0
      %v6235 = vsel %vm6130, %v6085, 0
      %v6237 = vsel %vm6130, %v6087, 0
      %v6239 = vsel %vm6130, %v6089, 0
      %v6241 = vsel %vm6130, %v6091, 0
      %v6243 = vsel %vm6130, %v6093, 0
      %v6245 = vsel %vm6130, %v6095, 0
      %v6247 = vsel %vm6130, %v6097, 0
      %v6249 = vsel %vm6130, %v6099, 0
      %v6251 = vsel %vm6130, %v6101, 0
      %v6253 = vsel %vm6130, %v6103, 0
      %v6255 = vsel %vm6130, %v6105, 0
      %v6257 = vsel %vm6130, %v6107, 0
      %vm6259 = vcmask 1044480
      %vm6260 = vcmask 1045504
      %v6261 = vsel %vm6259, 4294967295, 65535
      %v6262 = vsel %vm6260, %v6261, 0
      %v6264 = vand.u32 %v6128, %v6262
      %6266 = vmatprep.subr.bf16.mxu0 0
      %6267 = vmatpush1.bf16.msra.mxu0 0
      %6268 = vmatprep.subr.bf16.mxu0 0
      %6269 = vmatpush1.bf16.msra.mxu0 0
      %6270 = vmatprep.subr.bf16.mxu0 0
      %6271 = vmatpush1.bf16.msra.mxu0 0
      %6272 = vmatprep.subr.bf16.mxu0 0
      %6273 = vmatpush1.bf16.msra.mxu0 0
      %6274 = vmatprep.subr.bf16.mxu0 0
      %6275 = vmatpush1.bf16.msra.mxu0 0
      %6276 = vmatprep.subr.bf16.mxu0 0
      %6277 = vmatpush1.bf16.msra.mxu0 0
      %6278 = vmatprep.subr.bf16.mxu0 0
      %6279 = vmatpush1.bf16.msra.mxu0 %v6264
      %6280 = vmatprep.subr.bf16.mxu0 0
      %6281 = vmatpush1.bf16.msra.mxu0 %v6127
      %6282 = vmatprep.subr.bf16.mxu0 0
      %6283 = vmatpush2.bf16.msra.mxu0 0
      %6284 = vmatprep.subr.bf16.mxu0 0
      %6285 = vmatpush2.bf16.msra.mxu0 0
      %6286 = vmatprep.subr.bf16.mxu0 0
      %6287 = vmatpush2.bf16.msra.mxu0 0
      %6288 = vmatprep.subr.bf16.mxu0 0
      %6289 = vmatpush2.bf16.msra.mxu0 0
      %6290 = vmatprep.subr.bf16.mxu0 0
      %6291 = vmatpush2.bf16.msra.mxu0 0
      %6292 = vmatprep.subr.bf16.mxu0 0
      %6293 = vmatpush2.bf16.msra.mxu0 0
      %6294 = vmatprep.subr.bf16.mxu0 0
      %6295 = vmatpush2.bf16.msra.mxu0 0
      %6296 = vmatprep.subr.bf16.mxu0 0
      %6297 = vmatpush2.bf16.msra.mxu0 0
      %6298 = vmatprep.mubr.bf16.mxu0 0
      %6299 = vmatmul.mubr.bf16.gmra.mxu0 %v6131
      %v6300 = vpop.f32.mrf.mxu0
      %v6301 = vadd.f32 %v6117, %v6300
      %v6302 = vpop.f32.mrf.mxu0
      %v6303 = vpop.f32.mrf.mxu0
      %v6304 = vadd.f32 %v6117, %v6303
      %v6305 = vpop.f32.mrf.mxu0
      %6306 = vmatprep.mubr.bf16.mxu0 0
      %6307 = vmatmul.mubr.bf16.gmra.mxu0 %v6133
      %v6308 = vpop.f32.mrf.mxu0
      %v6309 = vadd.f32 %v6117, %v6308
      %v6310 = vpop.f32.mrf.mxu0
      %v6311 = vpop.f32.mrf.mxu0
      %v6312 = vadd.f32 %v6117, %v6311
      %v6313 = vpop.f32.mrf.mxu0
      %6314 = vmatprep.mubr.bf16.mxu0 0
      %6315 = vmatmul.mubr.bf16.gmra.mxu0 %v6135
      %v6316 = vpop.f32.mrf.mxu0
      %v6317 = vadd.f32 %v6117, %v6316
      %v6318 = vpop.f32.mrf.mxu0
      %v6319 = vpop.f32.mrf.mxu0
      %v6320 = vadd.f32 %v6117, %v6319
      %v6321 = vpop.f32.mrf.mxu0
      %6322 = vmatprep.mubr.bf16.mxu0 0
      %6323 = vmatmul.mubr.bf16.gmra.mxu0 %v6137
      %v6324 = vpop.f32.mrf.mxu0
      %v6325 = vadd.f32 %v6117, %v6324
      %v6326 = vpop.f32.mrf.mxu0
      %v6327 = vpop.f32.mrf.mxu0
      %v6328 = vadd.f32 %v6117, %v6327
      %v6329 = vpop.f32.mrf.mxu0
      %6330 = vmatprep.mubr.bf16.mxu0 0
      %6331 = vmatmul.mubr.bf16.gmra.mxu0 %v6139
      %v6332 = vpop.f32.mrf.mxu0
      %v6333 = vadd.f32 %v6117, %v6332
      %v6334 = vpop.f32.mrf.mxu0
      %v6335 = vpop.f32.mrf.mxu0
      %v6336 = vadd.f32 %v6117, %v6335
      %v6337 = vpop.f32.mrf.mxu0
      %6338 = vmatprep.mubr.bf16.mxu0 0
      %6339 = vmatmul.mubr.bf16.gmra.mxu0 %v6141
      %v6340 = vpop.f32.mrf.mxu0
      %v6341 = vadd.f32 %v6117, %v6340
      %v6342 = vpop.f32.mrf.mxu0
      %v6343 = vpop.f32.mrf.mxu0
      %v6344 = vadd.f32 %v6117, %v6343
      %v6345 = vpop.f32.mrf.mxu0
      %6346 = vmatprep.mubr.bf16.mxu0 0
      %6347 = vmatmul.mubr.bf16.gmra.mxu0 %v6143
      %v6348 = vpop.f32.mrf.mxu0
      %v6349 = vadd.f32 %v6117, %v6348
      %v6350 = vpop.f32.mrf.mxu0
      %v6351 = vpop.f32.mrf.mxu0
      %v6352 = vadd.f32 %v6117, %v6351
      %v6353 = vpop.f32.mrf.mxu0
      %6354 = vmatprep.mubr.bf16.mxu0 0
      %6355 = vmatmul.mubr.bf16.gmra.mxu0 %v6145
      %v6356 = vpop.f32.mrf.mxu0
      %v6357 = vadd.f32 %v6117, %v6356
      %v6358 = vpop.f32.mrf.mxu0
      %v6359 = vpop.f32.mrf.mxu0
      %v6360 = vadd.f32 %v6117, %v6359
      %v6361 = vpop.f32.mrf.mxu0
      %6362 = vmatprep.mubr.bf16.mxu0 0
      %6363 = vmatmul.mubr.bf16.gmra.mxu0 %v6147
      %v6364 = vpop.f32.mrf.mxu0
      %v6365 = vadd.f32 %v6117, %v6364
      %v6366 = vpop.f32.mrf.mxu0
      %v6367 = vpop.f32.mrf.mxu0
      %v6368 = vadd.f32 %v6117, %v6367
      %v6369 = vpop.f32.mrf.mxu0
      %6370 = vmatprep.mubr.bf16.mxu0 0
      %6371 = vmatmul.mubr.bf16.gmra.mxu0 %v6149
      %v6372 = vpop.f32.mrf.mxu0
      %v6373 = vadd.f32 %v6117, %v6372
      %v6374 = vpop.f32.mrf.mxu0
      %v6375 = vpop.f32.mrf.mxu0
      %v6376 = vadd.f32 %v6117, %v6375
      %v6377 = vpop.f32.mrf.mxu0
      %6378 = vmatprep.mubr.bf16.mxu0 0
      %6379 = vmatmul.mubr.bf16.gmra.mxu0 %v6151
      %v6380 = vpop.f32.mrf.mxu0
      %v6381 = vadd.f32 %v6117, %v6380
      %v6382 = vpop.f32.mrf.mxu0
      %v6383 = vpop.f32.mrf.mxu0
      %v6384 = vadd.f32 %v6117, %v6383
      %v6385 = vpop.f32.mrf.mxu0
      %6386 = vmatprep.mubr.bf16.mxu0 0
      %6387 = vmatmul.mubr.bf16.gmra.mxu0 %v6153
      %v6388 = vpop.f32.mrf.mxu0
      %v6389 = vadd.f32 %v6117, %v6388
      %v6390 = vpop.f32.mrf.mxu0
      %v6391 = vpop.f32.mrf.mxu0
      %v6392 = vadd.f32 %v6117, %v6391
      %v6393 = vpop.f32.mrf.mxu0
      %6394 = vmatprep.mubr.bf16.mxu0 0
      %6395 = vmatmul.mubr.bf16.gmra.mxu0 %v6155
      %v6396 = vpop.f32.mrf.mxu0
      %v6397 = vadd.f32 %v6117, %v6396
      %v6398 = vpop.f32.mrf.mxu0
      %v6399 = vpop.f32.mrf.mxu0
      %v6400 = vadd.f32 %v6117, %v6399
      %v6401 = vpop.f32.mrf.mxu0
      %6402 = vmatprep.mubr.bf16.mxu0 0
      %6403 = vmatmul.mubr.bf16.gmra.mxu0 %v6157
      %v6404 = vpop.f32.mrf.mxu0
      %v6405 = vadd.f32 %v6117, %v6404
      %v6406 = vpop.f32.mrf.mxu0
      %v6407 = vpop.f32.mrf.mxu0
      %v6408 = vadd.f32 %v6117, %v6407
      %v6409 = vpop.f32.mrf.mxu0
      %6410 = vmatprep.mubr.bf16.mxu0 0
      %6411 = vmatmul.mubr.bf16.gmra.mxu0 %v6159
      %v6412 = vpop.f32.mrf.mxu0
      %v6413 = vadd.f32 %v6117, %v6412
      %v6414 = vpop.f32.mrf.mxu0
      %v6415 = vpop.f32.mrf.mxu0
      %v6416 = vadd.f32 %v6117, %v6415
      %v6417 = vpop.f32.mrf.mxu0
      %6418 = vmatprep.mubr.bf16.mxu0 0
      %6419 = vmatmul.mubr.bf16.gmra.mxu0 %v6161
      %v6420 = vpop.f32.mrf.mxu0
      %v6421 = vadd.f32 %v6117, %v6420
      %v6422 = vpop.f32.mrf.mxu0
      %v6423 = vpop.f32.mrf.mxu0
      %v6424 = vadd.f32 %v6117, %v6423
      %v6425 = vpop.f32.mrf.mxu0
      %6426 = vmatprep.mubr.bf16.mxu0 0
      %6427 = vmatmul.mubr.bf16.gmra.mxu0 %v6163
      %v6428 = vpop.f32.mrf.mxu0
      %v6429 = vadd.f32 %v6117, %v6428
      %v6430 = vpop.f32.mrf.mxu0
      %v6431 = vpop.f32.mrf.mxu0
      %v6432 = vadd.f32 %v6117, %v6431
      %v6433 = vpop.f32.mrf.mxu0
      %6434 = vmatprep.mubr.bf16.mxu0 0
      %6435 = vmatmul.mubr.bf16.gmra.mxu0 %v6165
      %v6436 = vpop.f32.mrf.mxu0
      %v6437 = vadd.f32 %v6117, %v6436
      %v6438 = vpop.f32.mrf.mxu0
      %v6439 = vpop.f32.mrf.mxu0
      %v6440 = vadd.f32 %v6117, %v6439
      %v6441 = vpop.f32.mrf.mxu0
      %6442 = vmatprep.mubr.bf16.mxu0 0
      %6443 = vmatmul.mubr.bf16.gmra.mxu0 %v6167
      %v6444 = vpop.f32.mrf.mxu0
      %v6445 = vadd.f32 %v6117, %v6444
      %v6446 = vpop.f32.mrf.mxu0
      %v6447 = vpop.f32.mrf.mxu0
      %v6448 = vadd.f32 %v6117, %v6447
      %v6449 = vpop.f32.mrf.mxu0
      %6450 = vmatprep.mubr.bf16.mxu0 0
      %6451 = vmatmul.mubr.bf16.gmra.mxu0 %v6169
      %v6452 = vpop.f32.mrf.mxu0
      %v6453 = vadd.f32 %v6117, %v6452
      %v6454 = vpop.f32.mrf.mxu0
      %v6455 = vpop.f32.mrf.mxu0
      %v6456 = vadd.f32 %v6117, %v6455
      %v6457 = vpop.f32.mrf.mxu0
      %6458 = vmatprep.mubr.bf16.mxu0 0
      %6459 = vmatmul.mubr.bf16.gmra.mxu0 %v6171
      %v6460 = vpop.f32.mrf.mxu0
      %v6461 = vadd.f32 %v6117, %v6460
      %v6462 = vpop.f32.mrf.mxu0
      %v6463 = vpop.f32.mrf.mxu0
      %v6464 = vadd.f32 %v6117, %v6463
      %v6465 = vpop.f32.mrf.mxu0
      %6466 = vmatprep.mubr.bf16.mxu0 0
      %6467 = vmatmul.mubr.bf16.gmra.mxu0 %v6173
      %v6468 = vpop.f32.mrf.mxu0
      %v6469 = vadd.f32 %v6117, %v6468
      %v6470 = vpop.f32.mrf.mxu0
      %v6471 = vpop.f32.mrf.mxu0
      %v6472 = vadd.f32 %v6117, %v6471
      %v6473 = vpop.f32.mrf.mxu0
      %6474 = vmatprep.mubr.bf16.mxu0 0
      %6475 = vmatmul.mubr.bf16.gmra.mxu0 %v6175
      %v6476 = vpop.f32.mrf.mxu0
      %v6477 = vadd.f32 %v6117, %v6476
      %v6478 = vpop.f32.mrf.mxu0
      %v6479 = vpop.f32.mrf.mxu0
      %v6480 = vadd.f32 %v6117, %v6479
      %v6481 = vpop.f32.mrf.mxu0
      %6482 = vmatprep.mubr.bf16.mxu0 0
      %6483 = vmatmul.mubr.bf16.gmra.mxu0 %v6177
      %v6484 = vpop.f32.mrf.mxu0
      %v6485 = vadd.f32 %v6117, %v6484
      %v6486 = vpop.f32.mrf.mxu0
      %v6487 = vpop.f32.mrf.mxu0
      %v6488 = vadd.f32 %v6117, %v6487
      %v6489 = vpop.f32.mrf.mxu0
      %6490 = vmatprep.mubr.bf16.mxu0 0
      %6491 = vmatmul.mubr.bf16.gmra.mxu0 %v6179
      %v6492 = vpop.f32.mrf.mxu0
      %v6493 = vadd.f32 %v6117, %v6492
      %v6494 = vpop.f32.mrf.mxu0
      %v6495 = vpop.f32.mrf.mxu0
      %v6496 = vadd.f32 %v6117, %v6495
      %v6497 = vpop.f32.mrf.mxu0
      %6498 = vmatprep.mubr.bf16.mxu0 0
      %6499 = vmatmul.mubr.bf16.gmra.mxu0 %v6181
      %v6500 = vpop.f32.mrf.mxu0
      %v6501 = vadd.f32 %v6117, %v6500
      %v6502 = vpop.f32.mrf.mxu0
      %v6503 = vpop.f32.mrf.mxu0
      %v6504 = vadd.f32 %v6117, %v6503
      %v6505 = vpop.f32.mrf.mxu0
      %6506 = vmatprep.mubr.bf16.mxu0 0
      %6507 = vmatmul.mubr.bf16.gmra.mxu0 %v6183
      %v6508 = vpop.f32.mrf.mxu0
      %v6509 = vadd.f32 %v6117, %v6508
      %v6510 = vpop.f32.mrf.mxu0
      %v6511 = vpop.f32.mrf.mxu0
      %v6512 = vadd.f32 %v6117, %v6511
      %v6513 = vpop.f32.mrf.mxu0
      %6514 = vmatprep.mubr.bf16.mxu0 0
      %6515 = vmatmul.mubr.bf16.gmra.mxu0 %v6185
      %v6516 = vpop.f32.mrf.mxu0
      %v6517 = vadd.f32 %v6117, %v6516
      %v6518 = vpop.f32.mrf.mxu0
      %v6519 = vpop.f32.mrf.mxu0
      %v6520 = vadd.f32 %v6117, %v6519
      %v6521 = vpop.f32.mrf.mxu0
      %6522 = vmatprep.mubr.bf16.mxu0 0
      %6523 = vmatmul.mubr.bf16.gmra.mxu0 %v6187
      %v6524 = vpop.f32.mrf.mxu0
      %v6525 = vadd.f32 %v6117, %v6524
      %v6526 = vpop.f32.mrf.mxu0
      %v6527 = vpop.f32.mrf.mxu0
      %v6528 = vadd.f32 %v6117, %v6527
      %v6529 = vpop.f32.mrf.mxu0
      %6530 = vmatprep.mubr.bf16.mxu0 0
      %6531 = vmatmul.mubr.bf16.gmra.mxu0 %v6189
      %v6532 = vpop.f32.mrf.mxu0
      %v6533 = vadd.f32 %v6117, %v6532
      %v6534 = vpop.f32.mrf.mxu0
      %v6535 = vpop.f32.mrf.mxu0
      %v6536 = vadd.f32 %v6117, %v6535
      %v6537 = vpop.f32.mrf.mxu0
      %6538 = vmatprep.mubr.bf16.mxu0 0
      %6539 = vmatmul.mubr.bf16.gmra.mxu0 %v6191
      %v6540 = vpop.f32.mrf.mxu0
      %v6541 = vadd.f32 %v6117, %v6540
      %v6542 = vpop.f32.mrf.mxu0
      %v6543 = vpop.f32.mrf.mxu0
      %v6544 = vadd.f32 %v6117, %v6543
      %v6545 = vpop.f32.mrf.mxu0
      %6546 = vmatprep.mubr.bf16.mxu0 0
      %6547 = vmatmul.mubr.bf16.gmra.mxu0 %v6193
      %v6548 = vpop.f32.mrf.mxu0
      %v6549 = vadd.f32 %v6117, %v6548
      %v6550 = vpop.f32.mrf.mxu0
      %v6551 = vpop.f32.mrf.mxu0
      %v6552 = vadd.f32 %v6117, %v6551
      %v6553 = vpop.f32.mrf.mxu0
      %6554 = vmatprep.mubr.bf16.mxu0 0
      %6555 = vmatmul.mubr.bf16.gmra.mxu0 %v6195
      %v6556 = vpop.f32.mrf.mxu0
      %v6557 = vadd.f32 %v6117, %v6556
      %v6558 = vpop.f32.mrf.mxu0
      %v6559 = vpop.f32.mrf.mxu0
      %v6560 = vadd.f32 %v6117, %v6559
      %v6561 = vpop.f32.mrf.mxu0
      %6562 = vmatprep.mubr.bf16.mxu0 0
      %6563 = vmatmul.mubr.bf16.gmra.mxu0 %v6197
      %v6564 = vpop.f32.mrf.mxu0
      %v6565 = vadd.f32 %v6117, %v6564
      %v6566 = vpop.f32.mrf.mxu0
      %v6567 = vpop.f32.mrf.mxu0
      %v6568 = vadd.f32 %v6117, %v6567
      %v6569 = vpop.f32.mrf.mxu0
      %6570 = vmatprep.mubr.bf16.mxu0 0
      %6571 = vmatmul.mubr.bf16.gmra.mxu0 %v6199
      %v6572 = vpop.f32.mrf.mxu0
      %v6573 = vadd.f32 %v6117, %v6572
      %v6574 = vpop.f32.mrf.mxu0
      %v6575 = vpop.f32.mrf.mxu0
      %v6576 = vadd.f32 %v6117, %v6575
      %v6577 = vpop.f32.mrf.mxu0
      %6578 = vmatprep.mubr.bf16.mxu0 0
      %6579 = vmatmul.mubr.bf16.gmra.mxu0 %v6201
      %v6580 = vpop.f32.mrf.mxu0
      %v6581 = vadd.f32 %v6117, %v6580
      %v6582 = vpop.f32.mrf.mxu0
      %v6583 = vpop.f32.mrf.mxu0
      %v6584 = vadd.f32 %v6117, %v6583
      %v6585 = vpop.f32.mrf.mxu0
      %6586 = vmatprep.mubr.bf16.mxu0 0
      %6587 = vmatmul.mubr.bf16.gmra.mxu0 %v6203
      %v6588 = vpop.f32.mrf.mxu0
      %v6589 = vadd.f32 %v6117, %v6588
      %v6590 = vpop.f32.mrf.mxu0
      %v6591 = vpop.f32.mrf.mxu0
      %v6592 = vadd.f32 %v6117, %v6591
      %v6593 = vpop.f32.mrf.mxu0
      %6594 = vmatprep.mubr.bf16.mxu0 0
      %6595 = vmatmul.mubr.bf16.gmra.mxu0 %v6205
      %v6596 = vpop.f32.mrf.mxu0
      %v6597 = vadd.f32 %v6117, %v6596
      %v6598 = vpop.f32.mrf.mxu0
      %v6599 = vpop.f32.mrf.mxu0
      %v6600 = vadd.f32 %v6117, %v6599
      %v6601 = vpop.f32.mrf.mxu0
      %6602 = vmatprep.mubr.bf16.mxu0 0
      %6603 = vmatmul.mubr.bf16.gmra.mxu0 %v6207
      %v6604 = vpop.f32.mrf.mxu0
      %v6605 = vadd.f32 %v6117, %v6604
      %v6606 = vpop.f32.mrf.mxu0
      %v6607 = vpop.f32.mrf.mxu0
      %v6608 = vadd.f32 %v6117, %v6607
      %v6609 = vpop.f32.mrf.mxu0
      %6610 = vmatprep.mubr.bf16.mxu0 0
      %6611 = vmatmul.mubr.bf16.gmra.mxu0 %v6209
      %v6612 = vpop.f32.mrf.mxu0
      %v6613 = vadd.f32 %v6117, %v6612
      %v6614 = vpop.f32.mrf.mxu0
      %v6615 = vpop.f32.mrf.mxu0
      %v6616 = vadd.f32 %v6117, %v6615
      %v6617 = vpop.f32.mrf.mxu0
      %6618 = vmatprep.mubr.bf16.mxu0 0
      %6619 = vmatmul.mubr.bf16.gmra.mxu0 %v6211
      %v6620 = vpop.f32.mrf.mxu0
      %v6621 = vadd.f32 %v6117, %v6620
      %v6622 = vpop.f32.mrf.mxu0
      %v6623 = vpop.f32.mrf.mxu0
      %v6624 = vadd.f32 %v6117, %v6623
      %v6625 = vpop.f32.mrf.mxu0
      %6626 = vmatprep.mubr.bf16.mxu0 0
      %6627 = vmatmul.mubr.bf16.gmra.mxu0 %v6213
      %v6628 = vpop.f32.mrf.mxu0
      %v6629 = vadd.f32 %v6117, %v6628
      %v6630 = vpop.f32.mrf.mxu0
      %v6631 = vpop.f32.mrf.mxu0
      %v6632 = vadd.f32 %v6117, %v6631
      %v6633 = vpop.f32.mrf.mxu0
      %6634 = vmatprep.mubr.bf16.mxu0 0
      %6635 = vmatmul.mubr.bf16.gmra.mxu0 %v6215
      %v6636 = vpop.f32.mrf.mxu0
      %v6637 = vadd.f32 %v6117, %v6636
      %v6638 = vpop.f32.mrf.mxu0
      %v6639 = vpop.f32.mrf.mxu0
      %v6640 = vadd.f32 %v6117, %v6639
      %v6641 = vpop.f32.mrf.mxu0
      %6642 = vmatprep.mubr.bf16.mxu0 0
      %6643 = vmatmul.mubr.bf16.gmra.mxu0 %v6217
      %v6644 = vpop.f32.mrf.mxu0
      %v6645 = vadd.f32 %v6117, %v6644
      %v6646 = vpop.f32.mrf.mxu0
      %v6647 = vpop.f32.mrf.mxu0
      %v6648 = vadd.f32 %v6117, %v6647
      %v6649 = vpop.f32.mrf.mxu0
      %6650 = vmatprep.mubr.bf16.mxu0 0
      %6651 = vmatmul.mubr.bf16.gmra.mxu0 %v6219
      %v6652 = vpop.f32.mrf.mxu0
      %v6653 = vadd.f32 %v6117, %v6652
      %v6654 = vpop.f32.mrf.mxu0
      %v6655 = vpop.f32.mrf.mxu0
      %v6656 = vadd.f32 %v6117, %v6655
      %v6657 = vpop.f32.mrf.mxu0
      %6658 = vmatprep.mubr.bf16.mxu0 0
      %6659 = vmatmul.mubr.bf16.gmra.mxu0 %v6221
      %v6660 = vpop.f32.mrf.mxu0
      %v6661 = vadd.f32 %v6117, %v6660
      %v6662 = vpop.f32.mrf.mxu0
      %v6663 = vpop.f32.mrf.mxu0
      %v6664 = vadd.f32 %v6117, %v6663
      %v6665 = vpop.f32.mrf.mxu0
      %6666 = vmatprep.mubr.bf16.mxu0 0
      %6667 = vmatmul.mubr.bf16.gmra.mxu0 %v6223
      %v6668 = vpop.f32.mrf.mxu0
      %v6669 = vadd.f32 %v6117, %v6668
      %v6670 = vpop.f32.mrf.mxu0
      %v6671 = vpop.f32.mrf.mxu0
      %v6672 = vadd.f32 %v6117, %v6671
      %v6673 = vpop.f32.mrf.mxu0
      %6674 = vmatprep.mubr.bf16.mxu0 0
      %6675 = vmatmul.mubr.bf16.gmra.mxu0 %v6225
      %v6676 = vpop.f32.mrf.mxu0
      %v6677 = vadd.f32 %v6117, %v6676
      %v6678 = vpop.f32.mrf.mxu0
      %v6679 = vpop.f32.mrf.mxu0
      %v6680 = vadd.f32 %v6117, %v6679
      %v6681 = vpop.f32.mrf.mxu0
      %6682 = vmatprep.mubr.bf16.mxu0 0
      %6683 = vmatmul.mubr.bf16.gmra.mxu0 %v6227
      %v6684 = vpop.f32.mrf.mxu0
      %v6685 = vadd.f32 %v6117, %v6684
      %v6686 = vpop.f32.mrf.mxu0
      %v6687 = vpop.f32.mrf.mxu0
      %v6688 = vadd.f32 %v6117, %v6687
      %v6689 = vpop.f32.mrf.mxu0
      %6690 = vmatprep.mubr.bf16.mxu0 0
      %6691 = vmatmul.mubr.bf16.gmra.mxu0 %v6229
      %v6692 = vpop.f32.mrf.mxu0
      %v6693 = vadd.f32 %v6117, %v6692
      %v6694 = vpop.f32.mrf.mxu0
      %v6695 = vpop.f32.mrf.mxu0
      %v6696 = vadd.f32 %v6117, %v6695
      %v6697 = vpop.f32.mrf.mxu0
      %6698 = vmatprep.mubr.bf16.mxu0 0
      %6699 = vmatmul.mubr.bf16.gmra.mxu0 %v6231
      %v6700 = vpop.f32.mrf.mxu0
      %v6701 = vadd.f32 %v6117, %v6700
      %v6702 = vpop.f32.mrf.mxu0
      %v6703 = vpop.f32.mrf.mxu0
      %v6704 = vadd.f32 %v6117, %v6703
      %v6705 = vpop.f32.mrf.mxu0
      %6706 = vmatprep.mubr.bf16.mxu0 0
      %6707 = vmatmul.mubr.bf16.gmra.mxu0 %v6233
      %v6708 = vpop.f32.mrf.mxu0
      %v6709 = vadd.f32 %v6117, %v6708
      %v6710 = vpop.f32.mrf.mxu0
      %v6711 = vpop.f32.mrf.mxu0
      %v6712 = vadd.f32 %v6117, %v6711
      %v6713 = vpop.f32.mrf.mxu0
      %6714 = vmatprep.mubr.bf16.mxu0 0
      %6715 = vmatmul.mubr.bf16.gmra.mxu0 %v6235
      %v6716 = vpop.f32.mrf.mxu0
      %v6717 = vadd.f32 %v6117, %v6716
      %v6718 = vpop.f32.mrf.mxu0
      %v6719 = vpop.f32.mrf.mxu0
      %v6720 = vadd.f32 %v6117, %v6719
      %v6721 = vpop.f32.mrf.mxu0
      %6722 = vmatprep.mubr.bf16.mxu0 0
      %6723 = vmatmul.mubr.bf16.gmra.mxu0 %v6237
      %v6724 = vpop.f32.mrf.mxu0
      %v6725 = vadd.f32 %v6117, %v6724
      %v6726 = vpop.f32.mrf.mxu0
      %v6727 = vpop.f32.mrf.mxu0
      %v6728 = vadd.f32 %v6117, %v6727
      %v6729 = vpop.f32.mrf.mxu0
      %6730 = vmatprep.mubr.bf16.mxu0 0
      %6731 = vmatmul.mubr.bf16.gmra.mxu0 %v6239
      %v6732 = vpop.f32.mrf.mxu0
      %v6733 = vadd.f32 %v6117, %v6732
      %v6734 = vpop.f32.mrf.mxu0
      %v6735 = vpop.f32.mrf.mxu0
      %v6736 = vadd.f32 %v6117, %v6735
      %v6737 = vpop.f32.mrf.mxu0
      %6738 = vmatprep.mubr.bf16.mxu0 0
      %6739 = vmatmul.mubr.bf16.gmra.mxu0 %v6241
      %v6740 = vpop.f32.mrf.mxu0
      %v6741 = vadd.f32 %v6117, %v6740
      %v6742 = vpop.f32.mrf.mxu0
      %v6743 = vpop.f32.mrf.mxu0
      %v6744 = vadd.f32 %v6117, %v6743
      %v6745 = vpop.f32.mrf.mxu0
      %6746 = vmatprep.mubr.bf16.mxu0 0
      %6747 = vmatmul.mubr.bf16.gmra.mxu0 %v6243
      %v6748 = vpop.f32.mrf.mxu0
      %v6749 = vadd.f32 %v6117, %v6748
      %v6750 = vpop.f32.mrf.mxu0
      %v6751 = vpop.f32.mrf.mxu0
      %v6752 = vadd.f32 %v6117, %v6751
      %v6753 = vpop.f32.mrf.mxu0
      %6754 = vmatprep.mubr.bf16.mxu0 0
      %6755 = vmatmul.mubr.bf16.gmra.mxu0 %v6245
      %v6756 = vpop.f32.mrf.mxu0
      %v6757 = vadd.f32 %v6117, %v6756
      %v6758 = vpop.f32.mrf.mxu0
      %v6759 = vpop.f32.mrf.mxu0
      %v6760 = vadd.f32 %v6117, %v6759
      %v6761 = vpop.f32.mrf.mxu0
      %6762 = vmatprep.mubr.bf16.mxu0 0
      %6763 = vmatmul.mubr.bf16.gmra.mxu0 %v6247
      %v6764 = vpop.f32.mrf.mxu0
      %v6765 = vadd.f32 %v6117, %v6764
      %v6766 = vpop.f32.mrf.mxu0
      %v6767 = vpop.f32.mrf.mxu0
      %v6768 = vadd.f32 %v6117, %v6767
      %v6769 = vpop.f32.mrf.mxu0
      %6770 = vmatprep.mubr.bf16.mxu0 0
      %6771 = vmatmul.mubr.bf16.gmra.mxu0 %v6249
      %v6772 = vpop.f32.mrf.mxu0
      %v6773 = vadd.f32 %v6117, %v6772
      %v6774 = vpop.f32.mrf.mxu0
      %v6775 = vpop.f32.mrf.mxu0
      %v6776 = vadd.f32 %v6117, %v6775
      %v6777 = vpop.f32.mrf.mxu0
      %6778 = vmatprep.mubr.bf16.mxu0 0
      %6779 = vmatmul.mubr.bf16.gmra.mxu0 %v6251
      %v6780 = vpop.f32.mrf.mxu0
      %v6781 = vadd.f32 %v6117, %v6780
      %v6782 = vpop.f32.mrf.mxu0
      %v6783 = vpop.f32.mrf.mxu0
      %v6784 = vadd.f32 %v6117, %v6783
      %v6785 = vpop.f32.mrf.mxu0
      %6786 = vmatprep.mubr.bf16.mxu0 0
      %6787 = vmatmul.mubr.bf16.gmra.mxu0 %v6253
      %v6788 = vpop.f32.mrf.mxu0
      %v6789 = vadd.f32 %v6117, %v6788
      %v6790 = vpop.f32.mrf.mxu0
      %v6791 = vpop.f32.mrf.mxu0
      %v6792 = vadd.f32 %v6117, %v6791
      %v6793 = vpop.f32.mrf.mxu0
      %6794 = vmatprep.mubr.bf16.mxu0 0
      %6795 = vmatmul.mubr.bf16.gmra.mxu0 %v6255
      %v6796 = vpop.f32.mrf.mxu0
      %v6797 = vadd.f32 %v6117, %v6796
      %v6798 = vpop.f32.mrf.mxu0
      %v6799 = vpop.f32.mrf.mxu0
      %v6800 = vadd.f32 %v6117, %v6799
      %v6801 = vpop.f32.mrf.mxu0
      %6802 = vmatprep.mubr.bf16.mxu0 0
      %6803 = vmatmul.mubr.bf16.gmra.mxu0 %v6257
      %v6804 = vpop.f32.mrf.mxu0
      %v6805 = vadd.f32 %v6117, %v6804
      %v6806 = vpop.f32.mrf.mxu0
      %v6807 = vpop.f32.mrf.mxu0
      %v6808 = vadd.f32 %v6117, %v6807
      %v6809 = vpop.f32.mrf.mxu0
      %6810 = vdwg.mxu0
      %v6811 = vmax.f32 %v6301, 0.0
      %v6812 = vmax.f32 %v6304, 0.0
      %v6813 = vmax.f32 %v6309, 0.0
      %v6814 = vmax.f32 %v6312, 0.0
      %v6815 = vmax.f32 %v6317, 0.0
      %v6816 = vmax.f32 %v6320, 0.0
      %v6817 = vmax.f32 %v6325, 0.0
      %v6818 = vmax.f32 %v6328, 0.0
      %v6819 = vmax.f32 %v6333, 0.0
      %v6820 = vmax.f32 %v6336, 0.0
      %v6821 = vmax.f32 %v6341, 0.0
      %v6822 = vmax.f32 %v6344, 0.0
      %v6823 = vmax.f32 %v6349, 0.0
      %v6824 = vmax.f32 %v6352, 0.0
      %v6825 = vmax.f32 %v6357, 0.0
      %v6826 = vmax.f32 %v6360, 0.0
      %v6827 = vmax.f32 %v6365, 0.0
      %v6828 = vmax.f32 %v6368, 0.0
      %v6829 = vmax.f32 %v6373, 0.0
      %v6830 = vmax.f32 %v6376, 0.0
      %v6831 = vmax.f32 %v6381, 0.0
      %v6832 = vmax.f32 %v6384, 0.0
      %v6833 = vmax.f32 %v6389, 0.0
      %v6834 = vmax.f32 %v6392, 0.0
      %v6835 = vmax.f32 %v6397, 0.0
      %v6836 = vmax.f32 %v6400, 0.0
      %v6837 = vmax.f32 %v6405, 0.0
      %v6838 = vmax.f32 %v6408, 0.0
      %v6839 = vmax.f32 %v6413, 0.0
      %v6840 = vmax.f32 %v6416, 0.0
      %v6841 = vmax.f32 %v6421, 0.0
      %v6842 = vmax.f32 %v6424, 0.0
      %v6843 = vmax.f32 %v6429, 0.0
      %v6844 = vmax.f32 %v6432, 0.0
      %v6845 = vmax.f32 %v6437, 0.0
      %v6846 = vmax.f32 %v6440, 0.0
      %v6847 = vmax.f32 %v6445, 0.0
      %v6848 = vmax.f32 %v6448, 0.0
      %v6849 = vmax.f32 %v6453, 0.0
      %v6850 = vmax.f32 %v6456, 0.0
      %v6851 = vmax.f32 %v6461, 0.0
      %v6852 = vmax.f32 %v6464, 0.0
      %v6853 = vmax.f32 %v6469, 0.0
      %v6854 = vmax.f32 %v6472, 0.0
      %v6855 = vmax.f32 %v6477, 0.0
      %v6856 = vmax.f32 %v6480, 0.0
      %v6857 = vmax.f32 %v6485, 0.0
      %v6858 = vmax.f32 %v6488, 0.0
      %v6859 = vmax.f32 %v6493, 0.0
      %v6860 = vmax.f32 %v6496, 0.0
      %v6861 = vmax.f32 %v6501, 0.0
      %v6862 = vmax.f32 %v6504, 0.0
      %v6863 = vmax.f32 %v6509, 0.0
      %v6864 = vmax.f32 %v6512, 0.0
      %v6865 = vmax.f32 %v6517, 0.0
      %v6866 = vmax.f32 %v6520, 0.0
      %v6867 = vmax.f32 %v6525, 0.0
      %v6868 = vmax.f32 %v6528, 0.0
      %v6869 = vmax.f32 %v6533, 0.0
      %v6870 = vmax.f32 %v6536, 0.0
      %v6871 = vmax.f32 %v6541, 0.0
      %v6872 = vmax.f32 %v6544, 0.0
      %v6873 = vmax.f32 %v6549, 0.0
      %v6874 = vmax.f32 %v6552, 0.0
      %v6875 = vmax.f32 %v6557, 0.0
      %v6876 = vmax.f32 %v6560, 0.0
      %v6877 = vmax.f32 %v6565, 0.0
      %v6878 = vmax.f32 %v6568, 0.0
      %v6879 = vmax.f32 %v6573, 0.0
      %v6880 = vmax.f32 %v6576, 0.0
      %v6881 = vmax.f32 %v6581, 0.0
      %v6882 = vmax.f32 %v6584, 0.0
      %v6883 = vmax.f32 %v6589, 0.0
      %v6884 = vmax.f32 %v6592, 0.0
      %v6885 = vmax.f32 %v6597, 0.0
      %v6886 = vmax.f32 %v6600, 0.0
      %v6887 = vmax.f32 %v6605, 0.0
      %v6888 = vmax.f32 %v6608, 0.0
      %v6889 = vmax.f32 %v6613, 0.0
      %v6890 = vmax.f32 %v6616, 0.0
      %v6891 = vmax.f32 %v6621, 0.0
      %v6892 = vmax.f32 %v6624, 0.0
      %v6893 = vmax.f32 %v6629, 0.0
      %v6894 = vmax.f32 %v6632, 0.0
      %v6895 = vmax.f32 %v6637, 0.0
      %v6896 = vmax.f32 %v6640, 0.0
      %v6897 = vmax.f32 %v6645, 0.0
      %v6898 = vmax.f32 %v6648, 0.0
      %v6899 = vmax.f32 %v6653, 0.0
      %v6900 = vmax.f32 %v6656, 0.0
      %v6901 = vmax.f32 %v6661, 0.0
      %v6902 = vmax.f32 %v6664, 0.0
      %v6903 = vmax.f32 %v6669, 0.0
      %v6904 = vmax.f32 %v6672, 0.0
      %v6905 = vmax.f32 %v6677, 0.0
      %v6906 = vmax.f32 %v6680, 0.0
      %v6907 = vmax.f32 %v6685, 0.0
      %v6908 = vmax.f32 %v6688, 0.0
      %v6909 = vmax.f32 %v6693, 0.0
      %v6910 = vmax.f32 %v6696, 0.0
      %v6911 = vmax.f32 %v6701, 0.0
      %v6912 = vmax.f32 %v6704, 0.0
      %v6913 = vmax.f32 %v6709, 0.0
      %v6914 = vmax.f32 %v6712, 0.0
      %v6915 = vmax.f32 %v6717, 0.0
      %v6916 = vmax.f32 %v6720, 0.0
      %v6917 = vmax.f32 %v6725, 0.0
      %v6918 = vmax.f32 %v6728, 0.0
      %v6919 = vmax.f32 %v6733, 0.0
      %v6920 = vmax.f32 %v6736, 0.0
      %v6921 = vmax.f32 %v6741, 0.0
      %v6922 = vmax.f32 %v6744, 0.0
      %v6923 = vmax.f32 %v6749, 0.0
      %v6924 = vmax.f32 %v6752, 0.0
      %v6925 = vmax.f32 %v6757, 0.0
      %v6926 = vmax.f32 %v6760, 0.0
      %v6927 = vmax.f32 %v6765, 0.0
      %v6928 = vmax.f32 %v6768, 0.0
      %v6929 = vmax.f32 %v6773, 0.0
      %v6930 = vmax.f32 %v6776, 0.0
      %v6931 = vmax.f32 %v6781, 0.0
      %v6932 = vmax.f32 %v6784, 0.0
      %v6933 = vmax.f32 %v6789, 0.0
      %v6934 = vmax.f32 %v6792, 0.0
      %v6935 = vmax.f32 %v6797, 0.0
      %v6936 = vmax.f32 %v6800, 0.0
      %v6937 = vmax.f32 %v6805, 0.0
      %v6938 = vmax.f32 %v6808, 0.0
      %vm6971 = vcmask 1040384
      %v6972 = vrot.slane %v6811, 7
      %v6973 = vrot.slane %v6812, 7
      %v6974 = vsel %vm6971, %v6972, %v6973
      %v6975 = vrot.slane %v6813, 7
      %v6976 = vrot.slane %v6814, 7
      %v6977 = vsel %vm6971, %v6975, %v6976
      %v6978 = vrot.slane %v6815, 7
      %v6979 = vrot.slane %v6816, 7
      %v6980 = vsel %vm6971, %v6978, %v6979
      %v6981 = vrot.slane %v6817, 7
      %v6982 = vrot.slane %v6818, 7
      %v6983 = vsel %vm6971, %v6981, %v6982
      %v6984 = vrot.slane %v6819, 7
      %v6985 = vrot.slane %v6820, 7
      %v6986 = vsel %vm6971, %v6984, %v6985
      %v6987 = vrot.slane %v6821, 7
      %v6988 = vrot.slane %v6822, 7
      %v6989 = vsel %vm6971, %v6987, %v6988
      %v6990 = vrot.slane %v6823, 7
      %v6991 = vrot.slane %v6824, 7
      %v6992 = vsel %vm6971, %v6990, %v6991
      %v6993 = vrot.slane %v6825, 7
      %v6994 = vrot.slane %v6826, 7
      %v6995 = vsel %vm6971, %v6993, %v6994
      %v6996 = vrot.slane %v6827, 7
      %v6997 = vrot.slane %v6828, 7
      %v6998 = vsel %vm6971, %v6996, %v6997
      %v6999 = vrot.slane %v6829, 7
      %v7000 = vrot.slane %v6830, 7
      %v7001 = vsel %vm6971, %v6999, %v7000
      %v7002 = vrot.slane %v6831, 7
      %v7003 = vrot.slane %v6832, 7
      %v7004 = vsel %vm6971, %v7002, %v7003
      %v7005 = vrot.slane %v6833, 7
      %v7006 = vrot.slane %v6834, 7
      %v7007 = vsel %vm6971, %v7005, %v7006
      %v7008 = vrot.slane %v6835, 7
      %v7009 = vrot.slane %v6836, 7
      %v7010 = vsel %vm6971, %v7008, %v7009
      %v7011 = vrot.slane %v6837, 7
      %v7012 = vrot.slane %v6838, 7
      %v7013 = vsel %vm6971, %v7011, %v7012
      %v7014 = vrot.slane %v6839, 7
      %v7015 = vrot.slane %v6840, 7
      %v7016 = vsel %vm6971, %v7014, %v7015
      %v7017 = vrot.slane %v6841, 7
      %v7018 = vrot.slane %v6842, 7
      %v7019 = vsel %vm6971, %v7017, %v7018
      %v7036 = vsel %vm6971, 0.0, %v6972
      %v7037 = vsel %vm6971, 0.0, %v6975
      %v7038 = vsel %vm6971, 0.0, %v6978
      %v7039 = vsel %vm6971, 0.0, %v6981
      %v7040 = vsel %vm6971, 0.0, %v6984
      %v7041 = vsel %vm6971, 0.0, %v6987
      %v7042 = vsel %vm6971, 0.0, %v6990
      %v7043 = vsel %vm6971, 0.0, %v6993
      %v7044 = vsel %vm6971, 0.0, %v6996
      %v7045 = vsel %vm6971, 0.0, %v6999
      %v7046 = vsel %vm6971, 0.0, %v7002
      %v7047 = vsel %vm6971, 0.0, %v7005
      %v7048 = vsel %vm6971, 0.0, %v7008
      %v7049 = vsel %vm6971, 0.0, %v7011
      %v7050 = vsel %vm6971, 0.0, %v7014
      %v7051 = vsel %vm6971, 0.0, %v7017
      %v7084 = vrot.slane %v6843, 7
      %v7085 = vrot.slane %v6844, 7
      %v7086 = vsel %vm6971, %v7084, %v7085
      %v7087 = vrot.slane %v6845, 7
      %v7088 = vrot.slane %v6846, 7
      %v7089 = vsel %vm6971, %v7087, %v7088
      %v7090 = vrot.slane %v6847, 7
      %v7091 = vrot.slane %v6848, 7
      %v7092 = vsel %vm6971, %v7090, %v7091
      %v7093 = vrot.slane %v6849, 7
      %v7094 = vrot.slane %v6850, 7
      %v7095 = vsel %vm6971, %v7093, %v7094
      %v7096 = vrot.slane %v6851, 7
      %v7097 = vrot.slane %v6852, 7
      %v7098 = vsel %vm6971, %v7096, %v7097
      %v7099 = vrot.slane %v6853, 7
      %v7100 = vrot.slane %v6854, 7
      %v7101 = vsel %vm6971, %v7099, %v7100
      %v7102 = vrot.slane %v6855, 7
      %v7103 = vrot.slane %v6856, 7
      %v7104 = vsel %vm6971, %v7102, %v7103
      %v7105 = vrot.slane %v6857, 7
      %v7106 = vrot.slane %v6858, 7
      %v7107 = vsel %vm6971, %v7105, %v7106
      %v7108 = vrot.slane %v6859, 7
      %v7109 = vrot.slane %v6860, 7
      %v7110 = vsel %vm6971, %v7108, %v7109
      %v7111 = vrot.slane %v6861, 7
      %v7112 = vrot.slane %v6862, 7
      %v7113 = vsel %vm6971, %v7111, %v7112
      %v7114 = vrot.slane %v6863, 7
      %v7115 = vrot.slane %v6864, 7
      %v7116 = vsel %vm6971, %v7114, %v7115
      %v7117 = vrot.slane %v6865, 7
      %v7118 = vrot.slane %v6866, 7
      %v7119 = vsel %vm6971, %v7117, %v7118
      %v7120 = vrot.slane %v6867, 7
      %v7121 = vrot.slane %v6868, 7
      %v7122 = vsel %vm6971, %v7120, %v7121
      %v7123 = vrot.slane %v6869, 7
      %v7124 = vrot.slane %v6870, 7
      %v7125 = vsel %vm6971, %v7123, %v7124
      %v7126 = vrot.slane %v6871, 7
      %v7127 = vrot.slane %v6872, 7
      %v7128 = vsel %vm6971, %v7126, %v7127
      %v7129 = vrot.slane %v6873, 7
      %v7130 = vrot.slane %v6874, 7
      %v7131 = vsel %vm6971, %v7129, %v7130
      %v7148 = vsel %vm6971, 0.0, %v7084
      %v7149 = vsel %vm6971, 0.0, %v7087
      %v7150 = vsel %vm6971, 0.0, %v7090
      %v7151 = vsel %vm6971, 0.0, %v7093
      %v7152 = vsel %vm6971, 0.0, %v7096
      %v7153 = vsel %vm6971, 0.0, %v7099
      %v7154 = vsel %vm6971, 0.0, %v7102
      %v7155 = vsel %vm6971, 0.0, %v7105
      %v7156 = vsel %vm6971, 0.0, %v7108
      %v7157 = vsel %vm6971, 0.0, %v7111
      %v7158 = vsel %vm6971, 0.0, %v7114
      %v7159 = vsel %vm6971, 0.0, %v7117
      %v7160 = vsel %vm6971, 0.0, %v7120
      %v7161 = vsel %vm6971, 0.0, %v7123
      %v7162 = vsel %vm6971, 0.0, %v7126
      %v7163 = vsel %vm6971, 0.0, %v7129
      %v7196 = vrot.slane %v6875, 7
      %v7197 = vrot.slane %v6876, 7
      %v7198 = vsel %vm6971, %v7196, %v7197
      %v7199 = vrot.slane %v6877, 7
      %v7200 = vrot.slane %v6878, 7
      %v7201 = vsel %vm6971, %v7199, %v7200
      %v7202 = vrot.slane %v6879, 7
      %v7203 = vrot.slane %v6880, 7
      %v7204 = vsel %vm6971, %v7202, %v7203
      %v7205 = vrot.slane %v6881, 7
      %v7206 = vrot.slane %v6882, 7
      %v7207 = vsel %vm6971, %v7205, %v7206
      %v7208 = vrot.slane %v6883, 7
      %v7209 = vrot.slane %v6884, 7
      %v7210 = vsel %vm6971, %v7208, %v7209
      %v7211 = vrot.slane %v6885, 7
      %v7212 = vrot.slane %v6886, 7
      %v7213 = vsel %vm6971, %v7211, %v7212
      %v7214 = vrot.slane %v6887, 7
      %v7215 = vrot.slane %v6888, 7
      %v7216 = vsel %vm6971, %v7214, %v7215
      %v7217 = vrot.slane %v6889, 7
      %v7218 = vrot.slane %v6890, 7
      %v7219 = vsel %vm6971, %v7217, %v7218
      %v7220 = vrot.slane %v6891, 7
      %v7221 = vrot.slane %v6892, 7
      %v7222 = vsel %vm6971, %v7220, %v7221
      %v7223 = vrot.slane %v6893, 7
      %v7224 = vrot.slane %v6894, 7
      %v7225 = vsel %vm6971, %v7223, %v7224
      %v7226 = vrot.slane %v6895, 7
      %v7227 = vrot.slane %v6896, 7
      %v7228 = vsel %vm6971, %v7226, %v7227
      %v7229 = vrot.slane %v6897, 7
      %v7230 = vrot.slane %v6898, 7
      %v7231 = vsel %vm6971, %v7229, %v7230
      %v7232 = vrot.slane %v6899, 7
      %v7233 = vrot.slane %v6900, 7
      %v7234 = vsel %vm6971, %v7232, %v7233
      %v7235 = vrot.slane %v6901, 7
      %v7236 = vrot.slane %v6902, 7
      %v7237 = vsel %vm6971, %v7235, %v7236
      %v7238 = vrot.slane %v6903, 7
      %v7239 = vrot.slane %v6904, 7
      %v7240 = vsel %vm6971, %v7238, %v7239
      %v7241 = vrot.slane %v6905, 7
      %v7242 = vrot.slane %v6906, 7
      %v7243 = vsel %vm6971, %v7241, %v7242
      %v7260 = vsel %vm6971, 0.0, %v7196
      %v7261 = vsel %vm6971, 0.0, %v7199
      %v7262 = vsel %vm6971, 0.0, %v7202
      %v7263 = vsel %vm6971, 0.0, %v7205
      %v7264 = vsel %vm6971, 0.0, %v7208
      %v7265 = vsel %vm6971, 0.0, %v7211
      %v7266 = vsel %vm6971, 0.0, %v7214
      %v7267 = vsel %vm6971, 0.0, %v7217
      %v7268 = vsel %vm6971, 0.0, %v7220
      %v7269 = vsel %vm6971, 0.0, %v7223
      %v7270 = vsel %vm6971, 0.0, %v7226
      %v7271 = vsel %vm6971, 0.0, %v7229
      %v7272 = vsel %vm6971, 0.0, %v7232
      %v7273 = vsel %vm6971, 0.0, %v7235
      %v7274 = vsel %vm6971, 0.0, %v7238
      %v7275 = vsel %vm6971, 0.0, %v7241
      %v7308 = vrot.slane %v6907, 7
      %v7309 = vrot.slane %v6908, 7
      %v7310 = vsel %vm6971, %v7308, %v7309
      %v7311 = vrot.slane %v6909, 7
      %v7312 = vrot.slane %v6910, 7
      %v7313 = vsel %vm6971, %v7311, %v7312
      %v7314 = vrot.slane %v6911, 7
      %v7315 = vrot.slane %v6912, 7
      %v7316 = vsel %vm6971, %v7314, %v7315
      %v7317 = vrot.slane %v6913, 7
      %v7318 = vrot.slane %v6914, 7
      %v7319 = vsel %vm6971, %v7317, %v7318
      %v7320 = vrot.slane %v6915, 7
      %v7321 = vrot.slane %v6916, 7
      %v7322 = vsel %vm6971, %v7320, %v7321
      %v7323 = vrot.slane %v6917, 7
      %v7324 = vrot.slane %v6918, 7
      %v7325 = vsel %vm6971, %v7323, %v7324
      %v7326 = vrot.slane %v6919, 7
      %v7327 = vrot.slane %v6920, 7
      %v7328 = vsel %vm6971, %v7326, %v7327
      %v7329 = vrot.slane %v6921, 7
      %v7330 = vrot.slane %v6922, 7
      %v7331 = vsel %vm6971, %v7329, %v7330
      %v7332 = vrot.slane %v6923, 7
      %v7333 = vrot.slane %v6924, 7
      %v7334 = vsel %vm6971, %v7332, %v7333
      %v7335 = vrot.slane %v6925, 7
      %v7336 = vrot.slane %v6926, 7
      %v7337 = vsel %vm6971, %v7335, %v7336
      %v7338 = vrot.slane %v6927, 7
      %v7339 = vrot.slane %v6928, 7
      %v7340 = vsel %vm6971, %v7338, %v7339
      %v7341 = vrot.slane %v6929, 7
      %v7342 = vrot.slane %v6930, 7
      %v7343 = vsel %vm6971, %v7341, %v7342
      %v7344 = vrot.slane %v6931, 7
      %v7345 = vrot.slane %v6932, 7
      %v7346 = vsel %vm6971, %v7344, %v7345
      %v7347 = vrot.slane %v6933, 7
      %v7348 = vrot.slane %v6934, 7
      %v7349 = vsel %vm6971, %v7347, %v7348
      %v7350 = vrot.slane %v6935, 7
      %v7351 = vrot.slane %v6936, 7
      %v7352 = vsel %vm6971, %v7350, %v7351
      %v7353 = vrot.slane %v6937, 7
      %v7354 = vrot.slane %v6938, 7
      %v7355 = vsel %vm6971, %v7353, %v7354
      %v7387 = vsel %vm6971, 0.0, %v7308
      %v7388 = vsel %vm6971, 0.0, %v7311
      %v7389 = vsel %vm6971, 0.0, %v7314
      %v7390 = vsel %vm6971, 0.0, %v7317
      %v7391 = vsel %vm6971, 0.0, %v7320
      %v7392 = vsel %vm6971, 0.0, %v7323
      %v7393 = vsel %vm6971, 0.0, %v7326
      %v7394 = vsel %vm6971, 0.0, %v7329
      %v7395 = vsel %vm6971, 0.0, %v7332
      %v7396 = vsel %vm6971, 0.0, %v7335
      %v7397 = vsel %vm6971, 0.0, %v7338
      %v7398 = vsel %vm6971, 0.0, %v7341
      %v7399 = vsel %vm6971, 0.0, %v7344
      %v7400 = vsel %vm6971, 0.0, %v7347
      %v7401 = vsel %vm6971, 0.0, %v7350
      %v7402 = vsel %vm6971, 0.0, %v7353
      %vm7419 = vcmask 1046528
      %v7420 = vrot.slane 0.0, 1
      %v7421 = vsel %vm7419, %v7420, %v7420
      %v7422 = vrot.slane %v7260, 1
      %v7423 = vrot.slane %v7198, 1
      %v7424 = vsel %vm7419, %v7422, %v7423
      %v7425 = vrot.slane %v7197, 1
      %v7426 = vsel %vm7419, %v7423, %v7425
      %v7427 = vrot.slane %v7261, 1
      %v7428 = vrot.slane %v7201, 1
      %v7429 = vsel %vm7419, %v7427, %v7428
      %v7430 = vrot.slane %v7200, 1
      %v7431 = vsel %vm7419, %v7428, %v7430
      %v7432 = vrot.slane %v7262, 1
      %v7433 = vrot.slane %v7204, 1
      %v7434 = vsel %vm7419, %v7432, %v7433
      %v7435 = vrot.slane %v7203, 1
      %v7436 = vsel %vm7419, %v7433, %v7435
      %v7437 = vrot.slane %v7263, 1
      %v7438 = vrot.slane %v7207, 1
      %v7439 = vsel %vm7419, %v7437, %v7438
      %v7440 = vrot.slane %v7206, 1
      %v7441 = vsel %vm7419, %v7438, %v7440
      %v7442 = vrot.slane %v7264, 1
      %v7443 = vrot.slane %v7210, 1
      %v7444 = vsel %vm7419, %v7442, %v7443
      %v7445 = vrot.slane %v7209, 1
      %v7446 = vsel %vm7419, %v7443, %v7445
      %v7447 = vrot.slane %v7265, 1
      %v7448 = vrot.slane %v7213, 1
      %v7449 = vsel %vm7419, %v7447, %v7448
      %v7450 = vrot.slane %v7212, 1
      %v7451 = vsel %vm7419, %v7448, %v7450
      %v7452 = vrot.slane %v7266, 1
      %v7453 = vrot.slane %v7216, 1
      %v7454 = vsel %vm7419, %v7452, %v7453
      %v7455 = vrot.slane %v7215, 1
      %v7456 = vsel %vm7419, %v7453, %v7455
      %v7457 = vrot.slane %v7267, 1
      %v7458 = vrot.slane %v7219, 1
      %v7459 = vsel %vm7419, %v7457, %v7458
      %v7460 = vrot.slane %v7218, 1
      %v7461 = vsel %vm7419, %v7458, %v7460
      %v7462 = vrot.slane %v7268, 1
      %v7463 = vrot.slane %v7222, 1
      %v7464 = vsel %vm7419, %v7462, %v7463
      %v7465 = vrot.slane %v7221, 1
      %v7466 = vsel %vm7419, %v7463, %v7465
      %v7467 = vrot.slane %v7269, 1
      %v7468 = vrot.slane %v7225, 1
      %v7469 = vsel %vm7419, %v7467, %v7468
      %v7470 = vrot.slane %v7224, 1
      %v7471 = vsel %vm7419, %v7468, %v7470
      %v7472 = vrot.slane %v7270, 1
      %v7473 = vrot.slane %v7228, 1
      %v7474 = vsel %vm7419, %v7472, %v7473
      %v7475 = vrot.slane %v7227, 1
      %v7476 = vsel %vm7419, %v7473, %v7475
      %v7477 = vrot.slane %v7271, 1
      %v7478 = vrot.slane %v7231, 1
      %v7479 = vsel %vm7419, %v7477, %v7478
      %v7480 = vrot.slane %v7230, 1
      %v7481 = vsel %vm7419, %v7478, %v7480
      %v7482 = vrot.slane %v7272, 1
      %v7483 = vrot.slane %v7234, 1
      %v7484 = vsel %vm7419, %v7482, %v7483
      %v7485 = vrot.slane %v7233, 1
      %v7486 = vsel %vm7419, %v7483, %v7485
      %v7487 = vrot.slane %v7273, 1
      %v7488 = vrot.slane %v7237, 1
      %v7489 = vsel %vm7419, %v7487, %v7488
      %v7490 = vrot.slane %v7236, 1
      %v7491 = vsel %vm7419, %v7488, %v7490
      %v7492 = vrot.slane %v7274, 1
      %v7493 = vrot.slane %v7240, 1
      %v7494 = vsel %vm7419, %v7492, %v7493
      %v7495 = vrot.slane %v7239, 1
      %v7496 = vsel %vm7419, %v7493, %v7495
      %v7512 = vrot.slane %v7387, 1
      %v7513 = vrot.slane %v7310, 1
      %v7514 = vsel %vm7419, %v7512, %v7513
      %v7515 = vrot.slane %v7309, 1
      %v7516 = vsel %vm7419, %v7513, %v7515
      %v7517 = vrot.slane %v7388, 1
      %v7518 = vrot.slane %v7313, 1
      %v7519 = vsel %vm7419, %v7517, %v7518
      %v7520 = vrot.slane %v7312, 1
      %v7521 = vsel %vm7419, %v7518, %v7520
      %v7522 = vrot.slane %v7389, 1
      %v7523 = vrot.slane %v7316, 1
      %v7524 = vsel %vm7419, %v7522, %v7523
      %v7525 = vrot.slane %v7315, 1
      %v7526 = vsel %vm7419, %v7523, %v7525
      %v7527 = vrot.slane %v7390, 1
      %v7528 = vrot.slane %v7319, 1
      %v7529 = vsel %vm7419, %v7527, %v7528
      %v7530 = vrot.slane %v7318, 1
      %v7531 = vsel %vm7419, %v7528, %v7530
      %v7532 = vrot.slane %v7391, 1
      %v7533 = vrot.slane %v7322, 1
      %v7534 = vsel %vm7419, %v7532, %v7533
      %v7535 = vrot.slane %v7321, 1
      %v7536 = vsel %vm7419, %v7533, %v7535
      %v7537 = vrot.slane %v7392, 1
      %v7538 = vrot.slane %v7325, 1
      %v7539 = vsel %vm7419, %v7537, %v7538
      %v7540 = vrot.slane %v7324, 1
      %v7541 = vsel %vm7419, %v7538, %v7540
      %v7542 = vrot.slane %v7393, 1
      %v7543 = vrot.slane %v7328, 1
      %v7544 = vsel %vm7419, %v7542, %v7543
      %v7545 = vrot.slane %v7327, 1
      %v7546 = vsel %vm7419, %v7543, %v7545
      %v7547 = vrot.slane %v7394, 1
      %v7548 = vrot.slane %v7331, 1
      %v7549 = vsel %vm7419, %v7547, %v7548
      %v7550 = vrot.slane %v7330, 1
      %v7551 = vsel %vm7419, %v7548, %v7550
      %v7552 = vrot.slane %v7395, 1
      %v7553 = vrot.slane %v7334, 1
      %v7554 = vsel %vm7419, %v7552, %v7553
      %v7555 = vrot.slane %v7333, 1
      %v7556 = vsel %vm7419, %v7553, %v7555
      %v7557 = vrot.slane %v7396, 1
      %v7558 = vrot.slane %v7337, 1
      %v7559 = vsel %vm7419, %v7557, %v7558
      %v7560 = vrot.slane %v7336, 1
      %v7561 = vsel %vm7419, %v7558, %v7560
      %v7562 = vrot.slane %v7397, 1
      %v7563 = vrot.slane %v7340, 1
      %v7564 = vsel %vm7419, %v7562, %v7563
      %v7565 = vrot.slane %v7339, 1
      %v7566 = vsel %vm7419, %v7563, %v7565
      %v7567 = vrot.slane %v7398, 1
      %v7568 = vrot.slane %v7343, 1
      %v7569 = vsel %vm7419, %v7567, %v7568
      %v7570 = vrot.slane %v7342, 1
      %v7571 = vsel %vm7419, %v7568, %v7570
      %v7572 = vrot.slane %v7399, 1
      %v7573 = vrot.slane %v7346, 1
      %v7574 = vsel %vm7419, %v7572, %v7573
      %v7575 = vrot.slane %v7345, 1
      %v7576 = vsel %vm7419, %v7573, %v7575
      %v7577 = vrot.slane %v7400, 1
      %v7578 = vrot.slane %v7349, 1
      %v7579 = vsel %vm7419, %v7577, %v7578
      %v7580 = vrot.slane %v7348, 1
      %v7581 = vsel %vm7419, %v7578, %v7580
      %v7582 = vrot.slane %v7401, 1
      %v7583 = vrot.slane %v7352, 1
      %v7584 = vsel %vm7419, %v7582, %v7583
      %v7585 = vrot.slane %v7351, 1
      %v7586 = vsel %vm7419, %v7583, %v7585
      %v7603 = vrot.slane %v7036, 1
      %v7604 = vrot.slane %v6974, 1
      %v7605 = vsel %vm7419, %v7603, %v7604
      %v7606 = vrot.slane %v6973, 1
      %v7607 = vsel %vm7419, %v7604, %v7606
      %v7608 = vrot.slane %v7037, 1
      %v7609 = vrot.slane %v6977, 1
      %v7610 = vsel %vm7419, %v7608, %v7609
      %v7611 = vrot.slane %v6976, 1
      %v7612 = vsel %vm7419, %v7609, %v7611
      %v7613 = vrot.slane %v7038, 1
      %v7614 = vrot.slane %v6980, 1
      %v7615 = vsel %vm7419, %v7613, %v7614
      %v7616 = vrot.slane %v6979, 1
      %v7617 = vsel %vm7419, %v7614, %v7616
      %v7618 = vrot.slane %v7039, 1
      %v7619 = vrot.slane %v6983, 1
      %v7620 = vsel %vm7419, %v7618, %v7619
      %v7621 = vrot.slane %v6982, 1
      %v7622 = vsel %vm7419, %v7619, %v7621
      %v7623 = vrot.slane %v7040, 1
      %v7624 = vrot.slane %v6986, 1
      %v7625 = vsel %vm7419, %v7623, %v7624
      %v7626 = vrot.slane %v6985, 1
      %v7627 = vsel %vm7419, %v7624, %v7626
      %v7628 = vrot.slane %v7041, 1
      %v7629 = vrot.slane %v6989, 1
      %v7630 = vsel %vm7419, %v7628, %v7629
      %v7631 = vrot.slane %v6988, 1
      %v7632 = vsel %vm7419, %v7629, %v7631
      %v7633 = vrot.slane %v7042, 1
      %v7634 = vrot.slane %v6992, 1
      %v7635 = vsel %vm7419, %v7633, %v7634
      %v7636 = vrot.slane %v6991, 1
      %v7637 = vsel %vm7419, %v7634, %v7636
      %v7638 = vrot.slane %v7043, 1
      %v7639 = vrot.slane %v6995, 1
      %v7640 = vsel %vm7419, %v7638, %v7639
      %v7641 = vrot.slane %v6994, 1
      %v7642 = vsel %vm7419, %v7639, %v7641
      %v7643 = vrot.slane %v7044, 1
      %v7644 = vrot.slane %v6998, 1
      %v7645 = vsel %vm7419, %v7643, %v7644
      %v7646 = vrot.slane %v6997, 1
      %v7647 = vsel %vm7419, %v7644, %v7646
      %v7648 = vrot.slane %v7045, 1
      %v7649 = vrot.slane %v7001, 1
      %v7650 = vsel %vm7419, %v7648, %v7649
      %v7651 = vrot.slane %v7000, 1
      %v7652 = vsel %vm7419, %v7649, %v7651
      %v7653 = vrot.slane %v7046, 1
      %v7654 = vrot.slane %v7004, 1
      %v7655 = vsel %vm7419, %v7653, %v7654
      %v7656 = vrot.slane %v7003, 1
      %v7657 = vsel %vm7419, %v7654, %v7656
      %v7658 = vrot.slane %v7047, 1
      %v7659 = vrot.slane %v7007, 1
      %v7660 = vsel %vm7419, %v7658, %v7659
      %v7661 = vrot.slane %v7006, 1
      %v7662 = vsel %vm7419, %v7659, %v7661
      %v7663 = vrot.slane %v7048, 1
      %v7664 = vrot.slane %v7010, 1
      %v7665 = vsel %vm7419, %v7663, %v7664
      %v7666 = vrot.slane %v7009, 1
      %v7667 = vsel %vm7419, %v7664, %v7666
      %v7668 = vrot.slane %v7049, 1
      %v7669 = vrot.slane %v7013, 1
      %v7670 = vsel %vm7419, %v7668, %v7669
      %v7671 = vrot.slane %v7012, 1
      %v7672 = vsel %vm7419, %v7669, %v7671
      %v7673 = vrot.slane %v7050, 1
      %v7674 = vrot.slane %v7016, 1
      %v7675 = vsel %vm7419, %v7673, %v7674
      %v7676 = vrot.slane %v7015, 1
      %v7677 = vsel %vm7419, %v7674, %v7676
      %v7678 = vrot.slane %v7051, 1
      %v7679 = vrot.slane %v7019, 1
      %v7680 = vsel %vm7419, %v7678, %v7679
      %v7681 = vrot.slane %v7018, 1
      %v7682 = vsel %vm7419, %v7679, %v7681
      %v7731 = vrot.slane %v7148, 1
      %v7732 = vrot.slane %v7086, 1
      %v7733 = vsel %vm7419, %v7731, %v7732
      %v7734 = vrot.slane %v7085, 1
      %v7735 = vsel %vm7419, %v7732, %v7734
      %v7736 = vrot.slane %v7149, 1
      %v7737 = vrot.slane %v7089, 1
      %v7738 = vsel %vm7419, %v7736, %v7737
      %v7739 = vrot.slane %v7088, 1
      %v7740 = vsel %vm7419, %v7737, %v7739
      %v7741 = vrot.slane %v7150, 1
      %v7742 = vrot.slane %v7092, 1
      %v7743 = vsel %vm7419, %v7741, %v7742
      %v7744 = vrot.slane %v7091, 1
      %v7745 = vsel %vm7419, %v7742, %v7744
      %v7746 = vrot.slane %v7151, 1
      %v7747 = vrot.slane %v7095, 1
      %v7748 = vsel %vm7419, %v7746, %v7747
      %v7749 = vrot.slane %v7094, 1
      %v7750 = vsel %vm7419, %v7747, %v7749
      %v7751 = vrot.slane %v7152, 1
      %v7752 = vrot.slane %v7098, 1
      %v7753 = vsel %vm7419, %v7751, %v7752
      %v7754 = vrot.slane %v7097, 1
      %v7755 = vsel %vm7419, %v7752, %v7754
      %v7756 = vrot.slane %v7153, 1
      %v7757 = vrot.slane %v7101, 1
      %v7758 = vsel %vm7419, %v7756, %v7757
      %v7759 = vrot.slane %v7100, 1
      %v7760 = vsel %vm7419, %v7757, %v7759
      %v7761 = vrot.slane %v7154, 1
      %v7762 = vrot.slane %v7104, 1
      %v7763 = vsel %vm7419, %v7761, %v7762
      %v7764 = vrot.slane %v7103, 1
      %v7765 = vsel %vm7419, %v7762, %v7764
      %v7766 = vrot.slane %v7155, 1
      %v7767 = vrot.slane %v7107, 1
      %v7768 = vsel %vm7419, %v7766, %v7767
      %v7769 = vrot.slane %v7106, 1
      %v7770 = vsel %vm7419, %v7767, %v7769
      %v7771 = vrot.slane %v7156, 1
      %v7772 = vrot.slane %v7110, 1
      %v7773 = vsel %vm7419, %v7771, %v7772
      %v7774 = vrot.slane %v7109, 1
      %v7775 = vsel %vm7419, %v7772, %v7774
      %v7776 = vrot.slane %v7157, 1
      %v7777 = vrot.slane %v7113, 1
      %v7778 = vsel %vm7419, %v7776, %v7777
      %v7779 = vrot.slane %v7112, 1
      %v7780 = vsel %vm7419, %v7777, %v7779
      %v7781 = vrot.slane %v7158, 1
      %v7782 = vrot.slane %v7116, 1
      %v7783 = vsel %vm7419, %v7781, %v7782
      %v7784 = vrot.slane %v7115, 1
      %v7785 = vsel %vm7419, %v7782, %v7784
      %v7786 = vrot.slane %v7159, 1
      %v7787 = vrot.slane %v7119, 1
      %v7788 = vsel %vm7419, %v7786, %v7787
      %v7789 = vrot.slane %v7118, 1
      %v7790 = vsel %vm7419, %v7787, %v7789
      %v7791 = vrot.slane %v7160, 1
      %v7792 = vrot.slane %v7122, 1
      %v7793 = vsel %vm7419, %v7791, %v7792
      %v7794 = vrot.slane %v7121, 1
      %v7795 = vsel %vm7419, %v7792, %v7794
      %v7796 = vrot.slane %v7161, 1
      %v7797 = vrot.slane %v7125, 1
      %v7798 = vsel %vm7419, %v7796, %v7797
      %v7799 = vrot.slane %v7124, 1
      %v7800 = vsel %vm7419, %v7797, %v7799
      %v7801 = vrot.slane %v7162, 1
      %v7802 = vrot.slane %v7128, 1
      %v7803 = vsel %vm7419, %v7801, %v7802
      %v7804 = vrot.slane %v7127, 1
      %v7805 = vsel %vm7419, %v7802, %v7804
      %v7806 = vrot.slane %v7163, 1
      %v7807 = vrot.slane %v7131, 1
      %v7808 = vsel %vm7419, %v7806, %v7807
      %v7809 = vrot.slane %v7130, 1
      %v7810 = vsel %vm7419, %v7807, %v7809
      %v7812 = vrot.slane %v7275, 1
      %v7813 = vrot.slane %v7243, 1
      %v7814 = vsel %vm7419, %v7812, %v7813
      %v7815 = vrot.slane %v7242, 1
      %v7816 = vsel %vm7419, %v7813, %v7815
      %v7818 = vrot.slane %v7402, 1
      %v7819 = vrot.slane %v7355, 1
      %v7820 = vsel %vm7419, %v7818, %v7819
      %v7821 = vrot.slane %v7354, 1
      %v7822 = vsel %vm7419, %v7819, %v7821
      %7855 = vrot.lane.b32.xlu0 %v7421, 32
      %v7856 = vpop.permute.xlu0 %7855
      %7857 = vrot.lane.b32.xlu0 %v7424, 32
      %v7858 = vpop.permute.xlu0 %7857
      %7859 = vrot.lane.b32.xlu0 %v7426, 32
      %v7860 = vpop.permute.xlu0 %7859
      %7861 = vrot.lane.b32.xlu0 %v7429, 32
      %v7862 = vpop.permute.xlu0 %7861
      %7863 = vrot.lane.b32.xlu0 %v7431, 32
      %v7864 = vpop.permute.xlu0 %7863
      %7865 = vrot.lane.b32.xlu0 %v7434, 32
      %v7866 = vpop.permute.xlu0 %7865
      %7867 = vrot.lane.b32.xlu0 %v7436, 32
      %v7868 = vpop.permute.xlu0 %7867
      %7869 = vrot.lane.b32.xlu0 %v7439, 32
      %v7870 = vpop.permute.xlu0 %7869
      %7871 = vrot.lane.b32.xlu0 %v7441, 32
      %v7872 = vpop.permute.xlu0 %7871
      %7873 = vrot.lane.b32.xlu0 %v7444, 32
      %v7874 = vpop.permute.xlu0 %7873
      %7875 = vrot.lane.b32.xlu0 %v7446, 32
      %v7876 = vpop.permute.xlu0 %7875
      %7877 = vrot.lane.b32.xlu0 %v7449, 32
      %v7878 = vpop.permute.xlu0 %7877
      %7879 = vrot.lane.b32.xlu0 %v7451, 32
      %v7880 = vpop.permute.xlu0 %7879
      %7881 = vrot.lane.b32.xlu0 %v7454, 32
      %v7882 = vpop.permute.xlu0 %7881
      %7883 = vrot.lane.b32.xlu0 %v7456, 32
      %v7884 = vpop.permute.xlu0 %7883
      %7885 = vrot.lane.b32.xlu0 %v7459, 32
      %v7886 = vpop.permute.xlu0 %7885
      %7887 = vrot.lane.b32.xlu0 %v7461, 32
      %v7888 = vpop.permute.xlu0 %7887
      %7889 = vrot.lane.b32.xlu0 %v7464, 32
      %v7890 = vpop.permute.xlu0 %7889
      %7891 = vrot.lane.b32.xlu0 %v7466, 32
      %v7892 = vpop.permute.xlu0 %7891
      %7893 = vrot.lane.b32.xlu0 %v7469, 32
      %v7894 = vpop.permute.xlu0 %7893
      %7895 = vrot.lane.b32.xlu0 %v7471, 32
      %v7896 = vpop.permute.xlu0 %7895
      %7897 = vrot.lane.b32.xlu0 %v7474, 32
      %v7898 = vpop.permute.xlu0 %7897
      %7899 = vrot.lane.b32.xlu0 %v7476, 32
      %v7900 = vpop.permute.xlu0 %7899
      %7901 = vrot.lane.b32.xlu0 %v7479, 32
      %v7902 = vpop.permute.xlu0 %7901
      %7903 = vrot.lane.b32.xlu0 %v7481, 32
      %v7904 = vpop.permute.xlu0 %7903
      %7905 = vrot.lane.b32.xlu0 %v7484, 32
      %v7906 = vpop.permute.xlu0 %7905
      %7907 = vrot.lane.b32.xlu0 %v7486, 32
      %v7908 = vpop.permute.xlu0 %7907
      %7909 = vrot.lane.b32.xlu0 %v7489, 32
      %v7910 = vpop.permute.xlu0 %7909
      %7911 = vrot.lane.b32.xlu0 %v7491, 32
      %v7912 = vpop.permute.xlu0 %7911
      %7913 = vrot.lane.b32.xlu0 %v7494, 32
      %v7914 = vpop.permute.xlu0 %7913
      %7915 = vrot.lane.b32.xlu0 %v7496, 32
      %v7916 = vpop.permute.xlu0 %7915
      %7948 = vrot.lane.b32.xlu0 %v7421, 64
      %v7949 = vpop.permute.xlu0 %7948
      %7950 = vrot.lane.b32.xlu0 %v7514, 64
      %v7951 = vpop.permute.xlu0 %7950
      %7952 = vrot.lane.b32.xlu0 %v7516, 64
      %v7953 = vpop.permute.xlu0 %7952
      %7954 = vrot.lane.b32.xlu0 %v7519, 64
      %v7955 = vpop.permute.xlu0 %7954
      %7956 = vrot.lane.b32.xlu0 %v7521, 64
      %v7957 = vpop.permute.xlu0 %7956
      %7958 = vrot.lane.b32.xlu0 %v7524, 64
      %v7959 = vpop.permute.xlu0 %7958
      %7960 = vrot.lane.b32.xlu0 %v7526, 64
      %v7961 = vpop.permute.xlu0 %7960
      %7962 = vrot.lane.b32.xlu0 %v7529, 64
      %v7963 = vpop.permute.xlu0 %7962
      %7964 = vrot.lane.b32.xlu0 %v7531, 64
      %v7965 = vpop.permute.xlu0 %7964
      %7966 = vrot.lane.b32.xlu0 %v7534, 64
      %v7967 = vpop.permute.xlu0 %7966
      %7968 = vrot.lane.b32.xlu0 %v7536, 64
      %v7969 = vpop.permute.xlu0 %7968
      %7970 = vrot.lane.b32.xlu0 %v7539, 64
      %v7971 = vpop.permute.xlu0 %7970
      %7972 = vrot.lane.b32.xlu0 %v7541, 64
      %v7973 = vpop.permute.xlu0 %7972
      %7974 = vrot.lane.b32.xlu0 %v7544, 64
      %v7975 = vpop.permute.xlu0 %7974
      %7976 = vrot.lane.b32.xlu0 %v7546, 64
      %v7977 = vpop.permute.xlu0 %7976
      %7978 = vrot.lane.b32.xlu0 %v7549, 64
      %v7979 = vpop.permute.xlu0 %7978
      %7980 = vrot.lane.b32.xlu0 %v7551, 64
      %v7981 = vpop.permute.xlu0 %7980
      %7982 = vrot.lane.b32.xlu0 %v7554, 64
      %v7983 = vpop.permute.xlu0 %7982
      %7984 = vrot.lane.b32.xlu0 %v7556, 64
      %v7985 = vpop.permute.xlu0 %7984
      %7986 = vrot.lane.b32.xlu0 %v7559, 64
      %v7987 = vpop.permute.xlu0 %7986
      %7988 = vrot.lane.b32.xlu0 %v7561, 64
      %v7989 = vpop.permute.xlu0 %7988
      %7990 = vrot.lane.b32.xlu0 %v7564, 64
      %v7991 = vpop.permute.xlu0 %7990
      %7992 = vrot.lane.b32.xlu0 %v7566, 64
      %v7993 = vpop.permute.xlu0 %7992
      %7994 = vrot.lane.b32.xlu0 %v7569, 64
      %v7995 = vpop.permute.xlu0 %7994
      %7996 = vrot.lane.b32.xlu0 %v7571, 64
      %v7997 = vpop.permute.xlu0 %7996
      %7998 = vrot.lane.b32.xlu0 %v7574, 64
      %v7999 = vpop.permute.xlu0 %7998
      %8000 = vrot.lane.b32.xlu0 %v7576, 64
      %v8001 = vpop.permute.xlu0 %8000
      %8002 = vrot.lane.b32.xlu0 %v7579, 64
      %v8003 = vpop.permute.xlu0 %8002
      %8004 = vrot.lane.b32.xlu0 %v7581, 64
      %v8005 = vpop.permute.xlu0 %8004
      %8006 = vrot.lane.b32.xlu0 %v7584, 64
      %v8007 = vpop.permute.xlu0 %8006
      %8008 = vrot.lane.b32.xlu0 %v7586, 64
      %v8009 = vpop.permute.xlu0 %8008
      %8041 = vrot.lane.b32.xlu0 %v7148, 96
      %v8042 = vpop.permute.xlu0 %8041
      %8043 = vrot.lane.b32.xlu0 %v7086, 96
      %v8044 = vpop.permute.xlu0 %8043
      %8045 = vrot.lane.b32.xlu0 %v7149, 96
      %v8046 = vpop.permute.xlu0 %8045
      %8047 = vrot.lane.b32.xlu0 %v7089, 96
      %v8048 = vpop.permute.xlu0 %8047
      %8049 = vrot.lane.b32.xlu0 %v7150, 96
      %v8050 = vpop.permute.xlu0 %8049
      %8051 = vrot.lane.b32.xlu0 %v7092, 96
      %v8052 = vpop.permute.xlu0 %8051
      %8053 = vrot.lane.b32.xlu0 %v7151, 96
      %v8054 = vpop.permute.xlu0 %8053
      %8055 = vrot.lane.b32.xlu0 %v7095, 96
      %v8056 = vpop.permute.xlu0 %8055
      %8057 = vrot.lane.b32.xlu0 %v7152, 96
      %v8058 = vpop.permute.xlu0 %8057
      %8059 = vrot.lane.b32.xlu0 %v7098, 96
      %v8060 = vpop.permute.xlu0 %8059
      %8061 = vrot.lane.b32.xlu0 %v7153, 96
      %v8062 = vpop.permute.xlu0 %8061
      %8063 = vrot.lane.b32.xlu0 %v7101, 96
      %v8064 = vpop.permute.xlu0 %8063
      %8065 = vrot.lane.b32.xlu0 %v7154, 96
      %v8066 = vpop.permute.xlu0 %8065
      %8067 = vrot.lane.b32.xlu0 %v7104, 96
      %v8068 = vpop.permute.xlu0 %8067
      %8069 = vrot.lane.b32.xlu0 %v7155, 96
      %v8070 = vpop.permute.xlu0 %8069
      %8071 = vrot.lane.b32.xlu0 %v7107, 96
      %v8072 = vpop.permute.xlu0 %8071
      %8073 = vrot.lane.b32.xlu0 %v7156, 96
      %v8074 = vpop.permute.xlu0 %8073
      %8075 = vrot.lane.b32.xlu0 %v7110, 96
      %v8076 = vpop.permute.xlu0 %8075
      %8077 = vrot.lane.b32.xlu0 %v7157, 96
      %v8078 = vpop.permute.xlu0 %8077
      %8079 = vrot.lane.b32.xlu0 %v7113, 96
      %v8080 = vpop.permute.xlu0 %8079
      %8081 = vrot.lane.b32.xlu0 %v7158, 96
      %v8082 = vpop.permute.xlu0 %8081
      %8083 = vrot.lane.b32.xlu0 %v7116, 96
      %v8084 = vpop.permute.xlu0 %8083
      %8085 = vrot.lane.b32.xlu0 %v7159, 96
      %v8086 = vpop.permute.xlu0 %8085
      %8087 = vrot.lane.b32.xlu0 %v7119, 96
      %v8088 = vpop.permute.xlu0 %8087
      %8089 = vrot.lane.b32.xlu0 %v7160, 96
      %v8090 = vpop.permute.xlu0 %8089
      %8091 = vrot.lane.b32.xlu0 %v7122, 96
      %v8092 = vpop.permute.xlu0 %8091
      %8093 = vrot.lane.b32.xlu0 %v7161, 96
      %v8094 = vpop.permute.xlu0 %8093
      %8095 = vrot.lane.b32.xlu0 %v7125, 96
      %v8096 = vpop.permute.xlu0 %8095
      %8097 = vrot.lane.b32.xlu0 %v7162, 96
      %v8098 = vpop.permute.xlu0 %8097
      %8099 = vrot.lane.b32.xlu0 %v7128, 96
      %v8100 = vpop.permute.xlu0 %8099
      %8101 = vrot.lane.b32.xlu0 %v7163, 96
      %v8102 = vpop.permute.xlu0 %8101
      %8103 = vrot.lane.b32.xlu0 %v7131, 96
      %v8104 = vpop.permute.xlu0 %8103
      %8137 = vrot.lane.b32.xlu0 %v7733, 32
      %v8138 = vpop.permute.xlu0 %8137
      %8139 = vrot.lane.b32.xlu0 %v7735, 32
      %v8140 = vpop.permute.xlu0 %8139
      %8141 = vrot.lane.b32.xlu0 %v7738, 32
      %v8142 = vpop.permute.xlu0 %8141
      %8143 = vrot.lane.b32.xlu0 %v7740, 32
      %v8144 = vpop.permute.xlu0 %8143
      %8145 = vrot.lane.b32.xlu0 %v7743, 32
      %v8146 = vpop.permute.xlu0 %8145
      %8147 = vrot.lane.b32.xlu0 %v7745, 32
      %v8148 = vpop.permute.xlu0 %8147
      %8149 = vrot.lane.b32.xlu0 %v7748, 32
      %v8150 = vpop.permute.xlu0 %8149
      %8151 = vrot.lane.b32.xlu0 %v7750, 32
      %v8152 = vpop.permute.xlu0 %8151
      %8153 = vrot.lane.b32.xlu0 %v7753, 32
      %v8154 = vpop.permute.xlu0 %8153
      %8155 = vrot.lane.b32.xlu0 %v7755, 32
      %v8156 = vpop.permute.xlu0 %8155
      %8157 = vrot.lane.b32.xlu0 %v7758, 32
      %v8158 = vpop.permute.xlu0 %8157
      %8159 = vrot.lane.b32.xlu0 %v7760, 32
      %v8160 = vpop.permute.xlu0 %8159
      %8161 = vrot.lane.b32.xlu0 %v7763, 32
      %v8162 = vpop.permute.xlu0 %8161
      %8163 = vrot.lane.b32.xlu0 %v7765, 32
      %v8164 = vpop.permute.xlu0 %8163
      %8165 = vrot.lane.b32.xlu0 %v7768, 32
      %v8166 = vpop.permute.xlu0 %8165
      %8167 = vrot.lane.b32.xlu0 %v7770, 32
      %v8168 = vpop.permute.xlu0 %8167
      %8169 = vrot.lane.b32.xlu0 %v7773, 32
      %v8170 = vpop.permute.xlu0 %8169
      %8171 = vrot.lane.b32.xlu0 %v7775, 32
      %v8172 = vpop.permute.xlu0 %8171
      %8173 = vrot.lane.b32.xlu0 %v7778, 32
      %v8174 = vpop.permute.xlu0 %8173
      %8175 = vrot.lane.b32.xlu0 %v7780, 32
      %v8176 = vpop.permute.xlu0 %8175
      %8177 = vrot.lane.b32.xlu0 %v7783, 32
      %v8178 = vpop.permute.xlu0 %8177
      %8179 = vrot.lane.b32.xlu0 %v7785, 32
      %v8180 = vpop.permute.xlu0 %8179
      %8181 = vrot.lane.b32.xlu0 %v7788, 32
      %v8182 = vpop.permute.xlu0 %8181
      %8183 = vrot.lane.b32.xlu0 %v7790, 32
      %v8184 = vpop.permute.xlu0 %8183
      %8185 = vrot.lane.b32.xlu0 %v7793, 32
      %v8186 = vpop.permute.xlu0 %8185
      %8187 = vrot.lane.b32.xlu0 %v7795, 32
      %v8188 = vpop.permute.xlu0 %8187
      %8189 = vrot.lane.b32.xlu0 %v7798, 32
      %v8190 = vpop.permute.xlu0 %8189
      %8191 = vrot.lane.b32.xlu0 %v7800, 32
      %v8192 = vpop.permute.xlu0 %8191
      %8193 = vrot.lane.b32.xlu0 %v7803, 32
      %v8194 = vpop.permute.xlu0 %8193
      %8195 = vrot.lane.b32.xlu0 %v7805, 32
      %v8196 = vpop.permute.xlu0 %8195
      %8197 = vrot.lane.b32.xlu0 %v7808, 32
      %v8198 = vpop.permute.xlu0 %8197
      %8199 = vrot.lane.b32.xlu0 %v7810, 32
      %v8200 = vpop.permute.xlu0 %8199
      %8233 = vrot.lane.b32.xlu0 %v7387, 64
      %v8234 = vpop.permute.xlu0 %8233
      %8235 = vrot.lane.b32.xlu0 %v7310, 64
      %v8236 = vpop.permute.xlu0 %8235
      %8237 = vrot.lane.b32.xlu0 %v7388, 64
      %v8238 = vpop.permute.xlu0 %8237
      %8239 = vrot.lane.b32.xlu0 %v7313, 64
      %v8240 = vpop.permute.xlu0 %8239
      %8241 = vrot.lane.b32.xlu0 %v7389, 64
      %v8242 = vpop.permute.xlu0 %8241
      %8243 = vrot.lane.b32.xlu0 %v7316, 64
      %v8244 = vpop.permute.xlu0 %8243
      %8245 = vrot.lane.b32.xlu0 %v7390, 64
      %v8246 = vpop.permute.xlu0 %8245
      %8247 = vrot.lane.b32.xlu0 %v7319, 64
      %v8248 = vpop.permute.xlu0 %8247
      %8249 = vrot.lane.b32.xlu0 %v7391, 64
      %v8250 = vpop.permute.xlu0 %8249
      %8251 = vrot.lane.b32.xlu0 %v7322, 64
      %v8252 = vpop.permute.xlu0 %8251
      %8253 = vrot.lane.b32.xlu0 %v7392, 64
      %v8254 = vpop.permute.xlu0 %8253
      %8255 = vrot.lane.b32.xlu0 %v7325, 64
      %v8256 = vpop.permute.xlu0 %8255
      %8257 = vrot.lane.b32.xlu0 %v7393, 64
      %v8258 = vpop.permute.xlu0 %8257
      %8259 = vrot.lane.b32.xlu0 %v7328, 64
      %v8260 = vpop.permute.xlu0 %8259
      %8261 = vrot.lane.b32.xlu0 %v7394, 64
      %v8262 = vpop.permute.xlu0 %8261
      %8263 = vrot.lane.b32.xlu0 %v7331, 64
      %v8264 = vpop.permute.xlu0 %8263
      %8265 = vrot.lane.b32.xlu0 %v7395, 64
      %v8266 = vpop.permute.xlu0 %8265
      %8267 = vrot.lane.b32.xlu0 %v7334, 64
      %v8268 = vpop.permute.xlu0 %8267
      %8269 = vrot.lane.b32.xlu0 %v7396, 64
      %v8270 = vpop.permute.xlu0 %8269
      %8271 = vrot.lane.b32.xlu0 %v7337, 64
      %v8272 = vpop.permute.xlu0 %8271
      %8273 = vrot.lane.b32.xlu0 %v7397, 64
      %v8274 = vpop.permute.xlu0 %8273
      %8275 = vrot.lane.b32.xlu0 %v7340, 64
      %v8276 = vpop.permute.xlu0 %8275
      %8277 = vrot.lane.b32.xlu0 %v7398, 64
      %v8278 = vpop.permute.xlu0 %8277
      %8279 = vrot.lane.b32.xlu0 %v7343, 64
      %v8280 = vpop.permute.xlu0 %8279
      %8281 = vrot.lane.b32.xlu0 %v7399, 64
      %v8282 = vpop.permute.xlu0 %8281
      %8283 = vrot.lane.b32.xlu0 %v7346, 64
      %v8284 = vpop.permute.xlu0 %8283
      %8285 = vrot.lane.b32.xlu0 %v7400, 64
      %v8286 = vpop.permute.xlu0 %8285
      %8287 = vrot.lane.b32.xlu0 %v7349, 64
      %v8288 = vpop.permute.xlu0 %8287
      %8289 = vrot.lane.b32.xlu0 %v7401, 64
      %v8290 = vpop.permute.xlu0 %8289
      %8291 = vrot.lane.b32.xlu0 %v7352, 64
      %v8292 = vpop.permute.xlu0 %8291
      %8293 = vrot.lane.b32.xlu0 %v7402, 64
      %v8294 = vpop.permute.xlu0 %8293
      %8295 = vrot.lane.b32.xlu0 %v7355, 64
      %v8296 = vpop.permute.xlu0 %8295
      %8329 = vrot.lane.b32.xlu0 %v7424, 96
      %v8330 = vpop.permute.xlu0 %8329
      %8331 = vrot.lane.b32.xlu0 %v7426, 96
      %v8332 = vpop.permute.xlu0 %8331
      %8333 = vrot.lane.b32.xlu0 %v7429, 96
      %v8334 = vpop.permute.xlu0 %8333
      %8335 = vrot.lane.b32.xlu0 %v7431, 96
      %v8336 = vpop.permute.xlu0 %8335
      %8337 = vrot.lane.b32.xlu0 %v7434, 96
      %v8338 = vpop.permute.xlu0 %8337
      %8339 = vrot.lane.b32.xlu0 %v7436, 96
      %v8340 = vpop.permute.xlu0 %8339
      %8341 = vrot.lane.b32.xlu0 %v7439, 96
      %v8342 = vpop.permute.xlu0 %8341
      %8343 = vrot.lane.b32.xlu0 %v7441, 96
      %v8344 = vpop.permute.xlu0 %8343
      %8345 = vrot.lane.b32.xlu0 %v7444, 96
      %v8346 = vpop.permute.xlu0 %8345
      %8347 = vrot.lane.b32.xlu0 %v7446, 96
      %v8348 = vpop.permute.xlu0 %8347
      %8349 = vrot.lane.b32.xlu0 %v7449, 96
      %v8350 = vpop.permute.xlu0 %8349
      %8351 = vrot.lane.b32.xlu0 %v7451, 96
      %v8352 = vpop.permute.xlu0 %8351
      %8353 = vrot.lane.b32.xlu0 %v7454, 96
      %v8354 = vpop.permute.xlu0 %8353
      %8355 = vrot.lane.b32.xlu0 %v7456, 96
      %v8356 = vpop.permute.xlu0 %8355
      %8357 = vrot.lane.b32.xlu0 %v7459, 96
      %v8358 = vpop.permute.xlu0 %8357
      %8359 = vrot.lane.b32.xlu0 %v7461, 96
      %v8360 = vpop.permute.xlu0 %8359
      %8361 = vrot.lane.b32.xlu0 %v7464, 96
      %v8362 = vpop.permute.xlu0 %8361
      %8363 = vrot.lane.b32.xlu0 %v7466, 96
      %v8364 = vpop.permute.xlu0 %8363
      %8365 = vrot.lane.b32.xlu0 %v7469, 96
      %v8366 = vpop.permute.xlu0 %8365
      %8367 = vrot.lane.b32.xlu0 %v7471, 96
      %v8368 = vpop.permute.xlu0 %8367
      %8369 = vrot.lane.b32.xlu0 %v7474, 96
      %v8370 = vpop.permute.xlu0 %8369
      %8371 = vrot.lane.b32.xlu0 %v7476, 96
      %v8372 = vpop.permute.xlu0 %8371
      %8373 = vrot.lane.b32.xlu0 %v7479, 96
      %v8374 = vpop.permute.xlu0 %8373
      %8375 = vrot.lane.b32.xlu0 %v7481, 96
      %v8376 = vpop.permute.xlu0 %8375
      %8377 = vrot.lane.b32.xlu0 %v7484, 96
      %v8378 = vpop.permute.xlu0 %8377
      %8379 = vrot.lane.b32.xlu0 %v7486, 96
      %v8380 = vpop.permute.xlu0 %8379
      %8381 = vrot.lane.b32.xlu0 %v7489, 96
      %v8382 = vpop.permute.xlu0 %8381
      %8383 = vrot.lane.b32.xlu0 %v7491, 96
      %v8384 = vpop.permute.xlu0 %8383
      %8385 = vrot.lane.b32.xlu0 %v7494, 96
      %v8386 = vpop.permute.xlu0 %8385
      %8387 = vrot.lane.b32.xlu0 %v7496, 96
      %v8388 = vpop.permute.xlu0 %8387
      %8389 = vrot.lane.b32.xlu0 %v7814, 96
      %v8390 = vpop.permute.xlu0 %8389
      %8391 = vrot.lane.b32.xlu0 %v7816, 96
      %v8392 = vpop.permute.xlu0 %8391
      %vm8425 = vcmask 261120
      %v8426 = vsel %vm8425, 0.0, %v7856
      %v8427 = vsel %vm8425, %v7387, %v7858
      %v8428 = vsel %vm8425, %v7310, %v7860
      %v8429 = vsel %vm8425, %v7388, %v7862
      %v8430 = vsel %vm8425, %v7313, %v7864
      %v8431 = vsel %vm8425, %v7389, %v7866
      %v8432 = vsel %vm8425, %v7316, %v7868
      %v8433 = vsel %vm8425, %v7390, %v7870
      %v8434 = vsel %vm8425, %v7319, %v7872
      %v8435 = vsel %vm8425, %v7391, %v7874
      %v8436 = vsel %vm8425, %v7322, %v7876
      %v8437 = vsel %vm8425, %v7392, %v7878
      %v8438 = vsel %vm8425, %v7325, %v7880
      %v8439 = vsel %vm8425, %v7393, %v7882
      %v8440 = vsel %vm8425, %v7328, %v7884
      %v8441 = vsel %vm8425, %v7394, %v7886
      %v8442 = vsel %vm8425, %v7331, %v7888
      %v8443 = vsel %vm8425, %v7395, %v7890
      %v8444 = vsel %vm8425, %v7334, %v7892
      %v8445 = vsel %vm8425, %v7396, %v7894
      %v8446 = vsel %vm8425, %v7337, %v7896
      %v8447 = vsel %vm8425, %v7397, %v7898
      %v8448 = vsel %vm8425, %v7340, %v7900
      %v8449 = vsel %vm8425, %v7398, %v7902
      %v8450 = vsel %vm8425, %v7343, %v7904
      %v8451 = vsel %vm8425, %v7399, %v7906
      %v8452 = vsel %vm8425, %v7346, %v7908
      %v8453 = vsel %vm8425, %v7400, %v7910
      %v8454 = vsel %vm8425, %v7349, %v7912
      %v8455 = vsel %vm8425, %v7401, %v7914
      %v8456 = vsel %vm8425, %v7352, %v7916
      %vm8457 = vcmask 523264
      %v8458 = vsel %vm8457, %v8426, %v7949
      %v8459 = vsel %vm8457, %v8427, %v7951
      %v8460 = vsel %vm8457, %v8428, %v7953
      %v8461 = vsel %vm8457, %v8429, %v7955
      %v8462 = vsel %vm8457, %v8430, %v7957
      %v8463 = vsel %vm8457, %v8431, %v7959
      %v8464 = vsel %vm8457, %v8432, %v7961
      %v8465 = vsel %vm8457, %v8433, %v7963
      %v8466 = vsel %vm8457, %v8434, %v7965
      %v8467 = vsel %vm8457, %v8435, %v7967
      %v8468 = vsel %vm8457, %v8436, %v7969
      %v8469 = vsel %vm8457, %v8437, %v7971
      %v8470 = vsel %vm8457, %v8438, %v7973
      %v8471 = vsel %vm8457, %v8439, %v7975
      %v8472 = vsel %vm8457, %v8440, %v7977
      %v8473 = vsel %vm8457, %v8441, %v7979
      %v8474 = vsel %vm8457, %v8442, %v7981
      %v8475 = vsel %vm8457, %v8443, %v7983
      %v8476 = vsel %vm8457, %v8444, %v7985
      %v8477 = vsel %vm8457, %v8445, %v7987
      %v8478 = vsel %vm8457, %v8446, %v7989
      %v8479 = vsel %vm8457, %v8447, %v7991
      %v8480 = vsel %vm8457, %v8448, %v7993
      %v8481 = vsel %vm8457, %v8449, %v7995
      %v8482 = vsel %vm8457, %v8450, %v7997
      %v8483 = vsel %vm8457, %v8451, %v7999
      %v8484 = vsel %vm8457, %v8452, %v8001
      %v8485 = vsel %vm8457, %v8453, %v8003
      %v8486 = vsel %vm8457, %v8454, %v8005
      %v8487 = vsel %vm8457, %v8455, %v8007
      %v8488 = vsel %vm8457, %v8456, %v8009
      %vm8489 = vcmask 785408
      %v8490 = vsel %vm8489, %v8458, %v8042
      %v8491 = vsel %vm8489, %v8458, %v8044
      %v8492 = vsel %vm8489, %v8459, %v8046
      %v8493 = vsel %vm8489, %v8460, %v8048
      %v8494 = vsel %vm8489, %v8461, %v8050
      %v8495 = vsel %vm8489, %v8462, %v8052
      %v8496 = vsel %vm8489, %v8463, %v8054
      %v8497 = vsel %vm8489, %v8464, %v8056
      %v8498 = vsel %vm8489, %v8465, %v8058
      %v8499 = vsel %vm8489, %v8466, %v8060
      %v8500 = vsel %vm8489, %v8467, %v8062
      %v8501 = vsel %vm8489, %v8468, %v8064
      %v8502 = vsel %vm8489, %v8469, %v8066
      %v8503 = vsel %vm8489, %v8470, %v8068
      %v8504 = vsel %vm8489, %v8471, %v8070
      %v8505 = vsel %vm8489, %v8472, %v8072
      %v8506 = vsel %vm8489, %v8473, %v8074
      %v8507 = vsel %vm8489, %v8474, %v8076
      %v8508 = vsel %vm8489, %v8475, %v8078
      %v8509 = vsel %vm8489, %v8476, %v8080
      %v8510 = vsel %vm8489, %v8477, %v8082
      %v8511 = vsel %vm8489, %v8478, %v8084
      %v8512 = vsel %vm8489, %v8479, %v8086
      %v8513 = vsel %vm8489, %v8480, %v8088
      %v8514 = vsel %vm8489, %v8481, %v8090
      %v8515 = vsel %vm8489, %v8482, %v8092
      %v8516 = vsel %vm8489, %v8483, %v8094
      %v8517 = vsel %vm8489, %v8484, %v8096
      %v8518 = vsel %vm8489, %v8485, %v8098
      %v8519 = vsel %vm8489, %v8486, %v8100
      %v8520 = vsel %vm8489, %v8487, %v8102
      %v8521 = vsel %vm8489, %v8488, %v8104
      %v8522 = vsel %vm8425, %v7605, %v8138
      %v8523 = vsel %vm8425, %v7607, %v8140
      %v8524 = vsel %vm8425, %v7610, %v8142
      %v8525 = vsel %vm8425, %v7612, %v8144
      %v8526 = vsel %vm8425, %v7615, %v8146
      %v8527 = vsel %vm8425, %v7617, %v8148
      %v8528 = vsel %vm8425, %v7620, %v8150
      %v8529 = vsel %vm8425, %v7622, %v8152
      %v8530 = vsel %vm8425, %v7625, %v8154
      %v8531 = vsel %vm8425, %v7627, %v8156
      %v8532 = vsel %vm8425, %v7630, %v8158
      %v8533 = vsel %vm8425, %v7632, %v8160
      %v8534 = vsel %vm8425, %v7635, %v8162
      %v8535 = vsel %vm8425, %v7637, %v8164
      %v8536 = vsel %vm8425, %v7640, %v8166
      %v8537 = vsel %vm8425, %v7642, %v8168
      %v8538 = vsel %vm8425, %v7645, %v8170
      %v8539 = vsel %vm8425, %v7647, %v8172
      %v8540 = vsel %vm8425, %v7650, %v8174
      %v8541 = vsel %vm8425, %v7652, %v8176
      %v8542 = vsel %vm8425, %v7655, %v8178
      %v8543 = vsel %vm8425, %v7657, %v8180
      %v8544 = vsel %vm8425, %v7660, %v8182
      %v8545 = vsel %vm8425, %v7662, %v8184
      %v8546 = vsel %vm8425, %v7665, %v8186
      %v8547 = vsel %vm8425, %v7667, %v8188
      %v8548 = vsel %vm8425, %v7670, %v8190
      %v8549 = vsel %vm8425, %v7672, %v8192
      %v8550 = vsel %vm8425, %v7675, %v8194
      %v8551 = vsel %vm8425, %v7677, %v8196
      %v8552 = vsel %vm8425, %v7680, %v8198
      %v8553 = vsel %vm8425, %v7682, %v8200
      %v8554 = vsel %vm8457, %v8522, %v8234
      %v8555 = vsel %vm8457, %v8523, %v8236
      %v8556 = vsel %vm8457, %v8524, %v8238
      %v8557 = vsel %vm8457, %v8525, %v8240
      %v8558 = vsel %vm8457, %v8526, %v8242
      %v8559 = vsel %vm8457, %v8527, %v8244
      %v8560 = vsel %vm8457, %v8528, %v8246
      %v8561 = vsel %vm8457, %v8529, %v8248
      %v8562 = vsel %vm8457, %v8530, %v8250
      %v8563 = vsel %vm8457, %v8531, %v8252
      %v8564 = vsel %vm8457, %v8532, %v8254
      %v8565 = vsel %vm8457, %v8533, %v8256
      %v8566 = vsel %vm8457, %v8534, %v8258
      %v8567 = vsel %vm8457, %v8535, %v8260
      %v8568 = vsel %vm8457, %v8536, %v8262
      %v8569 = vsel %vm8457, %v8537, %v8264
      %v8570 = vsel %vm8457, %v8538, %v8266
      %v8571 = vsel %vm8457, %v8539, %v8268
      %v8572 = vsel %vm8457, %v8540, %v8270
      %v8573 = vsel %vm8457, %v8541, %v8272
      %v8574 = vsel %vm8457, %v8542, %v8274
      %v8575 = vsel %vm8457, %v8543, %v8276
      %v8576 = vsel %vm8457, %v8544, %v8278
      %v8577 = vsel %vm8457, %v8545, %v8280
      %v8578 = vsel %vm8457, %v8546, %v8282
      %v8579 = vsel %vm8457, %v8547, %v8284
      %v8580 = vsel %vm8457, %v8548, %v8286
      %v8581 = vsel %vm8457, %v8549, %v8288
      %v8582 = vsel %vm8457, %v8550, %v8290
      %v8583 = vsel %vm8457, %v8551, %v8292
      %v8584 = vsel %vm8457, %v8552, %v8294
      %v8585 = vsel %vm8457, %v8553, %v8296
      %v8586 = vsel %vm8489, %v8554, %v8330
      %v8587 = vsel %vm8489, %v8555, %v8332
      %v8588 = vsel %vm8489, %v8556, %v8334
      %v8589 = vsel %vm8489, %v8557, %v8336
      %v8590 = vsel %vm8489, %v8558, %v8338
      %v8591 = vsel %vm8489, %v8559, %v8340
      %v8592 = vsel %vm8489, %v8560, %v8342
      %v8593 = vsel %vm8489, %v8561, %v8344
      %v8594 = vsel %vm8489, %v8562, %v8346
      %v8595 = vsel %vm8489, %v8563, %v8348
      %v8596 = vsel %vm8489, %v8564, %v8350
      %v8597 = vsel %vm8489, %v8565, %v8352
      %v8598 = vsel %vm8489, %v8566, %v8354
      %v8599 = vsel %vm8489, %v8567, %v8356
      %v8600 = vsel %vm8489, %v8568, %v8358
      %v8601 = vsel %vm8489, %v8569, %v8360
      %v8602 = vsel %vm8489, %v8570, %v8362
      %v8603 = vsel %vm8489, %v8571, %v8364
      %v8604 = vsel %vm8489, %v8572, %v8366
      %v8605 = vsel %vm8489, %v8573, %v8368
      %v8606 = vsel %vm8489, %v8574, %v8370
      %v8607 = vsel %vm8489, %v8575, %v8372
      %v8608 = vsel %vm8489, %v8576, %v8374
      %v8609 = vsel %vm8489, %v8577, %v8376
      %v8610 = vsel %vm8489, %v8578, %v8378
      %v8611 = vsel %vm8489, %v8579, %v8380
      %v8612 = vsel %vm8489, %v8580, %v8382
      %v8613 = vsel %vm8489, %v8581, %v8384
      %v8614 = vsel %vm8489, %v8582, %v8386
      %v8615 = vsel %vm8489, %v8583, %v8388
      %v8616 = vsel %vm8489, %v8584, %v8390
      %v8617 = vsel %vm8489, %v8585, %v8392
      %v8618 = vpack.c.bf16 %v8491, %v8490
      %v8619 = vpack.c.bf16 %v8587, %v8586
      %v8620 = vpack.c.bf16 %v7516, %v7514
      %v8621 = vpack.c.bf16 %v8493, %v8492
      %v8622 = vpack.c.bf16 %v8589, %v8588
      %v8623 = vpack.c.bf16 %v7521, %v7519
      %v8624 = vpack.c.bf16 %v8495, %v8494
      %v8625 = vpack.c.bf16 %v8591, %v8590
      %v8626 = vpack.c.bf16 %v7526, %v7524
      %v8627 = vpack.c.bf16 %v8497, %v8496
      %v8628 = vpack.c.bf16 %v8593, %v8592
      %v8629 = vpack.c.bf16 %v7531, %v7529
      %v8630 = vpack.c.bf16 %v8499, %v8498
      %v8631 = vpack.c.bf16 %v8595, %v8594
      %v8632 = vpack.c.bf16 %v7536, %v7534
      %v8633 = vpack.c.bf16 %v8501, %v8500
      %v8634 = vpack.c.bf16 %v8597, %v8596
      %v8635 = vpack.c.bf16 %v7541, %v7539
      %v8636 = vpack.c.bf16 %v8503, %v8502
      %v8637 = vpack.c.bf16 %v8599, %v8598
      %v8638 = vpack.c.bf16 %v7546, %v7544
      %v8639 = vpack.c.bf16 %v8505, %v8504
      %v8640 = vpack.c.bf16 %v8601, %v8600
      %v8641 = vpack.c.bf16 %v7551, %v7549
      %v8642 = vpack.c.bf16 %v8507, %v8506
      %v8643 = vpack.c.bf16 %v8603, %v8602
      %v8644 = vpack.c.bf16 %v7556, %v7554
      %v8645 = vpack.c.bf16 %v8509, %v8508
      %v8646 = vpack.c.bf16 %v8605, %v8604
      %v8647 = vpack.c.bf16 %v7561, %v7559
      %v8648 = vpack.c.bf16 %v8511, %v8510
      %v8649 = vpack.c.bf16 %v8607, %v8606
      %v8650 = vpack.c.bf16 %v7566, %v7564
      %v8651 = vpack.c.bf16 %v8513, %v8512
      %v8652 = vpack.c.bf16 %v8609, %v8608
      %v8653 = vpack.c.bf16 %v7571, %v7569
      %v8654 = vpack.c.bf16 %v8515, %v8514
      %v8655 = vpack.c.bf16 %v8611, %v8610
      %v8656 = vpack.c.bf16 %v7576, %v7574
      %v8657 = vpack.c.bf16 %v8517, %v8516
      %v8658 = vpack.c.bf16 %v8613, %v8612
      %v8659 = vpack.c.bf16 %v7581, %v7579
      %v8660 = vpack.c.bf16 %v8519, %v8518
      %v8661 = vpack.c.bf16 %v8615, %v8614
      %v8662 = vpack.c.bf16 %v7586, %v7584
      %v8663 = vpack.c.bf16 %v8521, %v8520
      %v8664 = vpack.c.bf16 %v8617, %v8616
      %v8665 = vpack.c.bf16 %v7822, %v7820
      %v8666 = vld [vmem:[%s3] sm:$0xf]
      %v8667 = vld [vmem:[%s3 + $0x4] sm:$0xf]
      %v8668 = vld [vmem:[%s3 + $0x8] sm:$0xf]
      %v8669 = vld [vmem:[%s3 + $0xc] sm:$0xf]
      %v8670 = vld [vmem:[%s3 + $0x10] sm:$0xf]
      %v8671 = vld [vmem:[%s3 + $0x14] sm:$0xf]
      %v8672 = vld [vmem:[%s3 + $0x18] sm:$0xf]
      %v8673 = vld [vmem:[%s3 + $0x1c] sm:$0xf]
      %v8674 = vld [vmem:[%s3 + $0x20] sm:$0xf]
      %v8675 = vld [vmem:[%s3 + $0x24] sm:$0xf]
      %v8676 = vld [vmem:[%s3 + $0x28] sm:$0xf]
      %v8677 = vld [vmem:[%s3 + $0x2c] sm:$0xf]
      %v8678 = vld [vmem:[%s3 + $0x30] sm:$0xf]
      %v8679 = vld [vmem:[%s3 + $0x34] sm:$0xf]
      %v8680 = vld [vmem:[%s3 + $0x38] sm:$0xf]
      %v8681 = vld [vmem:[%s3 + $0x3c] sm:$0xf]
      %v8682 = vld [vmem:[%s3 + $0x40] sm:$0xf]
      %v8683 = vld [vmem:[%s3 + $0x44] sm:$0xf]
      %v8684 = vld [vmem:[%s3 + $0x48] sm:$0xf]
      %v8685 = vld [vmem:[%s3 + $0x4c] sm:$0xf]
      %v8686 = vld [vmem:[%s3 + $0x50] sm:$0xf]
      %v8687 = vld [vmem:[%s3 + $0x54] sm:$0xf]
      %v8688 = vld [vmem:[%s3 + $0x58] sm:$0xf]
      %v8689 = vld [vmem:[%s3 + $0x5c] sm:$0xf]
      %v8690 = vld [vmem:[%s3 + $0x60] sm:$0xf]
      %v8691 = vld [vmem:[%s3 + $0x64] sm:$0xf]
      %v8692 = vld [vmem:[%s3 + $0x68] sm:$0xf]
      %v8693 = vld [vmem:[%s3 + $0x6c] sm:$0xf]
      %v8694 = vld [vmem:[%s3 + $0x70] sm:$0xf]
      %v8695 = vld [vmem:[%s3 + $0x74] sm:$0xf]
      %v8696 = vld [vmem:[%s3 + $0x78] sm:$0xf]
      %v8697 = vld [vmem:[%s3 + $0x7c] sm:$0xf]
      %v8698 = vld [vmem:[%s3 + $0x80] sm:$0xf]
      %v8699 = vld [vmem:[%s3 + $0x84] sm:$0xf]
      %v8700 = vld [vmem:[%s3 + $0x88] sm:$0xf]
      %v8701 = vld [vmem:[%s3 + $0x8c] sm:$0xf]
      %v8702 = vld [vmem:[%s4] sm:$0x1]
      %v8704 = vlaneseq
      %v8705 = vshrl.u32 %v8704, 7
      %v8706 = vsub.s32 0, %v8705
      %v8707 = vrot.slane %v8702, %v8706
      %v8745 = vunpack.c.l.b16 %v8666
      %v8746 = vunpack.c.l.b16 %v8667
      %v8747 = vunpack.c.l.b16 %v8668
      %v8748 = vunpack.c.l.b16 %v8669
      %v8749 = vunpack.c.l.b16 %v8670
      %v8750 = vunpack.c.l.b16 %v8671
      %v8751 = vunpack.c.l.b16 %v8672
      %v8752 = vunpack.c.l.b16 %v8673
      %v8753 = vunpack.c.l.b16 %v8674
      %v8754 = vunpack.c.l.b16 %v8675
      %v8755 = vunpack.c.l.b16 %v8676
      %v8756 = vunpack.c.l.b16 %v8677
      %v8757 = vunpack.c.l.b16 %v8678
      %v8758 = vunpack.c.l.b16 %v8679
      %v8759 = vunpack.c.l.b16 %v8680
      %v8760 = vunpack.c.l.b16 %v8681
      %v8761 = vunpack.c.l.b16 %v8682
      %v8762 = vunpack.c.l.b16 %v8683
      %v8763 = vunpack.c.l.b16 %v8684
      %v8764 = vunpack.c.l.b16 %v8685
      %v8765 = vunpack.c.l.b16 %v8686
      %v8766 = vunpack.c.l.b16 %v8687
      %v8767 = vunpack.c.l.b16 %v8688
      %v8768 = vunpack.c.l.b16 %v8689
      %v8769 = vunpack.c.l.b16 %v8690
      %v8770 = vunpack.c.l.b16 %v8691
      %v8771 = vunpack.c.l.b16 %v8692
      %v8772 = vunpack.c.l.b16 %v8693
      %v8773 = vunpack.c.l.b16 %v8694
      %v8774 = vunpack.c.l.b16 %v8695
      %v8775 = vunpack.c.l.b16 %v8696
      %v8776 = vunpack.c.l.b16 %v8697
      %v8777 = vunpack.c.l.b16 %v8698
      %v8778 = vunpack.c.l.b16 %v8699
      %v8779 = vunpack.c.l.b16 %v8700
      %v8780 = vunpack.c.l.b16 %v8701
      %v8781 = vpack.c.b16 %v8746, %v8745
      %v8782 = vpack.c.b16 %v8748, %v8747
      %v8783 = vpack.c.b16 %v8750, %v8749
      %v8784 = vpack.c.b16 %v8752, %v8751
      %v8785 = vpack.c.b16 %v8754, %v8753
      %v8786 = vpack.c.b16 %v8756, %v8755
      %v8787 = vpack.c.b16 %v8758, %v8757
      %v8788 = vpack.c.b16 %v8760, %v8759
      %v8789 = vpack.c.b16 %v8762, %v8761
      %v8790 = vpack.c.b16 %v8764, %v8763
      %v8791 = vpack.c.b16 %v8766, %v8765
      %v8792 = vpack.c.b16 %v8768, %v8767
      %v8793 = vpack.c.b16 %v8770, %v8769
      %v8794 = vpack.c.b16 %v8772, %v8771
      %v8795 = vpack.c.b16 %v8774, %v8773
      %v8796 = vpack.c.b16 %v8776, %v8775
      %v8797 = vpack.c.b16 %v8778, %v8777
      %v8798 = vpack.c.b16 %v8780, %v8779
      %v8818 = vsel %vm8425, %v8620, 0
      %v8821 = vsel %vm8425, %v8623, 0
      %v8824 = vsel %vm8425, %v8626, 0
      %v8827 = vsel %vm8425, %v8629, 0
      %v8830 = vsel %vm8425, %v8632, 0
      %v8833 = vsel %vm8425, %v8635, 0
      %v8836 = vsel %vm8425, %v8638, 0
      %v8839 = vsel %vm8425, %v8641, 0
      %v8842 = vsel %vm8425, %v8644, 0
      %v8845 = vsel %vm8425, %v8647, 0
      %v8848 = vsel %vm8425, %v8650, 0
      %v8851 = vsel %vm8425, %v8653, 0
      %v8854 = vsel %vm8425, %v8656, 0
      %v8857 = vsel %vm8425, %v8659, 0
      %v8860 = vsel %vm8425, %v8662, 0
      %v8863 = vsel %vm8425, %v8665, 0
      %8865 = vmatprep.subr.bf16.mxu0 0
      %8866 = vmatpush1.bf16.msra.mxu0 %v8788
      %8867 = vmatprep.subr.bf16.mxu0 0
      %8868 = vmatpush1.bf16.msra.mxu0 %v8787
      %8869 = vmatprep.subr.bf16.mxu0 0
      %8870 = vmatpush1.bf16.msra.mxu0 %v8786
      %8871 = vmatprep.subr.bf16.mxu0 0
      %8872 = vmatpush1.bf16.msra.mxu0 %v8785
      %8873 = vmatprep.subr.bf16.mxu0 0
      %8874 = vmatpush1.bf16.msra.mxu0 %v8784
      %8875 = vmatprep.subr.bf16.mxu0 0
      %8876 = vmatpush1.bf16.msra.mxu0 %v8783
      %8877 = vmatprep.subr.bf16.mxu0 0
      %8878 = vmatpush1.bf16.msra.mxu0 %v8782
      %8879 = vmatprep.subr.bf16.mxu0 0
      %8880 = vmatpush1.bf16.msra.mxu0 %v8781
      %8881 = vmatprep.subr.bf16.mxu0 0
      %8882 = vmatpush2.bf16.msra.mxu0 %v8796
      %8883 = vmatprep.subr.bf16.mxu0 0
      %8884 = vmatpush2.bf16.msra.mxu0 %v8795
      %8885 = vmatprep.subr.bf16.mxu0 0
      %8886 = vmatpush2.bf16.msra.mxu0 %v8794
      %8887 = vmatprep.subr.bf16.mxu0 0
      %8888 = vmatpush2.bf16.msra.mxu0 %v8793
      %8889 = vmatprep.subr.bf16.mxu0 0
      %8890 = vmatpush2.bf16.msra.mxu0 %v8792
      %8891 = vmatprep.subr.bf16.mxu0 0
      %8892 = vmatpush2.bf16.msra.mxu0 %v8791
      %8893 = vmatprep.subr.bf16.mxu0 0
      %8894 = vmatpush2.bf16.msra.mxu0 %v8790
      %8895 = vmatprep.subr.bf16.mxu0 0
      %8896 = vmatpush2.bf16.msra.mxu0 %v8789
      %8897 = vmatprep.mubr.bf16.mxu0 %v8619
      %8898 = vmatmul.mubr.bf16.gmra.mxu0 %v8618
      %v8899 = vpop.f32.mrf.mxu0
      %v8900 = vadd.f32 %v8707, %v8899
      %v8901 = vpop.f32.mrf.mxu0
      %v8902 = vpop.f32.mrf.mxu0
      %v8903 = vadd.f32 %v8707, %v8902
      %v8904 = vpop.f32.mrf.mxu0
      %8905 = vmatprep.mubr.bf16.mxu0 %v8622
      %8906 = vmatmul.mubr.bf16.gmra.mxu0 %v8621
      %v8907 = vpop.f32.mrf.mxu0
      %v8908 = vadd.f32 %v8707, %v8907
      %v8909 = vpop.f32.mrf.mxu0
      %v8910 = vpop.f32.mrf.mxu0
      %v8911 = vadd.f32 %v8707, %v8910
      %v8912 = vpop.f32.mrf.mxu0
      %8913 = vmatprep.mubr.bf16.mxu0 %v8625
      %8914 = vmatmul.mubr.bf16.gmra.mxu0 %v8624
      %v8915 = vpop.f32.mrf.mxu0
      %v8916 = vadd.f32 %v8707, %v8915
      %v8917 = vpop.f32.mrf.mxu0
      %v8918 = vpop.f32.mrf.mxu0
      %v8919 = vadd.f32 %v8707, %v8918
      %v8920 = vpop.f32.mrf.mxu0
      %8921 = vmatprep.mubr.bf16.mxu0 %v8628
      %8922 = vmatmul.mubr.bf16.gmra.mxu0 %v8627
      %v8923 = vpop.f32.mrf.mxu0
      %v8924 = vadd.f32 %v8707, %v8923
      %v8925 = vpop.f32.mrf.mxu0
      %v8926 = vpop.f32.mrf.mxu0
      %v8927 = vadd.f32 %v8707, %v8926
      %v8928 = vpop.f32.mrf.mxu0
      %8929 = vmatprep.mubr.bf16.mxu0 %v8631
      %8930 = vmatmul.mubr.bf16.gmra.mxu0 %v8630
      %v8931 = vpop.f32.mrf.mxu0
      %v8932 = vadd.f32 %v8707, %v8931
      %v8933 = vpop.f32.mrf.mxu0
      %v8934 = vpop.f32.mrf.mxu0
      %v8935 = vadd.f32 %v8707, %v8934
      %v8936 = vpop.f32.mrf.mxu0
      %8937 = vmatprep.mubr.bf16.mxu0 %v8634
      %8938 = vmatmul.mubr.bf16.gmra.mxu0 %v8633
      %v8939 = vpop.f32.mrf.mxu0
      %v8940 = vadd.f32 %v8707, %v8939
      %v8941 = vpop.f32.mrf.mxu0
      %v8942 = vpop.f32.mrf.mxu0
      %v8943 = vadd.f32 %v8707, %v8942
      %v8944 = vpop.f32.mrf.mxu0
      %8945 = vmatprep.mubr.bf16.mxu0 %v8637
      %8946 = vmatmul.mubr.bf16.gmra.mxu0 %v8636
      %v8947 = vpop.f32.mrf.mxu0
      %v8948 = vadd.f32 %v8707, %v8947
      %v8949 = vpop.f32.mrf.mxu0
      %v8950 = vpop.f32.mrf.mxu0
      %v8951 = vadd.f32 %v8707, %v8950
      %v8952 = vpop.f32.mrf.mxu0
      %8953 = vmatprep.mubr.bf16.mxu0 %v8640
      %8954 = vmatmul.mubr.bf16.gmra.mxu0 %v8639
      %v8955 = vpop.f32.mrf.mxu0
      %v8956 = vadd.f32 %v8707, %v8955
      %v8957 = vpop.f32.mrf.mxu0
      %v8958 = vpop.f32.mrf.mxu0
      %v8959 = vadd.f32 %v8707, %v8958
      %v8960 = vpop.f32.mrf.mxu0
      %8961 = vmatprep.mubr.bf16.mxu0 %v8643
      %8962 = vmatmul.mubr.bf16.gmra.mxu0 %v8642
      %v8963 = vpop.f32.mrf.mxu0
      %v8964 = vadd.f32 %v8707, %v8963
      %v8965 = vpop.f32.mrf.mxu0
      %v8966 = vpop.f32.mrf.mxu0
      %v8967 = vadd.f32 %v8707, %v8966
      %v8968 = vpop.f32.mrf.mxu0
      %8969 = vmatprep.mubr.bf16.mxu0 %v8646
      %8970 = vmatmul.mubr.bf16.gmra.mxu0 %v8645
      %v8971 = vpop.f32.mrf.mxu0
      %v8972 = vadd.f32 %v8707, %v8971
      %v8973 = vpop.f32.mrf.mxu0
      %v8974 = vpop.f32.mrf.mxu0
      %v8975 = vadd.f32 %v8707, %v8974
      %v8976 = vpop.f32.mrf.mxu0
      %8977 = vmatprep.mubr.bf16.mxu0 %v8649
      %8978 = vmatmul.mubr.bf16.gmra.mxu0 %v8648
      %v8979 = vpop.f32.mrf.mxu0
      %v8980 = vadd.f32 %v8707, %v8979
      %v8981 = vpop.f32.mrf.mxu0
      %v8982 = vpop.f32.mrf.mxu0
      %v8983 = vadd.f32 %v8707, %v8982
      %v8984 = vpop.f32.mrf.mxu0
      %8985 = vmatprep.mubr.bf16.mxu0 %v8652
      %8986 = vmatmul.mubr.bf16.gmra.mxu0 %v8651
      %v8987 = vpop.f32.mrf.mxu0
      %v8988 = vadd.f32 %v8707, %v8987
      %v8989 = vpop.f32.mrf.mxu0
      %v8990 = vpop.f32.mrf.mxu0
      %v8991 = vadd.f32 %v8707, %v8990
      %v8992 = vpop.f32.mrf.mxu0
      %8993 = vmatprep.mubr.bf16.mxu0 %v8655
      %8994 = vmatmul.mubr.bf16.gmra.mxu0 %v8654
      %v8995 = vpop.f32.mrf.mxu0
      %v8996 = vadd.f32 %v8707, %v8995
      %v8997 = vpop.f32.mrf.mxu0
      %v8998 = vpop.f32.mrf.mxu0
      %v8999 = vadd.f32 %v8707, %v8998
      %v9000 = vpop.f32.mrf.mxu0
      %9001 = vmatprep.mubr.bf16.mxu0 %v8658
      %9002 = vmatmul.mubr.bf16.gmra.mxu0 %v8657
      %v9003 = vpop.f32.mrf.mxu0
      %v9004 = vadd.f32 %v8707, %v9003
      %v9005 = vpop.f32.mrf.mxu0
      %v9006 = vpop.f32.mrf.mxu0
      %v9007 = vadd.f32 %v8707, %v9006
      %v9008 = vpop.f32.mrf.mxu0
      %9009 = vmatprep.mubr.bf16.mxu0 %v8661
      %9010 = vmatmul.mubr.bf16.gmra.mxu0 %v8660
      %v9011 = vpop.f32.mrf.mxu0
      %v9012 = vadd.f32 %v8707, %v9011
      %v9013 = vpop.f32.mrf.mxu0
      %v9014 = vpop.f32.mrf.mxu0
      %v9015 = vadd.f32 %v8707, %v9014
      %v9016 = vpop.f32.mrf.mxu0
      %9017 = vmatprep.mubr.bf16.mxu0 %v8664
      %9018 = vmatmul.mubr.bf16.gmra.mxu0 %v8663
      %v9019 = vpop.f32.mrf.mxu0
      %v9020 = vadd.f32 %v8707, %v9019
      %v9021 = vpop.f32.mrf.mxu0
      %v9022 = vpop.f32.mrf.mxu0
      %v9023 = vadd.f32 %v8707, %v9022
      %v9024 = vpop.f32.mrf.mxu0
      %9025 = vdwg.mxu0
      %9026 = vmatprep.subr.bf16.mxu0 0
      %9027 = vmatpush1.bf16.msra.mxu0 0
      %9028 = vmatprep.subr.bf16.mxu0 0
      %9029 = vmatpush1.bf16.msra.mxu0 0
      %9030 = vmatprep.subr.bf16.mxu0 0
      %9031 = vmatpush1.bf16.msra.mxu0 0
      %9032 = vmatprep.subr.bf16.mxu0 0
      %9033 = vmatpush1.bf16.msra.mxu0 0
      %9034 = vmatprep.subr.bf16.mxu0 0
      %9035 = vmatpush1.bf16.msra.mxu0 0
      %9036 = vmatprep.subr.bf16.mxu0 0
      %9037 = vmatpush1.bf16.msra.mxu0 0
      %9038 = vmatprep.subr.bf16.mxu0 0
      %9039 = vmatpush1.bf16.msra.mxu0 %v8798
      %9040 = vmatprep.subr.bf16.mxu0 0
      %9041 = vmatpush1.bf16.msra.mxu0 %v8797
      %9042 = vmatprep.subr.bf16.mxu0 0
      %9043 = vmatpush2.bf16.msra.mxu0 0
      %9044 = vmatprep.subr.bf16.mxu0 0
      %9045 = vmatpush2.bf16.msra.mxu0 0
      %9046 = vmatprep.subr.bf16.mxu0 0
      %9047 = vmatpush2.bf16.msra.mxu0 0
      %9048 = vmatprep.subr.bf16.mxu0 0
      %9049 = vmatpush2.bf16.msra.mxu0 0
      %9050 = vmatprep.subr.bf16.mxu0 0
      %9051 = vmatpush2.bf16.msra.mxu0 0
      %9052 = vmatprep.subr.bf16.mxu0 0
      %9053 = vmatpush2.bf16.msra.mxu0 0
      %9054 = vmatprep.subr.bf16.mxu0 0
      %9055 = vmatpush2.bf16.msra.mxu0 0
      %9056 = vmatprep.subr.bf16.mxu0 0
      %9057 = vmatpush2.bf16.msra.mxu0 0
      %9058 = vmatprep.mubr.bf16.mxu0 0
      %9059 = vmatmul.mubr.bf16.gmra.mxu0 %v8818
      %v9060 = vpop.f32.mrf.mxu0
      %v9061 = vadd.f32 %v8900, %v9060
      %v9062 = vpop.f32.mrf.mxu0
      %v9063 = vpop.f32.mrf.mxu0
      %v9064 = vadd.f32 %v8903, %v9063
      %v9065 = vpop.f32.mrf.mxu0
      %9066 = vmatprep.mubr.bf16.mxu0 0
      %9067 = vmatmul.mubr.bf16.gmra.mxu0 %v8821
      %v9068 = vpop.f32.mrf.mxu0
      %v9069 = vadd.f32 %v8908, %v9068
      %v9070 = vpop.f32.mrf.mxu0
      %v9071 = vpop.f32.mrf.mxu0
      %v9072 = vadd.f32 %v8911, %v9071
      %v9073 = vpop.f32.mrf.mxu0
      %9074 = vmatprep.mubr.bf16.mxu0 0
      %9075 = vmatmul.mubr.bf16.gmra.mxu0 %v8824
      %v9076 = vpop.f32.mrf.mxu0
      %v9077 = vadd.f32 %v8916, %v9076
      %v9078 = vpop.f32.mrf.mxu0
      %v9079 = vpop.f32.mrf.mxu0
      %v9080 = vadd.f32 %v8919, %v9079
      %v9081 = vpop.f32.mrf.mxu0
      %9082 = vmatprep.mubr.bf16.mxu0 0
      %9083 = vmatmul.mubr.bf16.gmra.mxu0 %v8827
      %v9084 = vpop.f32.mrf.mxu0
      %v9085 = vadd.f32 %v8924, %v9084
      %v9086 = vpop.f32.mrf.mxu0
      %v9087 = vpop.f32.mrf.mxu0
      %v9088 = vadd.f32 %v8927, %v9087
      %v9089 = vpop.f32.mrf.mxu0
      %9090 = vmatprep.mubr.bf16.mxu0 0
      %9091 = vmatmul.mubr.bf16.gmra.mxu0 %v8830
      %v9092 = vpop.f32.mrf.mxu0
      %v9093 = vadd.f32 %v8932, %v9092
      %v9094 = vpop.f32.mrf.mxu0
      %v9095 = vpop.f32.mrf.mxu0
      %v9096 = vadd.f32 %v8935, %v9095
      %v9097 = vpop.f32.mrf.mxu0
      %9098 = vmatprep.mubr.bf16.mxu0 0
      %9099 = vmatmul.mubr.bf16.gmra.mxu0 %v8833
      %v9100 = vpop.f32.mrf.mxu0
      %v9101 = vadd.f32 %v8940, %v9100
      %v9102 = vpop.f32.mrf.mxu0
      %v9103 = vpop.f32.mrf.mxu0
      %v9104 = vadd.f32 %v8943, %v9103
      %v9105 = vpop.f32.mrf.mxu0
      %9106 = vmatprep.mubr.bf16.mxu0 0
      %9107 = vmatmul.mubr.bf16.gmra.mxu0 %v8836
      %v9108 = vpop.f32.mrf.mxu0
      %v9109 = vadd.f32 %v8948, %v9108
      %v9110 = vpop.f32.mrf.mxu0
      %v9111 = vpop.f32.mrf.mxu0
      %v9112 = vadd.f32 %v8951, %v9111
      %v9113 = vpop.f32.mrf.mxu0
      %9114 = vmatprep.mubr.bf16.mxu0 0
      %9115 = vmatmul.mubr.bf16.gmra.mxu0 %v8839
      %v9116 = vpop.f32.mrf.mxu0
      %v9117 = vadd.f32 %v8956, %v9116
      %v9118 = vpop.f32.mrf.mxu0
      %v9119 = vpop.f32.mrf.mxu0
      %v9120 = vadd.f32 %v8959, %v9119
      %v9121 = vpop.f32.mrf.mxu0
      %9122 = vmatprep.mubr.bf16.mxu0 0
      %9123 = vmatmul.mubr.bf16.gmra.mxu0 %v8842
      %v9124 = vpop.f32.mrf.mxu0
      %v9125 = vadd.f32 %v8964, %v9124
      %v9126 = vpop.f32.mrf.mxu0
      %v9127 = vpop.f32.mrf.mxu0
      %v9128 = vadd.f32 %v8967, %v9127
      %v9129 = vpop.f32.mrf.mxu0
      %9130 = vmatprep.mubr.bf16.mxu0 0
      %9131 = vmatmul.mubr.bf16.gmra.mxu0 %v8845
      %v9132 = vpop.f32.mrf.mxu0
      %v9133 = vadd.f32 %v8972, %v9132
      %v9134 = vpop.f32.mrf.mxu0
      %v9135 = vpop.f32.mrf.mxu0
      %v9136 = vadd.f32 %v8975, %v9135
      %v9137 = vpop.f32.mrf.mxu0
      %9138 = vmatprep.mubr.bf16.mxu0 0
      %9139 = vmatmul.mubr.bf16.gmra.mxu0 %v8848
      %v9140 = vpop.f32.mrf.mxu0
      %v9141 = vadd.f32 %v8980, %v9140
      %v9142 = vpop.f32.mrf.mxu0
      %v9143 = vpop.f32.mrf.mxu0
      %v9144 = vadd.f32 %v8983, %v9143
      %v9145 = vpop.f32.mrf.mxu0
      %9146 = vmatprep.mubr.bf16.mxu0 0
      %9147 = vmatmul.mubr.bf16.gmra.mxu0 %v8851
      %v9148 = vpop.f32.mrf.mxu0
      %v9149 = vadd.f32 %v8988, %v9148
      %v9150 = vpop.f32.mrf.mxu0
      %v9151 = vpop.f32.mrf.mxu0
      %v9152 = vadd.f32 %v8991, %v9151
      %v9153 = vpop.f32.mrf.mxu0
      %9154 = vmatprep.mubr.bf16.mxu0 0
      %9155 = vmatmul.mubr.bf16.gmra.mxu0 %v8854
      %v9156 = vpop.f32.mrf.mxu0
      %v9157 = vadd.f32 %v8996, %v9156
      %v9158 = vpop.f32.mrf.mxu0
      %v9159 = vpop.f32.mrf.mxu0
      %v9160 = vadd.f32 %v8999, %v9159
      %v9161 = vpop.f32.mrf.mxu0
      %9162 = vmatprep.mubr.bf16.mxu0 0
      %9163 = vmatmul.mubr.bf16.gmra.mxu0 %v8857
      %v9164 = vpop.f32.mrf.mxu0
      %v9165 = vadd.f32 %v9004, %v9164
      %v9166 = vpop.f32.mrf.mxu0
      %v9167 = vpop.f32.mrf.mxu0
      %v9168 = vadd.f32 %v9007, %v9167
      %v9169 = vpop.f32.mrf.mxu0
      %9170 = vmatprep.mubr.bf16.mxu0 0
      %9171 = vmatmul.mubr.bf16.gmra.mxu0 %v8860
      %v9172 = vpop.f32.mrf.mxu0
      %v9173 = vadd.f32 %v9012, %v9172
      %v9174 = vpop.f32.mrf.mxu0
      %v9175 = vpop.f32.mrf.mxu0
      %v9176 = vadd.f32 %v9015, %v9175
      %v9177 = vpop.f32.mrf.mxu0
      %9178 = vmatprep.mubr.bf16.mxu0 0
      %9179 = vmatmul.mubr.bf16.gmra.mxu0 %v8863
      %v9180 = vpop.f32.mrf.mxu0
      %v9181 = vadd.f32 %v9020, %v9180
      %v9182 = vpop.f32.mrf.mxu0
      %v9183 = vpop.f32.mrf.mxu0
      %v9184 = vadd.f32 %v9023, %v9183
      %v9185 = vpop.f32.mrf.mxu0
      %9186 = vdwg.mxu0
      %v9187 = vmax.f32 %v9061, 0.0
      %v9188 = vmax.f32 %v9064, 0.0
      %v9189 = vmax.f32 %v9069, 0.0
      %v9190 = vmax.f32 %v9072, 0.0
      %v9191 = vmax.f32 %v9077, 0.0
      %v9192 = vmax.f32 %v9080, 0.0
      %v9193 = vmax.f32 %v9085, 0.0
      %v9194 = vmax.f32 %v9088, 0.0
      %v9195 = vmax.f32 %v9093, 0.0
      %v9196 = vmax.f32 %v9096, 0.0
      %v9197 = vmax.f32 %v9101, 0.0
      %v9198 = vmax.f32 %v9104, 0.0
      %v9199 = vmax.f32 %v9109, 0.0
      %v9200 = vmax.f32 %v9112, 0.0
      %v9201 = vmax.f32 %v9117, 0.0
      %v9202 = vmax.f32 %v9120, 0.0
      %v9203 = vmax.f32 %v9125, 0.0
      %v9204 = vmax.f32 %v9128, 0.0
      %v9205 = vmax.f32 %v9133, 0.0
      %v9206 = vmax.f32 %v9136, 0.0
      %v9207 = vmax.f32 %v9141, 0.0
      %v9208 = vmax.f32 %v9144, 0.0
      %v9209 = vmax.f32 %v9149, 0.0
      %v9210 = vmax.f32 %v9152, 0.0
      %v9211 = vmax.f32 %v9157, 0.0
      %v9212 = vmax.f32 %v9160, 0.0
      %v9213 = vmax.f32 %v9165, 0.0
      %v9214 = vmax.f32 %v9168, 0.0
      %v9215 = vmax.f32 %v9173, 0.0
      %v9216 = vmax.f32 %v9176, 0.0
      %v9217 = vmax.f32 %v9181, 0.0
      %v9218 = vmax.f32 %v9184, 0.0
      %vm9219 = vcmask 392448
      %v9220 = vsel %vm9219, %v9187, 0.0
      %v9221 = vsel %vm9219, %v9188, 0.0
      %v9222 = vadd.f32 %v9220, %v9221
      %v9223 = vsel %vm9219, %v9189, 0.0
      %v9224 = vadd.f32 %v9222, %v9223
      %v9225 = vsel %vm9219, %v9190, 0.0
      %v9226 = vadd.f32 %v9224, %v9225
      %v9227 = vsel %vm9219, %v9191, 0.0
      %v9228 = vadd.f32 %v9226, %v9227
      %v9229 = vsel %vm9219, %v9192, 0.0
      %v9230 = vadd.f32 %v9228, %v9229
      %v9231 = vsel %vm9219, %v9193, 0.0
      %v9232 = vadd.f32 %v9230, %v9231
      %v9233 = vsel %vm9219, %v9194, 0.0
      %v9234 = vadd.f32 %v9232, %v9233
      %v9235 = vsel %vm9219, %v9195, 0.0
      %v9236 = vadd.f32 %v9234, %v9235
      %v9237 = vsel %vm9219, %v9196, 0.0
      %v9238 = vadd.f32 %v9236, %v9237
      %v9239 = vsel %vm9219, %v9197, 0.0
      %v9240 = vadd.f32 %v9238, %v9239
      %v9241 = vsel %vm9219, %v9198, 0.0
      %v9242 = vadd.f32 %v9240, %v9241
      %v9243 = vsel %vm9219, %v9199, 0.0
      %v9244 = vadd.f32 %v9242, %v9243
      %v9245 = vsel %vm9219, %v9200, 0.0
      %v9246 = vadd.f32 %v9244, %v9245
      %v9247 = vsel %vm9219, %v9201, 0.0
      %v9248 = vadd.f32 %v9246, %v9247
      %v9249 = vsel %vm9219, %v9202, 0.0
      %v9250 = vadd.f32 %v9248, %v9249
      %v9251 = vsel %vm9219, %v9203, 0.0
      %v9252 = vadd.f32 %v9250, %v9251
      %v9253 = vsel %vm9219, %v9204, 0.0
      %v9254 = vadd.f32 %v9252, %v9253
      %v9255 = vsel %vm9219, %v9205, 0.0
      %v9256 = vadd.f32 %v9254, %v9255
      %v9257 = vsel %vm9219, %v9206, 0.0
      %v9258 = vadd.f32 %v9256, %v9257
      %v9259 = vsel %vm9219, %v9207, 0.0
      %v9260 = vadd.f32 %v9258, %v9259
      %v9261 = vsel %vm9219, %v9208, 0.0
      %v9262 = vadd.f32 %v9260, %v9261
      %v9263 = vsel %vm9219, %v9209, 0.0
      %v9264 = vadd.f32 %v9262, %v9263
      %v9265 = vsel %vm9219, %v9210, 0.0
      %v9266 = vadd.f32 %v9264, %v9265
      %v9267 = vsel %vm9219, %v9211, 0.0
      %v9268 = vadd.f32 %v9266, %v9267
      %v9269 = vsel %vm9219, %v9212, 0.0
      %v9270 = vadd.f32 %v9268, %v9269
      %v9271 = vsel %vm9219, %v9213, 0.0
      %v9272 = vadd.f32 %v9270, %v9271
      %v9273 = vsel %vm9219, %v9214, 0.0
      %v9274 = vadd.f32 %v9272, %v9273
      %v9275 = vsel %vm9219, %v9215, 0.0
      %v9276 = vadd.f32 %v9274, %v9275
      %v9277 = vsel %vm9219, %v9216, 0.0
      %v9278 = vadd.f32 %v9276, %v9277
      %v9279 = vsel %vm9219, %v9217, 0.0
      %v9280 = vadd.f32 %v9278, %v9279
      %v9281 = vsel %vm9219, %v9218, 0.0
      %v9282 = vadd.f32 %v9280, %v9281
      %v9283 = vrot.slane %v9282, 4
      %v9284 = vadd.f32 %v9282, %v9283
      %v9285 = vrot.slane %v9284, 2
      %v9286 = vadd.f32 %v9284, %v9285
      %v9287 = vrot.slane %v9286, 1
      %v9288 = vadd.f32 %v9286, %v9287
      %v9289 = vmul.f32 %v9288, 0.00390625
      %v9322 = vrot.slane %v9187, 7
      %v9323 = vrot.slane %v9188, 7
      %v9324 = vsel %vm6971, %v9322, %v9323
      %v9325 = vrot.slane %v9189, 7
      %v9326 = vrot.slane %v9190, 7
      %v9327 = vsel %vm6971, %v9325, %v9326
      %v9328 = vrot.slane %v9191, 7
      %v9329 = vrot.slane %v9192, 7
      %v9330 = vsel %vm6971, %v9328, %v9329
      %v9331 = vrot.slane %v9193, 7
      %v9332 = vrot.slane %v9194, 7
      %v9333 = vsel %vm6971, %v9331, %v9332
      %v9334 = vrot.slane %v9195, 7
      %v9335 = vrot.slane %v9196, 7
      %v9336 = vsel %vm6971, %v9334, %v9335
      %v9337 = vrot.slane %v9197, 7
      %v9338 = vrot.slane %v9198, 7
      %v9339 = vsel %vm6971, %v9337, %v9338
      %v9340 = vrot.slane %v9199, 7
      %v9341 = vrot.slane %v9200, 7
      %v9342 = vsel %vm6971, %v9340, %v9341
      %v9343 = vrot.slane %v9201, 7
      %v9344 = vrot.slane %v9202, 7
      %v9345 = vsel %vm6971, %v9343, %v9344
      %v9346 = vrot.slane %v9203, 7
      %v9347 = vrot.slane %v9204, 7
      %v9348 = vsel %vm6971, %v9346, %v9347
      %v9349 = vrot.slane %v9205, 7
      %v9350 = vrot.slane %v9206, 7
      %v9351 = vsel %vm6971, %v9349, %v9350
      %v9352 = vrot.slane %v9207, 7
      %v9353 = vrot.slane %v9208, 7
      %v9354 = vsel %vm6971, %v9352, %v9353
      %v9355 = vrot.slane %v9209, 7
      %v9356 = vrot.slane %v9210, 7
      %v9357 = vsel %vm6971, %v9355, %v9356
      %v9358 = vrot.slane %v9211, 7
      %v9359 = vrot.slane %v9212, 7
      %v9360 = vsel %vm6971, %v9358, %v9359
      %v9361 = vrot.slane %v9213, 7
      %v9362 = vrot.slane %v9214, 7
      %v9363 = vsel %vm6971, %v9361, %v9362
      %v9364 = vrot.slane %v9215, 7
      %v9365 = vrot.slane %v9216, 7
      %v9366 = vsel %vm6971, %v9364, %v9365
      %v9367 = vrot.slane %v9217, 7
      %v9368 = vrot.slane %v9218, 7
      %v9369 = vsel %vm6971, %v9367, %v9368
      %v9417 = vsel %vm6971, 0.0, %v9322
      %v9418 = vsel %vm6971, 0.0, %v9325
      %v9419 = vsel %vm6971, 0.0, %v9328
      %v9420 = vsel %vm6971, 0.0, %v9331
      %v9421 = vsel %vm6971, 0.0, %v9334
      %v9422 = vsel %vm6971, 0.0, %v9337
      %v9423 = vsel %vm6971, 0.0, %v9340
      %v9424 = vsel %vm6971, 0.0, %v9343
      %v9425 = vsel %vm6971, 0.0, %v9346
      %v9426 = vsel %vm6971, 0.0, %v9349
      %v9427 = vsel %vm6971, 0.0, %v9352
      %v9428 = vsel %vm6971, 0.0, %v9355
      %v9429 = vsel %vm6971, 0.0, %v9358
      %v9430 = vsel %vm6971, 0.0, %v9361
      %v9431 = vsel %vm6971, 0.0, %v9364
      %v9432 = vsel %vm6971, 0.0, %v9367
      %v9433 = vsel %vm6971, %v9323, 0.0
      %v9434 = vsel %vm6971, %v9326, 0.0
      %v9435 = vsel %vm6971, %v9329, 0.0
      %v9436 = vsel %vm6971, %v9332, 0.0
      %v9437 = vsel %vm6971, %v9335, 0.0
      %v9438 = vsel %vm6971, %v9338, 0.0
      %v9439 = vsel %vm6971, %v9341, 0.0
      %v9440 = vsel %vm6971, %v9344, 0.0
      %v9441 = vsel %vm6971, %v9347, 0.0
      %v9442 = vsel %vm6971, %v9350, 0.0
      %v9443 = vsel %vm6971, %v9353, 0.0
      %v9444 = vsel %vm6971, %v9356, 0.0
      %v9445 = vsel %vm6971, %v9359, 0.0
      %v9446 = vsel %vm6971, %v9362, 0.0
      %v9447 = vsel %vm6971, %v9365, 0.0
      %v9448 = vsel %vm6971, %v9368, 0.0
      %v9463 = vrot.slane %v9417, 1
      %v9464 = vrot.slane %v9324, 1
      %v9465 = vsel %vm7419, %v9463, %v9464
      %v9466 = vrot.slane %v9433, 1
      %v9467 = vsel %vm7419, %v9464, %v9466
      %v9468 = vrot.slane %v9418, 1
      %v9469 = vrot.slane %v9327, 1
      %v9470 = vsel %vm7419, %v9468, %v9469
      %v9471 = vrot.slane %v9434, 1
      %v9472 = vsel %vm7419, %v9469, %v9471
      %v9473 = vrot.slane %v9419, 1
      %v9474 = vrot.slane %v9330, 1
      %v9475 = vsel %vm7419, %v9473, %v9474
      %v9476 = vrot.slane %v9435, 1
      %v9477 = vsel %vm7419, %v9474, %v9476
      %v9478 = vrot.slane %v9420, 1
      %v9479 = vrot.slane %v9333, 1
      %v9480 = vsel %vm7419, %v9478, %v9479
      %v9481 = vrot.slane %v9436, 1
      %v9482 = vsel %vm7419, %v9479, %v9481
      %v9483 = vrot.slane %v9421, 1
      %v9484 = vrot.slane %v9336, 1
      %v9485 = vsel %vm7419, %v9483, %v9484
      %v9486 = vrot.slane %v9437, 1
      %v9487 = vsel %vm7419, %v9484, %v9486
      %v9488 = vrot.slane %v9422, 1
      %v9489 = vrot.slane %v9339, 1
      %v9490 = vsel %vm7419, %v9488, %v9489
      %v9491 = vrot.slane %v9438, 1
      %v9492 = vsel %vm7419, %v9489, %v9491
      %v9493 = vrot.slane %v9423, 1
      %v9494 = vrot.slane %v9342, 1
      %v9495 = vsel %vm7419, %v9493, %v9494
      %v9496 = vrot.slane %v9439, 1
      %v9497 = vsel %vm7419, %v9494, %v9496
      %v9498 = vrot.slane 0.0, 2
      %v9499 = vsel %vm6260, %v9498, %v9498
      %v9500 = vrot.slane %v9417, 2
      %v9501 = vrot.slane %v9324, 2
      %v9502 = vsel %vm6260, %v9500, %v9501
      %v9503 = vrot.slane %v9433, 2
      %v9504 = vsel %vm6260, %v9501, %v9503
      %v9505 = vrot.slane %v9418, 2
      %v9506 = vrot.slane %v9327, 2
      %v9507 = vsel %vm6260, %v9505, %v9506
      %v9508 = vrot.slane %v9434, 2
      %v9509 = vsel %vm6260, %v9506, %v9508
      %v9510 = vrot.slane %v9419, 2
      %v9511 = vrot.slane %v9330, 2
      %v9512 = vsel %vm6260, %v9510, %v9511
      %v9513 = vrot.slane %v9435, 2
      %v9514 = vsel %vm6260, %v9511, %v9513
      %v9515 = vrot.slane %v9420, 2
      %v9516 = vrot.slane %v9333, 2
      %v9517 = vsel %vm6260, %v9515, %v9516
      %v9518 = vrot.slane %v9436, 2
      %v9519 = vsel %vm6260, %v9516, %v9518
      %v9520 = vrot.slane %v9421, 2
      %v9521 = vrot.slane %v9336, 2
      %v9522 = vsel %vm6260, %v9520, %v9521
      %v9523 = vrot.slane %v9437, 2
      %v9524 = vsel %vm6260, %v9521, %v9523
      %v9525 = vrot.slane %v9422, 2
      %v9526 = vrot.slane %v9339, 2
      %v9527 = vsel %vm6260, %v9525, %v9526
      %v9528 = vrot.slane %v9438, 2
      %v9529 = vsel %vm6260, %v9526, %v9528
      %v9530 = vrot.slane %v9423, 2
      %v9531 = vrot.slane %v9342, 2
      %v9532 = vsel %vm6260, %v9530, %v9531
      %v9533 = vrot.slane %v9439, 2
      %v9534 = vsel %vm6260, %v9531, %v9533
      %v9537 = vrot.slane %v9424, 1
      %v9538 = vrot.slane %v9345, 1
      %v9539 = vsel %vm7419, %v9537, %v9538
      %v9540 = vrot.slane %v9440, 1
      %v9541 = vsel %vm7419, %v9538, %v9540
      %v9558 = vrot.slane %v9424, 2
      %v9559 = vrot.slane %v9345, 2
      %v9560 = vsel %vm6260, %v9558, %v9559
      %v9561 = vrot.slane %v9440, 2
      %v9562 = vsel %vm6260, %v9559, %v9561
      %v9565 = vrot.slane %v9425, 1
      %v9566 = vrot.slane %v9348, 1
      %v9567 = vsel %vm7419, %v9565, %v9566
      %v9568 = vrot.slane %v9441, 1
      %v9569 = vsel %vm7419, %v9566, %v9568
      %v9570 = vrot.slane %v9425, 2
      %v9571 = vrot.slane %v9348, 2
      %v9572 = vsel %vm6260, %v9570, %v9571
      %v9573 = vrot.slane %v9441, 2
      %v9574 = vsel %vm6260, %v9571, %v9573
      %9591 = vrot.lane.b32.xlu0 %v9465, 32
      %v9592 = vpop.permute.xlu0 %9591
      %9593 = vrot.lane.b32.xlu0 %v9467, 32
      %v9594 = vpop.permute.xlu0 %9593
      %9595 = vrot.lane.b32.xlu0 %v9470, 32
      %v9596 = vpop.permute.xlu0 %9595
      %9597 = vrot.lane.b32.xlu0 %v9472, 32
      %v9598 = vpop.permute.xlu0 %9597
      %9599 = vrot.lane.b32.xlu0 %v9475, 32
      %v9600 = vpop.permute.xlu0 %9599
      %9601 = vrot.lane.b32.xlu0 %v9477, 32
      %v9602 = vpop.permute.xlu0 %9601
      %9603 = vrot.lane.b32.xlu0 %v9480, 32
      %v9604 = vpop.permute.xlu0 %9603
      %9605 = vrot.lane.b32.xlu0 %v9482, 32
      %v9606 = vpop.permute.xlu0 %9605
      %9607 = vrot.lane.b32.xlu0 %v9485, 32
      %v9608 = vpop.permute.xlu0 %9607
      %9609 = vrot.lane.b32.xlu0 %v9487, 32
      %v9610 = vpop.permute.xlu0 %9609
      %9611 = vrot.lane.b32.xlu0 %v9490, 32
      %v9612 = vpop.permute.xlu0 %9611
      %9613 = vrot.lane.b32.xlu0 %v9492, 32
      %v9614 = vpop.permute.xlu0 %9613
      %9615 = vrot.lane.b32.xlu0 %v9495, 32
      %v9616 = vpop.permute.xlu0 %9615
      %9617 = vrot.lane.b32.xlu0 %v9497, 32
      %v9618 = vpop.permute.xlu0 %9617
      %9633 = vrot.lane.b32.xlu0 %v9499, 64
      %v9634 = vpop.permute.xlu0 %9633
      %9635 = vrot.lane.b32.xlu0 %v9502, 64
      %v9636 = vpop.permute.xlu0 %9635
      %9637 = vrot.lane.b32.xlu0 %v9504, 64
      %v9638 = vpop.permute.xlu0 %9637
      %9639 = vrot.lane.b32.xlu0 %v9507, 64
      %v9640 = vpop.permute.xlu0 %9639
      %9641 = vrot.lane.b32.xlu0 %v9509, 64
      %v9642 = vpop.permute.xlu0 %9641
      %9643 = vrot.lane.b32.xlu0 %v9512, 64
      %v9644 = vpop.permute.xlu0 %9643
      %9645 = vrot.lane.b32.xlu0 %v9514, 64
      %v9646 = vpop.permute.xlu0 %9645
      %9647 = vrot.lane.b32.xlu0 %v9517, 64
      %v9648 = vpop.permute.xlu0 %9647
      %9649 = vrot.lane.b32.xlu0 %v9519, 64
      %v9650 = vpop.permute.xlu0 %9649
      %9651 = vrot.lane.b32.xlu0 %v9522, 64
      %v9652 = vpop.permute.xlu0 %9651
      %9653 = vrot.lane.b32.xlu0 %v9524, 64
      %v9654 = vpop.permute.xlu0 %9653
      %9655 = vrot.lane.b32.xlu0 %v9527, 64
      %v9656 = vpop.permute.xlu0 %9655
      %9657 = vrot.lane.b32.xlu0 %v9529, 64
      %v9658 = vpop.permute.xlu0 %9657
      %9659 = vrot.lane.b32.xlu0 %v9532, 64
      %v9660 = vpop.permute.xlu0 %9659
      %9661 = vrot.lane.b32.xlu0 %v9534, 64
      %v9662 = vpop.permute.xlu0 %9661
      %9678 = vrot.lane.b32.xlu0 %v9417, 96
      %v9679 = vpop.permute.xlu0 %9678
      %9680 = vrot.lane.b32.xlu0 %v9324, 96
      %v9681 = vpop.permute.xlu0 %9680
      %9682 = vrot.lane.b32.xlu0 %v9418, 96
      %v9683 = vpop.permute.xlu0 %9682
      %9684 = vrot.lane.b32.xlu0 %v9327, 96
      %v9685 = vpop.permute.xlu0 %9684
      %9686 = vrot.lane.b32.xlu0 %v9419, 96
      %v9687 = vpop.permute.xlu0 %9686
      %9688 = vrot.lane.b32.xlu0 %v9330, 96
      %v9689 = vpop.permute.xlu0 %9688
      %9690 = vrot.lane.b32.xlu0 %v9420, 96
      %v9691 = vpop.permute.xlu0 %9690
      %9692 = vrot.lane.b32.xlu0 %v9333, 96
      %v9693 = vpop.permute.xlu0 %9692
      %9694 = vrot.lane.b32.xlu0 %v9421, 96
      %v9695 = vpop.permute.xlu0 %9694
      %9696 = vrot.lane.b32.xlu0 %v9336, 96
      %v9697 = vpop.permute.xlu0 %9696
      %9698 = vrot.lane.b32.xlu0 %v9422, 96
      %v9699 = vpop.permute.xlu0 %9698
      %9700 = vrot.lane.b32.xlu0 %v9339, 96
      %v9701 = vpop.permute.xlu0 %9700
      %9702 = vrot.lane.b32.xlu0 %v9423, 96
      %v9703 = vpop.permute.xlu0 %9702
      %9704 = vrot.lane.b32.xlu0 %v9342, 96
      %v9705 = vpop.permute.xlu0 %9704
      %9706 = vrot.lane.b32.xlu0 %v9424, 96
      %v9707 = vpop.permute.xlu0 %9706
      %9708 = vrot.lane.b32.xlu0 %v9345, 96
      %v9709 = vpop.permute.xlu0 %9708
      %9726 = vrot.lane.b32.xlu0 %v9502, 32
      %v9727 = vpop.permute.xlu0 %9726
      %9728 = vrot.lane.b32.xlu0 %v9504, 32
      %v9729 = vpop.permute.xlu0 %9728
      %9730 = vrot.lane.b32.xlu0 %v9507, 32
      %v9731 = vpop.permute.xlu0 %9730
      %9732 = vrot.lane.b32.xlu0 %v9509, 32
      %v9733 = vpop.permute.xlu0 %9732
      %9734 = vrot.lane.b32.xlu0 %v9512, 32
      %v9735 = vpop.permute.xlu0 %9734
      %9736 = vrot.lane.b32.xlu0 %v9514, 32
      %v9737 = vpop.permute.xlu0 %9736
      %9738 = vrot.lane.b32.xlu0 %v9517, 32
      %v9739 = vpop.permute.xlu0 %9738
      %9740 = vrot.lane.b32.xlu0 %v9519, 32
      %v9741 = vpop.permute.xlu0 %9740
      %9742 = vrot.lane.b32.xlu0 %v9522, 32
      %v9743 = vpop.permute.xlu0 %9742
      %9744 = vrot.lane.b32.xlu0 %v9524, 32
      %v9745 = vpop.permute.xlu0 %9744
      %9746 = vrot.lane.b32.xlu0 %v9527, 32
      %v9747 = vpop.permute.xlu0 %9746
      %9748 = vrot.lane.b32.xlu0 %v9529, 32
      %v9749 = vpop.permute.xlu0 %9748
      %9750 = vrot.lane.b32.xlu0 %v9532, 32
      %v9751 = vpop.permute.xlu0 %9750
      %9752 = vrot.lane.b32.xlu0 %v9534, 32
      %v9753 = vpop.permute.xlu0 %9752
      %9754 = vrot.lane.b32.xlu0 %v9560, 32
      %v9755 = vpop.permute.xlu0 %9754
      %9756 = vrot.lane.b32.xlu0 %v9562, 32
      %v9757 = vpop.permute.xlu0 %9756
      %9774 = vrot.lane.b32.xlu0 %v9418, 64
      %v9775 = vpop.permute.xlu0 %9774
      %9776 = vrot.lane.b32.xlu0 %v9327, 64
      %v9777 = vpop.permute.xlu0 %9776
      %9778 = vrot.lane.b32.xlu0 %v9419, 64
      %v9779 = vpop.permute.xlu0 %9778
      %9780 = vrot.lane.b32.xlu0 %v9330, 64
      %v9781 = vpop.permute.xlu0 %9780
      %9782 = vrot.lane.b32.xlu0 %v9420, 64
      %v9783 = vpop.permute.xlu0 %9782
      %9784 = vrot.lane.b32.xlu0 %v9333, 64
      %v9785 = vpop.permute.xlu0 %9784
      %9786 = vrot.lane.b32.xlu0 %v9421, 64
      %v9787 = vpop.permute.xlu0 %9786
      %9788 = vrot.lane.b32.xlu0 %v9336, 64
      %v9789 = vpop.permute.xlu0 %9788
      %9790 = vrot.lane.b32.xlu0 %v9422, 64
      %v9791 = vpop.permute.xlu0 %9790
      %9792 = vrot.lane.b32.xlu0 %v9339, 64
      %v9793 = vpop.permute.xlu0 %9792
      %9794 = vrot.lane.b32.xlu0 %v9423, 64
      %v9795 = vpop.permute.xlu0 %9794
      %9796 = vrot.lane.b32.xlu0 %v9342, 64
      %v9797 = vpop.permute.xlu0 %9796
      %9798 = vrot.lane.b32.xlu0 %v9424, 64
      %v9799 = vpop.permute.xlu0 %9798
      %9800 = vrot.lane.b32.xlu0 %v9345, 64
      %v9801 = vpop.permute.xlu0 %9800
      %9802 = vrot.lane.b32.xlu0 %v9425, 64
      %v9803 = vpop.permute.xlu0 %9802
      %9804 = vrot.lane.b32.xlu0 %v9348, 64
      %v9805 = vpop.permute.xlu0 %9804
      %9822 = vrot.lane.b32.xlu0 %v9470, 96
      %v9823 = vpop.permute.xlu0 %9822
      %9824 = vrot.lane.b32.xlu0 %v9472, 96
      %v9825 = vpop.permute.xlu0 %9824
      %9826 = vrot.lane.b32.xlu0 %v9475, 96
      %v9827 = vpop.permute.xlu0 %9826
      %9828 = vrot.lane.b32.xlu0 %v9477, 96
      %v9829 = vpop.permute.xlu0 %9828
      %9830 = vrot.lane.b32.xlu0 %v9480, 96
      %v9831 = vpop.permute.xlu0 %9830
      %9832 = vrot.lane.b32.xlu0 %v9482, 96
      %v9833 = vpop.permute.xlu0 %9832
      %9834 = vrot.lane.b32.xlu0 %v9485, 96
      %v9835 = vpop.permute.xlu0 %9834
      %9836 = vrot.lane.b32.xlu0 %v9487, 96
      %v9837 = vpop.permute.xlu0 %9836
      %9838 = vrot.lane.b32.xlu0 %v9490, 96
      %v9839 = vpop.permute.xlu0 %9838
      %9840 = vrot.lane.b32.xlu0 %v9492, 96
      %v9841 = vpop.permute.xlu0 %9840
      %9842 = vrot.lane.b32.xlu0 %v9495, 96
      %v9843 = vpop.permute.xlu0 %9842
      %9844 = vrot.lane.b32.xlu0 %v9497, 96
      %v9845 = vpop.permute.xlu0 %9844
      %9846 = vrot.lane.b32.xlu0 %v9539, 96
      %v9847 = vpop.permute.xlu0 %9846
      %9848 = vrot.lane.b32.xlu0 %v9541, 96
      %v9849 = vpop.permute.xlu0 %9848
      %9850 = vrot.lane.b32.xlu0 %v9567, 96
      %v9851 = vpop.permute.xlu0 %9850
      %9852 = vrot.lane.b32.xlu0 %v9569, 96
      %v9853 = vpop.permute.xlu0 %9852
      %v9870 = vsel %vm8425, %v9417, %v9592
      %v9871 = vsel %vm8425, %v9324, %v9594
      %v9872 = vsel %vm8425, %v9418, %v9596
      %v9873 = vsel %vm8425, %v9327, %v9598
      %v9874 = vsel %vm8425, %v9419, %v9600
      %v9875 = vsel %vm8425, %v9330, %v9602
      %v9876 = vsel %vm8425, %v9420, %v9604
      %v9877 = vsel %vm8425, %v9333, %v9606
      %v9878 = vsel %vm8425, %v9421, %v9608
      %v9879 = vsel %vm8425, %v9336, %v9610
      %v9880 = vsel %vm8425, %v9422, %v9612
      %v9881 = vsel %vm8425, %v9339, %v9614
      %v9882 = vsel %vm8425, %v9423, %v9616
      %v9883 = vsel %vm8425, %v9342, %v9618
      %v9884 = vsel %vm8457, %v8426, %v9634
      %v9885 = vsel %vm8457, %v9870, %v9636
      %v9886 = vsel %vm8457, %v9871, %v9638
      %v9887 = vsel %vm8457, %v9872, %v9640
      %v9888 = vsel %vm8457, %v9873, %v9642
      %v9889 = vsel %vm8457, %v9874, %v9644
      %v9890 = vsel %vm8457, %v9875, %v9646
      %v9891 = vsel %vm8457, %v9876, %v9648
      %v9892 = vsel %vm8457, %v9877, %v9650
      %v9893 = vsel %vm8457, %v9878, %v9652
      %v9894 = vsel %vm8457, %v9879, %v9654
      %v9895 = vsel %vm8457, %v9880, %v9656
      %v9896 = vsel %vm8457, %v9881, %v9658
      %v9897 = vsel %vm8457, %v9882, %v9660
      %v9898 = vsel %vm8457, %v9883, %v9662
      %v9899 = vsel %vm8489, %v9884, %v9679
      %v9900 = vsel %vm8489, %v9884, %v9681
      %v9901 = vsel %vm8489, %v9885, %v9683
      %v9902 = vsel %vm8489, %v9886, %v9685
      %v9903 = vsel %vm8489, %v9887, %v9687
      %v9904 = vsel %vm8489, %v9888, %v9689
      %v9905 = vsel %vm8489, %v9889, %v9691
      %v9906 = vsel %vm8489, %v9890, %v9693
      %v9907 = vsel %vm8489, %v9891, %v9695
      %v9908 = vsel %vm8489, %v9892, %v9697
      %v9909 = vsel %vm8489, %v9893, %v9699
      %v9910 = vsel %vm8489, %v9894, %v9701
      %v9911 = vsel %vm8489, %v9895, %v9703
      %v9912 = vsel %vm8489, %v9896, %v9705
      %v9913 = vsel %vm8489, %v9897, %v9707
      %v9914 = vsel %vm8489, %v9898, %v9709
      %v9915 = vsel %vm8425, %v9465, %v9727
      %v9916 = vsel %vm8425, %v9467, %v9729
      %v9917 = vsel %vm8425, %v9470, %v9731
      %v9918 = vsel %vm8425, %v9472, %v9733
      %v9919 = vsel %vm8425, %v9475, %v9735
      %v9920 = vsel %vm8425, %v9477, %v9737
      %v9921 = vsel %vm8425, %v9480, %v9739
      %v9922 = vsel %vm8425, %v9482, %v9741
      %v9923 = vsel %vm8425, %v9485, %v9743
      %v9924 = vsel %vm8425, %v9487, %v9745
      %v9925 = vsel %vm8425, %v9490, %v9747
      %v9926 = vsel %vm8425, %v9492, %v9749
      %v9927 = vsel %vm8425, %v9495, %v9751
      %v9928 = vsel %vm8425, %v9497, %v9753
      %v9929 = vsel %vm8425, %v9539, %v9755
      %v9930 = vsel %vm8425, %v9541, %v9757
      %v9931 = vsel %vm8457, %v9915, %v9775
      %v9932 = vsel %vm8457, %v9916, %v9777
      %v9933 = vsel %vm8457, %v9917, %v9779
      %v9934 = vsel %vm8457, %v9918, %v9781
      %v9935 = vsel %vm8457, %v9919, %v9783
      %v9936 = vsel %vm8457, %v9920, %v9785
      %v9937 = vsel %vm8457, %v9921, %v9787
      %v9938 = vsel %vm8457, %v9922, %v9789
      %v9939 = vsel %vm8457, %v9923, %v9791
      %v9940 = vsel %vm8457, %v9924, %v9793
      %v9941 = vsel %vm8457, %v9925, %v9795
      %v9942 = vsel %vm8457, %v9926, %v9797
      %v9943 = vsel %vm8457, %v9927, %v9799
      %v9944 = vsel %vm8457, %v9928, %v9801
      %v9945 = vsel %vm8457, %v9929, %v9803
      %v9946 = vsel %vm8457, %v9930, %v9805
      %v9947 = vsel %vm8489, %v9931, %v9823
      %v9948 = vsel %vm8489, %v9932, %v9825
      %v9949 = vsel %vm8489, %v9933, %v9827
      %v9950 = vsel %vm8489, %v9934, %v9829
      %v9951 = vsel %vm8489, %v9935, %v9831
      %v9952 = vsel %vm8489, %v9936, %v9833
      %v9953 = vsel %vm8489, %v9937, %v9835
      %v9954 = vsel %vm8489, %v9938, %v9837
      %v9955 = vsel %vm8489, %v9939, %v9839
      %v9956 = vsel %vm8489, %v9940, %v9841
      %v9957 = vsel %vm8489, %v9941, %v9843
      %v9958 = vsel %vm8489, %v9942, %v9845
      %v9959 = vsel %vm8489, %v9943, %v9847
      %v9960 = vsel %vm8489, %v9944, %v9849
      %v9961 = vsel %vm8489, %v9945, %v9851
      %v9962 = vsel %vm8489, %v9946, %v9853
      %v9963 = vpack.c.bf16 %v9900, %v9899
      %v9964 = vpack.c.bf16 %v9948, %v9947
      %v9965 = vpack.c.bf16 %v9509, %v9507
      %v9966 = vpack.c.bf16 %v9902, %v9901
      %v9967 = vpack.c.bf16 %v9950, %v9949
      %v9968 = vpack.c.bf16 %v9514, %v9512
      %v9969 = vpack.c.bf16 %v9904, %v9903
      %v9970 = vpack.c.bf16 %v9952, %v9951
      %v9971 = vpack.c.bf16 %v9519, %v9517
      %v9972 = vpack.c.bf16 %v9906, %v9905
      %v9973 = vpack.c.bf16 %v9954, %v9953
      %v9974 = vpack.c.bf16 %v9524, %v9522
      %v9975 = vpack.c.bf16 %v9908, %v9907
      %v9976 = vpack.c.bf16 %v9956, %v9955
      %v9977 = vpack.c.bf16 %v9529, %v9527
      %v9978 = vpack.c.bf16 %v9910, %v9909
      %v9979 = vpack.c.bf16 %v9958, %v9957
      %v9980 = vpack.c.bf16 %v9534, %v9532
      %v9981 = vpack.c.bf16 %v9912, %v9911
      %v9982 = vpack.c.bf16 %v9960, %v9959
      %v9983 = vpack.c.bf16 %v9562, %v9560
      %v9984 = vpack.c.bf16 %v9914, %v9913
      %v9985 = vpack.c.bf16 %v9962, %v9961
      %v9986 = vpack.c.bf16 %v9574, %v9572
      %v9987 = vld [vmem:[%s5] sm:$0xf]
      %v9988 = vld [vmem:[%s5 + $0x4] sm:$0xf]
      %v9989 = vld [vmem:[%s5 + $0x8] sm:$0xf]
      %v9990 = vld [vmem:[%s5 + $0xc] sm:$0xf]
      %v9991 = vld [vmem:[%s5 + $0x10] sm:$0xf]
      %v9992 = vld [vmem:[%s5 + $0x14] sm:$0xf]
      %v9993 = vld [vmem:[%s5 + $0x18] sm:$0xf]
      %v9994 = vld [vmem:[%s5 + $0x1c] sm:$0xf]
      %v9995 = vld [vmem:[%s5 + $0x20] sm:$0xf]
      %v9996 = vld [vmem:[%s5 + $0x24] sm:$0xf]
      %v9997 = vld [vmem:[%s5 + $0x28] sm:$0xf]
      %v9998 = vld [vmem:[%s5 + $0x2c] sm:$0xf]
      %v9999 = vld [vmem:[%s5 + $0x30] sm:$0xf]
      %v10000 = vld [vmem:[%s5 + $0x34] sm:$0xf]
      %v10001 = vld [vmem:[%s5 + $0x38] sm:$0xf]
      %v10002 = vld [vmem:[%s5 + $0x3c] sm:$0xf]
      %v10003 = vld [vmem:[%s5 + $0x40] sm:$0xf]
      %v10004 = vld [vmem:[%s5 + $0x44] sm:$0xf]
      %v10005 = vld [vmem:[%s5 + $0x48] sm:$0xf]
      %v10006 = vld [vmem:[%s5 + $0x4c] sm:$0xf]
      %v10007 = vld [vmem:[%s5 + $0x50] sm:$0xf]
      %v10008 = vld [vmem:[%s5 + $0x54] sm:$0xf]
      %v10009 = vld [vmem:[%s5 + $0x58] sm:$0xf]
      %v10010 = vld [vmem:[%s5 + $0x5c] sm:$0xf]
      %v10011 = vld [vmem:[%s5 + $0x60] sm:$0xf]
      %v10012 = vld [vmem:[%s5 + $0x64] sm:$0xf]
      %v10013 = vld [vmem:[%s5 + $0x68] sm:$0xf]
      %v10014 = vld [vmem:[%s5 + $0x6c] sm:$0xf]
      %v10015 = vld [vmem:[%s5 + $0x70] sm:$0xf]
      %v10016 = vld [vmem:[%s5 + $0x74] sm:$0xf]
      %v10017 = vld [vmem:[%s5 + $0x78] sm:$0xf]
      %v10018 = vld [vmem:[%s5 + $0x7c] sm:$0xf]
      %v10019 = vld [vmem:[%s5 + $0x80] sm:$0xf]
      %v10020 = vld [vmem:[%s5 + $0x84] sm:$0xf]
      %v10021 = vld [vmem:[%s5 + $0x88] sm:$0xf]
      %v10022 = vld [vmem:[%s5 + $0x8c] sm:$0xf]
      %v10023 = vld [vmem:[%s6] sm:$0x1]
      %v10025 = vlaneseq
      %v10026 = vshrl.u32 %v10025, 7
      %v10027 = vsub.s32 0, %v10026
      %v10028 = vrot.slane %v10023, %v10027
      %v10066 = vunpack.c.l.b16 %v9987
      %v10067 = vunpack.c.l.b16 %v9988
      %v10068 = vunpack.c.l.b16 %v9989
      %v10069 = vunpack.c.l.b16 %v9990
      %v10070 = vunpack.c.l.b16 %v9991
      %v10071 = vunpack.c.l.b16 %v9992
      %v10072 = vunpack.c.l.b16 %v9993
      %v10073 = vunpack.c.l.b16 %v9994
      %v10074 = vunpack.c.l.b16 %v9995
      %v10075 = vunpack.c.l.b16 %v9996
      %v10076 = vunpack.c.l.b16 %v9997
      %v10077 = vunpack.c.l.b16 %v9998
      %v10078 = vunpack.c.l.b16 %v9999
      %v10079 = vunpack.c.l.b16 %v10000
      %v10080 = vunpack.c.l.b16 %v10001
      %v10081 = vunpack.c.l.b16 %v10002
      %v10082 = vunpack.c.l.b16 %v10003
      %v10083 = vunpack.c.l.b16 %v10004
      %v10084 = vunpack.c.l.b16 %v10005
      %v10085 = vunpack.c.l.b16 %v10006
      %v10086 = vunpack.c.l.b16 %v10007
      %v10087 = vunpack.c.l.b16 %v10008
      %v10088 = vunpack.c.l.b16 %v10009
      %v10089 = vunpack.c.l.b16 %v10010
      %v10090 = vunpack.c.l.b16 %v10011
      %v10091 = vunpack.c.l.b16 %v10012
      %v10092 = vunpack.c.l.b16 %v10013
      %v10093 = vunpack.c.l.b16 %v10014
      %v10094 = vunpack.c.l.b16 %v10015
      %v10095 = vunpack.c.l.b16 %v10016
      %v10096 = vunpack.c.l.b16 %v10017
      %v10097 = vunpack.c.l.b16 %v10018
      %v10098 = vunpack.c.l.b16 %v10019
      %v10099 = vunpack.c.l.b16 %v10020
      %v10100 = vunpack.c.l.b16 %v10021
      %v10101 = vunpack.c.l.b16 %v10022
      %v10102 = vpack.c.b16 %v10067, %v10066
      %v10103 = vpack.c.b16 %v10069, %v10068
      %v10104 = vpack.c.b16 %v10071, %v10070
      %v10105 = vpack.c.b16 %v10073, %v10072
      %v10106 = vpack.c.b16 %v10075, %v10074
      %v10107 = vpack.c.b16 %v10077, %v10076
      %v10108 = vpack.c.b16 %v10079, %v10078
      %v10109 = vpack.c.b16 %v10081, %v10080
      %v10110 = vpack.c.b16 %v10083, %v10082
      %v10111 = vpack.c.b16 %v10085, %v10084
      %v10112 = vpack.c.b16 %v10087, %v10086
      %v10113 = vpack.c.b16 %v10089, %v10088
      %v10114 = vpack.c.b16 %v10091, %v10090
      %v10115 = vpack.c.b16 %v10093, %v10092
      %v10116 = vpack.c.b16 %v10095, %v10094
      %v10117 = vpack.c.b16 %v10097, %v10096
      %v10118 = vpack.c.b16 %v10099, %v10098
      %v10119 = vpack.c.b16 %v10101, %v10100
      %v10139 = vsel %vm8425, %v9965, 0
      %v10142 = vsel %vm8425, %v9968, 0
      %v10145 = vsel %vm8425, %v9971, 0
      %v10148 = vsel %vm8425, %v9974, 0
      %v10151 = vsel %vm8425, %v9977, 0
      %v10154 = vsel %vm8425, %v9980, 0
      %v10157 = vsel %vm8425, %v9983, 0
      %v10160 = vsel %vm8425, %v9986, 0
      %10162 = vmatprep.subr.bf16.mxu0 0
      %10163 = vmatpush1.bf16.msra.mxu0 %v10109
      %10164 = vmatprep.subr.bf16.mxu0 0
      %10165 = vmatpush1.bf16.msra.mxu0 %v10108
      %10166 = vmatprep.subr.bf16.mxu0 0
      %10167 = vmatpush1.bf16.msra.mxu0 %v10107
      %10168 = vmatprep.subr.bf16.mxu0 0
      %10169 = vmatpush1.bf16.msra.mxu0 %v10106
      %10170 = vmatprep.subr.bf16.mxu0 0
      %10171 = vmatpush1.bf16.msra.mxu0 %v10105
      %10172 = vmatprep.subr.bf16.mxu0 0
      %10173 = vmatpush1.bf16.msra.mxu0 %v10104
      %10174 = vmatprep.subr.bf16.mxu0 0
      %10175 = vmatpush1.bf16.msra.mxu0 %v10103
      %10176 = vmatprep.subr.bf16.mxu0 0
      %10177 = vmatpush1.bf16.msra.mxu0 %v10102
      %10178 = vmatprep.subr.bf16.mxu0 0
      %10179 = vmatpush2.bf16.msra.mxu0 %v10117
      %10180 = vmatprep.subr.bf16.mxu0 0
      %10181 = vmatpush2.bf16.msra.mxu0 %v10116
      %10182 = vmatprep.subr.bf16.mxu0 0
      %10183 = vmatpush2.bf16.msra.mxu0 %v10115
      %10184 = vmatprep.subr.bf16.mxu0 0
      %10185 = vmatpush2.bf16.msra.mxu0 %v10114
      %10186 = vmatprep.subr.bf16.mxu0 0
      %10187 = vmatpush2.bf16.msra.mxu0 %v10113
      %10188 = vmatprep.subr.bf16.mxu0 0
      %10189 = vmatpush2.bf16.msra.mxu0 %v10112
      %10190 = vmatprep.subr.bf16.mxu0 0
      %10191 = vmatpush2.bf16.msra.mxu0 %v10111
      %10192 = vmatprep.subr.bf16.mxu0 0
      %10193 = vmatpush2.bf16.msra.mxu0 %v10110
      %10194 = vmatprep.mubr.bf16.mxu0 %v9964
      %10195 = vmatmul.mubr.bf16.gmra.mxu0 %v9963
      %v10196 = vpop.f32.mrf.mxu0
      %v10197 = vadd.f32 %v10028, %v10196
      %v10198 = vpop.f32.mrf.mxu0
      %v10199 = vpop.f32.mrf.mxu0
      %v10200 = vadd.f32 %v10028, %v10199
      %v10201 = vpop.f32.mrf.mxu0
      %10202 = vmatprep.mubr.bf16.mxu0 %v9967
      %10203 = vmatmul.mubr.bf16.gmra.mxu0 %v9966
      %v10204 = vpop.f32.mrf.mxu0
      %v10205 = vadd.f32 %v10028, %v10204
      %v10206 = vpop.f32.mrf.mxu0
      %v10207 = vpop.f32.mrf.mxu0
      %v10208 = vadd.f32 %v10028, %v10207
      %v10209 = vpop.f32.mrf.mxu0
      %10210 = vmatprep.mubr.bf16.mxu0 %v9970
      %10211 = vmatmul.mubr.bf16.gmra.mxu0 %v9969
      %v10212 = vpop.f32.mrf.mxu0
      %v10213 = vadd.f32 %v10028, %v10212
      %v10214 = vpop.f32.mrf.mxu0
      %v10215 = vpop.f32.mrf.mxu0
      %v10216 = vadd.f32 %v10028, %v10215
      %v10217 = vpop.f32.mrf.mxu0
      %10218 = vmatprep.mubr.bf16.mxu0 %v9973
      %10219 = vmatmul.mubr.bf16.gmra.mxu0 %v9972
      %v10220 = vpop.f32.mrf.mxu0
      %v10221 = vadd.f32 %v10028, %v10220
      %v10222 = vpop.f32.mrf.mxu0
      %v10223 = vpop.f32.mrf.mxu0
      %v10224 = vadd.f32 %v10028, %v10223
      %v10225 = vpop.f32.mrf.mxu0
      %10226 = vmatprep.mubr.bf16.mxu0 %v9976
      %10227 = vmatmul.mubr.bf16.gmra.mxu0 %v9975
      %v10228 = vpop.f32.mrf.mxu0
      %v10229 = vadd.f32 %v10028, %v10228
      %v10230 = vpop.f32.mrf.mxu0
      %v10231 = vpop.f32.mrf.mxu0
      %v10232 = vadd.f32 %v10028, %v10231
      %v10233 = vpop.f32.mrf.mxu0
      %10234 = vmatprep.mubr.bf16.mxu0 %v9979
      %10235 = vmatmul.mubr.bf16.gmra.mxu0 %v9978
      %v10236 = vpop.f32.mrf.mxu0
      %v10237 = vadd.f32 %v10028, %v10236
      %v10238 = vpop.f32.mrf.mxu0
      %v10239 = vpop.f32.mrf.mxu0
      %v10240 = vadd.f32 %v10028, %v10239
      %v10241 = vpop.f32.mrf.mxu0
      %10242 = vmatprep.mubr.bf16.mxu0 %v9982
      %10243 = vmatmul.mubr.bf16.gmra.mxu0 %v9981
      %v10244 = vpop.f32.mrf.mxu0
      %v10245 = vadd.f32 %v10028, %v10244
      %v10246 = vpop.f32.mrf.mxu0
      %v10247 = vpop.f32.mrf.mxu0
      %v10248 = vadd.f32 %v10028, %v10247
      %v10249 = vpop.f32.mrf.mxu0
      %10250 = vmatprep.mubr.bf16.mxu0 %v9985
      %10251 = vmatmul.mubr.bf16.gmra.mxu0 %v9984
      %v10252 = vpop.f32.mrf.mxu0
      %v10253 = vadd.f32 %v10028, %v10252
      %v10254 = vpop.f32.mrf.mxu0
      %v10255 = vpop.f32.mrf.mxu0
      %v10256 = vadd.f32 %v10028, %v10255
      %v10257 = vpop.f32.mrf.mxu0
      %10258 = vdwg.mxu0
      %10259 = vmatprep.subr.bf16.mxu0 0
      %10260 = vmatpush1.bf16.msra.mxu0 0
      %10261 = vmatprep.subr.bf16.mxu0 0
      %10262 = vmatpush1.bf16.msra.mxu0 0
      %10263 = vmatprep.subr.bf16.mxu0 0
      %10264 = vmatpush1.bf16.msra.mxu0 0
      %10265 = vmatprep.subr.bf16.mxu0 0
      %10266 = vmatpush1.bf16.msra.mxu0 0
      %10267 = vmatprep.subr.bf16.mxu0 0
      %10268 = vmatpush1.bf16.msra.mxu0 0
      %10269 = vmatprep.subr.bf16.mxu0 0
      %10270 = vmatpush1.bf16.msra.mxu0 0
      %10271 = vmatprep.subr.bf16.mxu0 0
      %10272 = vmatpush1.bf16.msra.mxu0 %v10119
      %10273 = vmatprep.subr.bf16.mxu0 0
      %10274 = vmatpush1.bf16.msra.mxu0 %v10118
      %10275 = vmatprep.subr.bf16.mxu0 0
      %10276 = vmatpush2.bf16.msra.mxu0 0
      %10277 = vmatprep.subr.bf16.mxu0 0
      %10278 = vmatpush2.bf16.msra.mxu0 0
      %10279 = vmatprep.subr.bf16.mxu0 0
      %10280 = vmatpush2.bf16.msra.mxu0 0
      %10281 = vmatprep.subr.bf16.mxu0 0
      %10282 = vmatpush2.bf16.msra.mxu0 0
      %10283 = vmatprep.subr.bf16.mxu0 0
      %10284 = vmatpush2.bf16.msra.mxu0 0
      %10285 = vmatprep.subr.bf16.mxu0 0
      %10286 = vmatpush2.bf16.msra.mxu0 0
      %10287 = vmatprep.subr.bf16.mxu0 0
      %10288 = vmatpush2.bf16.msra.mxu0 0
      %10289 = vmatprep.subr.bf16.mxu0 0
      %10290 = vmatpush2.bf16.msra.mxu0 0
      %10291 = vmatprep.mubr.bf16.mxu0 0
      %10292 = vmatmul.mubr.bf16.gmra.mxu0 %v10139
      %v10293 = vpop.f32.mrf.mxu0
      %v10294 = vadd.f32 %v10197, %v10293
      %v10295 = vpop.f32.mrf.mxu0
      %v10296 = vpop.f32.mrf.mxu0
      %v10297 = vadd.f32 %v10200, %v10296
      %v10298 = vpop.f32.mrf.mxu0
      %10299 = vmatprep.mubr.bf16.mxu0 0
      %10300 = vmatmul.mubr.bf16.gmra.mxu0 %v10142
      %v10301 = vpop.f32.mrf.mxu0
      %v10302 = vadd.f32 %v10205, %v10301
      %v10303 = vpop.f32.mrf.mxu0
      %v10304 = vpop.f32.mrf.mxu0
      %v10305 = vadd.f32 %v10208, %v10304
      %v10306 = vpop.f32.mrf.mxu0
      %10307 = vmatprep.mubr.bf16.mxu0 0
      %10308 = vmatmul.mubr.bf16.gmra.mxu0 %v10145
      %v10309 = vpop.f32.mrf.mxu0
      %v10310 = vadd.f32 %v10213, %v10309
      %v10311 = vpop.f32.mrf.mxu0
      %v10312 = vpop.f32.mrf.mxu0
      %v10313 = vadd.f32 %v10216, %v10312
      %v10314 = vpop.f32.mrf.mxu0
      %10315 = vmatprep.mubr.bf16.mxu0 0
      %10316 = vmatmul.mubr.bf16.gmra.mxu0 %v10148
      %v10317 = vpop.f32.mrf.mxu0
      %v10318 = vadd.f32 %v10221, %v10317
      %v10319 = vpop.f32.mrf.mxu0
      %v10320 = vpop.f32.mrf.mxu0
      %v10321 = vadd.f32 %v10224, %v10320
      %v10322 = vpop.f32.mrf.mxu0
      %10323 = vmatprep.mubr.bf16.mxu0 0
      %10324 = vmatmul.mubr.bf16.gmra.mxu0 %v10151
      %v10325 = vpop.f32.mrf.mxu0
      %v10326 = vadd.f32 %v10229, %v10325
      %v10327 = vpop.f32.mrf.mxu0
      %v10328 = vpop.f32.mrf.mxu0
      %v10329 = vadd.f32 %v10232, %v10328
      %v10330 = vpop.f32.mrf.mxu0
      %10331 = vmatprep.mubr.bf16.mxu0 0
      %10332 = vmatmul.mubr.bf16.gmra.mxu0 %v10154
      %v10333 = vpop.f32.mrf.mxu0
      %v10334 = vadd.f32 %v10237, %v10333
      %v10335 = vpop.f32.mrf.mxu0
      %v10336 = vpop.f32.mrf.mxu0
      %v10337 = vadd.f32 %v10240, %v10336
      %v10338 = vpop.f32.mrf.mxu0
      %10339 = vmatprep.mubr.bf16.mxu0 0
      %10340 = vmatmul.mubr.bf16.gmra.mxu0 %v10157
      %v10341 = vpop.f32.mrf.mxu0
      %v10342 = vadd.f32 %v10245, %v10341
      %v10343 = vpop.f32.mrf.mxu0
      %v10344 = vpop.f32.mrf.mxu0
      %v10345 = vadd.f32 %v10248, %v10344
      %v10346 = vpop.f32.mrf.mxu0
      %10347 = vmatprep.mubr.bf16.mxu0 0
      %10348 = vmatmul.mubr.bf16.gmra.mxu0 %v10160
      %v10349 = vpop.f32.mrf.mxu0
      %v10350 = vadd.f32 %v10253, %v10349
      %v10351 = vpop.f32.mrf.mxu0
      %v10352 = vpop.f32.mrf.mxu0
      %v10353 = vadd.f32 %v10256, %v10352
      %v10354 = vpop.f32.mrf.mxu0
      %10355 = vdwg.mxu0
      %v10356 = vmax.f32 %v10294, 0.0
      %v10357 = vmax.f32 %v10297, 0.0
      %v10358 = vmax.f32 %v10302, 0.0
      %v10359 = vmax.f32 %v10305, 0.0
      %v10360 = vmax.f32 %v10310, 0.0
      %v10361 = vmax.f32 %v10313, 0.0
      %v10362 = vmax.f32 %v10318, 0.0
      %v10363 = vmax.f32 %v10321, 0.0
      %v10364 = vmax.f32 %v10326, 0.0
      %v10365 = vmax.f32 %v10329, 0.0
      %v10366 = vmax.f32 %v10334, 0.0
      %v10367 = vmax.f32 %v10337, 0.0
      %v10368 = vmax.f32 %v10342, 0.0
      %v10369 = vmax.f32 %v10345, 0.0
      %v10370 = vmax.f32 %v10350, 0.0
      %v10371 = vmax.f32 %v10353, 0.0
      %v10372 = vadd.f32 %v10356, %v10357
      %v10373 = vadd.f32 %v10372, %v10358
      %v10374 = vadd.f32 %v10373, %v10359
      %v10375 = vadd.f32 %v10374, %v10360
      %v10376 = vadd.f32 %v10375, %v10361
      %v10377 = vadd.f32 %v10376, %v10362
      %v10378 = vadd.f32 %v10377, %v10363
      %v10379 = vadd.f32 %v10378, %v10364
      %v10380 = vadd.f32 %v10379, %v10365
      %v10381 = vadd.f32 %v10380, %v10366
      %v10382 = vadd.f32 %v10381, %v10367
      %v10383 = vadd.f32 %v10382, %v10368
      %v10384 = vadd.f32 %v10383, %v10369
      %v10385 = vadd.f32 %v10384, %v10370
      %v10386 = vadd.f32 %v10385, %v10371
      %v10387 = vrot.slane %v10386, 4
      %v10388 = vadd.f32 %v10386, %v10387
      %v10389 = vrot.slane %v10388, 2
      %v10390 = vadd.f32 %v10388, %v10389
      %v10391 = vrot.slane %v10390, 1
      %v10392 = vadd.f32 %v10390, %v10391
      %v10393 = vadd.f32 %v10392, 0.0
      %v10406 = vrot.slane %v9426, 1
      %v10407 = vrot.slane %v9351, 1
      %v10408 = vsel %vm7419, %v10406, %v10407
      %v10409 = vrot.slane %v9442, 1
      %v10410 = vsel %vm7419, %v10407, %v10409
      %v10411 = vrot.slane %v9427, 1
      %v10412 = vrot.slane %v9354, 1
      %v10413 = vsel %vm7419, %v10411, %v10412
      %v10414 = vrot.slane %v9443, 1
      %v10415 = vsel %vm7419, %v10412, %v10414
      %v10416 = vrot.slane %v9428, 1
      %v10417 = vrot.slane %v9357, 1
      %v10418 = vsel %vm7419, %v10416, %v10417
      %v10419 = vrot.slane %v9444, 1
      %v10420 = vsel %vm7419, %v10417, %v10419
      %v10421 = vrot.slane %v9429, 1
      %v10422 = vrot.slane %v9360, 1
      %v10423 = vsel %vm7419, %v10421, %v10422
      %v10424 = vrot.slane %v9445, 1
      %v10425 = vsel %vm7419, %v10422, %v10424
      %v10426 = vrot.slane %v9430, 1
      %v10427 = vrot.slane %v9363, 1
      %v10428 = vsel %vm7419, %v10426, %v10427
      %v10429 = vrot.slane %v9446, 1
      %v10430 = vsel %vm7419, %v10427, %v10429
      %v10431 = vrot.slane %v9431, 1
      %v10432 = vrot.slane %v9366, 1
      %v10433 = vsel %vm7419, %v10431, %v10432
      %v10434 = vrot.slane %v9447, 1
      %v10435 = vsel %vm7419, %v10432, %v10434
      %v10436 = vrot.slane %v9426, 2
      %v10437 = vrot.slane %v9351, 2
      %v10438 = vsel %vm6260, %v10436, %v10437
      %v10439 = vrot.slane %v9442, 2
      %v10440 = vsel %vm6260, %v10437, %v10439
      %v10441 = vrot.slane %v9427, 2
      %v10442 = vrot.slane %v9354, 2
      %v10443 = vsel %vm6260, %v10441, %v10442
      %v10444 = vrot.slane %v9443, 2
      %v10445 = vsel %vm6260, %v10442, %v10444
      %v10446 = vrot.slane %v9428, 2
      %v10447 = vrot.slane %v9357, 2
      %v10448 = vsel %vm6260, %v10446, %v10447
      %v10449 = vrot.slane %v9444, 2
      %v10450 = vsel %vm6260, %v10447, %v10449
      %v10451 = vrot.slane %v9429, 2
      %v10452 = vrot.slane %v9360, 2
      %v10453 = vsel %vm6260, %v10451, %v10452
      %v10454 = vrot.slane %v9445, 2
      %v10455 = vsel %vm6260, %v10452, %v10454
      %v10456 = vrot.slane %v9430, 2
      %v10457 = vrot.slane %v9363, 2
      %v10458 = vsel %vm6260, %v10456, %v10457
      %v10459 = vrot.slane %v9446, 2
      %v10460 = vsel %vm6260, %v10457, %v10459
      %v10461 = vrot.slane %v9431, 2
      %v10462 = vrot.slane %v9366, 2
      %v10463 = vsel %vm6260, %v10461, %v10462
      %v10464 = vrot.slane %v9447, 2
      %v10465 = vsel %vm6260, %v10462, %v10464
      %v10468 = vrot.slane %v9432, 1
      %v10469 = vrot.slane %v9369, 1
      %v10470 = vsel %vm7419, %v10468, %v10469
      %v10471 = vrot.slane %v9448, 1
      %v10472 = vsel %vm7419, %v10469, %v10471
      %v10489 = vrot.slane %v9432, 2
      %v10490 = vrot.slane %v9369, 2
      %v10491 = vsel %vm6260, %v10489, %v10490
      %v10492 = vrot.slane %v9448, 2
      %v10493 = vsel %vm6260, %v10490, %v10492
      %10509 = vrot.lane.b32.xlu0 %v9539, 32
      %v10510 = vpop.permute.xlu0 %10509
      %10511 = vrot.lane.b32.xlu0 %v9541, 32
      %v10512 = vpop.permute.xlu0 %10511
      %10513 = vrot.lane.b32.xlu0 %v9567, 32
      %v10514 = vpop.permute.xlu0 %10513
      %10515 = vrot.lane.b32.xlu0 %v9569, 32
      %v10516 = vpop.permute.xlu0 %10515
      %10517 = vrot.lane.b32.xlu0 %v10408, 32
      %v10518 = vpop.permute.xlu0 %10517
      %10519 = vrot.lane.b32.xlu0 %v10410, 32
      %v10520 = vpop.permute.xlu0 %10519
      %10521 = vrot.lane.b32.xlu0 %v10413, 32
      %v10522 = vpop.permute.xlu0 %10521
      %10523 = vrot.lane.b32.xlu0 %v10415, 32
      %v10524 = vpop.permute.xlu0 %10523
      %10525 = vrot.lane.b32.xlu0 %v10418, 32
      %v10526 = vpop.permute.xlu0 %10525
      %10527 = vrot.lane.b32.xlu0 %v10420, 32
      %v10528 = vpop.permute.xlu0 %10527
      %10529 = vrot.lane.b32.xlu0 %v10423, 32
      %v10530 = vpop.permute.xlu0 %10529
      %10531 = vrot.lane.b32.xlu0 %v10425, 32
      %v10532 = vpop.permute.xlu0 %10531
      %10533 = vrot.lane.b32.xlu0 %v10428, 32
      %v10534 = vpop.permute.xlu0 %10533
      %10535 = vrot.lane.b32.xlu0 %v10430, 32
      %v10536 = vpop.permute.xlu0 %10535
      %10537 = vrot.lane.b32.xlu0 %v10433, 32
      %v10538 = vpop.permute.xlu0 %10537
      %10539 = vrot.lane.b32.xlu0 %v10435, 32
      %v10540 = vpop.permute.xlu0 %10539
      %10557 = vrot.lane.b32.xlu0 %v9560, 64
      %v10558 = vpop.permute.xlu0 %10557
      %10559 = vrot.lane.b32.xlu0 %v9562, 64
      %v10560 = vpop.permute.xlu0 %10559
      %10561 = vrot.lane.b32.xlu0 %v9572, 64
      %v10562 = vpop.permute.xlu0 %10561
      %10563 = vrot.lane.b32.xlu0 %v9574, 64
      %v10564 = vpop.permute.xlu0 %10563
      %10565 = vrot.lane.b32.xlu0 %v10438, 64
      %v10566 = vpop.permute.xlu0 %10565
      %10567 = vrot.lane.b32.xlu0 %v10440, 64
      %v10568 = vpop.permute.xlu0 %10567
      %10569 = vrot.lane.b32.xlu0 %v10443, 64
      %v10570 = vpop.permute.xlu0 %10569
      %10571 = vrot.lane.b32.xlu0 %v10445, 64
      %v10572 = vpop.permute.xlu0 %10571
      %10573 = vrot.lane.b32.xlu0 %v10448, 64
      %v10574 = vpop.permute.xlu0 %10573
      %10575 = vrot.lane.b32.xlu0 %v10450, 64
      %v10576 = vpop.permute.xlu0 %10575
      %10577 = vrot.lane.b32.xlu0 %v10453, 64
      %v10578 = vpop.permute.xlu0 %10577
      %10579 = vrot.lane.b32.xlu0 %v10455, 64
      %v10580 = vpop.permute.xlu0 %10579
      %10581 = vrot.lane.b32.xlu0 %v10458, 64
      %v10582 = vpop.permute.xlu0 %10581
      %10583 = vrot.lane.b32.xlu0 %v10460, 64
      %v10584 = vpop.permute.xlu0 %10583
      %10585 = vrot.lane.b32.xlu0 %v10463, 64
      %v10586 = vpop.permute.xlu0 %10585
      %10587 = vrot.lane.b32.xlu0 %v10465, 64
      %v10588 = vpop.permute.xlu0 %10587
      %10605 = vrot.lane.b32.xlu0 %v9425, 96
      %v10606 = vpop.permute.xlu0 %10605
      %10607 = vrot.lane.b32.xlu0 %v9348, 96
      %v10608 = vpop.permute.xlu0 %10607
      %10609 = vrot.lane.b32.xlu0 %v9426, 96
      %v10610 = vpop.permute.xlu0 %10609
      %10611 = vrot.lane.b32.xlu0 %v9351, 96
      %v10612 = vpop.permute.xlu0 %10611
      %10613 = vrot.lane.b32.xlu0 %v9427, 96
      %v10614 = vpop.permute.xlu0 %10613
      %10615 = vrot.lane.b32.xlu0 %v9354, 96
      %v10616 = vpop.permute.xlu0 %10615
      %10617 = vrot.lane.b32.xlu0 %v9428, 96
      %v10618 = vpop.permute.xlu0 %10617
      %10619 = vrot.lane.b32.xlu0 %v9357, 96
      %v10620 = vpop.permute.xlu0 %10619
      %10621 = vrot.lane.b32.xlu0 %v9429, 96
      %v10622 = vpop.permute.xlu0 %10621
      %10623 = vrot.lane.b32.xlu0 %v9360, 96
      %v10624 = vpop.permute.xlu0 %10623
      %10625 = vrot.lane.b32.xlu0 %v9430, 96
      %v10626 = vpop.permute.xlu0 %10625
      %10627 = vrot.lane.b32.xlu0 %v9363, 96
      %v10628 = vpop.permute.xlu0 %10627
      %10629 = vrot.lane.b32.xlu0 %v9431, 96
      %v10630 = vpop.permute.xlu0 %10629
      %10631 = vrot.lane.b32.xlu0 %v9366, 96
      %v10632 = vpop.permute.xlu0 %10631
      %10633 = vrot.lane.b32.xlu0 %v9432, 96
      %v10634 = vpop.permute.xlu0 %10633
      %10635 = vrot.lane.b32.xlu0 %v9369, 96
      %v10636 = vpop.permute.xlu0 %10635
      %10653 = vrot.lane.b32.xlu0 %v9572, 32
      %v10654 = vpop.permute.xlu0 %10653
      %10655 = vrot.lane.b32.xlu0 %v9574, 32
      %v10656 = vpop.permute.xlu0 %10655
      %10657 = vrot.lane.b32.xlu0 %v10438, 32
      %v10658 = vpop.permute.xlu0 %10657
      %10659 = vrot.lane.b32.xlu0 %v10440, 32
      %v10660 = vpop.permute.xlu0 %10659
      %10661 = vrot.lane.b32.xlu0 %v10443, 32
      %v10662 = vpop.permute.xlu0 %10661
      %10663 = vrot.lane.b32.xlu0 %v10445, 32
      %v10664 = vpop.permute.xlu0 %10663
      %10665 = vrot.lane.b32.xlu0 %v10448, 32
      %v10666 = vpop.permute.xlu0 %10665
      %10667 = vrot.lane.b32.xlu0 %v10450, 32
      %v10668 = vpop.permute.xlu0 %10667
      %10669 = vrot.lane.b32.xlu0 %v10453, 32
      %v10670 = vpop.permute.xlu0 %10669
      %10671 = vrot.lane.b32.xlu0 %v10455, 32
      %v10672 = vpop.permute.xlu0 %10671
      %10673 = vrot.lane.b32.xlu0 %v10458, 32
      %v10674 = vpop.permute.xlu0 %10673
      %10675 = vrot.lane.b32.xlu0 %v10460, 32
      %v10676 = vpop.permute.xlu0 %10675
      %10677 = vrot.lane.b32.xlu0 %v10463, 32
      %v10678 = vpop.permute.xlu0 %10677
      %10679 = vrot.lane.b32.xlu0 %v10465, 32
      %v10680 = vpop.permute.xlu0 %10679
      %10681 = vrot.lane.b32.xlu0 %v10491, 32
      %v10682 = vpop.permute.xlu0 %10681
      %10683 = vrot.lane.b32.xlu0 %v10493, 32
      %v10684 = vpop.permute.xlu0 %10683
      %10701 = vrot.lane.b32.xlu0 %v9426, 64
      %v10702 = vpop.permute.xlu0 %10701
      %10703 = vrot.lane.b32.xlu0 %v9351, 64
      %v10704 = vpop.permute.xlu0 %10703
      %10705 = vrot.lane.b32.xlu0 %v9427, 64
      %v10706 = vpop.permute.xlu0 %10705
      %10707 = vrot.lane.b32.xlu0 %v9354, 64
      %v10708 = vpop.permute.xlu0 %10707
      %10709 = vrot.lane.b32.xlu0 %v9428, 64
      %v10710 = vpop.permute.xlu0 %10709
      %10711 = vrot.lane.b32.xlu0 %v9357, 64
      %v10712 = vpop.permute.xlu0 %10711
      %10713 = vrot.lane.b32.xlu0 %v9429, 64
      %v10714 = vpop.permute.xlu0 %10713
      %10715 = vrot.lane.b32.xlu0 %v9360, 64
      %v10716 = vpop.permute.xlu0 %10715
      %10717 = vrot.lane.b32.xlu0 %v9430, 64
      %v10718 = vpop.permute.xlu0 %10717
      %10719 = vrot.lane.b32.xlu0 %v9363, 64
      %v10720 = vpop.permute.xlu0 %10719
      %10721 = vrot.lane.b32.xlu0 %v9431, 64
      %v10722 = vpop.permute.xlu0 %10721
      %10723 = vrot.lane.b32.xlu0 %v9366, 64
      %v10724 = vpop.permute.xlu0 %10723
      %10725 = vrot.lane.b32.xlu0 %v9432, 64
      %v10726 = vpop.permute.xlu0 %10725
      %10727 = vrot.lane.b32.xlu0 %v9369, 64
      %v10728 = vpop.permute.xlu0 %10727
      %10729 = vrot.lane.b32.xlu0 0.0, 64
      %v10730 = vpop.permute.xlu0 %10729
      %10746 = vrot.lane.b32.xlu0 %v10408, 96
      %v10747 = vpop.permute.xlu0 %10746
      %10748 = vrot.lane.b32.xlu0 %v10410, 96
      %v10749 = vpop.permute.xlu0 %10748
      %10750 = vrot.lane.b32.xlu0 %v10413, 96
      %v10751 = vpop.permute.xlu0 %10750
      %10752 = vrot.lane.b32.xlu0 %v10415, 96
      %v10753 = vpop.permute.xlu0 %10752
      %10754 = vrot.lane.b32.xlu0 %v10418, 96
      %v10755 = vpop.permute.xlu0 %10754
      %10756 = vrot.lane.b32.xlu0 %v10420, 96
      %v10757 = vpop.permute.xlu0 %10756
      %10758 = vrot.lane.b32.xlu0 %v10423, 96
      %v10759 = vpop.permute.xlu0 %10758
      %10760 = vrot.lane.b32.xlu0 %v10425, 96
      %v10761 = vpop.permute.xlu0 %10760
      %10762 = vrot.lane.b32.xlu0 %v10428, 96
      %v10763 = vpop.permute.xlu0 %10762
      %10764 = vrot.lane.b32.xlu0 %v10430, 96
      %v10765 = vpop.permute.xlu0 %10764
      %10766 = vrot.lane.b32.xlu0 %v10433, 96
      %v10767 = vpop.permute.xlu0 %10766
      %10768 = vrot.lane.b32.xlu0 %v10435, 96
      %v10769 = vpop.permute.xlu0 %10768
      %10770 = vrot.lane.b32.xlu0 %v10470, 96
      %v10771 = vpop.permute.xlu0 %10770
      %10772 = vrot.lane.b32.xlu0 %v10472, 96
      %v10773 = vpop.permute.xlu0 %10772
      %10774 = vrot.lane.b32.xlu0 %v7421, 96
      %v10775 = vpop.permute.xlu0 %10774
      %v10791 = vsel %vm8425, %v9424, %v10510
      %v10792 = vsel %vm8425, %v9345, %v10512
      %v10793 = vsel %vm8425, %v9425, %v10514
      %v10794 = vsel %vm8425, %v9348, %v10516
      %v10795 = vsel %vm8425, %v9426, %v10518
      %v10796 = vsel %vm8425, %v9351, %v10520
      %v10797 = vsel %vm8425, %v9427, %v10522
      %v10798 = vsel %vm8425, %v9354, %v10524
      %v10799 = vsel %vm8425, %v9428, %v10526
      %v10800 = vsel %vm8425, %v9357, %v10528
      %v10801 = vsel %vm8425, %v9429, %v10530
      %v10802 = vsel %vm8425, %v9360, %v10532
      %v10803 = vsel %vm8425, %v9430, %v10534
      %v10804 = vsel %vm8425, %v9363, %v10536
      %v10805 = vsel %vm8425, %v9431, %v10538
      %v10806 = vsel %vm8425, %v9366, %v10540
      %v10807 = vsel %vm8457, %v10791, %v10558
      %v10808 = vsel %vm8457, %v10792, %v10560
      %v10809 = vsel %vm8457, %v10793, %v10562
      %v10810 = vsel %vm8457, %v10794, %v10564
      %v10811 = vsel %vm8457, %v10795, %v10566
      %v10812 = vsel %vm8457, %v10796, %v10568
      %v10813 = vsel %vm8457, %v10797, %v10570
      %v10814 = vsel %vm8457, %v10798, %v10572
      %v10815 = vsel %vm8457, %v10799, %v10574
      %v10816 = vsel %vm8457, %v10800, %v10576
      %v10817 = vsel %vm8457, %v10801, %v10578
      %v10818 = vsel %vm8457, %v10802, %v10580
      %v10819 = vsel %vm8457, %v10803, %v10582
      %v10820 = vsel %vm8457, %v10804, %v10584
      %v10821 = vsel %vm8457, %v10805, %v10586
      %v10822 = vsel %vm8457, %v10806, %v10588
      %v10823 = vsel %vm8489, %v10807, %v10606
      %v10824 = vsel %vm8489, %v10808, %v10608
      %v10825 = vsel %vm8489, %v10809, %v10610
      %v10826 = vsel %vm8489, %v10810, %v10612
      %v10827 = vsel %vm8489, %v10811, %v10614
      %v10828 = vsel %vm8489, %v10812, %v10616
      %v10829 = vsel %vm8489, %v10813, %v10618
      %v10830 = vsel %vm8489, %v10814, %v10620
      %v10831 = vsel %vm8489, %v10815, %v10622
      %v10832 = vsel %vm8489, %v10816, %v10624
      %v10833 = vsel %vm8489, %v10817, %v10626
      %v10834 = vsel %vm8489, %v10818, %v10628
      %v10835 = vsel %vm8489, %v10819, %v10630
      %v10836 = vsel %vm8489, %v10820, %v10632
      %v10837 = vsel %vm8489, %v10821, %v10634
      %v10838 = vsel %vm8489, %v10822, %v10636
      %v10839 = vsel %vm8425, %v9567, %v10654
      %v10840 = vsel %vm8425, %v9569, %v10656
      %v10841 = vsel %vm8425, %v10408, %v10658
      %v10842 = vsel %vm8425, %v10410, %v10660
      %v10843 = vsel %vm8425, %v10413, %v10662
      %v10844 = vsel %vm8425, %v10415, %v10664
      %v10845 = vsel %vm8425, %v10418, %v10666
      %v10846 = vsel %vm8425, %v10420, %v10668
      %v10847 = vsel %vm8425, %v10423, %v10670
      %v10848 = vsel %vm8425, %v10425, %v10672
      %v10849 = vsel %vm8425, %v10428, %v10674
      %v10850 = vsel %vm8425, %v10430, %v10676
      %v10851 = vsel %vm8425, %v10433, %v10678
      %v10852 = vsel %vm8425, %v10435, %v10680
      %v10853 = vsel %vm8425, %v10470, %v10682
      %v10854 = vsel %vm8425, %v10472, %v10684
      %v10855 = vsel %vm8457, %v10839, %v10702
      %v10856 = vsel %vm8457, %v10840, %v10704
      %v10857 = vsel %vm8457, %v10841, %v10706
      %v10858 = vsel %vm8457, %v10842, %v10708
      %v10859 = vsel %vm8457, %v10843, %v10710
      %v10860 = vsel %vm8457, %v10844, %v10712
      %v10861 = vsel %vm8457, %v10845, %v10714
      %v10862 = vsel %vm8457, %v10846, %v10716
      %v10863 = vsel %vm8457, %v10847, %v10718
      %v10864 = vsel %vm8457, %v10848, %v10720
      %v10865 = vsel %vm8457, %v10849, %v10722
      %v10866 = vsel %vm8457, %v10850, %v10724
      %v10867 = vsel %vm8457, %v10851, %v10726
      %v10868 = vsel %vm8457, %v10852, %v10728
      %v10869 = vsel %vm8457, %v10853, %v10730
      %v10870 = vsel %vm8457, %v10854, %v10730
      %v10871 = vsel %vm8489, %v10855, %v10747
      %v10872 = vsel %vm8489, %v10856, %v10749
      %v10873 = vsel %vm8489, %v10857, %v10751
      %v10874 = vsel %vm8489, %v10858, %v10753
      %v10875 = vsel %vm8489, %v10859, %v10755
      %v10876 = vsel %vm8489, %v10860, %v10757
      %v10877 = vsel %vm8489, %v10861, %v10759
      %v10878 = vsel %vm8489, %v10862, %v10761
      %v10879 = vsel %vm8489, %v10863, %v10763
      %v10880 = vsel %vm8489, %v10864, %v10765
      %v10881 = vsel %vm8489, %v10865, %v10767
      %v10882 = vsel %vm8489, %v10866, %v10769
      %v10883 = vsel %vm8489, %v10867, %v10771
      %v10884 = vsel %vm8489, %v10868, %v10773
      %v10885 = vsel %vm8489, %v10869, %v10775
      %v10886 = vsel %vm8489, %v10870, %v10775
      %v10887 = vpack.c.bf16 %v10824, %v10823
      %v10888 = vpack.c.bf16 %v10872, %v10871
      %v10889 = vpack.c.bf16 %v10440, %v10438
      %v10890 = vpack.c.bf16 %v10826, %v10825
      %v10891 = vpack.c.bf16 %v10874, %v10873
      %v10892 = vpack.c.bf16 %v10445, %v10443
      %v10893 = vpack.c.bf16 %v10828, %v10827
      %v10894 = vpack.c.bf16 %v10876, %v10875
      %v10895 = vpack.c.bf16 %v10450, %v10448
      %v10896 = vpack.c.bf16 %v10830, %v10829
      %v10897 = vpack.c.bf16 %v10878, %v10877
      %v10898 = vpack.c.bf16 %v10455, %v10453
      %v10899 = vpack.c.bf16 %v10832, %v10831
      %v10900 = vpack.c.bf16 %v10880, %v10879
      %v10901 = vpack.c.bf16 %v10460, %v10458
      %v10902 = vpack.c.bf16 %v10834, %v10833
      %v10903 = vpack.c.bf16 %v10882, %v10881
      %v10904 = vpack.c.bf16 %v10465, %v10463
      %v10905 = vpack.c.bf16 %v10836, %v10835
      %v10906 = vpack.c.bf16 %v10884, %v10883
      %v10907 = vpack.c.bf16 %v10493, %v10491
      %v10908 = vpack.c.bf16 %v10838, %v10837
      %v10909 = vpack.c.bf16 %v10886, %v10885
      %v10910 = vpack.c.bf16 %v9499, %v9499
      %v10912 = vsel %vm8425, %v10889, 0
      %v10915 = vsel %vm8425, %v10892, 0
      %v10918 = vsel %vm8425, %v10895, 0
      %v10921 = vsel %vm8425, %v10898, 0
      %v10924 = vsel %vm8425, %v10901, 0
      %v10927 = vsel %vm8425, %v10904, 0
      %v10930 = vsel %vm8425, %v10907, 0
      %v10933 = vsel %vm8425, %v10910, 0
      %10935 = vmatprep.subr.bf16.mxu0 0
      %10936 = vmatpush1.bf16.msra.mxu0 %v10109
      %10937 = vmatprep.subr.bf16.mxu0 0
      %10938 = vmatpush1.bf16.msra.mxu0 %v10108
      %10939 = vmatprep.subr.bf16.mxu0 0
      %10940 = vmatpush1.bf16.msra.mxu0 %v10107
      %10941 = vmatprep.subr.bf16.mxu0 0
      %10942 = vmatpush1.bf16.msra.mxu0 %v10106
      %10943 = vmatprep.subr.bf16.mxu0 0
      %10944 = vmatpush1.bf16.msra.mxu0 %v10105
      %10945 = vmatprep.subr.bf16.mxu0 0
      %10946 = vmatpush1.bf16.msra.mxu0 %v10104
      %10947 = vmatprep.subr.bf16.mxu0 0
      %10948 = vmatpush1.bf16.msra.mxu0 %v10103
      %10949 = vmatprep.subr.bf16.mxu0 0
      %10950 = vmatpush1.bf16.msra.mxu0 %v10102
      %10951 = vmatprep.subr.bf16.mxu0 0
      %10952 = vmatpush2.bf16.msra.mxu0 %v10117
      %10953 = vmatprep.subr.bf16.mxu0 0
      %10954 = vmatpush2.bf16.msra.mxu0 %v10116
      %10955 = vmatprep.subr.bf16.mxu0 0
      %10956 = vmatpush2.bf16.msra.mxu0 %v10115
      %10957 = vmatprep.subr.bf16.mxu0 0
      %10958 = vmatpush2.bf16.msra.mxu0 %v10114
      %10959 = vmatprep.subr.bf16.mxu0 0
      %10960 = vmatpush2.bf16.msra.mxu0 %v10113
      %10961 = vmatprep.subr.bf16.mxu0 0
      %10962 = vmatpush2.bf16.msra.mxu0 %v10112
      %10963 = vmatprep.subr.bf16.mxu0 0
      %10964 = vmatpush2.bf16.msra.mxu0 %v10111
      %10965 = vmatprep.subr.bf16.mxu0 0
      %10966 = vmatpush2.bf16.msra.mxu0 %v10110
      %10967 = vmatprep.mubr.bf16.mxu0 %v10888
      %10968 = vmatmul.mubr.bf16.gmra.mxu0 %v10887
      %v10969 = vpop.f32.mrf.mxu0
      %v10970 = vadd.f32 %v10028, %v10969
      %v10971 = vpop.f32.mrf.mxu0
      %v10972 = vpop.f32.mrf.mxu0
      %v10973 = vadd.f32 %v10028, %v10972
      %v10974 = vpop.f32.mrf.mxu0
      %10975 = vmatprep.mubr.bf16.mxu0 %v10891
      %10976 = vmatmul.mubr.bf16.gmra.mxu0 %v10890
      %v10977 = vpop.f32.mrf.mxu0
      %v10978 = vadd.f32 %v10028, %v10977
      %v10979 = vpop.f32.mrf.mxu0
      %v10980 = vpop.f32.mrf.mxu0
      %v10981 = vadd.f32 %v10028, %v10980
      %v10982 = vpop.f32.mrf.mxu0
      %10983 = vmatprep.mubr.bf16.mxu0 %v10894
      %10984 = vmatmul.mubr.bf16.gmra.mxu0 %v10893
      %v10985 = vpop.f32.mrf.mxu0
      %v10986 = vadd.f32 %v10028, %v10985
      %v10987 = vpop.f32.mrf.mxu0
      %v10988 = vpop.f32.mrf.mxu0
      %v10989 = vadd.f32 %v10028, %v10988
      %v10990 = vpop.f32.mrf.mxu0
      %10991 = vmatprep.mubr.bf16.mxu0 %v10897
      %10992 = vmatmul.mubr.bf16.gmra.mxu0 %v10896
      %v10993 = vpop.f32.mrf.mxu0
      %v10994 = vadd.f32 %v10028, %v10993
      %v10995 = vpop.f32.mrf.mxu0
      %v10996 = vpop.f32.mrf.mxu0
      %v10997 = vadd.f32 %v10028, %v10996
      %v10998 = vpop.f32.mrf.mxu0
      %10999 = vmatprep.mubr.bf16.mxu0 %v10900
      %11000 = vmatmul.mubr.bf16.gmra.mxu0 %v10899
      %v11001 = vpop.f32.mrf.mxu0
      %v11002 = vadd.f32 %v10028, %v11001
      %v11003 = vpop.f32.mrf.mxu0
      %v11004 = vpop.f32.mrf.mxu0
      %v11005 = vadd.f32 %v10028, %v11004
      %v11006 = vpop.f32.mrf.mxu0
      %11007 = vmatprep.mubr.bf16.mxu0 %v10903
      %11008 = vmatmul.mubr.bf16.gmra.mxu0 %v10902
      %v11009 = vpop.f32.mrf.mxu0
      %v11010 = vadd.f32 %v10028, %v11009
      %v11011 = vpop.f32.mrf.mxu0
      %v11012 = vpop.f32.mrf.mxu0
      %v11013 = vadd.f32 %v10028, %v11012
      %v11014 = vpop.f32.mrf.mxu0
      %11015 = vmatprep.mubr.bf16.mxu0 %v10906
      %11016 = vmatmul.mubr.bf16.gmra.mxu0 %v10905
      %v11017 = vpop.f32.mrf.mxu0
      %v11018 = vadd.f32 %v10028, %v11017
      %v11019 = vpop.f32.mrf.mxu0
      %v11020 = vpop.f32.mrf.mxu0
      %v11021 = vadd.f32 %v10028, %v11020
      %v11022 = vpop.f32.mrf.mxu0
      %11023 = vmatprep.mubr.bf16.mxu0 %v10909
      %11024 = vmatmul.mubr.bf16.gmra.mxu0 %v10908
      %v11025 = vpop.f32.mrf.mxu0
      %v11026 = vadd.f32 %v10028, %v11025
      %v11027 = vpop.f32.mrf.mxu0
      %v11028 = vpop.f32.mrf.mxu0
      %v11029 = vadd.f32 %v10028, %v11028
      %v11030 = vpop.f32.mrf.mxu0
      %11031 = vdwg.mxu0
      %11032 = vmatprep.subr.bf16.mxu0 0
      %11033 = vmatpush1.bf16.msra.mxu0 0
      %11034 = vmatprep.subr.bf16.mxu0 0
      %11035 = vmatpush1.bf16.msra.mxu0 0
      %11036 = vmatprep.subr.bf16.mxu0 0
      %11037 = vmatpush1.bf16.msra.mxu0 0
      %11038 = vmatprep.subr.bf16.mxu0 0
      %11039 = vmatpush1.bf16.msra.mxu0 0
      %11040 = vmatprep.subr.bf16.mxu0 0
      %11041 = vmatpush1.bf16.msra.mxu0 0
      %11042 = vmatprep.subr.bf16.mxu0 0
      %11043 = vmatpush1.bf16.msra.mxu0 0
      %11044 = vmatprep.subr.bf16.mxu0 0
      %11045 = vmatpush1.bf16.msra.mxu0 %v10119
      %11046 = vmatprep.subr.bf16.mxu0 0
      %11047 = vmatpush1.bf16.msra.mxu0 %v10118
      %11048 = vmatprep.subr.bf16.mxu0 0
      %11049 = vmatpush2.bf16.msra.mxu0 0
      %11050 = vmatprep.subr.bf16.mxu0 0
      %11051 = vmatpush2.bf16.msra.mxu0 0
      %11052 = vmatprep.subr.bf16.mxu0 0
      %11053 = vmatpush2.bf16.msra.mxu0 0
      %11054 = vmatprep.subr.bf16.mxu0 0
      %11055 = vmatpush2.bf16.msra.mxu0 0
      %11056 = vmatprep.subr.bf16.mxu0 0
      %11057 = vmatpush2.bf16.msra.mxu0 0
      %11058 = vmatprep.subr.bf16.mxu0 0
      %11059 = vmatpush2.bf16.msra.mxu0 0
      %11060 = vmatprep.subr.bf16.mxu0 0
      %11061 = vmatpush2.bf16.msra.mxu0 0
      %11062 = vmatprep.subr.bf16.mxu0 0
      %11063 = vmatpush2.bf16.msra.mxu0 0
      %11064 = vmatprep.mubr.bf16.mxu0 0
      %11065 = vmatmul.mubr.bf16.gmra.mxu0 %v10912
      %v11066 = vpop.f32.mrf.mxu0
      %v11067 = vadd.f32 %v10970, %v11066
      %v11068 = vpop.f32.mrf.mxu0
      %v11069 = vpop.f32.mrf.mxu0
      %v11070 = vadd.f32 %v10973, %v11069
      %v11071 = vpop.f32.mrf.mxu0
      %11072 = vmatprep.mubr.bf16.mxu0 0
      %11073 = vmatmul.mubr.bf16.gmra.mxu0 %v10915
      %v11074 = vpop.f32.mrf.mxu0
      %v11075 = vadd.f32 %v10978, %v11074
      %v11076 = vpop.f32.mrf.mxu0
      %v11077 = vpop.f32.mrf.mxu0
      %v11078 = vadd.f32 %v10981, %v11077
      %v11079 = vpop.f32.mrf.mxu0
      %11080 = vmatprep.mubr.bf16.mxu0 0
      %11081 = vmatmul.mubr.bf16.gmra.mxu0 %v10918
      %v11082 = vpop.f32.mrf.mxu0
      %v11083 = vadd.f32 %v10986, %v11082
      %v11084 = vpop.f32.mrf.mxu0
      %v11085 = vpop.f32.mrf.mxu0
      %v11086 = vadd.f32 %v10989, %v11085
      %v11087 = vpop.f32.mrf.mxu0
      %11088 = vmatprep.mubr.bf16.mxu0 0
      %11089 = vmatmul.mubr.bf16.gmra.mxu0 %v10921
      %v11090 = vpop.f32.mrf.mxu0
      %v11091 = vadd.f32 %v10994, %v11090
      %v11092 = vpop.f32.mrf.mxu0
      %v11093 = vpop.f32.mrf.mxu0
      %v11094 = vadd.f32 %v10997, %v11093
      %v11095 = vpop.f32.mrf.mxu0
      %11096 = vmatprep.mubr.bf16.mxu0 0
      %11097 = vmatmul.mubr.bf16.gmra.mxu0 %v10924
      %v11098 = vpop.f32.mrf.mxu0
      %v11099 = vadd.f32 %v11002, %v11098
      %v11100 = vpop.f32.mrf.mxu0
      %v11101 = vpop.f32.mrf.mxu0
      %v11102 = vadd.f32 %v11005, %v11101
      %v11103 = vpop.f32.mrf.mxu0
      %11104 = vmatprep.mubr.bf16.mxu0 0
      %11105 = vmatmul.mubr.bf16.gmra.mxu0 %v10927
      %v11106 = vpop.f32.mrf.mxu0
      %v11107 = vadd.f32 %v11010, %v11106
      %v11108 = vpop.f32.mrf.mxu0
      %v11109 = vpop.f32.mrf.mxu0
      %v11110 = vadd.f32 %v11013, %v11109
      %v11111 = vpop.f32.mrf.mxu0
      %11112 = vmatprep.mubr.bf16.mxu0 0
      %11113 = vmatmul.mubr.bf16.gmra.mxu0 %v10930
      %v11114 = vpop.f32.mrf.mxu0
      %v11115 = vadd.f32 %v11018, %v11114
      %v11116 = vpop.f32.mrf.mxu0
      %v11117 = vpop.f32.mrf.mxu0
      %v11118 = vadd.f32 %v11021, %v11117
      %v11119 = vpop.f32.mrf.mxu0
      %11120 = vmatprep.mubr.bf16.mxu0 0
      %11121 = vmatmul.mubr.bf16.gmra.mxu0 %v10933
      %v11122 = vpop.f32.mrf.mxu0
      %v11123 = vadd.f32 %v11026, %v11122
      %v11124 = vpop.f32.mrf.mxu0
      %v11125 = vpop.f32.mrf.mxu0
      %v11126 = vadd.f32 %v11029, %v11125
      %v11127 = vpop.f32.mrf.mxu0
      %11128 = vdwg.mxu0
      %v11129 = vmax.f32 %v11067, 0.0
      %v11130 = vmax.f32 %v11070, 0.0
      %v11131 = vmax.f32 %v11075, 0.0
      %v11132 = vmax.f32 %v11078, 0.0
      %v11133 = vmax.f32 %v11083, 0.0
      %v11134 = vmax.f32 %v11086, 0.0
      %v11135 = vmax.f32 %v11091, 0.0
      %v11136 = vmax.f32 %v11094, 0.0
      %v11137 = vmax.f32 %v11099, 0.0
      %v11138 = vmax.f32 %v11102, 0.0
      %v11139 = vmax.f32 %v11107, 0.0
      %v11140 = vmax.f32 %v11110, 0.0
      %v11141 = vmax.f32 %v11115, 0.0
      %v11142 = vmax.f32 %v11118, 0.0
      %v11143 = vmax.f32 %v11123, 0.0
      %v11144 = vmax.f32 %v11126, 0.0
      %v11145 = vadd.f32 %v11129, %v11130
      %v11146 = vadd.f32 %v11145, %v11131
      %v11147 = vadd.f32 %v11146, %v11132
      %v11148 = vadd.f32 %v11147, %v11133
      %v11149 = vadd.f32 %v11148, %v11134
      %v11150 = vadd.f32 %v11149, %v11135
      %v11151 = vadd.f32 %v11150, %v11136
      %v11152 = vadd.f32 %v11151, %v11137
      %v11153 = vadd.f32 %v11152, %v11138
      %v11154 = vadd.f32 %v11153, %v11139
      %v11155 = vadd.f32 %v11154, %v11140
      %v11156 = vadd.f32 %v11155, %v11141
      %v11157 = vadd.f32 %v11156, %v11142
      %v11158 = vadd.f32 %v11157, %v11143
      %v11159 = vadd.f32 %v11158, %v11144
      %v11160 = vrot.slane %v11159, 4
      %v11161 = vadd.f32 %v11159, %v11160
      %v11162 = vrot.slane %v11161, 2
      %v11163 = vadd.f32 %v11161, %v11162
      %v11164 = vrot.slane %v11163, 1
      %v11165 = vadd.f32 %v11163, %v11164
      %v11166 = vadd.f32 %v10393, %v11165
      %v11167 = vmul.f32 %v11166, 0.00390625
      %v11168 = vsel %vm8425, %v11167, %v9289
      %v11169 = vld [vmem:[%s7] sm:$0xff]
      %v11170 = vld [vmem:[%s7 + $0x8] sm:$0xff]
      %v11171 = vld [vmem:[%s7 + $0x10] sm:$0xff]
      %v11172 = vld [vmem:[%s7 + $0x18] sm:$0xff]
      %v11173 = vld [vmem:[%s7 + $0x20] sm:$0xff]
      %v11174 = vld [vmem:[%s7 + $0x28] sm:$0xff]
      %v11175 = vld [vmem:[%s8] sm:$0x1]
      %vm11176 = vcmask 392192
      %v11178 = vsel %vm11176, %v11168, 0
      %11180 = vmatprep.subr.mxu0 0.0
      %11181 = vmatpush1.msra.mxu0 0.0
      %11182 = vmatprep.subr.mxu0 0.0
      %11183 = vmatpush1.msra.mxu0 0.0
      %11184 = vmatprep.subr.mxu0 0.0
      %11185 = vmatpush1.msra.mxu0 0.0
      %11186 = vmatprep.subr.mxu0 0.0
      %11187 = vmatpush1.msra.mxu0 0.0
      %11188 = vmatprep.subr.mxu0 0.0
      %11189 = vmatpush1.msra.mxu0 0.0
      %11190 = vmatprep.subr.mxu0 0.0
      %11191 = vmatpush1.msra.mxu0 0.0
      %11192 = vmatprep.subr.mxu0 0.0
      %11193 = vmatpush1.msra.mxu0 0.0
      %11194 = vmatprep.subr.mxu0 0.0
      %11195 = vmatpush1.msra.mxu0 0.0
      %11196 = vmatprep.subr.mxu0 0.0
      %11197 = vmatpush1.msra.mxu0 0.0
      %11198 = vmatprep.subr.mxu0 0.0
      %11199 = vmatpush1.msra.mxu0 0.0
      %11200 = vmatprep.subr.mxu0 0.0
      %11201 = vmatpush1.msra.mxu0 %v11174
      %11202 = vmatprep.subr.mxu0 0.0
      %11203 = vmatpush1.msra.mxu0 %v11173
      %11204 = vmatprep.subr.mxu0 0.0
      %11205 = vmatpush1.msra.mxu0 %v11172
      %11206 = vmatprep.subr.mxu0 0.0
      %11207 = vmatpush1.msra.mxu0 %v11171
      %11208 = vmatprep.subr.mxu0 0.0
      %11209 = vmatpush1.msra.mxu0 %v11170
      %11210 = vmatprep.subr.mxu0 0.0
      %11211 = vmatpush1.msra.mxu0 %v11169
      %11212 = vmatprep.subr.mxu0 0.0
      %11213 = vmatpush2.msra.mxu0 0.0
      %11214 = vmatprep.subr.mxu0 0.0
      %11215 = vmatpush2.msra.mxu0 0.0
      %11216 = vmatprep.subr.mxu0 0.0
      %11217 = vmatpush2.msra.mxu0 0.0
      %11218 = vmatprep.subr.mxu0 0.0
      %11219 = vmatpush2.msra.mxu0 0.0
      %11220 = vmatprep.subr.mxu0 0.0
      %11221 = vmatpush2.msra.mxu0 0.0
      %11222 = vmatprep.subr.mxu0 0.0
      %11223 = vmatpush2.msra.mxu0 0.0
      %11224 = vmatprep.subr.mxu0 0.0
      %11225 = vmatpush2.msra.mxu0 0.0
      %11226 = vmatprep.subr.mxu0 0.0
      %11227 = vmatpush2.msra.mxu0 0.0
      %11228 = vmatprep.subr.mxu0 0.0
      %11229 = vmatpush2.msra.mxu0 0.0
      %11230 = vmatprep.subr.mxu0 0.0
      %11231 = vmatpush2.msra.mxu0 0.0
      %11232 = vmatprep.subr.mxu0 0.0
      %11233 = vmatpush2.msra.mxu0 0.0
      %11234 = vmatprep.subr.mxu0 0.0
      %11235 = vmatpush2.msra.mxu0 0.0
      %11236 = vmatprep.subr.mxu0 0.0
      %11237 = vmatpush2.msra.mxu0 0.0
      %11238 = vmatprep.subr.mxu0 0.0
      %11239 = vmatpush2.msra.mxu0 0.0
      %11240 = vmatprep.subr.mxu0 0.0
      %11241 = vmatpush2.msra.mxu0 0.0
      %11242 = vmatprep.subr.mxu0 0.0
      %11243 = vmatpush2.msra.mxu0 0.0
      %11244 = vmatprep.mubr.f32.mxu0 0.0
      %11245 = vmatmul.mubr.f32.gmra.mxu0 %v11178
      %v11246 = vpop.f32.mrf.mxu0
      %v11247 = vadd.f32 %v11175, %v11246
      %v11248 = vpop.f32.mrf.mxu0
      %11249 = vdwg.mxu0
      %v11250 = vlaneseq
      %v11251 = vand.u32 %v11250, 127
      %vm11252 = vcmp.ge.s32.totalorder %v11251, 42
      %vm11253 = vcmp.lt.s32.totalorder %v11251, 84
      %vm11254 = vmand %vm11252, %vm11253
      %v11255 = vxor.u32 %v11247, 2147483648
      %v11256 = vmul.f32 %v11255, 1.442695
      %v11257 = vpow.pop %v11256
      %v11258 = vadd.f32 %v11257, 1.0
      %v11259 = vrcp.pop %v11258
      %v11260 = vmul.f32 1.0, %v11259
      %v11261 = vsel %vm11254, %v11260, %v11247
      %11262 = vst [vmem:[%s328] sm:$0x1] %v11261
      %p11263 = scmp.lt.s32.totalorder %s20, 1
      %s11264 = scalar_select %p11263, %s20, 1
      %s11265 = scalar_lea.vmem %s9, %s11264
      // Predicated region
      $region57: #{model_forward.1} parent=55 // pred_check
        %p11266 = pneg %p232
      $region58: #{model_forward.1} parent=55 // pred_check_branch
        %11268 = sbr.rel (%p11266) target = $region60
      $region59: #{model_forward.1} parent=55 // pred_region
        _
      $region60: #{model_forward.1} parent=55 // pred_fallthru
        _
    $region56: #{model_forward.1} parent=5 // pred_fallthru
      _
    %p11269 = scmp.le.s32.totalorder 2, %s15
    // Predicated region
    $region61: #{model_forward.1} parent=5 // pred_check
      %p11270 = pneg %p11269
    $region62: #{model_forward.1} parent=5 // pred_check_branch
      %11272 = sbr.rel (%p11270) target = $region64
    $region63: #{model_forward.1} parent=5 // pred_region
      %s11273 = ssub.s32 %s15, 2
      // Predicated region
      $region65: #{model_forward.1} parent=63 // pred_check
        %p11274 = pneg %p238
      $region66: #{model_forward.1} parent=63 // pred_check_branch
        %11276 = sbr.rel (%p11274) target = $region68
      $region67: #{model_forward.1} parent=63 // pred_region
        %p11277 = scmp.lt.s32.totalorder %s21, 1
        %s11278 = scalar_select %p11277, %s21, 1
        %s11279 = scalar_lea.vmem %s9, %s11278
      $region68: #{model_forward.1} parent=63 // pred_fallthru
        _
    $region64: #{model_forward.1} parent=5 // pred_fallthru
      _
  $region6: #{model_forward.1} parent=0 // loop_footer
    %s19 = sadd.s32 1, %s15
  $region7: #{model_forward.1} parent=0 // loop_footer_branch
    %14 = sbr.rel target = $region3
  $region8: #{model_forward.1} parent=0 // loop_exit
    _

</llo_original>
